<compile_context>
chip_gen: v7x
topology: tpu7x:2x2x1
jax: 0.10.0
libtpu: 0.0.40
codegen_flags: <defaults>
</compile_context>

<pallas_src>
import jax
import jax.numpy as jnp
from jax import lax
from jax.experimental import pallas as pl
from jax.experimental.pallas import tpu as pltpu

INV_SCALE_FACTOR = 1.0  # matches `inv_scale_factor = 1` in the PyTorch script
DROPOUT_P = 1.0         # matches `dropout_p = 1` (eval-mode identity here)
_SCALE = 1.0 / INV_SCALE_FACTOR


def _attn_kernel(q_ref, k_ref, v_ref, o_ref):
    # q_ref: (G, Sq, D), k_ref/v_ref: (G, Sk, D), o_ref: (G, Sq, D)
    q = q_ref[...]
    k = k_ref[...]
    v = v_ref[...]

    # Fold the scale into q (trace-time no-op when inv_scale_factor == 1).
    if _SCALE != 1.0:
        q = q * jnp.asarray(_SCALE, q.dtype)

    # v1/v2: scores = (q @ k^T) / inv_scale, contracting over D (no k transpose),
    # batched over the G packed heads; f32 MXU accumulation.
    s = lax.dot_general(
        q, k,
        dimension_numbers=(((2,), (2,)), ((0,), (0,))),
        preferred_element_type=jnp.float32,
        precision=lax.Precision.HIGHEST,
    )  # (G, Sq, Sk), f32

    # v3: numerically-stable softmax; intermediates in f32 (v5e has no bf16 VPU/EUP).
    m = jnp.max(s, axis=-1, keepdims=True)
    e = jnp.exp(s - m)
    l = jnp.sum(e, axis=-1, keepdims=True)  # (G, Sq, 1)

    # v4: dropout -> identity (eval semantics).
    # v5: (unnormalized) probs @ v, then exact-normalize the small (G, Sq, D)
    # result by the row sums (one vreg divide — essentially free).
    acc = lax.dot_general(
        e.astype(v.dtype), v,
        dimension_numbers=(((2,), (1,)), ((0,), (0,))),
        preferred_element_type=jnp.float32,
        precision=lax.Precision.HIGHEST,
    )  # (G, Sq, D), f32

    o_ref[...] = (acc / l).astype(o_ref.dtype)


def _num_tensorcores():
    """Best-effort TensorCore count (v7x has 2/chip; v5e/v6e have 1)."""
    try:
        info = pltpu.get_tpu_info()
        for attr in ("num_cores", "core_count", "num_tensorcores",
                     "tensorcores_per_chip"):
            n = getattr(info, attr, None)
            if isinstance(n, int) and n > 0:
                return n
    except Exception:
        pass
    try:
        n = getattr(jax.local_devices()[0], "num_cores", None)
        if isinstance(n, int) and n > 0:
            return n
    except Exception:
        pass
    return 1


def _pick_group(BH, D, min_steps):
    """Largest head-group G dividing BH s.t. grid >= min_steps, preferring G*D % 128 == 0."""
    divisors = [g for g in range(BH, 0, -1) if BH % g == 0]
    for g in divisors:
        if BH // g >= min_steps and (g * D) % 128 == 0:
            return g
    for g in divisors:
        if BH // g >= min_steps:
            return g
    return divisors[0]  # fall back to a single grid step with all heads


def sdpa_pallas(q, k, v):
    """q: (B, H, Sq, D), k/v: (B, H, Sk, D) -> (B, H, Sq, D)."""
    B, H, Sq, D = q.shape
    Sk = k.shape[2]
    BH = B * H

    num_cores = max(1, _num_tensorcores())
    G = _pick_group(BH, D, num_cores)  # heads per grid step
    NB = BH // G                       # grid steps (1 on single-TC parts)

    q2 = q.reshape(BH, Sq, D)
    k2 = k.reshape(BH, Sk, D)
    v2 = v.reshape(BH, Sk, D)

    itemsize = jnp.dtype(q.dtype).itemsize
    cost = pl.CostEstimate(
        flops=4 * BH * Sq * Sk * D,
        transcendentals=BH * Sq * Sk,
        bytes_accessed=(q2.size + k2.size + v2.size + BH * Sq * D) * itemsize,
    )

    out = pl.pallas_call(
        _attn_kernel,
        out_shape=jax.ShapeDtypeStruct((BH, Sq, D), q.dtype),
        grid_spec=pltpu.PrefetchScalarGridSpec(
            num_scalar_prefetch=0,
            grid=(NB,),
            in_specs=[
                pl.BlockSpec((G, Sq, D), lambda b: (b, 0, 0)),
                pl.BlockSpec((G, Sk, D), lambda b: (b, 0, 0)),
                pl.BlockSpec((G, Sk, D), lambda b: (b, 0, 0)),
            ],
            out_specs=pl.BlockSpec((G, Sq, D), lambda b: (b, 0, 0)),
        ),
        compiler_params=pltpu.CompilerParams(
            dimension_semantics=("parallel",),
        ),
        cost_estimate=cost,
    )(q2, k2, v2)

    # Leading-dim reshape only (no transpose, no extra HBM traffic).
    return out.reshape(B, H, Sq, D)


def sdpa_ref(q, k, v):
    s = jnp.einsum("bhqd,bhkd->bhqk", q, k,
                   precision=lax.Precision.HIGHEST) / INV_SCALE_FACTOR
    p = jax.nn.softmax(s, axis=-1)
    return jnp.einsum("bhqk,bhkd->bhqd", p, v, precision=lax.Precision.HIGHEST)


if __name__ == "__main__":
    batch_size = 2
    num_heads = 4
    query_sequence_length = 8
    key_sequence_length = 8
    head_size = 32

    key0 = jax.random.PRNGKey(0)
    kq, kk, kv = jax.random.split(key0, 3)
    query = jax.random.normal(
        kq, (batch_size, num_heads, query_sequence_length, head_size), jnp.float32)
    key_t = jax.random.normal(
        kk, (batch_size, num_heads, key_sequence_length, head_size), jnp.float32)
    value = jax.random.normal(
        kv, (batch_size, num_heads, key_sequence_length, head_size), jnp.float32)

    out = sdpa_pallas(query, key_t, value)
    out = jax.block_until_ready(out)

    ref = sdpa_ref(query, key_t, value)
    assert out.shape == ref.shape
    assert jnp.allclose(out, ref, atol=1e-4, rtol=1e-4), "mismatch vs reference"

    print("KERNEL_OK")
</pallas_src>

<mosaic_0001>
module attributes {stable_mosaic.version = 11 : i64} {
  func.func @_attn_kernel(%arg0: i32, %arg1: memref<8x8x32xf32, #tpu.memory_space<vmem>>, %arg2: memref<8x8x32xf32, #tpu.memory_space<vmem>>, %arg3: memref<8x8x32xf32, #tpu.memory_space<vmem>>, %arg4: memref<8x8x32xf32, #tpu.memory_space<vmem>>) attributes {dimension_semantics = [#tpu.dimension_semantics<parallel>], iteration_bounds = array<i64: 1>, scalar_prefetch = 0 : i64, scratch_operands = 0 : i64, tpu.core_type = #tpu.core_type<tc>, window_params = [{transform_indices = @transform_0, window_bounds = array<i64: 8, 8, 32>}, {transform_indices = @transform_1, window_bounds = array<i64: 8, 8, 32>}, {transform_indices = @transform_2, window_bounds = array<i64: 8, 8, 32>}, {transform_indices = @transform_3, window_bounds = array<i64: 8, 8, 32>}]} {
    %c0 = arith.constant 0 : index
    %c0_0 = arith.constant 0 : index
    %c0_1 = arith.constant 0 : index
    %0 = vector.load %arg1[%c0, %c0_0, %c0_1] : memref<8x8x32xf32, #tpu.memory_space<vmem>>, vector<8x8x32xf32>
    %c0_2 = arith.constant 0 : index
    %c0_3 = arith.constant 0 : index
    %c0_4 = arith.constant 0 : index
    %1 = vector.load %arg2[%c0_2, %c0_3, %c0_4] : memref<8x8x32xf32, #tpu.memory_space<vmem>>, vector<8x8x32xf32>
    %c0_5 = arith.constant 0 : index
    %c0_6 = arith.constant 0 : index
    %c0_7 = arith.constant 0 : index
    %2 = vector.load %arg3[%c0_5, %c0_6, %c0_7] : memref<8x8x32xf32, #tpu.memory_space<vmem>>, vector<8x8x32xf32>
    %cst = arith.constant dense<0.000000e+00> : vector<8x8x8xf32>
    %3 = tpu.matmul %0, %1, %cst {dimension_numbers = #tpu.dot_dimension_numbers<[2], [2], [1], [1], [0, 0, 0, 1, 1, 1], [0], [0]>, precision = #tpu.contract_precision<fp32>} : vector<8x8x32xf32>, vector<8x8x32xf32>, vector<8x8x8xf32> -> vector<8x8x8xf32>
    %cst_8 = arith.constant dense<0xFF800000> : vector<8x8xf32>
    %4 = vector.multi_reduction <maximumf>, %3, %cst_8 [2] : vector<8x8x8xf32> to vector<8x8xf32>
    %5 = vector.shape_cast %4 : vector<8x8xf32> to vector<8x8x1xf32>
    %6 = vector.broadcast %5 : vector<8x8x1xf32> to vector<8x8x8xf32>
    %7 = arith.subf %3, %6 : vector<8x8x8xf32>
    %8 = math.exp %7 : vector<8x8x8xf32>
    %cst_9 = arith.constant dense<0.000000e+00> : vector<8x8xf32>
    %9 = vector.multi_reduction <add>, %8, %cst_9 [2] : vector<8x8x8xf32> to vector<8x8xf32>
    %10 = vector.shape_cast %9 : vector<8x8xf32> to vector<8x8x1xf32>
    %cst_10 = arith.constant dense<0.000000e+00> : vector<8x8x32xf32>
    %11 = tpu.matmul %8, %2, %cst_10 {dimension_numbers = #tpu.dot_dimension_numbers<[2], [1], [1], [2], [0, 0, 0, 1, 1, 2], [0], [0]>, precision = #tpu.contract_precision<fp32>} : vector<8x8x8xf32>, vector<8x8x32xf32>, vector<8x8x32xf32> -> vector<8x8x32xf32>
    %12 = vector.broadcast %10 : vector<8x8x1xf32> to vector<8x8x32xf32>
    %13 = arith.divf %11, %12 : vector<8x8x32xf32>
    %c0_11 = arith.constant 0 : index
    %c0_12 = arith.constant 0 : index
    %c0_13 = arith.constant 0 : index
    %14 = vector.load %arg4[%c0_11, %c0_12, %c0_13] : memref<8x8x32xf32, #tpu.memory_space<vmem>>, vector<8x8x32xf32>
    tpu.vector_store %arg4[%c0_11, %c0_12, %c0_13], %13 {strides = array<i32>} : memref<8x8x32xf32, #tpu.memory_space<vmem>>, vector<8x8x32xf32>,
    return
  }
  func.func @transform_0(%arg0: i32) -> (i32, i32, i32) {
    %c0_i32 = arith.constant 0 : i32
    %c0_i32_0 = arith.constant 0 : i32
    %c0_i32_1 = arith.constant 0 : i32
    return %arg0, %c0_i32, %c0_i32_0 : i32, i32, i32
  }
  func.func @transform_1(%arg0: i32) -> (i32, i32, i32) {
    %c0_i32 = arith.constant 0 : i32
    %c0_i32_0 = arith.constant 0 : i32
    %c0_i32_1 = arith.constant 0 : i32
    return %arg0, %c0_i32, %c0_i32_0 : i32, i32, i32
  }
  func.func @transform_2(%arg0: i32) -> (i32, i32, i32) {
    %c0_i32 = arith.constant 0 : i32
    %c0_i32_0 = arith.constant 0 : i32
    %c0_i32_1 = arith.constant 0 : i32
    return %arg0, %c0_i32, %c0_i32_0 : i32, i32, i32
  }
  func.func @transform_3(%arg0: i32) -> (i32, i32, i32) {
    %c0_i32 = arith.constant 0 : i32
    %c0_i32_0 = arith.constant 0 : i32
    %c0_i32_1 = arith.constant 0 : i32
    return %arg0, %c0_i32, %c0_i32_0 : i32, i32, i32
  }
}

</mosaic_0001>

<llo_original>
// kernel: tpu_custom_call.1
$region0: #{tpu_custom_call.1}
  #allocation0 [shape = 'u32[]', space=smem, size = 0x4, offset = 0x4, fixed_abs, tag = 'smem constant byte address 0x4 - core index']
  #allocation1 [shape = 'u32[144,128]{1,0:T(1,128)}', space=vmem, size = 0x12000, scoped, tag = 'internal scratch']
  %s0 = inlined_call_operand.hbm [shape: f32[8,8,32], index: 0, kind: input, shape index: {}]
  %s1 = inlined_call_operand.hbm [shape: f32[8,8,32], index: 1, kind: input, shape index: {}]
  %s2 = inlined_call_operand.hbm [shape: f32[8,8,32], index: 2, kind: input, shape index: {}]
  %s3 = inlined_call_operand.hbm [shape: f32[8,8,32], index: 3, kind: output, shape index: {}]
  %s4 = sld [smem:[#allocation0]]
  $region34: #{tpu_custom_call.1} parent=0
    _
  %s6 = ssub.s32 1, %s4
  %s7 = scalar_select 0, %s6, %s4
  $region1: #{tpu_custom_call.1} parent=0
    #allocation2 [shape = 'u8[32768]{0}', space=vmem, size = 0x8000, scoped, tag = 'input window, operand 0, single buffered']
    #allocation3 [shape = 's32[1]{0}', space=sflag, size = 0x4, scoped, tag = 'scoped memory for tpu_custom_call.1']
    #allocation4 [shape = 's32[1]{0}', space=sflag, size = 0x4, scoped, tag = 'scoped memory for tpu_custom_call.1']
    #allocation5 [shape = 'u8[32768]{0}', space=vmem, size = 0x8000, scoped, tag = 'input window, operand 1, single buffered']
    #allocation6 [shape = 's32[1]{0}', space=sflag, size = 0x4, scoped, tag = 'scoped memory for tpu_custom_call.1']
    #allocation7 [shape = 'u8[32768]{0}', space=vmem, size = 0x8000, scoped, tag = 'input window, operand 2, single buffered']
    #allocation8 [shape = 'u8[32768]{0}', space=vmem, size = 0x8000, scoped, tag = 'output window, operand 0, single buffered']
    %8 = vsyncpa [#allocation3], 0
    %9 = vsyncpa [#allocation6], 0
    %10 = vsyncpa [#allocation4], 0
    // Predicated region
    $region2: #{tpu_custom_call.1} parent=1 // pred_check
      _
    $region3: #{tpu_custom_call.1} parent=1 // pred_check_branch
      %12 = sbr.rel (0) target = $region5
    $region4: #{tpu_custom_call.1} parent=1 // pred_region
      %s14 = ssub.s32 1024, 1024
      %15 = vsyncadd [#allocation3], %s14
      %s16 = sshll.u32 [#allocation2], 4
      %s17 = int_to_ptr.vmem [resolvable:$true] %s16
      %22 = dma.hbm_to_vmem [thread:$0]  %s0, 1024, %s17, [#allocation3], 128, 128, 8
    $region5: #{tpu_custom_call.1} parent=1 // pred_fallthru
      _
    // Predicated region
    $region6: #{tpu_custom_call.1} parent=1 // pred_check
      _
    $region7: #{tpu_custom_call.1} parent=1 // pred_check_branch
      %24 = sbr.rel (0) target = $region9
    $region8: #{tpu_custom_call.1} parent=1 // pred_region
      %s26 = ssub.s32 1024, 1024
      %27 = vsyncadd [#allocation6], %s26
      %s28 = sshll.u32 [#allocation5], 4
      %s29 = int_to_ptr.vmem [resolvable:$true] %s28
      %34 = dma.hbm_to_vmem [thread:$0]  %s1, 1024, %s29, [#allocation6], 128, 128, 8
    $region9: #{tpu_custom_call.1} parent=1 // pred_fallthru
      _
    // Predicated region
    $region10: #{tpu_custom_call.1} parent=1 // pred_check
      _
    $region11: #{tpu_custom_call.1} parent=1 // pred_check_branch
      %36 = sbr.rel (0) target = $region13
    $region12: #{tpu_custom_call.1} parent=1 // pred_region
      %s38 = ssub.s32 1024, 1024
      %39 = vsyncadd [#allocation6], %s38
      %s40 = sshll.u32 [#allocation7], 4
      %s41 = int_to_ptr.vmem [resolvable:$true] %s40
      %46 = dma.hbm_to_vmem [thread:$0]  %s2, 1024, %s41, [#allocation6], 128, 128, 8
    $region13: #{tpu_custom_call.1} parent=1 // pred_fallthru
      _
    // Predicated region
    $region14: #{tpu_custom_call.1} parent=1 // pred_check
      _
    $region15: #{tpu_custom_call.1} parent=1 // pred_check_branch
      %48 = sbr.rel (0) target = $region17
    $region16: #{tpu_custom_call.1} parent=1 // pred_region
      %49 = dma.done [#allocation3], 1024
    $region17: #{tpu_custom_call.1} parent=1 // pred_fallthru
      _
    // Predicated region
    $region18: #{tpu_custom_call.1} parent=1 // pred_check
      _
    $region19: #{tpu_custom_call.1} parent=1 // pred_check_branch
      %51 = sbr.rel (0) target = $region21
    $region20: #{tpu_custom_call.1} parent=1 // pred_region
      %52 = dma.done [#allocation6], 1024
    $region21: #{tpu_custom_call.1} parent=1 // pred_fallthru
      _
    // Predicated region
    $region22: #{tpu_custom_call.1} parent=1 // pred_check
      _
    $region23: #{tpu_custom_call.1} parent=1 // pred_check_branch
      %54 = sbr.rel (0) target = $region25
    $region24: #{tpu_custom_call.1} parent=1 // pred_region
      %55 = dma.done [#allocation6], 1024
    $region25: #{tpu_custom_call.1} parent=1 // pred_fallthru
      _
    %v56 = vld [vmem:[#allocation2] sm:$0xff]
    %v57 = vld [vmem:[#allocation2 + $0x8] sm:$0xff]
    %v58 = vld [vmem:[#allocation2 + $0x10] sm:$0xff]
    %v59 = vld [vmem:[#allocation2 + $0x18] sm:$0xff]
    %v60 = vld [vmem:[#allocation2 + $0x20] sm:$0xff]
    %v61 = vld [vmem:[#allocation2 + $0x28] sm:$0xff]
    %v62 = vld [vmem:[#allocation2 + $0x30] sm:$0xff]
    %v63 = vld [vmem:[#allocation2 + $0x38] sm:$0xff]
    %v64 = vld [vmem:[#allocation5] sm:$0xff]
    %v65 = vld [vmem:[#allocation5 + $0x8] sm:$0xff]
    %v66 = vld [vmem:[#allocation5 + $0x10] sm:$0xff]
    %v67 = vld [vmem:[#allocation5 + $0x18] sm:$0xff]
    %v68 = vld [vmem:[#allocation5 + $0x20] sm:$0xff]
    %v69 = vld [vmem:[#allocation5 + $0x28] sm:$0xff]
    %v70 = vld [vmem:[#allocation5 + $0x30] sm:$0xff]
    %v71 = vld [vmem:[#allocation5 + $0x38] sm:$0xff]
    %v72 = vld [vmem:[#allocation7] sm:$0xff]
    %v73 = vld [vmem:[#allocation7 + $0x8] sm:$0xff]
    %v74 = vld [vmem:[#allocation7 + $0x10] sm:$0xff]
    %v75 = vld [vmem:[#allocation7 + $0x18] sm:$0xff]
    %v76 = vld [vmem:[#allocation7 + $0x20] sm:$0xff]
    %v77 = vld [vmem:[#allocation7 + $0x28] sm:$0xff]
    %v78 = vld [vmem:[#allocation7 + $0x30] sm:$0xff]
    %v79 = vld [vmem:[#allocation7 + $0x38] sm:$0xff]
    %vm80 = vcmask 261120
    %v82 = vsel %vm80, %v56, 0
    %v85 = vsel %vm80, %v64, 0
    %87 = vmatprep.subr.mxu0 0.0
    %v88 = vand.u32 %v85, 4294901760
    %89 = vmatpush1.xpose.msra.mxu0 %v88
    %90 = vmatprep.subr.mxu0 0.0
    %91 = vmatpush1.xpose.msra.mxu0 0.0
    %92 = vmatprep.subr.mxu0 0.0
    %93 = vmatpush1.xpose.msra.mxu0 0.0
    %94 = vmatprep.subr.mxu0 0.0
    %95 = vmatpush1.xpose.msra.mxu0 0.0
    %96 = vmatprep.subr.mxu0 0.0
    %97 = vmatpush1.xpose.msra.mxu0 0.0
    %98 = vmatprep.subr.mxu0 0.0
    %99 = vmatpush1.xpose.msra.mxu0 0.0
    %100 = vmatprep.subr.mxu0 0.0
    %101 = vmatpush1.xpose.msra.mxu0 0.0
    %102 = vmatprep.subr.mxu0 0.0
    %103 = vmatpush1.xpose.msra.mxu0 0.0
    %104 = vmatprep.subr.mxu0 0.0
    %105 = vmatpush1.xpose.msra.mxu0 0.0
    %106 = vmatprep.subr.mxu0 0.0
    %107 = vmatpush1.xpose.msra.mxu0 0.0
    %108 = vmatprep.subr.mxu0 0.0
    %109 = vmatpush1.xpose.msra.mxu0 0.0
    %110 = vmatprep.subr.mxu0 0.0
    %111 = vmatpush1.xpose.msra.mxu0 0.0
    %112 = vmatprep.subr.mxu0 0.0
    %113 = vmatpush1.xpose.msra.mxu0 0.0
    %114 = vmatprep.subr.mxu0 0.0
    %115 = vmatpush1.xpose.msra.mxu0 0.0
    %116 = vmatprep.subr.mxu0 0.0
    %117 = vmatpush1.xpose.msra.mxu0 0.0
    %118 = vmatprep.subr.mxu0 0.0
    %119 = vmatpush1.xpose.msra.mxu0 0.0
    %120 = vmatprep.subr.mxu0 0.0
    %121 = vmatpush1.xpose.msra.mxu0 0.0
    %122 = vmatprep.subr.mxu0 0.0
    %123 = vmatpush1.xpose.msra.mxu0 0.0
    %124 = vmatprep.subr.mxu0 0.0
    %125 = vmatpush1.xpose.msra.mxu0 0.0
    %126 = vmatprep.subr.mxu0 0.0
    %127 = vmatpush1.xpose.msra.mxu0 0.0
    %128 = vmatprep.subr.mxu0 0.0
    %129 = vmatpush1.xpose.msra.mxu0 0.0
    %130 = vmatprep.subr.mxu0 0.0
    %131 = vmatpush1.xpose.msra.mxu0 0.0
    %132 = vmatprep.subr.mxu0 0.0
    %133 = vmatpush1.xpose.msra.mxu0 0.0
    %134 = vmatprep.subr.mxu0 0.0
    %135 = vmatpush1.xpose.msra.mxu0 0.0
    %136 = vmatprep.subr.mxu0 0.0
    %137 = vmatpush1.xpose.msra.mxu0 0.0
    %138 = vmatprep.subr.mxu0 0.0
    %139 = vmatpush1.xpose.msra.mxu0 0.0
    %140 = vmatprep.subr.mxu0 0.0
    %141 = vmatpush1.xpose.msra.mxu0 0.0
    %142 = vmatprep.subr.mxu0 0.0
    %143 = vmatpush1.xpose.msra.mxu0 0.0
    %144 = vmatprep.subr.mxu0 0.0
    %145 = vmatpush1.xpose.msra.mxu0 0.0
    %146 = vmatprep.subr.mxu0 0.0
    %147 = vmatpush1.xpose.msra.mxu0 0.0
    %148 = vmatprep.subr.mxu0 0.0
    %149 = vmatpush1.xpose.msra.mxu0 0.0
    %150 = vmatprep.subr.mxu0 0.0
    %151 = vmatpush1.xpose.msra.mxu0 0.0
    %152 = vmatprep.mubr.f32.mxu0 0.0
    %v153 = vand.u32 %v82, 4294901760
    %v154 = vsub.f32 %v82, %v153
    %v155 = vand.u32 %v154, 4294901760
    %v156 = vsub.f32 %v154, %v155
    %v157 = vand.u32 %v156, 4294901760
    %158 = vmatmul.mubr.f32.gmra.mrb[0].mxu0 %v157
    %v159 = vpop.f32.mrb[0].mxu0
    %v160 = vadd.f32 0.0, %v159
    %v161 = vpop.f32.mrb[0].mxu0
    %162 = vdwg.mxu0
    %163 = vmatprep.subr.mxu0 0.0
    %v164 = vand.u32 %v85, 4294901760
    %v165 = vsub.f32 %v85, %v164
    %v166 = vand.u32 %v165, 4294901760
    %v167 = vsub.f32 %v165, %v166
    %v168 = vand.u32 %v167, 4294901760
    %169 = vmatpush1.xpose.msra.mxu0 %v168
    %170 = vmatprep.subr.mxu0 0.0
    %171 = vmatpush1.xpose.msra.mxu0 0.0
    %172 = vmatprep.subr.mxu0 0.0
    %173 = vmatpush1.xpose.msra.mxu0 0.0
    %174 = vmatprep.subr.mxu0 0.0
    %175 = vmatpush1.xpose.msra.mxu0 0.0
    %176 = vmatprep.subr.mxu0 0.0
    %177 = vmatpush1.xpose.msra.mxu0 0.0
    %178 = vmatprep.subr.mxu0 0.0
    %179 = vmatpush1.xpose.msra.mxu0 0.0
    %180 = vmatprep.subr.mxu0 0.0
    %181 = vmatpush1.xpose.msra.mxu0 0.0
    %182 = vmatprep.subr.mxu0 0.0
    %183 = vmatpush1.xpose.msra.mxu0 0.0
    %184 = vmatprep.subr.mxu0 0.0
    %185 = vmatpush1.xpose.msra.mxu0 0.0
    %186 = vmatprep.subr.mxu0 0.0
    %187 = vmatpush1.xpose.msra.mxu0 0.0
    %188 = vmatprep.subr.mxu0 0.0
    %189 = vmatpush1.xpose.msra.mxu0 0.0
    %190 = vmatprep.subr.mxu0 0.0
    %191 = vmatpush1.xpose.msra.mxu0 0.0
    %192 = vmatprep.subr.mxu0 0.0
    %193 = vmatpush1.xpose.msra.mxu0 0.0
    %194 = vmatprep.subr.mxu0 0.0
    %195 = vmatpush1.xpose.msra.mxu0 0.0
    %196 = vmatprep.subr.mxu0 0.0
    %197 = vmatpush1.xpose.msra.mxu0 0.0
    %198 = vmatprep.subr.mxu0 0.0
    %199 = vmatpush1.xpose.msra.mxu0 0.0
    %200 = vmatprep.subr.mxu0 0.0
    %201 = vmatpush1.xpose.msra.mxu0 0.0
    %202 = vmatprep.subr.mxu0 0.0
    %203 = vmatpush1.xpose.msra.mxu0 0.0
    %204 = vmatprep.subr.mxu0 0.0
    %205 = vmatpush1.xpose.msra.mxu0 0.0
    %206 = vmatprep.subr.mxu0 0.0
    %207 = vmatpush1.xpose.msra.mxu0 0.0
    %208 = vmatprep.subr.mxu0 0.0
    %209 = vmatpush1.xpose.msra.mxu0 0.0
    %210 = vmatprep.subr.mxu0 0.0
    %211 = vmatpush1.xpose.msra.mxu0 0.0
    %212 = vmatprep.subr.mxu0 0.0
    %213 = vmatpush1.xpose.msra.mxu0 0.0
    %214 = vmatprep.subr.mxu0 0.0
    %215 = vmatpush1.xpose.msra.mxu0 0.0
    %216 = vmatprep.subr.mxu0 0.0
    %217 = vmatpush1.xpose.msra.mxu0 0.0
    %218 = vmatprep.subr.mxu0 0.0
    %219 = vmatpush1.xpose.msra.mxu0 0.0
    %220 = vmatprep.subr.mxu0 0.0
    %221 = vmatpush1.xpose.msra.mxu0 0.0
    %222 = vmatprep.subr.mxu0 0.0
    %223 = vmatpush1.xpose.msra.mxu0 0.0
    %224 = vmatprep.subr.mxu0 0.0
    %225 = vmatpush1.xpose.msra.mxu0 0.0
    %226 = vmatprep.subr.mxu0 0.0
    %227 = vmatpush1.xpose.msra.mxu0 0.0
    %228 = vmatprep.subr.mxu0 0.0
    %229 = vmatpush1.xpose.msra.mxu0 0.0
    %230 = vmatprep.subr.mxu0 0.0
    %231 = vmatpush1.xpose.msra.mxu0 0.0
    %232 = vmatprep.mubr.f32.mxu0 0.0
    %v233 = vand.u32 %v82, 4294901760
    %234 = vmatmul.mubr.f32.gmra.mrb[0].mxu0 %v233
    %v235 = vpop.f32.mrb[0].mxu0
    %v236 = vadd.f32 %v160, %v235
    %v237 = vpop.f32.mrb[0].mxu0
    %238 = vdwg.mxu0
    %239 = vmatprep.subr.mxu0 0.0
    %v240 = vand.u32 %v85, 4294901760
    %v241 = vsub.f32 %v85, %v240
    %242 = vmatpush1.xpose.msra.mxu0 %v241
    %243 = vmatprep.subr.mxu0 0.0
    %244 = vmatpush1.xpose.msra.mxu0 0.0
    %245 = vmatprep.subr.mxu0 0.0
    %246 = vmatpush1.xpose.msra.mxu0 0.0
    %247 = vmatprep.subr.mxu0 0.0
    %248 = vmatpush1.xpose.msra.mxu0 0.0
    %249 = vmatprep.subr.mxu0 0.0
    %250 = vmatpush1.xpose.msra.mxu0 0.0
    %251 = vmatprep.subr.mxu0 0.0
    %252 = vmatpush1.xpose.msra.mxu0 0.0
    %253 = vmatprep.subr.mxu0 0.0
    %254 = vmatpush1.xpose.msra.mxu0 0.0
    %255 = vmatprep.subr.mxu0 0.0
    %256 = vmatpush1.xpose.msra.mxu0 0.0
    %257 = vmatprep.subr.mxu0 0.0
    %258 = vmatpush1.xpose.msra.mxu0 0.0
    %259 = vmatprep.subr.mxu0 0.0
    %260 = vmatpush1.xpose.msra.mxu0 0.0
    %261 = vmatprep.subr.mxu0 0.0
    %262 = vmatpush1.xpose.msra.mxu0 0.0
    %263 = vmatprep.subr.mxu0 0.0
    %264 = vmatpush1.xpose.msra.mxu0 0.0
    %265 = vmatprep.subr.mxu0 0.0
    %266 = vmatpush1.xpose.msra.mxu0 0.0
    %267 = vmatprep.subr.mxu0 0.0
    %268 = vmatpush1.xpose.msra.mxu0 0.0
    %269 = vmatprep.subr.mxu0 0.0
    %270 = vmatpush1.xpose.msra.mxu0 0.0
    %271 = vmatprep.subr.mxu0 0.0
    %272 = vmatpush1.xpose.msra.mxu0 0.0
    %273 = vmatprep.subr.mxu0 0.0
    %274 = vmatpush1.xpose.msra.mxu0 0.0
    %275 = vmatprep.subr.mxu0 0.0
    %276 = vmatpush1.xpose.msra.mxu0 0.0
    %277 = vmatprep.subr.mxu0 0.0
    %278 = vmatpush1.xpose.msra.mxu0 0.0
    %279 = vmatprep.subr.mxu0 0.0
    %280 = vmatpush1.xpose.msra.mxu0 0.0
    %281 = vmatprep.subr.mxu0 0.0
    %282 = vmatpush1.xpose.msra.mxu0 0.0
    %283 = vmatprep.subr.mxu0 0.0
    %284 = vmatpush1.xpose.msra.mxu0 0.0
    %285 = vmatprep.subr.mxu0 0.0
    %286 = vmatpush1.xpose.msra.mxu0 0.0
    %287 = vmatprep.subr.mxu0 0.0
    %288 = vmatpush1.xpose.msra.mxu0 0.0
    %289 = vmatprep.subr.mxu0 0.0
    %290 = vmatpush1.xpose.msra.mxu0 0.0
    %291 = vmatprep.subr.mxu0 0.0
    %292 = vmatpush1.xpose.msra.mxu0 0.0
    %293 = vmatprep.subr.mxu0 0.0
    %294 = vmatpush1.xpose.msra.mxu0 0.0
    %295 = vmatprep.subr.mxu0 0.0
    %296 = vmatpush1.xpose.msra.mxu0 0.0
    %297 = vmatprep.subr.mxu0 0.0
    %298 = vmatpush1.xpose.msra.mxu0 0.0
    %299 = vmatprep.subr.mxu0 0.0
    %300 = vmatpush1.xpose.msra.mxu0 0.0
    %301 = vmatprep.subr.mxu0 0.0
    %302 = vmatpush1.xpose.msra.mxu0 0.0
    %303 = vmatprep.subr.mxu0 0.0
    %304 = vmatpush1.xpose.msra.mxu0 0.0
    %305 = vmatprep.mubr.f32.mxu0 0.0
    %v306 = vand.u32 %v82, 4294901760
    %v307 = vsub.f32 %v82, %v306
    %308 = vmatmul.mubr.f32.gmra.mrb[0].mxu0 %v307
    %v309 = vpop.f32.mrb[0].mxu0
    %v310 = vadd.f32 %v236, %v309
    %v311 = vpop.f32.mrb[0].mxu0
    %312 = vdwg.mxu0
    %313 = vmatprep.subr.mxu0 0.0
    %v314 = vand.u32 %v85, 4294901760
    %315 = vmatpush1.xpose.msra.mxu0 %v314
    %316 = vmatprep.subr.mxu0 0.0
    %317 = vmatpush1.xpose.msra.mxu0 0.0
    %318 = vmatprep.subr.mxu0 0.0
    %319 = vmatpush1.xpose.msra.mxu0 0.0
    %320 = vmatprep.subr.mxu0 0.0
    %321 = vmatpush1.xpose.msra.mxu0 0.0
    %322 = vmatprep.subr.mxu0 0.0
    %323 = vmatpush1.xpose.msra.mxu0 0.0
    %324 = vmatprep.subr.mxu0 0.0
    %325 = vmatpush1.xpose.msra.mxu0 0.0
    %326 = vmatprep.subr.mxu0 0.0
    %327 = vmatpush1.xpose.msra.mxu0 0.0
    %328 = vmatprep.subr.mxu0 0.0
    %329 = vmatpush1.xpose.msra.mxu0 0.0
    %330 = vmatprep.subr.mxu0 0.0
    %331 = vmatpush1.xpose.msra.mxu0 0.0
    %332 = vmatprep.subr.mxu0 0.0
    %333 = vmatpush1.xpose.msra.mxu0 0.0
    %334 = vmatprep.subr.mxu0 0.0
    %335 = vmatpush1.xpose.msra.mxu0 0.0
    %336 = vmatprep.subr.mxu0 0.0
    %337 = vmatpush1.xpose.msra.mxu0 0.0
    %338 = vmatprep.subr.mxu0 0.0
    %339 = vmatpush1.xpose.msra.mxu0 0.0
    %340 = vmatprep.subr.mxu0 0.0
    %341 = vmatpush1.xpose.msra.mxu0 0.0
    %342 = vmatprep.subr.mxu0 0.0
    %343 = vmatpush1.xpose.msra.mxu0 0.0
    %344 = vmatprep.subr.mxu0 0.0
    %345 = vmatpush1.xpose.msra.mxu0 0.0
    %346 = vmatprep.subr.mxu0 0.0
    %347 = vmatpush1.xpose.msra.mxu0 0.0
    %348 = vmatprep.subr.mxu0 0.0
    %349 = vmatpush1.xpose.msra.mxu0 0.0
    %350 = vmatprep.subr.mxu0 0.0
    %351 = vmatpush1.xpose.msra.mxu0 0.0
    %352 = vmatprep.subr.mxu0 0.0
    %353 = vmatpush1.xpose.msra.mxu0 0.0
    %354 = vmatprep.subr.mxu0 0.0
    %355 = vmatpush1.xpose.msra.mxu0 0.0
    %356 = vmatprep.subr.mxu0 0.0
    %357 = vmatpush1.xpose.msra.mxu0 0.0
    %358 = vmatprep.subr.mxu0 0.0
    %359 = vmatpush1.xpose.msra.mxu0 0.0
    %360 = vmatprep.subr.mxu0 0.0
    %361 = vmatpush1.xpose.msra.mxu0 0.0
    %362 = vmatprep.subr.mxu0 0.0
    %363 = vmatpush1.xpose.msra.mxu0 0.0
    %364 = vmatprep.subr.mxu0 0.0
    %365 = vmatpush1.xpose.msra.mxu0 0.0
    %366 = vmatprep.subr.mxu0 0.0
    %367 = vmatpush1.xpose.msra.mxu0 0.0
    %368 = vmatprep.subr.mxu0 0.0
    %369 = vmatpush1.xpose.msra.mxu0 0.0
    %370 = vmatprep.subr.mxu0 0.0
    %371 = vmatpush1.xpose.msra.mxu0 0.0
    %372 = vmatprep.subr.mxu0 0.0
    %373 = vmatpush1.xpose.msra.mxu0 0.0
    %374 = vmatprep.subr.mxu0 0.0
    %375 = vmatpush1.xpose.msra.mxu0 0.0
    %376 = vmatprep.subr.mxu0 0.0
    %377 = vmatpush1.xpose.msra.mxu0 0.0
    %378 = vmatprep.mubr.f32.mxu0 0.0
    %v379 = vand.u32 %v82, 4294901760
    %v380 = vsub.f32 %v82, %v379
    %v381 = vand.u32 %v380, 4294901760
    %382 = vmatmul.mubr.f32.gmra.mrb[0].mxu0 %v381
    %v383 = vpop.f32.mrb[0].mxu0
    %v384 = vadd.f32 %v310, %v383
    %v385 = vpop.f32.mrb[0].mxu0
    %386 = vdwg.mxu0
    %387 = vmatprep.subr.mxu0 0.0
    %v388 = vand.u32 %v85, 4294901760
    %v389 = vsub.f32 %v85, %v388
    %v390 = vand.u32 %v389, 4294901760
    %391 = vmatpush1.xpose.msra.mxu0 %v390
    %392 = vmatprep.subr.mxu0 0.0
    %393 = vmatpush1.xpose.msra.mxu0 0.0
    %394 = vmatprep.subr.mxu0 0.0
    %395 = vmatpush1.xpose.msra.mxu0 0.0
    %396 = vmatprep.subr.mxu0 0.0
    %397 = vmatpush1.xpose.msra.mxu0 0.0
    %398 = vmatprep.subr.mxu0 0.0
    %399 = vmatpush1.xpose.msra.mxu0 0.0
    %400 = vmatprep.subr.mxu0 0.0
    %401 = vmatpush1.xpose.msra.mxu0 0.0
    %402 = vmatprep.subr.mxu0 0.0
    %403 = vmatpush1.xpose.msra.mxu0 0.0
    %404 = vmatprep.subr.mxu0 0.0
    %405 = vmatpush1.xpose.msra.mxu0 0.0
    %406 = vmatprep.subr.mxu0 0.0
    %407 = vmatpush1.xpose.msra.mxu0 0.0
    %408 = vmatprep.subr.mxu0 0.0
    %409 = vmatpush1.xpose.msra.mxu0 0.0
    %410 = vmatprep.subr.mxu0 0.0
    %411 = vmatpush1.xpose.msra.mxu0 0.0
    %412 = vmatprep.subr.mxu0 0.0
    %413 = vmatpush1.xpose.msra.mxu0 0.0
    %414 = vmatprep.subr.mxu0 0.0
    %415 = vmatpush1.xpose.msra.mxu0 0.0
    %416 = vmatprep.subr.mxu0 0.0
    %417 = vmatpush1.xpose.msra.mxu0 0.0
    %418 = vmatprep.subr.mxu0 0.0
    %419 = vmatpush1.xpose.msra.mxu0 0.0
    %420 = vmatprep.subr.mxu0 0.0
    %421 = vmatpush1.xpose.msra.mxu0 0.0
    %422 = vmatprep.subr.mxu0 0.0
    %423 = vmatpush1.xpose.msra.mxu0 0.0
    %424 = vmatprep.subr.mxu0 0.0
    %425 = vmatpush1.xpose.msra.mxu0 0.0
    %426 = vmatprep.subr.mxu0 0.0
    %427 = vmatpush1.xpose.msra.mxu0 0.0
    %428 = vmatprep.subr.mxu0 0.0
    %429 = vmatpush1.xpose.msra.mxu0 0.0
    %430 = vmatprep.subr.mxu0 0.0
    %431 = vmatpush1.xpose.msra.mxu0 0.0
    %432 = vmatprep.subr.mxu0 0.0
    %433 = vmatpush1.xpose.msra.mxu0 0.0
    %434 = vmatprep.subr.mxu0 0.0
    %435 = vmatpush1.xpose.msra.mxu0 0.0
    %436 = vmatprep.subr.mxu0 0.0
    %437 = vmatpush1.xpose.msra.mxu0 0.0
    %438 = vmatprep.subr.mxu0 0.0
    %439 = vmatpush1.xpose.msra.mxu0 0.0
    %440 = vmatprep.subr.mxu0 0.0
    %441 = vmatpush1.xpose.msra.mxu0 0.0
    %442 = vmatprep.subr.mxu0 0.0
    %443 = vmatpush1.xpose.msra.mxu0 0.0
    %444 = vmatprep.subr.mxu0 0.0
    %445 = vmatpush1.xpose.msra.mxu0 0.0
    %446 = vmatprep.subr.mxu0 0.0
    %447 = vmatpush1.xpose.msra.mxu0 0.0
    %448 = vmatprep.subr.mxu0 0.0
    %449 = vmatpush1.xpose.msra.mxu0 0.0
    %450 = vmatprep.subr.mxu0 0.0
    %451 = vmatpush1.xpose.msra.mxu0 0.0
    %452 = vmatprep.subr.mxu0 0.0
    %453 = vmatpush1.xpose.msra.mxu0 0.0
    %454 = vmatprep.mubr.f32.mxu0 0.0
    %v455 = vand.u32 %v82, 4294901760
    %456 = vmatmul.mubr.f32.gmra.mrb[0].mxu0 %v455
    %v457 = vpop.f32.mrb[0].mxu0
    %v458 = vadd.f32 %v384, %v457
    %v459 = vpop.f32.mrb[0].mxu0
    %460 = vdwg.mxu0
    %461 = vmatprep.subr.mxu0 0.0
    %v462 = vand.u32 %v85, 4294901760
    %463 = vmatpush1.xpose.msra.mxu0 %v462
    %464 = vmatprep.subr.mxu0 0.0
    %465 = vmatpush1.xpose.msra.mxu0 0.0
    %466 = vmatprep.subr.mxu0 0.0
    %467 = vmatpush1.xpose.msra.mxu0 0.0
    %468 = vmatprep.subr.mxu0 0.0
    %469 = vmatpush1.xpose.msra.mxu0 0.0
    %470 = vmatprep.subr.mxu0 0.0
    %471 = vmatpush1.xpose.msra.mxu0 0.0
    %472 = vmatprep.subr.mxu0 0.0
    %473 = vmatpush1.xpose.msra.mxu0 0.0
    %474 = vmatprep.subr.mxu0 0.0
    %475 = vmatpush1.xpose.msra.mxu0 0.0
    %476 = vmatprep.subr.mxu0 0.0
    %477 = vmatpush1.xpose.msra.mxu0 0.0
    %478 = vmatprep.subr.mxu0 0.0
    %479 = vmatpush1.xpose.msra.mxu0 0.0
    %480 = vmatprep.subr.mxu0 0.0
    %481 = vmatpush1.xpose.msra.mxu0 0.0
    %482 = vmatprep.subr.mxu0 0.0
    %483 = vmatpush1.xpose.msra.mxu0 0.0
    %484 = vmatprep.subr.mxu0 0.0
    %485 = vmatpush1.xpose.msra.mxu0 0.0
    %486 = vmatprep.subr.mxu0 0.0
    %487 = vmatpush1.xpose.msra.mxu0 0.0
    %488 = vmatprep.subr.mxu0 0.0
    %489 = vmatpush1.xpose.msra.mxu0 0.0
    %490 = vmatprep.subr.mxu0 0.0
    %491 = vmatpush1.xpose.msra.mxu0 0.0
    %492 = vmatprep.subr.mxu0 0.0
    %493 = vmatpush1.xpose.msra.mxu0 0.0
    %494 = vmatprep.subr.mxu0 0.0
    %495 = vmatpush1.xpose.msra.mxu0 0.0
    %496 = vmatprep.subr.mxu0 0.0
    %497 = vmatpush1.xpose.msra.mxu0 0.0
    %498 = vmatprep.subr.mxu0 0.0
    %499 = vmatpush1.xpose.msra.mxu0 0.0
    %500 = vmatprep.subr.mxu0 0.0
    %501 = vmatpush1.xpose.msra.mxu0 0.0
    %502 = vmatprep.subr.mxu0 0.0
    %503 = vmatpush1.xpose.msra.mxu0 0.0
    %504 = vmatprep.subr.mxu0 0.0
    %505 = vmatpush1.xpose.msra.mxu0 0.0
    %506 = vmatprep.subr.mxu0 0.0
    %507 = vmatpush1.xpose.msra.mxu0 0.0
    %508 = vmatprep.subr.mxu0 0.0
    %509 = vmatpush1.xpose.msra.mxu0 0.0
    %510 = vmatprep.subr.mxu0 0.0
    %511 = vmatpush1.xpose.msra.mxu0 0.0
    %512 = vmatprep.subr.mxu0 0.0
    %513 = vmatpush1.xpose.msra.mxu0 0.0
    %514 = vmatprep.subr.mxu0 0.0
    %515 = vmatpush1.xpose.msra.mxu0 0.0
    %516 = vmatprep.subr.mxu0 0.0
    %517 = vmatpush1.xpose.msra.mxu0 0.0
    %518 = vmatprep.subr.mxu0 0.0
    %519 = vmatpush1.xpose.msra.mxu0 0.0
    %520 = vmatprep.subr.mxu0 0.0
    %521 = vmatpush1.xpose.msra.mxu0 0.0
    %522 = vmatprep.subr.mxu0 0.0
    %523 = vmatpush1.xpose.msra.mxu0 0.0
    %524 = vmatprep.subr.mxu0 0.0
    %525 = vmatpush1.xpose.msra.mxu0 0.0
    %526 = vmatprep.mubr.f32.mxu0 0.0
    %v527 = vand.u32 %v82, 4294901760
    %528 = vmatmul.mubr.f32.gmra.mrb[0].mxu0 %v527
    %v529 = vpop.f32.mrb[0].mxu0
    %v530 = vadd.f32 %v458, %v529
    %v531 = vpop.f32.mrb[0].mxu0
    %532 = vdwg.mxu0
    %v534 = vsel %vm80, %v57, 0
    %v537 = vsel %vm80, %v65, 0
    %539 = vmatprep.subr.mxu0 0.0
    %v540 = vand.u32 %v537, 4294901760
    %541 = vmatpush1.xpose.msra.mxu0 %v540
    %542 = vmatprep.subr.mxu0 0.0
    %543 = vmatpush1.xpose.msra.mxu0 0.0
    %544 = vmatprep.subr.mxu0 0.0
    %545 = vmatpush1.xpose.msra.mxu0 0.0
    %546 = vmatprep.subr.mxu0 0.0
    %547 = vmatpush1.xpose.msra.mxu0 0.0
    %548 = vmatprep.subr.mxu0 0.0
    %549 = vmatpush1.xpose.msra.mxu0 0.0
    %550 = vmatprep.subr.mxu0 0.0
    %551 = vmatpush1.xpose.msra.mxu0 0.0
    %552 = vmatprep.subr.mxu0 0.0
    %553 = vmatpush1.xpose.msra.mxu0 0.0
    %554 = vmatprep.subr.mxu0 0.0
    %555 = vmatpush1.xpose.msra.mxu0 0.0
    %556 = vmatprep.subr.mxu0 0.0
    %557 = vmatpush1.xpose.msra.mxu0 0.0
    %558 = vmatprep.subr.mxu0 0.0
    %559 = vmatpush1.xpose.msra.mxu0 0.0
    %560 = vmatprep.subr.mxu0 0.0
    %561 = vmatpush1.xpose.msra.mxu0 0.0
    %562 = vmatprep.subr.mxu0 0.0
    %563 = vmatpush1.xpose.msra.mxu0 0.0
    %564 = vmatprep.subr.mxu0 0.0
    %565 = vmatpush1.xpose.msra.mxu0 0.0
    %566 = vmatprep.subr.mxu0 0.0
    %567 = vmatpush1.xpose.msra.mxu0 0.0
    %568 = vmatprep.subr.mxu0 0.0
    %569 = vmatpush1.xpose.msra.mxu0 0.0
    %570 = vmatprep.subr.mxu0 0.0
    %571 = vmatpush1.xpose.msra.mxu0 0.0
    %572 = vmatprep.subr.mxu0 0.0
    %573 = vmatpush1.xpose.msra.mxu0 0.0
    %574 = vmatprep.subr.mxu0 0.0
    %575 = vmatpush1.xpose.msra.mxu0 0.0
    %576 = vmatprep.subr.mxu0 0.0
    %577 = vmatpush1.xpose.msra.mxu0 0.0
    %578 = vmatprep.subr.mxu0 0.0
    %579 = vmatpush1.xpose.msra.mxu0 0.0
    %580 = vmatprep.subr.mxu0 0.0
    %581 = vmatpush1.xpose.msra.mxu0 0.0
    %582 = vmatprep.subr.mxu0 0.0
    %583 = vmatpush1.xpose.msra.mxu0 0.0
    %584 = vmatprep.subr.mxu0 0.0
    %585 = vmatpush1.xpose.msra.mxu0 0.0
    %586 = vmatprep.subr.mxu0 0.0
    %587 = vmatpush1.xpose.msra.mxu0 0.0
    %588 = vmatprep.subr.mxu0 0.0
    %589 = vmatpush1.xpose.msra.mxu0 0.0
    %590 = vmatprep.subr.mxu0 0.0
    %591 = vmatpush1.xpose.msra.mxu0 0.0
    %592 = vmatprep.subr.mxu0 0.0
    %593 = vmatpush1.xpose.msra.mxu0 0.0
    %594 = vmatprep.subr.mxu0 0.0
    %595 = vmatpush1.xpose.msra.mxu0 0.0
    %596 = vmatprep.subr.mxu0 0.0
    %597 = vmatpush1.xpose.msra.mxu0 0.0
    %598 = vmatprep.subr.mxu0 0.0
    %599 = vmatpush1.xpose.msra.mxu0 0.0
    %600 = vmatprep.subr.mxu0 0.0
    %601 = vmatpush1.xpose.msra.mxu0 0.0
    %602 = vmatprep.subr.mxu0 0.0
    %603 = vmatpush1.xpose.msra.mxu0 0.0
    %604 = vmatprep.mubr.f32.mxu0 0.0
    %v605 = vand.u32 %v534, 4294901760
    %v606 = vsub.f32 %v534, %v605
    %v607 = vand.u32 %v606, 4294901760
    %v608 = vsub.f32 %v606, %v607
    %v609 = vand.u32 %v608, 4294901760
    %610 = vmatmul.mubr.f32.gmra.mrb[0].mxu0 %v609
    %v611 = vpop.f32.mrb[0].mxu0
    %v612 = vadd.f32 0.0, %v611
    %v613 = vpop.f32.mrb[0].mxu0
    %614 = vdwg.mxu0
    %615 = vmatprep.subr.mxu0 0.0
    %v616 = vand.u32 %v537, 4294901760
    %v617 = vsub.f32 %v537, %v616
    %v618 = vand.u32 %v617, 4294901760
    %v619 = vsub.f32 %v617, %v618
    %v620 = vand.u32 %v619, 4294901760
    %621 = vmatpush1.xpose.msra.mxu0 %v620
    %622 = vmatprep.subr.mxu0 0.0
    %623 = vmatpush1.xpose.msra.mxu0 0.0
    %624 = vmatprep.subr.mxu0 0.0
    %625 = vmatpush1.xpose.msra.mxu0 0.0
    %626 = vmatprep.subr.mxu0 0.0
    %627 = vmatpush1.xpose.msra.mxu0 0.0
    %628 = vmatprep.subr.mxu0 0.0
    %629 = vmatpush1.xpose.msra.mxu0 0.0
    %630 = vmatprep.subr.mxu0 0.0
    %631 = vmatpush1.xpose.msra.mxu0 0.0
    %632 = vmatprep.subr.mxu0 0.0
    %633 = vmatpush1.xpose.msra.mxu0 0.0
    %634 = vmatprep.subr.mxu0 0.0
    %635 = vmatpush1.xpose.msra.mxu0 0.0
    %636 = vmatprep.subr.mxu0 0.0
    %637 = vmatpush1.xpose.msra.mxu0 0.0
    %638 = vmatprep.subr.mxu0 0.0
    %639 = vmatpush1.xpose.msra.mxu0 0.0
    %640 = vmatprep.subr.mxu0 0.0
    %641 = vmatpush1.xpose.msra.mxu0 0.0
    %642 = vmatprep.subr.mxu0 0.0
    %643 = vmatpush1.xpose.msra.mxu0 0.0
    %644 = vmatprep.subr.mxu0 0.0
    %645 = vmatpush1.xpose.msra.mxu0 0.0
    %646 = vmatprep.subr.mxu0 0.0
    %647 = vmatpush1.xpose.msra.mxu0 0.0
    %648 = vmatprep.subr.mxu0 0.0
    %649 = vmatpush1.xpose.msra.mxu0 0.0
    %650 = vmatprep.subr.mxu0 0.0
    %651 = vmatpush1.xpose.msra.mxu0 0.0
    %652 = vmatprep.subr.mxu0 0.0
    %653 = vmatpush1.xpose.msra.mxu0 0.0
    %654 = vmatprep.subr.mxu0 0.0
    %655 = vmatpush1.xpose.msra.mxu0 0.0
    %656 = vmatprep.subr.mxu0 0.0
    %657 = vmatpush1.xpose.msra.mxu0 0.0
    %658 = vmatprep.subr.mxu0 0.0
    %659 = vmatpush1.xpose.msra.mxu0 0.0
    %660 = vmatprep.subr.mxu0 0.0
    %661 = vmatpush1.xpose.msra.mxu0 0.0
    %662 = vmatprep.subr.mxu0 0.0
    %663 = vmatpush1.xpose.msra.mxu0 0.0
    %664 = vmatprep.subr.mxu0 0.0
    %665 = vmatpush1.xpose.msra.mxu0 0.0
    %666 = vmatprep.subr.mxu0 0.0
    %667 = vmatpush1.xpose.msra.mxu0 0.0
    %668 = vmatprep.subr.mxu0 0.0
    %669 = vmatpush1.xpose.msra.mxu0 0.0
    %670 = vmatprep.subr.mxu0 0.0
    %671 = vmatpush1.xpose.msra.mxu0 0.0
    %672 = vmatprep.subr.mxu0 0.0
    %673 = vmatpush1.xpose.msra.mxu0 0.0
    %674 = vmatprep.subr.mxu0 0.0
    %675 = vmatpush1.xpose.msra.mxu0 0.0
    %676 = vmatprep.subr.mxu0 0.0
    %677 = vmatpush1.xpose.msra.mxu0 0.0
    %678 = vmatprep.subr.mxu0 0.0
    %679 = vmatpush1.xpose.msra.mxu0 0.0
    %680 = vmatprep.subr.mxu0 0.0
    %681 = vmatpush1.xpose.msra.mxu0 0.0
    %682 = vmatprep.subr.mxu0 0.0
    %683 = vmatpush1.xpose.msra.mxu0 0.0
    %684 = vmatprep.mubr.f32.mxu0 0.0
    %v685 = vand.u32 %v534, 4294901760
    %686 = vmatmul.mubr.f32.gmra.mrb[0].mxu0 %v685
    %v687 = vpop.f32.mrb[0].mxu0
    %v688 = vadd.f32 %v612, %v687
    %v689 = vpop.f32.mrb[0].mxu0
    %690 = vdwg.mxu0
    %691 = vmatprep.subr.mxu0 0.0
    %v692 = vand.u32 %v537, 4294901760
    %v693 = vsub.f32 %v537, %v692
    %694 = vmatpush1.xpose.msra.mxu0 %v693
    %695 = vmatprep.subr.mxu0 0.0
    %696 = vmatpush1.xpose.msra.mxu0 0.0
    %697 = vmatprep.subr.mxu0 0.0
    %698 = vmatpush1.xpose.msra.mxu0 0.0
    %699 = vmatprep.subr.mxu0 0.0
    %700 = vmatpush1.xpose.msra.mxu0 0.0
    %701 = vmatprep.subr.mxu0 0.0
    %702 = vmatpush1.xpose.msra.mxu0 0.0
    %703 = vmatprep.subr.mxu0 0.0
    %704 = vmatpush1.xpose.msra.mxu0 0.0
    %705 = vmatprep.subr.mxu0 0.0
    %706 = vmatpush1.xpose.msra.mxu0 0.0
    %707 = vmatprep.subr.mxu0 0.0
    %708 = vmatpush1.xpose.msra.mxu0 0.0
    %709 = vmatprep.subr.mxu0 0.0
    %710 = vmatpush1.xpose.msra.mxu0 0.0
    %711 = vmatprep.subr.mxu0 0.0
    %712 = vmatpush1.xpose.msra.mxu0 0.0
    %713 = vmatprep.subr.mxu0 0.0
    %714 = vmatpush1.xpose.msra.mxu0 0.0
    %715 = vmatprep.subr.mxu0 0.0
    %716 = vmatpush1.xpose.msra.mxu0 0.0
    %717 = vmatprep.subr.mxu0 0.0
    %718 = vmatpush1.xpose.msra.mxu0 0.0
    %719 = vmatprep.subr.mxu0 0.0
    %720 = vmatpush1.xpose.msra.mxu0 0.0
    %721 = vmatprep.subr.mxu0 0.0
    %722 = vmatpush1.xpose.msra.mxu0 0.0
    %723 = vmatprep.subr.mxu0 0.0
    %724 = vmatpush1.xpose.msra.mxu0 0.0
    %725 = vmatprep.subr.mxu0 0.0
    %726 = vmatpush1.xpose.msra.mxu0 0.0
    %727 = vmatprep.subr.mxu0 0.0
    %728 = vmatpush1.xpose.msra.mxu0 0.0
    %729 = vmatprep.subr.mxu0 0.0
    %730 = vmatpush1.xpose.msra.mxu0 0.0
    %731 = vmatprep.subr.mxu0 0.0
    %732 = vmatpush1.xpose.msra.mxu0 0.0
    %733 = vmatprep.subr.mxu0 0.0
    %734 = vmatpush1.xpose.msra.mxu0 0.0
    %735 = vmatprep.subr.mxu0 0.0
    %736 = vmatpush1.xpose.msra.mxu0 0.0
    %737 = vmatprep.subr.mxu0 0.0
    %738 = vmatpush1.xpose.msra.mxu0 0.0
    %739 = vmatprep.subr.mxu0 0.0
    %740 = vmatpush1.xpose.msra.mxu0 0.0
    %741 = vmatprep.subr.mxu0 0.0
    %742 = vmatpush1.xpose.msra.mxu0 0.0
    %743 = vmatprep.subr.mxu0 0.0
    %744 = vmatpush1.xpose.msra.mxu0 0.0
    %745 = vmatprep.subr.mxu0 0.0
    %746 = vmatpush1.xpose.msra.mxu0 0.0
    %747 = vmatprep.subr.mxu0 0.0
    %748 = vmatpush1.xpose.msra.mxu0 0.0
    %749 = vmatprep.subr.mxu0 0.0
    %750 = vmatpush1.xpose.msra.mxu0 0.0
    %751 = vmatprep.subr.mxu0 0.0
    %752 = vmatpush1.xpose.msra.mxu0 0.0
    %753 = vmatprep.subr.mxu0 0.0
    %754 = vmatpush1.xpose.msra.mxu0 0.0
    %755 = vmatprep.subr.mxu0 0.0
    %756 = vmatpush1.xpose.msra.mxu0 0.0
    %757 = vmatprep.mubr.f32.mxu0 0.0
    %v758 = vand.u32 %v534, 4294901760
    %v759 = vsub.f32 %v534, %v758
    %760 = vmatmul.mubr.f32.gmra.mrb[0].mxu0 %v759
    %v761 = vpop.f32.mrb[0].mxu0
    %v762 = vadd.f32 %v688, %v761
    %v763 = vpop.f32.mrb[0].mxu0
    %764 = vdwg.mxu0
    %765 = vmatprep.subr.mxu0 0.0
    %v766 = vand.u32 %v537, 4294901760
    %767 = vmatpush1.xpose.msra.mxu0 %v766
    %768 = vmatprep.subr.mxu0 0.0
    %769 = vmatpush1.xpose.msra.mxu0 0.0
    %770 = vmatprep.subr.mxu0 0.0
    %771 = vmatpush1.xpose.msra.mxu0 0.0
    %772 = vmatprep.subr.mxu0 0.0
    %773 = vmatpush1.xpose.msra.mxu0 0.0
    %774 = vmatprep.subr.mxu0 0.0
    %775 = vmatpush1.xpose.msra.mxu0 0.0
    %776 = vmatprep.subr.mxu0 0.0
    %777 = vmatpush1.xpose.msra.mxu0 0.0
    %778 = vmatprep.subr.mxu0 0.0
    %779 = vmatpush1.xpose.msra.mxu0 0.0
    %780 = vmatprep.subr.mxu0 0.0
    %781 = vmatpush1.xpose.msra.mxu0 0.0
    %782 = vmatprep.subr.mxu0 0.0
    %783 = vmatpush1.xpose.msra.mxu0 0.0
    %784 = vmatprep.subr.mxu0 0.0
    %785 = vmatpush1.xpose.msra.mxu0 0.0
    %786 = vmatprep.subr.mxu0 0.0
    %787 = vmatpush1.xpose.msra.mxu0 0.0
    %788 = vmatprep.subr.mxu0 0.0
    %789 = vmatpush1.xpose.msra.mxu0 0.0
    %790 = vmatprep.subr.mxu0 0.0
    %791 = vmatpush1.xpose.msra.mxu0 0.0
    %792 = vmatprep.subr.mxu0 0.0
    %793 = vmatpush1.xpose.msra.mxu0 0.0
    %794 = vmatprep.subr.mxu0 0.0
    %795 = vmatpush1.xpose.msra.mxu0 0.0
    %796 = vmatprep.subr.mxu0 0.0
    %797 = vmatpush1.xpose.msra.mxu0 0.0
    %798 = vmatprep.subr.mxu0 0.0
    %799 = vmatpush1.xpose.msra.mxu0 0.0
    %800 = vmatprep.subr.mxu0 0.0
    %801 = vmatpush1.xpose.msra.mxu0 0.0
    %802 = vmatprep.subr.mxu0 0.0
    %803 = vmatpush1.xpose.msra.mxu0 0.0
    %804 = vmatprep.subr.mxu0 0.0
    %805 = vmatpush1.xpose.msra.mxu0 0.0
    %806 = vmatprep.subr.mxu0 0.0
    %807 = vmatpush1.xpose.msra.mxu0 0.0
    %808 = vmatprep.subr.mxu0 0.0
    %809 = vmatpush1.xpose.msra.mxu0 0.0
    %810 = vmatprep.subr.mxu0 0.0
    %811 = vmatpush1.xpose.msra.mxu0 0.0
    %812 = vmatprep.subr.mxu0 0.0
    %813 = vmatpush1.xpose.msra.mxu0 0.0
    %814 = vmatprep.subr.mxu0 0.0
    %815 = vmatpush1.xpose.msra.mxu0 0.0
    %816 = vmatprep.subr.mxu0 0.0
    %817 = vmatpush1.xpose.msra.mxu0 0.0
    %818 = vmatprep.subr.mxu0 0.0
    %819 = vmatpush1.xpose.msra.mxu0 0.0
    %820 = vmatprep.subr.mxu0 0.0
    %821 = vmatpush1.xpose.msra.mxu0 0.0
    %822 = vmatprep.subr.mxu0 0.0
    %823 = vmatpush1.xpose.msra.mxu0 0.0
    %824 = vmatprep.subr.mxu0 0.0
    %825 = vmatpush1.xpose.msra.mxu0 0.0
    %826 = vmatprep.subr.mxu0 0.0
    %827 = vmatpush1.xpose.msra.mxu0 0.0
    %828 = vmatprep.subr.mxu0 0.0
    %829 = vmatpush1.xpose.msra.mxu0 0.0
    %830 = vmatprep.mubr.f32.mxu0 0.0
    %v831 = vand.u32 %v534, 4294901760
    %v832 = vsub.f32 %v534, %v831
    %v833 = vand.u32 %v832, 4294901760
    %834 = vmatmul.mubr.f32.gmra.mrb[0].mxu0 %v833
    %v835 = vpop.f32.mrb[0].mxu0
    %v836 = vadd.f32 %v762, %v835
    %v837 = vpop.f32.mrb[0].mxu0
    %838 = vdwg.mxu0
    %839 = vmatprep.subr.mxu0 0.0
    %v840 = vand.u32 %v537, 4294901760
    %v841 = vsub.f32 %v537, %v840
    %v842 = vand.u32 %v841, 4294901760
    %843 = vmatpush1.xpose.msra.mxu0 %v842
    %844 = vmatprep.subr.mxu0 0.0
    %845 = vmatpush1.xpose.msra.mxu0 0.0
    %846 = vmatprep.subr.mxu0 0.0
    %847 = vmatpush1.xpose.msra.mxu0 0.0
    %848 = vmatprep.subr.mxu0 0.0
    %849 = vmatpush1.xpose.msra.mxu0 0.0
    %850 = vmatprep.subr.mxu0 0.0
    %851 = vmatpush1.xpose.msra.mxu0 0.0
    %852 = vmatprep.subr.mxu0 0.0
    %853 = vmatpush1.xpose.msra.mxu0 0.0
    %854 = vmatprep.subr.mxu0 0.0
    %855 = vmatpush1.xpose.msra.mxu0 0.0
    %856 = vmatprep.subr.mxu0 0.0
    %857 = vmatpush1.xpose.msra.mxu0 0.0
    %858 = vmatprep.subr.mxu0 0.0
    %859 = vmatpush1.xpose.msra.mxu0 0.0
    %860 = vmatprep.subr.mxu0 0.0
    %861 = vmatpush1.xpose.msra.mxu0 0.0
    %862 = vmatprep.subr.mxu0 0.0
    %863 = vmatpush1.xpose.msra.mxu0 0.0
    %864 = vmatprep.subr.mxu0 0.0
    %865 = vmatpush1.xpose.msra.mxu0 0.0
    %866 = vmatprep.subr.mxu0 0.0
    %867 = vmatpush1.xpose.msra.mxu0 0.0
    %868 = vmatprep.subr.mxu0 0.0
    %869 = vmatpush1.xpose.msra.mxu0 0.0
    %870 = vmatprep.subr.mxu0 0.0
    %871 = vmatpush1.xpose.msra.mxu0 0.0
    %872 = vmatprep.subr.mxu0 0.0
    %873 = vmatpush1.xpose.msra.mxu0 0.0
    %874 = vmatprep.subr.mxu0 0.0
    %875 = vmatpush1.xpose.msra.mxu0 0.0
    %876 = vmatprep.subr.mxu0 0.0
    %877 = vmatpush1.xpose.msra.mxu0 0.0
    %878 = vmatprep.subr.mxu0 0.0
    %879 = vmatpush1.xpose.msra.mxu0 0.0
    %880 = vmatprep.subr.mxu0 0.0
    %881 = vmatpush1.xpose.msra.mxu0 0.0
    %882 = vmatprep.subr.mxu0 0.0
    %883 = vmatpush1.xpose.msra.mxu0 0.0
    %884 = vmatprep.subr.mxu0 0.0
    %885 = vmatpush1.xpose.msra.mxu0 0.0
    %886 = vmatprep.subr.mxu0 0.0
    %887 = vmatpush1.xpose.msra.mxu0 0.0
    %888 = vmatprep.subr.mxu0 0.0
    %889 = vmatpush1.xpose.msra.mxu0 0.0
    %890 = vmatprep.subr.mxu0 0.0
    %891 = vmatpush1.xpose.msra.mxu0 0.0
    %892 = vmatprep.subr.mxu0 0.0
    %893 = vmatpush1.xpose.msra.mxu0 0.0
    %894 = vmatprep.subr.mxu0 0.0
    %895 = vmatpush1.xpose.msra.mxu0 0.0
    %896 = vmatprep.subr.mxu0 0.0
    %897 = vmatpush1.xpose.msra.mxu0 0.0
    %898 = vmatprep.subr.mxu0 0.0
    %899 = vmatpush1.xpose.msra.mxu0 0.0
    %900 = vmatprep.subr.mxu0 0.0
    %901 = vmatpush1.xpose.msra.mxu0 0.0
    %902 = vmatprep.subr.mxu0 0.0
    %903 = vmatpush1.xpose.msra.mxu0 0.0
    %904 = vmatprep.subr.mxu0 0.0
    %905 = vmatpush1.xpose.msra.mxu0 0.0
    %906 = vmatprep.mubr.f32.mxu0 0.0
    %v907 = vand.u32 %v534, 4294901760
    %908 = vmatmul.mubr.f32.gmra.mrb[0].mxu0 %v907
    %v909 = vpop.f32.mrb[0].mxu0
    %v910 = vadd.f32 %v836, %v909
    %v911 = vpop.f32.mrb[0].mxu0
    %912 = vdwg.mxu0
    %913 = vmatprep.subr.mxu0 0.0
    %v914 = vand.u32 %v537, 4294901760
    %915 = vmatpush1.xpose.msra.mxu0 %v914
    %916 = vmatprep.subr.mxu0 0.0
    %917 = vmatpush1.xpose.msra.mxu0 0.0
    %918 = vmatprep.subr.mxu0 0.0
    %919 = vmatpush1.xpose.msra.mxu0 0.0
    %920 = vmatprep.subr.mxu0 0.0
    %921 = vmatpush1.xpose.msra.mxu0 0.0
    %922 = vmatprep.subr.mxu0 0.0
    %923 = vmatpush1.xpose.msra.mxu0 0.0
    %924 = vmatprep.subr.mxu0 0.0
    %925 = vmatpush1.xpose.msra.mxu0 0.0
    %926 = vmatprep.subr.mxu0 0.0
    %927 = vmatpush1.xpose.msra.mxu0 0.0
    %928 = vmatprep.subr.mxu0 0.0
    %929 = vmatpush1.xpose.msra.mxu0 0.0
    %930 = vmatprep.subr.mxu0 0.0
    %931 = vmatpush1.xpose.msra.mxu0 0.0
    %932 = vmatprep.subr.mxu0 0.0
    %933 = vmatpush1.xpose.msra.mxu0 0.0
    %934 = vmatprep.subr.mxu0 0.0
    %935 = vmatpush1.xpose.msra.mxu0 0.0
    %936 = vmatprep.subr.mxu0 0.0
    %937 = vmatpush1.xpose.msra.mxu0 0.0
    %938 = vmatprep.subr.mxu0 0.0
    %939 = vmatpush1.xpose.msra.mxu0 0.0
    %940 = vmatprep.subr.mxu0 0.0
    %941 = vmatpush1.xpose.msra.mxu0 0.0
    %942 = vmatprep.subr.mxu0 0.0
    %943 = vmatpush1.xpose.msra.mxu0 0.0
    %944 = vmatprep.subr.mxu0 0.0
    %945 = vmatpush1.xpose.msra.mxu0 0.0
    %946 = vmatprep.subr.mxu0 0.0
    %947 = vmatpush1.xpose.msra.mxu0 0.0
    %948 = vmatprep.subr.mxu0 0.0
    %949 = vmatpush1.xpose.msra.mxu0 0.0
    %950 = vmatprep.subr.mxu0 0.0
    %951 = vmatpush1.xpose.msra.mxu0 0.0
    %952 = vmatprep.subr.mxu0 0.0
    %953 = vmatpush1.xpose.msra.mxu0 0.0
    %954 = vmatprep.subr.mxu0 0.0
    %955 = vmatpush1.xpose.msra.mxu0 0.0
    %956 = vmatprep.subr.mxu0 0.0
    %957 = vmatpush1.xpose.msra.mxu0 0.0
    %958 = vmatprep.subr.mxu0 0.0
    %959 = vmatpush1.xpose.msra.mxu0 0.0
    %960 = vmatprep.subr.mxu0 0.0
    %961 = vmatpush1.xpose.msra.mxu0 0.0
    %962 = vmatprep.subr.mxu0 0.0
    %963 = vmatpush1.xpose.msra.mxu0 0.0
    %964 = vmatprep.subr.mxu0 0.0
    %965 = vmatpush1.xpose.msra.mxu0 0.0
    %966 = vmatprep.subr.mxu0 0.0
    %967 = vmatpush1.xpose.msra.mxu0 0.0
    %968 = vmatprep.subr.mxu0 0.0
    %969 = vmatpush1.xpose.msra.mxu0 0.0
    %970 = vmatprep.subr.mxu0 0.0
    %971 = vmatpush1.xpose.msra.mxu0 0.0
    %972 = vmatprep.subr.mxu0 0.0
    %973 = vmatpush1.xpose.msra.mxu0 0.0
    %974 = vmatprep.subr.mxu0 0.0
    %975 = vmatpush1.xpose.msra.mxu0 0.0
    %976 = vmatprep.subr.mxu0 0.0
    %977 = vmatpush1.xpose.msra.mxu0 0.0
    %978 = vmatprep.mubr.f32.mxu0 0.0
    %v979 = vand.u32 %v534, 4294901760
    %980 = vmatmul.mubr.f32.gmra.mrb[0].mxu0 %v979
    %v981 = vpop.f32.mrb[0].mxu0
    %v982 = vadd.f32 %v910, %v981
    %v983 = vpop.f32.mrb[0].mxu0
    %984 = vdwg.mxu0
    %v986 = vsel %vm80, %v58, 0
    %v989 = vsel %vm80, %v66, 0
    %991 = vmatprep.subr.mxu0 0.0
    %v992 = vand.u32 %v989, 4294901760
    %993 = vmatpush1.xpose.msra.mxu0 %v992
    %994 = vmatprep.subr.mxu0 0.0
    %995 = vmatpush1.xpose.msra.mxu0 0.0
    %996 = vmatprep.subr.mxu0 0.0
    %997 = vmatpush1.xpose.msra.mxu0 0.0
    %998 = vmatprep.subr.mxu0 0.0
    %999 = vmatpush1.xpose.msra.mxu0 0.0
    %1000 = vmatprep.subr.mxu0 0.0
    %1001 = vmatpush1.xpose.msra.mxu0 0.0
    %1002 = vmatprep.subr.mxu0 0.0
    %1003 = vmatpush1.xpose.msra.mxu0 0.0
    %1004 = vmatprep.subr.mxu0 0.0
    %1005 = vmatpush1.xpose.msra.mxu0 0.0
    %1006 = vmatprep.subr.mxu0 0.0
    %1007 = vmatpush1.xpose.msra.mxu0 0.0
    %1008 = vmatprep.subr.mxu0 0.0
    %1009 = vmatpush1.xpose.msra.mxu0 0.0
    %1010 = vmatprep.subr.mxu0 0.0
    %1011 = vmatpush1.xpose.msra.mxu0 0.0
    %1012 = vmatprep.subr.mxu0 0.0
    %1013 = vmatpush1.xpose.msra.mxu0 0.0
    %1014 = vmatprep.subr.mxu0 0.0
    %1015 = vmatpush1.xpose.msra.mxu0 0.0
    %1016 = vmatprep.subr.mxu0 0.0
    %1017 = vmatpush1.xpose.msra.mxu0 0.0
    %1018 = vmatprep.subr.mxu0 0.0
    %1019 = vmatpush1.xpose.msra.mxu0 0.0
    %1020 = vmatprep.subr.mxu0 0.0
    %1021 = vmatpush1.xpose.msra.mxu0 0.0
    %1022 = vmatprep.subr.mxu0 0.0
    %1023 = vmatpush1.xpose.msra.mxu0 0.0
    %1024 = vmatprep.subr.mxu0 0.0
    %1025 = vmatpush1.xpose.msra.mxu0 0.0
    %1026 = vmatprep.subr.mxu0 0.0
    %1027 = vmatpush1.xpose.msra.mxu0 0.0
    %1028 = vmatprep.subr.mxu0 0.0
    %1029 = vmatpush1.xpose.msra.mxu0 0.0
    %1030 = vmatprep.subr.mxu0 0.0
    %1031 = vmatpush1.xpose.msra.mxu0 0.0
    %1032 = vmatprep.subr.mxu0 0.0
    %1033 = vmatpush1.xpose.msra.mxu0 0.0
    %1034 = vmatprep.subr.mxu0 0.0
    %1035 = vmatpush1.xpose.msra.mxu0 0.0
    %1036 = vmatprep.subr.mxu0 0.0
    %1037 = vmatpush1.xpose.msra.mxu0 0.0
    %1038 = vmatprep.subr.mxu0 0.0
    %1039 = vmatpush1.xpose.msra.mxu0 0.0
    %1040 = vmatprep.subr.mxu0 0.0
    %1041 = vmatpush1.xpose.msra.mxu0 0.0
    %1042 = vmatprep.subr.mxu0 0.0
    %1043 = vmatpush1.xpose.msra.mxu0 0.0
    %1044 = vmatprep.subr.mxu0 0.0
    %1045 = vmatpush1.xpose.msra.mxu0 0.0
    %1046 = vmatprep.subr.mxu0 0.0
    %1047 = vmatpush1.xpose.msra.mxu0 0.0
    %1048 = vmatprep.subr.mxu0 0.0
    %1049 = vmatpush1.xpose.msra.mxu0 0.0
    %1050 = vmatprep.subr.mxu0 0.0
    %1051 = vmatpush1.xpose.msra.mxu0 0.0
    %1052 = vmatprep.subr.mxu0 0.0
    %1053 = vmatpush1.xpose.msra.mxu0 0.0
    %1054 = vmatprep.subr.mxu0 0.0
    %1055 = vmatpush1.xpose.msra.mxu0 0.0
    %1056 = vmatprep.mubr.f32.mxu0 0.0
    %v1057 = vand.u32 %v986, 4294901760
    %v1058 = vsub.f32 %v986, %v1057
    %v1059 = vand.u32 %v1058, 4294901760
    %v1060 = vsub.f32 %v1058, %v1059
    %v1061 = vand.u32 %v1060, 4294901760
    %1062 = vmatmul.mubr.f32.gmra.mrb[0].mxu0 %v1061
    %v1063 = vpop.f32.mrb[0].mxu0
    %v1064 = vadd.f32 0.0, %v1063
    %v1065 = vpop.f32.mrb[0].mxu0
    %1066 = vdwg.mxu0
    %1067 = vmatprep.subr.mxu0 0.0
    %v1068 = vand.u32 %v989, 4294901760
    %v1069 = vsub.f32 %v989, %v1068
    %v1070 = vand.u32 %v1069, 4294901760
    %v1071 = vsub.f32 %v1069, %v1070
    %v1072 = vand.u32 %v1071, 4294901760
    %1073 = vmatpush1.xpose.msra.mxu0 %v1072
    %1074 = vmatprep.subr.mxu0 0.0
    %1075 = vmatpush1.xpose.msra.mxu0 0.0
    %1076 = vmatprep.subr.mxu0 0.0
    %1077 = vmatpush1.xpose.msra.mxu0 0.0
    %1078 = vmatprep.subr.mxu0 0.0
    %1079 = vmatpush1.xpose.msra.mxu0 0.0
    %1080 = vmatprep.subr.mxu0 0.0
    %1081 = vmatpush1.xpose.msra.mxu0 0.0
    %1082 = vmatprep.subr.mxu0 0.0
    %1083 = vmatpush1.xpose.msra.mxu0 0.0
    %1084 = vmatprep.subr.mxu0 0.0
    %1085 = vmatpush1.xpose.msra.mxu0 0.0
    %1086 = vmatprep.subr.mxu0 0.0
    %1087 = vmatpush1.xpose.msra.mxu0 0.0
    %1088 = vmatprep.subr.mxu0 0.0
    %1089 = vmatpush1.xpose.msra.mxu0 0.0
    %1090 = vmatprep.subr.mxu0 0.0
    %1091 = vmatpush1.xpose.msra.mxu0 0.0
    %1092 = vmatprep.subr.mxu0 0.0
    %1093 = vmatpush1.xpose.msra.mxu0 0.0
    %1094 = vmatprep.subr.mxu0 0.0
    %1095 = vmatpush1.xpose.msra.mxu0 0.0
    %1096 = vmatprep.subr.mxu0 0.0
    %1097 = vmatpush1.xpose.msra.mxu0 0.0
    %1098 = vmatprep.subr.mxu0 0.0
    %1099 = vmatpush1.xpose.msra.mxu0 0.0
    %1100 = vmatprep.subr.mxu0 0.0
    %1101 = vmatpush1.xpose.msra.mxu0 0.0
    %1102 = vmatprep.subr.mxu0 0.0
    %1103 = vmatpush1.xpose.msra.mxu0 0.0
    %1104 = vmatprep.subr.mxu0 0.0
    %1105 = vmatpush1.xpose.msra.mxu0 0.0
    %1106 = vmatprep.subr.mxu0 0.0
    %1107 = vmatpush1.xpose.msra.mxu0 0.0
    %1108 = vmatprep.subr.mxu0 0.0
    %1109 = vmatpush1.xpose.msra.mxu0 0.0
    %1110 = vmatprep.subr.mxu0 0.0
    %1111 = vmatpush1.xpose.msra.mxu0 0.0
    %1112 = vmatprep.subr.mxu0 0.0
    %1113 = vmatpush1.xpose.msra.mxu0 0.0
    %1114 = vmatprep.subr.mxu0 0.0
    %1115 = vmatpush1.xpose.msra.mxu0 0.0
    %1116 = vmatprep.subr.mxu0 0.0
    %1117 = vmatpush1.xpose.msra.mxu0 0.0
    %1118 = vmatprep.subr.mxu0 0.0
    %1119 = vmatpush1.xpose.msra.mxu0 0.0
    %1120 = vmatprep.subr.mxu0 0.0
    %1121 = vmatpush1.xpose.msra.mxu0 0.0
    %1122 = vmatprep.subr.mxu0 0.0
    %1123 = vmatpush1.xpose.msra.mxu0 0.0
    %1124 = vmatprep.subr.mxu0 0.0
    %1125 = vmatpush1.xpose.msra.mxu0 0.0
    %1126 = vmatprep.subr.mxu0 0.0
    %1127 = vmatpush1.xpose.msra.mxu0 0.0
    %1128 = vmatprep.subr.mxu0 0.0
    %1129 = vmatpush1.xpose.msra.mxu0 0.0
    %1130 = vmatprep.subr.mxu0 0.0
    %1131 = vmatpush1.xpose.msra.mxu0 0.0
    %1132 = vmatprep.subr.mxu0 0.0
    %1133 = vmatpush1.xpose.msra.mxu0 0.0
    %1134 = vmatprep.subr.mxu0 0.0
    %1135 = vmatpush1.xpose.msra.mxu0 0.0
    %1136 = vmatprep.mubr.f32.mxu0 0.0
    %v1137 = vand.u32 %v986, 4294901760
    %1138 = vmatmul.mubr.f32.gmra.mrb[0].mxu0 %v1137
    %v1139 = vpop.f32.mrb[0].mxu0
    %v1140 = vadd.f32 %v1064, %v1139
    %v1141 = vpop.f32.mrb[0].mxu0
    %1142 = vdwg.mxu0
    %1143 = vmatprep.subr.mxu0 0.0
    %v1144 = vand.u32 %v989, 4294901760
    %v1145 = vsub.f32 %v989, %v1144
    %1146 = vmatpush1.xpose.msra.mxu0 %v1145
    %1147 = vmatprep.subr.mxu0 0.0
    %1148 = vmatpush1.xpose.msra.mxu0 0.0
    %1149 = vmatprep.subr.mxu0 0.0
    %1150 = vmatpush1.xpose.msra.mxu0 0.0
    %1151 = vmatprep.subr.mxu0 0.0
    %1152 = vmatpush1.xpose.msra.mxu0 0.0
    %1153 = vmatprep.subr.mxu0 0.0
    %1154 = vmatpush1.xpose.msra.mxu0 0.0
    %1155 = vmatprep.subr.mxu0 0.0
    %1156 = vmatpush1.xpose.msra.mxu0 0.0
    %1157 = vmatprep.subr.mxu0 0.0
    %1158 = vmatpush1.xpose.msra.mxu0 0.0
    %1159 = vmatprep.subr.mxu0 0.0
    %1160 = vmatpush1.xpose.msra.mxu0 0.0
    %1161 = vmatprep.subr.mxu0 0.0
    %1162 = vmatpush1.xpose.msra.mxu0 0.0
    %1163 = vmatprep.subr.mxu0 0.0
    %1164 = vmatpush1.xpose.msra.mxu0 0.0
    %1165 = vmatprep.subr.mxu0 0.0
    %1166 = vmatpush1.xpose.msra.mxu0 0.0
    %1167 = vmatprep.subr.mxu0 0.0
    %1168 = vmatpush1.xpose.msra.mxu0 0.0
    %1169 = vmatprep.subr.mxu0 0.0
    %1170 = vmatpush1.xpose.msra.mxu0 0.0
    %1171 = vmatprep.subr.mxu0 0.0
    %1172 = vmatpush1.xpose.msra.mxu0 0.0
    %1173 = vmatprep.subr.mxu0 0.0
    %1174 = vmatpush1.xpose.msra.mxu0 0.0
    %1175 = vmatprep.subr.mxu0 0.0
    %1176 = vmatpush1.xpose.msra.mxu0 0.0
    %1177 = vmatprep.subr.mxu0 0.0
    %1178 = vmatpush1.xpose.msra.mxu0 0.0
    %1179 = vmatprep.subr.mxu0 0.0
    %1180 = vmatpush1.xpose.msra.mxu0 0.0
    %1181 = vmatprep.subr.mxu0 0.0
    %1182 = vmatpush1.xpose.msra.mxu0 0.0
    %1183 = vmatprep.subr.mxu0 0.0
    %1184 = vmatpush1.xpose.msra.mxu0 0.0
    %1185 = vmatprep.subr.mxu0 0.0
    %1186 = vmatpush1.xpose.msra.mxu0 0.0
    %1187 = vmatprep.subr.mxu0 0.0
    %1188 = vmatpush1.xpose.msra.mxu0 0.0
    %1189 = vmatprep.subr.mxu0 0.0
    %1190 = vmatpush1.xpose.msra.mxu0 0.0
    %1191 = vmatprep.subr.mxu0 0.0
    %1192 = vmatpush1.xpose.msra.mxu0 0.0
    %1193 = vmatprep.subr.mxu0 0.0
    %1194 = vmatpush1.xpose.msra.mxu0 0.0
    %1195 = vmatprep.subr.mxu0 0.0
    %1196 = vmatpush1.xpose.msra.mxu0 0.0
    %1197 = vmatprep.subr.mxu0 0.0
    %1198 = vmatpush1.xpose.msra.mxu0 0.0
    %1199 = vmatprep.subr.mxu0 0.0
    %1200 = vmatpush1.xpose.msra.mxu0 0.0
    %1201 = vmatprep.subr.mxu0 0.0
    %1202 = vmatpush1.xpose.msra.mxu0 0.0
    %1203 = vmatprep.subr.mxu0 0.0
    %1204 = vmatpush1.xpose.msra.mxu0 0.0
    %1205 = vmatprep.subr.mxu0 0.0
    %1206 = vmatpush1.xpose.msra.mxu0 0.0
    %1207 = vmatprep.subr.mxu0 0.0
    %1208 = vmatpush1.xpose.msra.mxu0 0.0
    %1209 = vmatprep.mubr.f32.mxu0 0.0
    %v1210 = vand.u32 %v986, 4294901760
    %v1211 = vsub.f32 %v986, %v1210
    %1212 = vmatmul.mubr.f32.gmra.mrb[0].mxu0 %v1211
    %v1213 = vpop.f32.mrb[0].mxu0
    %v1214 = vadd.f32 %v1140, %v1213
    %v1215 = vpop.f32.mrb[0].mxu0
    %1216 = vdwg.mxu0
    %1217 = vmatprep.subr.mxu0 0.0
    %v1218 = vand.u32 %v989, 4294901760
    %1219 = vmatpush1.xpose.msra.mxu0 %v1218
    %1220 = vmatprep.subr.mxu0 0.0
    %1221 = vmatpush1.xpose.msra.mxu0 0.0
    %1222 = vmatprep.subr.mxu0 0.0
    %1223 = vmatpush1.xpose.msra.mxu0 0.0
    %1224 = vmatprep.subr.mxu0 0.0
    %1225 = vmatpush1.xpose.msra.mxu0 0.0
    %1226 = vmatprep.subr.mxu0 0.0
    %1227 = vmatpush1.xpose.msra.mxu0 0.0
    %1228 = vmatprep.subr.mxu0 0.0
    %1229 = vmatpush1.xpose.msra.mxu0 0.0
    %1230 = vmatprep.subr.mxu0 0.0
    %1231 = vmatpush1.xpose.msra.mxu0 0.0
    %1232 = vmatprep.subr.mxu0 0.0
    %1233 = vmatpush1.xpose.msra.mxu0 0.0
    %1234 = vmatprep.subr.mxu0 0.0
    %1235 = vmatpush1.xpose.msra.mxu0 0.0
    %1236 = vmatprep.subr.mxu0 0.0
    %1237 = vmatpush1.xpose.msra.mxu0 0.0
    %1238 = vmatprep.subr.mxu0 0.0
    %1239 = vmatpush1.xpose.msra.mxu0 0.0
    %1240 = vmatprep.subr.mxu0 0.0
    %1241 = vmatpush1.xpose.msra.mxu0 0.0
    %1242 = vmatprep.subr.mxu0 0.0
    %1243 = vmatpush1.xpose.msra.mxu0 0.0
    %1244 = vmatprep.subr.mxu0 0.0
    %1245 = vmatpush1.xpose.msra.mxu0 0.0
    %1246 = vmatprep.subr.mxu0 0.0
    %1247 = vmatpush1.xpose.msra.mxu0 0.0
    %1248 = vmatprep.subr.mxu0 0.0
    %1249 = vmatpush1.xpose.msra.mxu0 0.0
    %1250 = vmatprep.subr.mxu0 0.0
    %1251 = vmatpush1.xpose.msra.mxu0 0.0
    %1252 = vmatprep.subr.mxu0 0.0
    %1253 = vmatpush1.xpose.msra.mxu0 0.0
    %1254 = vmatprep.subr.mxu0 0.0
    %1255 = vmatpush1.xpose.msra.mxu0 0.0
    %1256 = vmatprep.subr.mxu0 0.0
    %1257 = vmatpush1.xpose.msra.mxu0 0.0
    %1258 = vmatprep.subr.mxu0 0.0
    %1259 = vmatpush1.xpose.msra.mxu0 0.0
    %1260 = vmatprep.subr.mxu0 0.0
    %1261 = vmatpush1.xpose.msra.mxu0 0.0
    %1262 = vmatprep.subr.mxu0 0.0
    %1263 = vmatpush1.xpose.msra.mxu0 0.0
    %1264 = vmatprep.subr.mxu0 0.0
    %1265 = vmatpush1.xpose.msra.mxu0 0.0
    %1266 = vmatprep.subr.mxu0 0.0
    %1267 = vmatpush1.xpose.msra.mxu0 0.0
    %1268 = vmatprep.subr.mxu0 0.0
    %1269 = vmatpush1.xpose.msra.mxu0 0.0
    %1270 = vmatprep.subr.mxu0 0.0
    %1271 = vmatpush1.xpose.msra.mxu0 0.0
    %1272 = vmatprep.subr.mxu0 0.0
    %1273 = vmatpush1.xpose.msra.mxu0 0.0
    %1274 = vmatprep.subr.mxu0 0.0
    %1275 = vmatpush1.xpose.msra.mxu0 0.0
    %1276 = vmatprep.subr.mxu0 0.0
    %1277 = vmatpush1.xpose.msra.mxu0 0.0
    %1278 = vmatprep.subr.mxu0 0.0
    %1279 = vmatpush1.xpose.msra.mxu0 0.0
    %1280 = vmatprep.subr.mxu0 0.0
    %1281 = vmatpush1.xpose.msra.mxu0 0.0
    %1282 = vmatprep.mubr.f32.mxu0 0.0
    %v1283 = vand.u32 %v986, 4294901760
    %v1284 = vsub.f32 %v986, %v1283
    %v1285 = vand.u32 %v1284, 4294901760
    %1286 = vmatmul.mubr.f32.gmra.mrb[0].mxu0 %v1285
    %v1287 = vpop.f32.mrb[0].mxu0
    %v1288 = vadd.f32 %v1214, %v1287
    %v1289 = vpop.f32.mrb[0].mxu0
    %1290 = vdwg.mxu0
    %1291 = vmatprep.subr.mxu0 0.0
    %v1292 = vand.u32 %v989, 4294901760
    %v1293 = vsub.f32 %v989, %v1292
    %v1294 = vand.u32 %v1293, 4294901760
    %1295 = vmatpush1.xpose.msra.mxu0 %v1294
    %1296 = vmatprep.subr.mxu0 0.0
    %1297 = vmatpush1.xpose.msra.mxu0 0.0
    %1298 = vmatprep.subr.mxu0 0.0
    %1299 = vmatpush1.xpose.msra.mxu0 0.0
    %1300 = vmatprep.subr.mxu0 0.0
    %1301 = vmatpush1.xpose.msra.mxu0 0.0
    %1302 = vmatprep.subr.mxu0 0.0
    %1303 = vmatpush1.xpose.msra.mxu0 0.0
    %1304 = vmatprep.subr.mxu0 0.0
    %1305 = vmatpush1.xpose.msra.mxu0 0.0
    %1306 = vmatprep.subr.mxu0 0.0
    %1307 = vmatpush1.xpose.msra.mxu0 0.0
    %1308 = vmatprep.subr.mxu0 0.0
    %1309 = vmatpush1.xpose.msra.mxu0 0.0
    %1310 = vmatprep.subr.mxu0 0.0
    %1311 = vmatpush1.xpose.msra.mxu0 0.0
    %1312 = vmatprep.subr.mxu0 0.0
    %1313 = vmatpush1.xpose.msra.mxu0 0.0
    %1314 = vmatprep.subr.mxu0 0.0
    %1315 = vmatpush1.xpose.msra.mxu0 0.0
    %1316 = vmatprep.subr.mxu0 0.0
    %1317 = vmatpush1.xpose.msra.mxu0 0.0
    %1318 = vmatprep.subr.mxu0 0.0
    %1319 = vmatpush1.xpose.msra.mxu0 0.0
    %1320 = vmatprep.subr.mxu0 0.0
    %1321 = vmatpush1.xpose.msra.mxu0 0.0
    %1322 = vmatprep.subr.mxu0 0.0
    %1323 = vmatpush1.xpose.msra.mxu0 0.0
    %1324 = vmatprep.subr.mxu0 0.0
    %1325 = vmatpush1.xpose.msra.mxu0 0.0
    %1326 = vmatprep.subr.mxu0 0.0
    %1327 = vmatpush1.xpose.msra.mxu0 0.0
    %1328 = vmatprep.subr.mxu0 0.0
    %1329 = vmatpush1.xpose.msra.mxu0 0.0
    %1330 = vmatprep.subr.mxu0 0.0
    %1331 = vmatpush1.xpose.msra.mxu0 0.0
    %1332 = vmatprep.subr.mxu0 0.0
    %1333 = vmatpush1.xpose.msra.mxu0 0.0
    %1334 = vmatprep.subr.mxu0 0.0
    %1335 = vmatpush1.xpose.msra.mxu0 0.0
    %1336 = vmatprep.subr.mxu0 0.0
    %1337 = vmatpush1.xpose.msra.mxu0 0.0
    %1338 = vmatprep.subr.mxu0 0.0
    %1339 = vmatpush1.xpose.msra.mxu0 0.0
    %1340 = vmatprep.subr.mxu0 0.0
    %1341 = vmatpush1.xpose.msra.mxu0 0.0
    %1342 = vmatprep.subr.mxu0 0.0
    %1343 = vmatpush1.xpose.msra.mxu0 0.0
    %1344 = vmatprep.subr.mxu0 0.0
    %1345 = vmatpush1.xpose.msra.mxu0 0.0
    %1346 = vmatprep.subr.mxu0 0.0
    %1347 = vmatpush1.xpose.msra.mxu0 0.0
    %1348 = vmatprep.subr.mxu0 0.0
    %1349 = vmatpush1.xpose.msra.mxu0 0.0
    %1350 = vmatprep.subr.mxu0 0.0
    %1351 = vmatpush1.xpose.msra.mxu0 0.0
    %1352 = vmatprep.subr.mxu0 0.0
    %1353 = vmatpush1.xpose.msra.mxu0 0.0
    %1354 = vmatprep.subr.mxu0 0.0
    %1355 = vmatpush1.xpose.msra.mxu0 0.0
    %1356 = vmatprep.subr.mxu0 0.0
    %1357 = vmatpush1.xpose.msra.mxu0 0.0
    %1358 = vmatprep.mubr.f32.mxu0 0.0
    %v1359 = vand.u32 %v986, 4294901760
    %1360 = vmatmul.mubr.f32.gmra.mrb[0].mxu0 %v1359
    %v1361 = vpop.f32.mrb[0].mxu0
    %v1362 = vadd.f32 %v1288, %v1361
    %v1363 = vpop.f32.mrb[0].mxu0
    %1364 = vdwg.mxu0
    %1365 = vmatprep.subr.mxu0 0.0
    %v1366 = vand.u32 %v989, 4294901760
    %1367 = vmatpush1.xpose.msra.mxu0 %v1366
    %1368 = vmatprep.subr.mxu0 0.0
    %1369 = vmatpush1.xpose.msra.mxu0 0.0
    %1370 = vmatprep.subr.mxu0 0.0
    %1371 = vmatpush1.xpose.msra.mxu0 0.0
    %1372 = vmatprep.subr.mxu0 0.0
    %1373 = vmatpush1.xpose.msra.mxu0 0.0
    %1374 = vmatprep.subr.mxu0 0.0
    %1375 = vmatpush1.xpose.msra.mxu0 0.0
    %1376 = vmatprep.subr.mxu0 0.0
    %1377 = vmatpush1.xpose.msra.mxu0 0.0
    %1378 = vmatprep.subr.mxu0 0.0
    %1379 = vmatpush1.xpose.msra.mxu0 0.0
    %1380 = vmatprep.subr.mxu0 0.0
    %1381 = vmatpush1.xpose.msra.mxu0 0.0
    %1382 = vmatprep.subr.mxu0 0.0
    %1383 = vmatpush1.xpose.msra.mxu0 0.0
    %1384 = vmatprep.subr.mxu0 0.0
    %1385 = vmatpush1.xpose.msra.mxu0 0.0
    %1386 = vmatprep.subr.mxu0 0.0
    %1387 = vmatpush1.xpose.msra.mxu0 0.0
    %1388 = vmatprep.subr.mxu0 0.0
    %1389 = vmatpush1.xpose.msra.mxu0 0.0
    %1390 = vmatprep.subr.mxu0 0.0
    %1391 = vmatpush1.xpose.msra.mxu0 0.0
    %1392 = vmatprep.subr.mxu0 0.0
    %1393 = vmatpush1.xpose.msra.mxu0 0.0
    %1394 = vmatprep.subr.mxu0 0.0
    %1395 = vmatpush1.xpose.msra.mxu0 0.0
    %1396 = vmatprep.subr.mxu0 0.0
    %1397 = vmatpush1.xpose.msra.mxu0 0.0
    %1398 = vmatprep.subr.mxu0 0.0
    %1399 = vmatpush1.xpose.msra.mxu0 0.0
    %1400 = vmatprep.subr.mxu0 0.0
    %1401 = vmatpush1.xpose.msra.mxu0 0.0
    %1402 = vmatprep.subr.mxu0 0.0
    %1403 = vmatpush1.xpose.msra.mxu0 0.0
    %1404 = vmatprep.subr.mxu0 0.0
    %1405 = vmatpush1.xpose.msra.mxu0 0.0
    %1406 = vmatprep.subr.mxu0 0.0
    %1407 = vmatpush1.xpose.msra.mxu0 0.0
    %1408 = vmatprep.subr.mxu0 0.0
    %1409 = vmatpush1.xpose.msra.mxu0 0.0
    %1410 = vmatprep.subr.mxu0 0.0
    %1411 = vmatpush1.xpose.msra.mxu0 0.0
    %1412 = vmatprep.subr.mxu0 0.0
    %1413 = vmatpush1.xpose.msra.mxu0 0.0
    %1414 = vmatprep.subr.mxu0 0.0
    %1415 = vmatpush1.xpose.msra.mxu0 0.0
    %1416 = vmatprep.subr.mxu0 0.0
    %1417 = vmatpush1.xpose.msra.mxu0 0.0
    %1418 = vmatprep.subr.mxu0 0.0
    %1419 = vmatpush1.xpose.msra.mxu0 0.0
    %1420 = vmatprep.subr.mxu0 0.0
    %1421 = vmatpush1.xpose.msra.mxu0 0.0
    %1422 = vmatprep.subr.mxu0 0.0
    %1423 = vmatpush1.xpose.msra.mxu0 0.0
    %1424 = vmatprep.subr.mxu0 0.0
    %1425 = vmatpush1.xpose.msra.mxu0 0.0
    %1426 = vmatprep.subr.mxu0 0.0
    %1427 = vmatpush1.xpose.msra.mxu0 0.0
    %1428 = vmatprep.subr.mxu0 0.0
    %1429 = vmatpush1.xpose.msra.mxu0 0.0
    %1430 = vmatprep.mubr.f32.mxu0 0.0
    %v1431 = vand.u32 %v986, 4294901760
    %1432 = vmatmul.mubr.f32.gmra.mrb[0].mxu0 %v1431
    %v1433 = vpop.f32.mrb[0].mxu0
    %v1434 = vadd.f32 %v1362, %v1433
    %v1435 = vpop.f32.mrb[0].mxu0
    %1436 = vdwg.mxu0
    %v1438 = vsel %vm80, %v59, 0
    %v1441 = vsel %vm80, %v67, 0
    %1443 = vmatprep.subr.mxu0 0.0
    %v1444 = vand.u32 %v1441, 4294901760
    %1445 = vmatpush1.xpose.msra.mxu0 %v1444
    %1446 = vmatprep.subr.mxu0 0.0
    %1447 = vmatpush1.xpose.msra.mxu0 0.0
    %1448 = vmatprep.subr.mxu0 0.0
    %1449 = vmatpush1.xpose.msra.mxu0 0.0
    %1450 = vmatprep.subr.mxu0 0.0
    %1451 = vmatpush1.xpose.msra.mxu0 0.0
    %1452 = vmatprep.subr.mxu0 0.0
    %1453 = vmatpush1.xpose.msra.mxu0 0.0
    %1454 = vmatprep.subr.mxu0 0.0
    %1455 = vmatpush1.xpose.msra.mxu0 0.0
    %1456 = vmatprep.subr.mxu0 0.0
    %1457 = vmatpush1.xpose.msra.mxu0 0.0
    %1458 = vmatprep.subr.mxu0 0.0
    %1459 = vmatpush1.xpose.msra.mxu0 0.0
    %1460 = vmatprep.subr.mxu0 0.0
    %1461 = vmatpush1.xpose.msra.mxu0 0.0
    %1462 = vmatprep.subr.mxu0 0.0
    %1463 = vmatpush1.xpose.msra.mxu0 0.0
    %1464 = vmatprep.subr.mxu0 0.0
    %1465 = vmatpush1.xpose.msra.mxu0 0.0
    %1466 = vmatprep.subr.mxu0 0.0
    %1467 = vmatpush1.xpose.msra.mxu0 0.0
    %1468 = vmatprep.subr.mxu0 0.0
    %1469 = vmatpush1.xpose.msra.mxu0 0.0
    %1470 = vmatprep.subr.mxu0 0.0
    %1471 = vmatpush1.xpose.msra.mxu0 0.0
    %1472 = vmatprep.subr.mxu0 0.0
    %1473 = vmatpush1.xpose.msra.mxu0 0.0
    %1474 = vmatprep.subr.mxu0 0.0
    %1475 = vmatpush1.xpose.msra.mxu0 0.0
    %1476 = vmatprep.subr.mxu0 0.0
    %1477 = vmatpush1.xpose.msra.mxu0 0.0
    %1478 = vmatprep.subr.mxu0 0.0
    %1479 = vmatpush1.xpose.msra.mxu0 0.0
    %1480 = vmatprep.subr.mxu0 0.0
    %1481 = vmatpush1.xpose.msra.mxu0 0.0
    %1482 = vmatprep.subr.mxu0 0.0
    %1483 = vmatpush1.xpose.msra.mxu0 0.0
    %1484 = vmatprep.subr.mxu0 0.0
    %1485 = vmatpush1.xpose.msra.mxu0 0.0
    %1486 = vmatprep.subr.mxu0 0.0
    %1487 = vmatpush1.xpose.msra.mxu0 0.0
    %1488 = vmatprep.subr.mxu0 0.0
    %1489 = vmatpush1.xpose.msra.mxu0 0.0
    %1490 = vmatprep.subr.mxu0 0.0
    %1491 = vmatpush1.xpose.msra.mxu0 0.0
    %1492 = vmatprep.subr.mxu0 0.0
    %1493 = vmatpush1.xpose.msra.mxu0 0.0
    %1494 = vmatprep.subr.mxu0 0.0
    %1495 = vmatpush1.xpose.msra.mxu0 0.0
    %1496 = vmatprep.subr.mxu0 0.0
    %1497 = vmatpush1.xpose.msra.mxu0 0.0
    %1498 = vmatprep.subr.mxu0 0.0
    %1499 = vmatpush1.xpose.msra.mxu0 0.0
    %1500 = vmatprep.subr.mxu0 0.0
    %1501 = vmatpush1.xpose.msra.mxu0 0.0
    %1502 = vmatprep.subr.mxu0 0.0
    %1503 = vmatpush1.xpose.msra.mxu0 0.0
    %1504 = vmatprep.subr.mxu0 0.0
    %1505 = vmatpush1.xpose.msra.mxu0 0.0
    %1506 = vmatprep.subr.mxu0 0.0
    %1507 = vmatpush1.xpose.msra.mxu0 0.0
    %1508 = vmatprep.mubr.f32.mxu0 0.0
    %v1509 = vand.u32 %v1438, 4294901760
    %v1510 = vsub.f32 %v1438, %v1509
    %v1511 = vand.u32 %v1510, 4294901760
    %v1512 = vsub.f32 %v1510, %v1511
    %v1513 = vand.u32 %v1512, 4294901760
    %1514 = vmatmul.mubr.f32.gmra.mrb[0].mxu0 %v1513
    %v1515 = vpop.f32.mrb[0].mxu0
    %v1516 = vadd.f32 0.0, %v1515
    %v1517 = vpop.f32.mrb[0].mxu0
    %1518 = vdwg.mxu0
    %1519 = vmatprep.subr.mxu0 0.0
    %v1520 = vand.u32 %v1441, 4294901760
    %v1521 = vsub.f32 %v1441, %v1520
    %v1522 = vand.u32 %v1521, 4294901760
    %v1523 = vsub.f32 %v1521, %v1522
    %v1524 = vand.u32 %v1523, 4294901760
    %1525 = vmatpush1.xpose.msra.mxu0 %v1524
    %1526 = vmatprep.subr.mxu0 0.0
    %1527 = vmatpush1.xpose.msra.mxu0 0.0
    %1528 = vmatprep.subr.mxu0 0.0
    %1529 = vmatpush1.xpose.msra.mxu0 0.0
    %1530 = vmatprep.subr.mxu0 0.0
    %1531 = vmatpush1.xpose.msra.mxu0 0.0
    %1532 = vmatprep.subr.mxu0 0.0
    %1533 = vmatpush1.xpose.msra.mxu0 0.0
    %1534 = vmatprep.subr.mxu0 0.0
    %1535 = vmatpush1.xpose.msra.mxu0 0.0
    %1536 = vmatprep.subr.mxu0 0.0
    %1537 = vmatpush1.xpose.msra.mxu0 0.0
    %1538 = vmatprep.subr.mxu0 0.0
    %1539 = vmatpush1.xpose.msra.mxu0 0.0
    %1540 = vmatprep.subr.mxu0 0.0
    %1541 = vmatpush1.xpose.msra.mxu0 0.0
    %1542 = vmatprep.subr.mxu0 0.0
    %1543 = vmatpush1.xpose.msra.mxu0 0.0
    %1544 = vmatprep.subr.mxu0 0.0
    %1545 = vmatpush1.xpose.msra.mxu0 0.0
    %1546 = vmatprep.subr.mxu0 0.0
    %1547 = vmatpush1.xpose.msra.mxu0 0.0
    %1548 = vmatprep.subr.mxu0 0.0
    %1549 = vmatpush1.xpose.msra.mxu0 0.0
    %1550 = vmatprep.subr.mxu0 0.0
    %1551 = vmatpush1.xpose.msra.mxu0 0.0
    %1552 = vmatprep.subr.mxu0 0.0
    %1553 = vmatpush1.xpose.msra.mxu0 0.0
    %1554 = vmatprep.subr.mxu0 0.0
    %1555 = vmatpush1.xpose.msra.mxu0 0.0
    %1556 = vmatprep.subr.mxu0 0.0
    %1557 = vmatpush1.xpose.msra.mxu0 0.0
    %1558 = vmatprep.subr.mxu0 0.0
    %1559 = vmatpush1.xpose.msra.mxu0 0.0
    %1560 = vmatprep.subr.mxu0 0.0
    %1561 = vmatpush1.xpose.msra.mxu0 0.0
    %1562 = vmatprep.subr.mxu0 0.0
    %1563 = vmatpush1.xpose.msra.mxu0 0.0
    %1564 = vmatprep.subr.mxu0 0.0
    %1565 = vmatpush1.xpose.msra.mxu0 0.0
    %1566 = vmatprep.subr.mxu0 0.0
    %1567 = vmatpush1.xpose.msra.mxu0 0.0
    %1568 = vmatprep.subr.mxu0 0.0
    %1569 = vmatpush1.xpose.msra.mxu0 0.0
    %1570 = vmatprep.subr.mxu0 0.0
    %1571 = vmatpush1.xpose.msra.mxu0 0.0
    %1572 = vmatprep.subr.mxu0 0.0
    %1573 = vmatpush1.xpose.msra.mxu0 0.0
    %1574 = vmatprep.subr.mxu0 0.0
    %1575 = vmatpush1.xpose.msra.mxu0 0.0
    %1576 = vmatprep.subr.mxu0 0.0
    %1577 = vmatpush1.xpose.msra.mxu0 0.0
    %1578 = vmatprep.subr.mxu0 0.0
    %1579 = vmatpush1.xpose.msra.mxu0 0.0
    %1580 = vmatprep.subr.mxu0 0.0
    %1581 = vmatpush1.xpose.msra.mxu0 0.0
    %1582 = vmatprep.subr.mxu0 0.0
    %1583 = vmatpush1.xpose.msra.mxu0 0.0
    %1584 = vmatprep.subr.mxu0 0.0
    %1585 = vmatpush1.xpose.msra.mxu0 0.0
    %1586 = vmatprep.subr.mxu0 0.0
    %1587 = vmatpush1.xpose.msra.mxu0 0.0
    %1588 = vmatprep.mubr.f32.mxu0 0.0
    %v1589 = vand.u32 %v1438, 4294901760
    %1590 = vmatmul.mubr.f32.gmra.mrb[0].mxu0 %v1589
    %v1591 = vpop.f32.mrb[0].mxu0
    %v1592 = vadd.f32 %v1516, %v1591
    %v1593 = vpop.f32.mrb[0].mxu0
    %1594 = vdwg.mxu0
    %1595 = vmatprep.subr.mxu0 0.0
    %v1596 = vand.u32 %v1441, 4294901760
    %v1597 = vsub.f32 %v1441, %v1596
    %1598 = vmatpush1.xpose.msra.mxu0 %v1597
    %1599 = vmatprep.subr.mxu0 0.0
    %1600 = vmatpush1.xpose.msra.mxu0 0.0
    %1601 = vmatprep.subr.mxu0 0.0
    %1602 = vmatpush1.xpose.msra.mxu0 0.0
    %1603 = vmatprep.subr.mxu0 0.0
    %1604 = vmatpush1.xpose.msra.mxu0 0.0
    %1605 = vmatprep.subr.mxu0 0.0
    %1606 = vmatpush1.xpose.msra.mxu0 0.0
    %1607 = vmatprep.subr.mxu0 0.0
    %1608 = vmatpush1.xpose.msra.mxu0 0.0
    %1609 = vmatprep.subr.mxu0 0.0
    %1610 = vmatpush1.xpose.msra.mxu0 0.0
    %1611 = vmatprep.subr.mxu0 0.0
    %1612 = vmatpush1.xpose.msra.mxu0 0.0
    %1613 = vmatprep.subr.mxu0 0.0
    %1614 = vmatpush1.xpose.msra.mxu0 0.0
    %1615 = vmatprep.subr.mxu0 0.0
    %1616 = vmatpush1.xpose.msra.mxu0 0.0
    %1617 = vmatprep.subr.mxu0 0.0
    %1618 = vmatpush1.xpose.msra.mxu0 0.0
    %1619 = vmatprep.subr.mxu0 0.0
    %1620 = vmatpush1.xpose.msra.mxu0 0.0
    %1621 = vmatprep.subr.mxu0 0.0
    %1622 = vmatpush1.xpose.msra.mxu0 0.0
    %1623 = vmatprep.subr.mxu0 0.0
    %1624 = vmatpush1.xpose.msra.mxu0 0.0
    %1625 = vmatprep.subr.mxu0 0.0
    %1626 = vmatpush1.xpose.msra.mxu0 0.0
    %1627 = vmatprep.subr.mxu0 0.0
    %1628 = vmatpush1.xpose.msra.mxu0 0.0
    %1629 = vmatprep.subr.mxu0 0.0
    %1630 = vmatpush1.xpose.msra.mxu0 0.0
    %1631 = vmatprep.subr.mxu0 0.0
    %1632 = vmatpush1.xpose.msra.mxu0 0.0
    %1633 = vmatprep.subr.mxu0 0.0
    %1634 = vmatpush1.xpose.msra.mxu0 0.0
    %1635 = vmatprep.subr.mxu0 0.0
    %1636 = vmatpush1.xpose.msra.mxu0 0.0
    %1637 = vmatprep.subr.mxu0 0.0
    %1638 = vmatpush1.xpose.msra.mxu0 0.0
    %1639 = vmatprep.subr.mxu0 0.0
    %1640 = vmatpush1.xpose.msra.mxu0 0.0
    %1641 = vmatprep.subr.mxu0 0.0
    %1642 = vmatpush1.xpose.msra.mxu0 0.0
    %1643 = vmatprep.subr.mxu0 0.0
    %1644 = vmatpush1.xpose.msra.mxu0 0.0
    %1645 = vmatprep.subr.mxu0 0.0
    %1646 = vmatpush1.xpose.msra.mxu0 0.0
    %1647 = vmatprep.subr.mxu0 0.0
    %1648 = vmatpush1.xpose.msra.mxu0 0.0
    %1649 = vmatprep.subr.mxu0 0.0
    %1650 = vmatpush1.xpose.msra.mxu0 0.0
    %1651 = vmatprep.subr.mxu0 0.0
    %1652 = vmatpush1.xpose.msra.mxu0 0.0
    %1653 = vmatprep.subr.mxu0 0.0
    %1654 = vmatpush1.xpose.msra.mxu0 0.0
    %1655 = vmatprep.subr.mxu0 0.0
    %1656 = vmatpush1.xpose.msra.mxu0 0.0
    %1657 = vmatprep.subr.mxu0 0.0
    %1658 = vmatpush1.xpose.msra.mxu0 0.0
    %1659 = vmatprep.subr.mxu0 0.0
    %1660 = vmatpush1.xpose.msra.mxu0 0.0
    %1661 = vmatprep.mubr.f32.mxu0 0.0
    %v1662 = vand.u32 %v1438, 4294901760
    %v1663 = vsub.f32 %v1438, %v1662
    %1664 = vmatmul.mubr.f32.gmra.mrb[0].mxu0 %v1663
    %v1665 = vpop.f32.mrb[0].mxu0
    %v1666 = vadd.f32 %v1592, %v1665
    %v1667 = vpop.f32.mrb[0].mxu0
    %1668 = vdwg.mxu0
    %1669 = vmatprep.subr.mxu0 0.0
    %v1670 = vand.u32 %v1441, 4294901760
    %1671 = vmatpush1.xpose.msra.mxu0 %v1670
    %1672 = vmatprep.subr.mxu0 0.0
    %1673 = vmatpush1.xpose.msra.mxu0 0.0
    %1674 = vmatprep.subr.mxu0 0.0
    %1675 = vmatpush1.xpose.msra.mxu0 0.0
    %1676 = vmatprep.subr.mxu0 0.0
    %1677 = vmatpush1.xpose.msra.mxu0 0.0
    %1678 = vmatprep.subr.mxu0 0.0
    %1679 = vmatpush1.xpose.msra.mxu0 0.0
    %1680 = vmatprep.subr.mxu0 0.0
    %1681 = vmatpush1.xpose.msra.mxu0 0.0
    %1682 = vmatprep.subr.mxu0 0.0
    %1683 = vmatpush1.xpose.msra.mxu0 0.0
    %1684 = vmatprep.subr.mxu0 0.0
    %1685 = vmatpush1.xpose.msra.mxu0 0.0
    %1686 = vmatprep.subr.mxu0 0.0
    %1687 = vmatpush1.xpose.msra.mxu0 0.0
    %1688 = vmatprep.subr.mxu0 0.0
    %1689 = vmatpush1.xpose.msra.mxu0 0.0
    %1690 = vmatprep.subr.mxu0 0.0
    %1691 = vmatpush1.xpose.msra.mxu0 0.0
    %1692 = vmatprep.subr.mxu0 0.0
    %1693 = vmatpush1.xpose.msra.mxu0 0.0
    %1694 = vmatprep.subr.mxu0 0.0
    %1695 = vmatpush1.xpose.msra.mxu0 0.0
    %1696 = vmatprep.subr.mxu0 0.0
    %1697 = vmatpush1.xpose.msra.mxu0 0.0
    %1698 = vmatprep.subr.mxu0 0.0
    %1699 = vmatpush1.xpose.msra.mxu0 0.0
    %1700 = vmatprep.subr.mxu0 0.0
    %1701 = vmatpush1.xpose.msra.mxu0 0.0
    %1702 = vmatprep.subr.mxu0 0.0
    %1703 = vmatpush1.xpose.msra.mxu0 0.0
    %1704 = vmatprep.subr.mxu0 0.0
    %1705 = vmatpush1.xpose.msra.mxu0 0.0
    %1706 = vmatprep.subr.mxu0 0.0
    %1707 = vmatpush1.xpose.msra.mxu0 0.0
    %1708 = vmatprep.subr.mxu0 0.0
    %1709 = vmatpush1.xpose.msra.mxu0 0.0
    %1710 = vmatprep.subr.mxu0 0.0
    %1711 = vmatpush1.xpose.msra.mxu0 0.0
    %1712 = vmatprep.subr.mxu0 0.0
    %1713 = vmatpush1.xpose.msra.mxu0 0.0
    %1714 = vmatprep.subr.mxu0 0.0
    %1715 = vmatpush1.xpose.msra.mxu0 0.0
    %1716 = vmatprep.subr.mxu0 0.0
    %1717 = vmatpush1.xpose.msra.mxu0 0.0
    %1718 = vmatprep.subr.mxu0 0.0
    %1719 = vmatpush1.xpose.msra.mxu0 0.0
    %1720 = vmatprep.subr.mxu0 0.0
    %1721 = vmatpush1.xpose.msra.mxu0 0.0
    %1722 = vmatprep.subr.mxu0 0.0
    %1723 = vmatpush1.xpose.msra.mxu0 0.0
    %1724 = vmatprep.subr.mxu0 0.0
    %1725 = vmatpush1.xpose.msra.mxu0 0.0
    %1726 = vmatprep.subr.mxu0 0.0
    %1727 = vmatpush1.xpose.msra.mxu0 0.0
    %1728 = vmatprep.subr.mxu0 0.0
    %1729 = vmatpush1.xpose.msra.mxu0 0.0
    %1730 = vmatprep.subr.mxu0 0.0
    %1731 = vmatpush1.xpose.msra.mxu0 0.0
    %1732 = vmatprep.subr.mxu0 0.0
    %1733 = vmatpush1.xpose.msra.mxu0 0.0
    %1734 = vmatprep.mubr.f32.mxu0 0.0
    %v1735 = vand.u32 %v1438, 4294901760
    %v1736 = vsub.f32 %v1438, %v1735
    %v1737 = vand.u32 %v1736, 4294901760
    %1738 = vmatmul.mubr.f32.gmra.mrb[0].mxu0 %v1737
    %v1739 = vpop.f32.mrb[0].mxu0
    %v1740 = vadd.f32 %v1666, %v1739
    %v1741 = vpop.f32.mrb[0].mxu0
    %1742 = vdwg.mxu0
    %1743 = vmatprep.subr.mxu0 0.0
    %v1744 = vand.u32 %v1441, 4294901760
    %v1745 = vsub.f32 %v1441, %v1744
    %v1746 = vand.u32 %v1745, 4294901760
    %1747 = vmatpush1.xpose.msra.mxu0 %v1746
    %1748 = vmatprep.subr.mxu0 0.0
    %1749 = vmatpush1.xpose.msra.mxu0 0.0
    %1750 = vmatprep.subr.mxu0 0.0
    %1751 = vmatpush1.xpose.msra.mxu0 0.0
    %1752 = vmatprep.subr.mxu0 0.0
    %1753 = vmatpush1.xpose.msra.mxu0 0.0
    %1754 = vmatprep.subr.mxu0 0.0
    %1755 = vmatpush1.xpose.msra.mxu0 0.0
    %1756 = vmatprep.subr.mxu0 0.0
    %1757 = vmatpush1.xpose.msra.mxu0 0.0
    %1758 = vmatprep.subr.mxu0 0.0
    %1759 = vmatpush1.xpose.msra.mxu0 0.0
    %1760 = vmatprep.subr.mxu0 0.0
    %1761 = vmatpush1.xpose.msra.mxu0 0.0
    %1762 = vmatprep.subr.mxu0 0.0
    %1763 = vmatpush1.xpose.msra.mxu0 0.0
    %1764 = vmatprep.subr.mxu0 0.0
    %1765 = vmatpush1.xpose.msra.mxu0 0.0
    %1766 = vmatprep.subr.mxu0 0.0
    %1767 = vmatpush1.xpose.msra.mxu0 0.0
    %1768 = vmatprep.subr.mxu0 0.0
    %1769 = vmatpush1.xpose.msra.mxu0 0.0
    %1770 = vmatprep.subr.mxu0 0.0
    %1771 = vmatpush1.xpose.msra.mxu0 0.0
    %1772 = vmatprep.subr.mxu0 0.0
    %1773 = vmatpush1.xpose.msra.mxu0 0.0
    %1774 = vmatprep.subr.mxu0 0.0
    %1775 = vmatpush1.xpose.msra.mxu0 0.0
    %1776 = vmatprep.subr.mxu0 0.0
    %1777 = vmatpush1.xpose.msra.mxu0 0.0
    %1778 = vmatprep.subr.mxu0 0.0
    %1779 = vmatpush1.xpose.msra.mxu0 0.0
    %1780 = vmatprep.subr.mxu0 0.0
    %1781 = vmatpush1.xpose.msra.mxu0 0.0
    %1782 = vmatprep.subr.mxu0 0.0
    %1783 = vmatpush1.xpose.msra.mxu0 0.0
    %1784 = vmatprep.subr.mxu0 0.0
    %1785 = vmatpush1.xpose.msra.mxu0 0.0
    %1786 = vmatprep.subr.mxu0 0.0
    %1787 = vmatpush1.xpose.msra.mxu0 0.0
    %1788 = vmatprep.subr.mxu0 0.0
    %1789 = vmatpush1.xpose.msra.mxu0 0.0
    %1790 = vmatprep.subr.mxu0 0.0
    %1791 = vmatpush1.xpose.msra.mxu0 0.0
    %1792 = vmatprep.subr.mxu0 0.0
    %1793 = vmatpush1.xpose.msra.mxu0 0.0
    %1794 = vmatprep.subr.mxu0 0.0
    %1795 = vmatpush1.xpose.msra.mxu0 0.0
    %1796 = vmatprep.subr.mxu0 0.0
    %1797 = vmatpush1.xpose.msra.mxu0 0.0
    %1798 = vmatprep.subr.mxu0 0.0
    %1799 = vmatpush1.xpose.msra.mxu0 0.0
    %1800 = vmatprep.subr.mxu0 0.0
    %1801 = vmatpush1.xpose.msra.mxu0 0.0
    %1802 = vmatprep.subr.mxu0 0.0
    %1803 = vmatpush1.xpose.msra.mxu0 0.0
    %1804 = vmatprep.subr.mxu0 0.0
    %1805 = vmatpush1.xpose.msra.mxu0 0.0
    %1806 = vmatprep.subr.mxu0 0.0
    %1807 = vmatpush1.xpose.msra.mxu0 0.0
    %1808 = vmatprep.subr.mxu0 0.0
    %1809 = vmatpush1.xpose.msra.mxu0 0.0
    %1810 = vmatprep.mubr.f32.mxu0 0.0
    %v1811 = vand.u32 %v1438, 4294901760
    %1812 = vmatmul.mubr.f32.gmra.mrb[0].mxu0 %v1811
    %v1813 = vpop.f32.mrb[0].mxu0
    %v1814 = vadd.f32 %v1740, %v1813
    %v1815 = vpop.f32.mrb[0].mxu0
    %1816 = vdwg.mxu0
    %1817 = vmatprep.subr.mxu0 0.0
    %v1818 = vand.u32 %v1441, 4294901760
    %1819 = vmatpush1.xpose.msra.mxu0 %v1818
    %1820 = vmatprep.subr.mxu0 0.0
    %1821 = vmatpush1.xpose.msra.mxu0 0.0
    %1822 = vmatprep.subr.mxu0 0.0
    %1823 = vmatpush1.xpose.msra.mxu0 0.0
    %1824 = vmatprep.subr.mxu0 0.0
    %1825 = vmatpush1.xpose.msra.mxu0 0.0
    %1826 = vmatprep.subr.mxu0 0.0
    %1827 = vmatpush1.xpose.msra.mxu0 0.0
    %1828 = vmatprep.subr.mxu0 0.0
    %1829 = vmatpush1.xpose.msra.mxu0 0.0
    %1830 = vmatprep.subr.mxu0 0.0
    %1831 = vmatpush1.xpose.msra.mxu0 0.0
    %1832 = vmatprep.subr.mxu0 0.0
    %1833 = vmatpush1.xpose.msra.mxu0 0.0
    %1834 = vmatprep.subr.mxu0 0.0
    %1835 = vmatpush1.xpose.msra.mxu0 0.0
    %1836 = vmatprep.subr.mxu0 0.0
    %1837 = vmatpush1.xpose.msra.mxu0 0.0
    %1838 = vmatprep.subr.mxu0 0.0
    %1839 = vmatpush1.xpose.msra.mxu0 0.0
    %1840 = vmatprep.subr.mxu0 0.0
    %1841 = vmatpush1.xpose.msra.mxu0 0.0
    %1842 = vmatprep.subr.mxu0 0.0
    %1843 = vmatpush1.xpose.msra.mxu0 0.0
    %1844 = vmatprep.subr.mxu0 0.0
    %1845 = vmatpush1.xpose.msra.mxu0 0.0
    %1846 = vmatprep.subr.mxu0 0.0
    %1847 = vmatpush1.xpose.msra.mxu0 0.0
    %1848 = vmatprep.subr.mxu0 0.0
    %1849 = vmatpush1.xpose.msra.mxu0 0.0
    %1850 = vmatprep.subr.mxu0 0.0
    %1851 = vmatpush1.xpose.msra.mxu0 0.0
    %1852 = vmatprep.subr.mxu0 0.0
    %1853 = vmatpush1.xpose.msra.mxu0 0.0
    %1854 = vmatprep.subr.mxu0 0.0
    %1855 = vmatpush1.xpose.msra.mxu0 0.0
    %1856 = vmatprep.subr.mxu0 0.0
    %1857 = vmatpush1.xpose.msra.mxu0 0.0
    %1858 = vmatprep.subr.mxu0 0.0
    %1859 = vmatpush1.xpose.msra.mxu0 0.0
    %1860 = vmatprep.subr.mxu0 0.0
    %1861 = vmatpush1.xpose.msra.mxu0 0.0
    %1862 = vmatprep.subr.mxu0 0.0
    %1863 = vmatpush1.xpose.msra.mxu0 0.0
    %1864 = vmatprep.subr.mxu0 0.0
    %1865 = vmatpush1.xpose.msra.mxu0 0.0
    %1866 = vmatprep.subr.mxu0 0.0
    %1867 = vmatpush1.xpose.msra.mxu0 0.0
    %1868 = vmatprep.subr.mxu0 0.0
    %1869 = vmatpush1.xpose.msra.mxu0 0.0
    %1870 = vmatprep.subr.mxu0 0.0
    %1871 = vmatpush1.xpose.msra.mxu0 0.0
    %1872 = vmatprep.subr.mxu0 0.0
    %1873 = vmatpush1.xpose.msra.mxu0 0.0
    %1874 = vmatprep.subr.mxu0 0.0
    %1875 = vmatpush1.xpose.msra.mxu0 0.0
    %1876 = vmatprep.subr.mxu0 0.0
    %1877 = vmatpush1.xpose.msra.mxu0 0.0
    %1878 = vmatprep.subr.mxu0 0.0
    %1879 = vmatpush1.xpose.msra.mxu0 0.0
    %1880 = vmatprep.subr.mxu0 0.0
    %1881 = vmatpush1.xpose.msra.mxu0 0.0
    %1882 = vmatprep.mubr.f32.mxu0 0.0
    %v1883 = vand.u32 %v1438, 4294901760
    %1884 = vmatmul.mubr.f32.gmra.mrb[0].mxu0 %v1883
    %v1885 = vpop.f32.mrb[0].mxu0
    %v1886 = vadd.f32 %v1814, %v1885
    %v1887 = vpop.f32.mrb[0].mxu0
    %1888 = vdwg.mxu0
    %v1890 = vsel %vm80, %v60, 0
    %v1893 = vsel %vm80, %v68, 0
    %1895 = vmatprep.subr.mxu0 0.0
    %v1896 = vand.u32 %v1893, 4294901760
    %1897 = vmatpush1.xpose.msra.mxu0 %v1896
    %1898 = vmatprep.subr.mxu0 0.0
    %1899 = vmatpush1.xpose.msra.mxu0 0.0
    %1900 = vmatprep.subr.mxu0 0.0
    %1901 = vmatpush1.xpose.msra.mxu0 0.0
    %1902 = vmatprep.subr.mxu0 0.0
    %1903 = vmatpush1.xpose.msra.mxu0 0.0
    %1904 = vmatprep.subr.mxu0 0.0
    %1905 = vmatpush1.xpose.msra.mxu0 0.0
    %1906 = vmatprep.subr.mxu0 0.0
    %1907 = vmatpush1.xpose.msra.mxu0 0.0
    %1908 = vmatprep.subr.mxu0 0.0
    %1909 = vmatpush1.xpose.msra.mxu0 0.0
    %1910 = vmatprep.subr.mxu0 0.0
    %1911 = vmatpush1.xpose.msra.mxu0 0.0
    %1912 = vmatprep.subr.mxu0 0.0
    %1913 = vmatpush1.xpose.msra.mxu0 0.0
    %1914 = vmatprep.subr.mxu0 0.0
    %1915 = vmatpush1.xpose.msra.mxu0 0.0
    %1916 = vmatprep.subr.mxu0 0.0
    %1917 = vmatpush1.xpose.msra.mxu0 0.0
    %1918 = vmatprep.subr.mxu0 0.0
    %1919 = vmatpush1.xpose.msra.mxu0 0.0
    %1920 = vmatprep.subr.mxu0 0.0
    %1921 = vmatpush1.xpose.msra.mxu0 0.0
    %1922 = vmatprep.subr.mxu0 0.0
    %1923 = vmatpush1.xpose.msra.mxu0 0.0
    %1924 = vmatprep.subr.mxu0 0.0
    %1925 = vmatpush1.xpose.msra.mxu0 0.0
    %1926 = vmatprep.subr.mxu0 0.0
    %1927 = vmatpush1.xpose.msra.mxu0 0.0
    %1928 = vmatprep.subr.mxu0 0.0
    %1929 = vmatpush1.xpose.msra.mxu0 0.0
    %1930 = vmatprep.subr.mxu0 0.0
    %1931 = vmatpush1.xpose.msra.mxu0 0.0
    %1932 = vmatprep.subr.mxu0 0.0
    %1933 = vmatpush1.xpose.msra.mxu0 0.0
    %1934 = vmatprep.subr.mxu0 0.0
    %1935 = vmatpush1.xpose.msra.mxu0 0.0
    %1936 = vmatprep.subr.mxu0 0.0
    %1937 = vmatpush1.xpose.msra.mxu0 0.0
    %1938 = vmatprep.subr.mxu0 0.0
    %1939 = vmatpush1.xpose.msra.mxu0 0.0
    %1940 = vmatprep.subr.mxu0 0.0
    %1941 = vmatpush1.xpose.msra.mxu0 0.0
    %1942 = vmatprep.subr.mxu0 0.0
    %1943 = vmatpush1.xpose.msra.mxu0 0.0
    %1944 = vmatprep.subr.mxu0 0.0
    %1945 = vmatpush1.xpose.msra.mxu0 0.0
    %1946 = vmatprep.subr.mxu0 0.0
    %1947 = vmatpush1.xpose.msra.mxu0 0.0
    %1948 = vmatprep.subr.mxu0 0.0
    %1949 = vmatpush1.xpose.msra.mxu0 0.0
    %1950 = vmatprep.subr.mxu0 0.0
    %1951 = vmatpush1.xpose.msra.mxu0 0.0
    %1952 = vmatprep.subr.mxu0 0.0
    %1953 = vmatpush1.xpose.msra.mxu0 0.0
    %1954 = vmatprep.subr.mxu0 0.0
    %1955 = vmatpush1.xpose.msra.mxu0 0.0
    %1956 = vmatprep.subr.mxu0 0.0
    %1957 = vmatpush1.xpose.msra.mxu0 0.0
    %1958 = vmatprep.subr.mxu0 0.0
    %1959 = vmatpush1.xpose.msra.mxu0 0.0
    %1960 = vmatprep.mubr.f32.mxu0 0.0
    %v1961 = vand.u32 %v1890, 4294901760
    %v1962 = vsub.f32 %v1890, %v1961
    %v1963 = vand.u32 %v1962, 4294901760
    %v1964 = vsub.f32 %v1962, %v1963
    %v1965 = vand.u32 %v1964, 4294901760
    %1966 = vmatmul.mubr.f32.gmra.mrb[0].mxu0 %v1965
    %v1967 = vpop.f32.mrb[0].mxu0
    %v1968 = vadd.f32 0.0, %v1967
    %v1969 = vpop.f32.mrb[0].mxu0
    %1970 = vdwg.mxu0
    %1971 = vmatprep.subr.mxu0 0.0
    %v1972 = vand.u32 %v1893, 4294901760
    %v1973 = vsub.f32 %v1893, %v1972
    %v1974 = vand.u32 %v1973, 4294901760
    %v1975 = vsub.f32 %v1973, %v1974
    %v1976 = vand.u32 %v1975, 4294901760
    %1977 = vmatpush1.xpose.msra.mxu0 %v1976
    %1978 = vmatprep.subr.mxu0 0.0
    %1979 = vmatpush1.xpose.msra.mxu0 0.0
    %1980 = vmatprep.subr.mxu0 0.0
    %1981 = vmatpush1.xpose.msra.mxu0 0.0
    %1982 = vmatprep.subr.mxu0 0.0
    %1983 = vmatpush1.xpose.msra.mxu0 0.0
    %1984 = vmatprep.subr.mxu0 0.0
    %1985 = vmatpush1.xpose.msra.mxu0 0.0
    %1986 = vmatprep.subr.mxu0 0.0
    %1987 = vmatpush1.xpose.msra.mxu0 0.0
    %1988 = vmatprep.subr.mxu0 0.0
    %1989 = vmatpush1.xpose.msra.mxu0 0.0
    %1990 = vmatprep.subr.mxu0 0.0
    %1991 = vmatpush1.xpose.msra.mxu0 0.0
    %1992 = vmatprep.subr.mxu0 0.0
    %1993 = vmatpush1.xpose.msra.mxu0 0.0
    %1994 = vmatprep.subr.mxu0 0.0
    %1995 = vmatpush1.xpose.msra.mxu0 0.0
    %1996 = vmatprep.subr.mxu0 0.0
    %1997 = vmatpush1.xpose.msra.mxu0 0.0
    %1998 = vmatprep.subr.mxu0 0.0
    %1999 = vmatpush1.xpose.msra.mxu0 0.0
    %2000 = vmatprep.subr.mxu0 0.0
    %2001 = vmatpush1.xpose.msra.mxu0 0.0
    %2002 = vmatprep.subr.mxu0 0.0
    %2003 = vmatpush1.xpose.msra.mxu0 0.0
    %2004 = vmatprep.subr.mxu0 0.0
    %2005 = vmatpush1.xpose.msra.mxu0 0.0
    %2006 = vmatprep.subr.mxu0 0.0
    %2007 = vmatpush1.xpose.msra.mxu0 0.0
    %2008 = vmatprep.subr.mxu0 0.0
    %2009 = vmatpush1.xpose.msra.mxu0 0.0
    %2010 = vmatprep.subr.mxu0 0.0
    %2011 = vmatpush1.xpose.msra.mxu0 0.0
    %2012 = vmatprep.subr.mxu0 0.0
    %2013 = vmatpush1.xpose.msra.mxu0 0.0
    %2014 = vmatprep.subr.mxu0 0.0
    %2015 = vmatpush1.xpose.msra.mxu0 0.0
    %2016 = vmatprep.subr.mxu0 0.0
    %2017 = vmatpush1.xpose.msra.mxu0 0.0
    %2018 = vmatprep.subr.mxu0 0.0
    %2019 = vmatpush1.xpose.msra.mxu0 0.0
    %2020 = vmatprep.subr.mxu0 0.0
    %2021 = vmatpush1.xpose.msra.mxu0 0.0
    %2022 = vmatprep.subr.mxu0 0.0
    %2023 = vmatpush1.xpose.msra.mxu0 0.0
    %2024 = vmatprep.subr.mxu0 0.0
    %2025 = vmatpush1.xpose.msra.mxu0 0.0
    %2026 = vmatprep.subr.mxu0 0.0
    %2027 = vmatpush1.xpose.msra.mxu0 0.0
    %2028 = vmatprep.subr.mxu0 0.0
    %2029 = vmatpush1.xpose.msra.mxu0 0.0
    %2030 = vmatprep.subr.mxu0 0.0
    %2031 = vmatpush1.xpose.msra.mxu0 0.0
    %2032 = vmatprep.subr.mxu0 0.0
    %2033 = vmatpush1.xpose.msra.mxu0 0.0
    %2034 = vmatprep.subr.mxu0 0.0
    %2035 = vmatpush1.xpose.msra.mxu0 0.0
    %2036 = vmatprep.subr.mxu0 0.0
    %2037 = vmatpush1.xpose.msra.mxu0 0.0
    %2038 = vmatprep.subr.mxu0 0.0
    %2039 = vmatpush1.xpose.msra.mxu0 0.0
    %2040 = vmatprep.mubr.f32.mxu0 0.0
    %v2041 = vand.u32 %v1890, 4294901760
    %2042 = vmatmul.mubr.f32.gmra.mrb[0].mxu0 %v2041
    %v2043 = vpop.f32.mrb[0].mxu0
    %v2044 = vadd.f32 %v1968, %v2043
    %v2045 = vpop.f32.mrb[0].mxu0
    %2046 = vdwg.mxu0
    %2047 = vmatprep.subr.mxu0 0.0
    %v2048 = vand.u32 %v1893, 4294901760
    %v2049 = vsub.f32 %v1893, %v2048
    %2050 = vmatpush1.xpose.msra.mxu0 %v2049
    %2051 = vmatprep.subr.mxu0 0.0
    %2052 = vmatpush1.xpose.msra.mxu0 0.0
    %2053 = vmatprep.subr.mxu0 0.0
    %2054 = vmatpush1.xpose.msra.mxu0 0.0
    %2055 = vmatprep.subr.mxu0 0.0
    %2056 = vmatpush1.xpose.msra.mxu0 0.0
    %2057 = vmatprep.subr.mxu0 0.0
    %2058 = vmatpush1.xpose.msra.mxu0 0.0
    %2059 = vmatprep.subr.mxu0 0.0
    %2060 = vmatpush1.xpose.msra.mxu0 0.0
    %2061 = vmatprep.subr.mxu0 0.0
    %2062 = vmatpush1.xpose.msra.mxu0 0.0
    %2063 = vmatprep.subr.mxu0 0.0
    %2064 = vmatpush1.xpose.msra.mxu0 0.0
    %2065 = vmatprep.subr.mxu0 0.0
    %2066 = vmatpush1.xpose.msra.mxu0 0.0
    %2067 = vmatprep.subr.mxu0 0.0
    %2068 = vmatpush1.xpose.msra.mxu0 0.0
    %2069 = vmatprep.subr.mxu0 0.0
    %2070 = vmatpush1.xpose.msra.mxu0 0.0
    %2071 = vmatprep.subr.mxu0 0.0
    %2072 = vmatpush1.xpose.msra.mxu0 0.0
    %2073 = vmatprep.subr.mxu0 0.0
    %2074 = vmatpush1.xpose.msra.mxu0 0.0
    %2075 = vmatprep.subr.mxu0 0.0
    %2076 = vmatpush1.xpose.msra.mxu0 0.0
    %2077 = vmatprep.subr.mxu0 0.0
    %2078 = vmatpush1.xpose.msra.mxu0 0.0
    %2079 = vmatprep.subr.mxu0 0.0
    %2080 = vmatpush1.xpose.msra.mxu0 0.0
    %2081 = vmatprep.subr.mxu0 0.0
    %2082 = vmatpush1.xpose.msra.mxu0 0.0
    %2083 = vmatprep.subr.mxu0 0.0
    %2084 = vmatpush1.xpose.msra.mxu0 0.0
    %2085 = vmatprep.subr.mxu0 0.0
    %2086 = vmatpush1.xpose.msra.mxu0 0.0
    %2087 = vmatprep.subr.mxu0 0.0
    %2088 = vmatpush1.xpose.msra.mxu0 0.0
    %2089 = vmatprep.subr.mxu0 0.0
    %2090 = vmatpush1.xpose.msra.mxu0 0.0
    %2091 = vmatprep.subr.mxu0 0.0
    %2092 = vmatpush1.xpose.msra.mxu0 0.0
    %2093 = vmatprep.subr.mxu0 0.0
    %2094 = vmatpush1.xpose.msra.mxu0 0.0
    %2095 = vmatprep.subr.mxu0 0.0
    %2096 = vmatpush1.xpose.msra.mxu0 0.0
    %2097 = vmatprep.subr.mxu0 0.0
    %2098 = vmatpush1.xpose.msra.mxu0 0.0
    %2099 = vmatprep.subr.mxu0 0.0
    %2100 = vmatpush1.xpose.msra.mxu0 0.0
    %2101 = vmatprep.subr.mxu0 0.0
    %2102 = vmatpush1.xpose.msra.mxu0 0.0
    %2103 = vmatprep.subr.mxu0 0.0
    %2104 = vmatpush1.xpose.msra.mxu0 0.0
    %2105 = vmatprep.subr.mxu0 0.0
    %2106 = vmatpush1.xpose.msra.mxu0 0.0
    %2107 = vmatprep.subr.mxu0 0.0
    %2108 = vmatpush1.xpose.msra.mxu0 0.0
    %2109 = vmatprep.subr.mxu0 0.0
    %2110 = vmatpush1.xpose.msra.mxu0 0.0
    %2111 = vmatprep.subr.mxu0 0.0
    %2112 = vmatpush1.xpose.msra.mxu0 0.0
    %2113 = vmatprep.mubr.f32.mxu0 0.0
    %v2114 = vand.u32 %v1890, 4294901760
    %v2115 = vsub.f32 %v1890, %v2114
    %2116 = vmatmul.mubr.f32.gmra.mrb[0].mxu0 %v2115
    %v2117 = vpop.f32.mrb[0].mxu0
    %v2118 = vadd.f32 %v2044, %v2117
    %v2119 = vpop.f32.mrb[0].mxu0
    %2120 = vdwg.mxu0
    %2121 = vmatprep.subr.mxu0 0.0
    %v2122 = vand.u32 %v1893, 4294901760
    %2123 = vmatpush1.xpose.msra.mxu0 %v2122
    %2124 = vmatprep.subr.mxu0 0.0
    %2125 = vmatpush1.xpose.msra.mxu0 0.0
    %2126 = vmatprep.subr.mxu0 0.0
    %2127 = vmatpush1.xpose.msra.mxu0 0.0
    %2128 = vmatprep.subr.mxu0 0.0
    %2129 = vmatpush1.xpose.msra.mxu0 0.0
    %2130 = vmatprep.subr.mxu0 0.0
    %2131 = vmatpush1.xpose.msra.mxu0 0.0
    %2132 = vmatprep.subr.mxu0 0.0
    %2133 = vmatpush1.xpose.msra.mxu0 0.0
    %2134 = vmatprep.subr.mxu0 0.0
    %2135 = vmatpush1.xpose.msra.mxu0 0.0
    %2136 = vmatprep.subr.mxu0 0.0
    %2137 = vmatpush1.xpose.msra.mxu0 0.0
    %2138 = vmatprep.subr.mxu0 0.0
    %2139 = vmatpush1.xpose.msra.mxu0 0.0
    %2140 = vmatprep.subr.mxu0 0.0
    %2141 = vmatpush1.xpose.msra.mxu0 0.0
    %2142 = vmatprep.subr.mxu0 0.0
    %2143 = vmatpush1.xpose.msra.mxu0 0.0
    %2144 = vmatprep.subr.mxu0 0.0
    %2145 = vmatpush1.xpose.msra.mxu0 0.0
    %2146 = vmatprep.subr.mxu0 0.0
    %2147 = vmatpush1.xpose.msra.mxu0 0.0
    %2148 = vmatprep.subr.mxu0 0.0
    %2149 = vmatpush1.xpose.msra.mxu0 0.0
    %2150 = vmatprep.subr.mxu0 0.0
    %2151 = vmatpush1.xpose.msra.mxu0 0.0
    %2152 = vmatprep.subr.mxu0 0.0
    %2153 = vmatpush1.xpose.msra.mxu0 0.0
    %2154 = vmatprep.subr.mxu0 0.0
    %2155 = vmatpush1.xpose.msra.mxu0 0.0
    %2156 = vmatprep.subr.mxu0 0.0
    %2157 = vmatpush1.xpose.msra.mxu0 0.0
    %2158 = vmatprep.subr.mxu0 0.0
    %2159 = vmatpush1.xpose.msra.mxu0 0.0
    %2160 = vmatprep.subr.mxu0 0.0
    %2161 = vmatpush1.xpose.msra.mxu0 0.0
    %2162 = vmatprep.subr.mxu0 0.0
    %2163 = vmatpush1.xpose.msra.mxu0 0.0
    %2164 = vmatprep.subr.mxu0 0.0
    %2165 = vmatpush1.xpose.msra.mxu0 0.0
    %2166 = vmatprep.subr.mxu0 0.0
    %2167 = vmatpush1.xpose.msra.mxu0 0.0
    %2168 = vmatprep.subr.mxu0 0.0
    %2169 = vmatpush1.xpose.msra.mxu0 0.0
    %2170 = vmatprep.subr.mxu0 0.0
    %2171 = vmatpush1.xpose.msra.mxu0 0.0
    %2172 = vmatprep.subr.mxu0 0.0
    %2173 = vmatpush1.xpose.msra.mxu0 0.0
    %2174 = vmatprep.subr.mxu0 0.0
    %2175 = vmatpush1.xpose.msra.mxu0 0.0
    %2176 = vmatprep.subr.mxu0 0.0
    %2177 = vmatpush1.xpose.msra.mxu0 0.0
    %2178 = vmatprep.subr.mxu0 0.0
    %2179 = vmatpush1.xpose.msra.mxu0 0.0
    %2180 = vmatprep.subr.mxu0 0.0
    %2181 = vmatpush1.xpose.msra.mxu0 0.0
    %2182 = vmatprep.subr.mxu0 0.0
    %2183 = vmatpush1.xpose.msra.mxu0 0.0
    %2184 = vmatprep.subr.mxu0 0.0
    %2185 = vmatpush1.xpose.msra.mxu0 0.0
    %2186 = vmatprep.mubr.f32.mxu0 0.0
    %v2187 = vand.u32 %v1890, 4294901760
    %v2188 = vsub.f32 %v1890, %v2187
    %v2189 = vand.u32 %v2188, 4294901760
    %2190 = vmatmul.mubr.f32.gmra.mrb[0].mxu0 %v2189
    %v2191 = vpop.f32.mrb[0].mxu0
    %v2192 = vadd.f32 %v2118, %v2191
    %v2193 = vpop.f32.mrb[0].mxu0
    %2194 = vdwg.mxu0
    %2195 = vmatprep.subr.mxu0 0.0
    %v2196 = vand.u32 %v1893, 4294901760
    %v2197 = vsub.f32 %v1893, %v2196
    %v2198 = vand.u32 %v2197, 4294901760
    %2199 = vmatpush1.xpose.msra.mxu0 %v2198
    %2200 = vmatprep.subr.mxu0 0.0
    %2201 = vmatpush1.xpose.msra.mxu0 0.0
    %2202 = vmatprep.subr.mxu0 0.0
    %2203 = vmatpush1.xpose.msra.mxu0 0.0
    %2204 = vmatprep.subr.mxu0 0.0
    %2205 = vmatpush1.xpose.msra.mxu0 0.0
    %2206 = vmatprep.subr.mxu0 0.0
    %2207 = vmatpush1.xpose.msra.mxu0 0.0
    %2208 = vmatprep.subr.mxu0 0.0
    %2209 = vmatpush1.xpose.msra.mxu0 0.0
    %2210 = vmatprep.subr.mxu0 0.0
    %2211 = vmatpush1.xpose.msra.mxu0 0.0
    %2212 = vmatprep.subr.mxu0 0.0
    %2213 = vmatpush1.xpose.msra.mxu0 0.0
    %2214 = vmatprep.subr.mxu0 0.0
    %2215 = vmatpush1.xpose.msra.mxu0 0.0
    %2216 = vmatprep.subr.mxu0 0.0
    %2217 = vmatpush1.xpose.msra.mxu0 0.0
    %2218 = vmatprep.subr.mxu0 0.0
    %2219 = vmatpush1.xpose.msra.mxu0 0.0
    %2220 = vmatprep.subr.mxu0 0.0
    %2221 = vmatpush1.xpose.msra.mxu0 0.0
    %2222 = vmatprep.subr.mxu0 0.0
    %2223 = vmatpush1.xpose.msra.mxu0 0.0
    %2224 = vmatprep.subr.mxu0 0.0
    %2225 = vmatpush1.xpose.msra.mxu0 0.0
    %2226 = vmatprep.subr.mxu0 0.0
    %2227 = vmatpush1.xpose.msra.mxu0 0.0
    %2228 = vmatprep.subr.mxu0 0.0
    %2229 = vmatpush1.xpose.msra.mxu0 0.0
    %2230 = vmatprep.subr.mxu0 0.0
    %2231 = vmatpush1.xpose.msra.mxu0 0.0
    %2232 = vmatprep.subr.mxu0 0.0
    %2233 = vmatpush1.xpose.msra.mxu0 0.0
    %2234 = vmatprep.subr.mxu0 0.0
    %2235 = vmatpush1.xpose.msra.mxu0 0.0
    %2236 = vmatprep.subr.mxu0 0.0
    %2237 = vmatpush1.xpose.msra.mxu0 0.0
    %2238 = vmatprep.subr.mxu0 0.0
    %2239 = vmatpush1.xpose.msra.mxu0 0.0
    %2240 = vmatprep.subr.mxu0 0.0
    %2241 = vmatpush1.xpose.msra.mxu0 0.0
    %2242 = vmatprep.subr.mxu0 0.0
    %2243 = vmatpush1.xpose.msra.mxu0 0.0
    %2244 = vmatprep.subr.mxu0 0.0
    %2245 = vmatpush1.xpose.msra.mxu0 0.0
    %2246 = vmatprep.subr.mxu0 0.0
    %2247 = vmatpush1.xpose.msra.mxu0 0.0
    %2248 = vmatprep.subr.mxu0 0.0
    %2249 = vmatpush1.xpose.msra.mxu0 0.0
    %2250 = vmatprep.subr.mxu0 0.0
    %2251 = vmatpush1.xpose.msra.mxu0 0.0
    %2252 = vmatprep.subr.mxu0 0.0
    %2253 = vmatpush1.xpose.msra.mxu0 0.0
    %2254 = vmatprep.subr.mxu0 0.0
    %2255 = vmatpush1.xpose.msra.mxu0 0.0
    %2256 = vmatprep.subr.mxu0 0.0
    %2257 = vmatpush1.xpose.msra.mxu0 0.0
    %2258 = vmatprep.subr.mxu0 0.0
    %2259 = vmatpush1.xpose.msra.mxu0 0.0
    %2260 = vmatprep.subr.mxu0 0.0
    %2261 = vmatpush1.xpose.msra.mxu0 0.0
    %2262 = vmatprep.mubr.f32.mxu0 0.0
    %v2263 = vand.u32 %v1890, 4294901760
    %2264 = vmatmul.mubr.f32.gmra.mrb[0].mxu0 %v2263
    %v2265 = vpop.f32.mrb[0].mxu0
    %v2266 = vadd.f32 %v2192, %v2265
    %v2267 = vpop.f32.mrb[0].mxu0
    %2268 = vdwg.mxu0
    %2269 = vmatprep.subr.mxu0 0.0
    %v2270 = vand.u32 %v1893, 4294901760
    %2271 = vmatpush1.xpose.msra.mxu0 %v2270
    %2272 = vmatprep.subr.mxu0 0.0
    %2273 = vmatpush1.xpose.msra.mxu0 0.0
    %2274 = vmatprep.subr.mxu0 0.0
    %2275 = vmatpush1.xpose.msra.mxu0 0.0
    %2276 = vmatprep.subr.mxu0 0.0
    %2277 = vmatpush1.xpose.msra.mxu0 0.0
    %2278 = vmatprep.subr.mxu0 0.0
    %2279 = vmatpush1.xpose.msra.mxu0 0.0
    %2280 = vmatprep.subr.mxu0 0.0
    %2281 = vmatpush1.xpose.msra.mxu0 0.0
    %2282 = vmatprep.subr.mxu0 0.0
    %2283 = vmatpush1.xpose.msra.mxu0 0.0
    %2284 = vmatprep.subr.mxu0 0.0
    %2285 = vmatpush1.xpose.msra.mxu0 0.0
    %2286 = vmatprep.subr.mxu0 0.0
    %2287 = vmatpush1.xpose.msra.mxu0 0.0
    %2288 = vmatprep.subr.mxu0 0.0
    %2289 = vmatpush1.xpose.msra.mxu0 0.0
    %2290 = vmatprep.subr.mxu0 0.0
    %2291 = vmatpush1.xpose.msra.mxu0 0.0
    %2292 = vmatprep.subr.mxu0 0.0
    %2293 = vmatpush1.xpose.msra.mxu0 0.0
    %2294 = vmatprep.subr.mxu0 0.0
    %2295 = vmatpush1.xpose.msra.mxu0 0.0
    %2296 = vmatprep.subr.mxu0 0.0
    %2297 = vmatpush1.xpose.msra.mxu0 0.0
    %2298 = vmatprep.subr.mxu0 0.0
    %2299 = vmatpush1.xpose.msra.mxu0 0.0
    %2300 = vmatprep.subr.mxu0 0.0
    %2301 = vmatpush1.xpose.msra.mxu0 0.0
    %2302 = vmatprep.subr.mxu0 0.0
    %2303 = vmatpush1.xpose.msra.mxu0 0.0
    %2304 = vmatprep.subr.mxu0 0.0
    %2305 = vmatpush1.xpose.msra.mxu0 0.0
    %2306 = vmatprep.subr.mxu0 0.0
    %2307 = vmatpush1.xpose.msra.mxu0 0.0
    %2308 = vmatprep.subr.mxu0 0.0
    %2309 = vmatpush1.xpose.msra.mxu0 0.0
    %2310 = vmatprep.subr.mxu0 0.0
    %2311 = vmatpush1.xpose.msra.mxu0 0.0
    %2312 = vmatprep.subr.mxu0 0.0
    %2313 = vmatpush1.xpose.msra.mxu0 0.0
    %2314 = vmatprep.subr.mxu0 0.0
    %2315 = vmatpush1.xpose.msra.mxu0 0.0
    %2316 = vmatprep.subr.mxu0 0.0
    %2317 = vmatpush1.xpose.msra.mxu0 0.0
    %2318 = vmatprep.subr.mxu0 0.0
    %2319 = vmatpush1.xpose.msra.mxu0 0.0
    %2320 = vmatprep.subr.mxu0 0.0
    %2321 = vmatpush1.xpose.msra.mxu0 0.0
    %2322 = vmatprep.subr.mxu0 0.0
    %2323 = vmatpush1.xpose.msra.mxu0 0.0
    %2324 = vmatprep.subr.mxu0 0.0
    %2325 = vmatpush1.xpose.msra.mxu0 0.0
    %2326 = vmatprep.subr.mxu0 0.0
    %2327 = vmatpush1.xpose.msra.mxu0 0.0
    %2328 = vmatprep.subr.mxu0 0.0
    %2329 = vmatpush1.xpose.msra.mxu0 0.0
    %2330 = vmatprep.subr.mxu0 0.0
    %2331 = vmatpush1.xpose.msra.mxu0 0.0
    %2332 = vmatprep.subr.mxu0 0.0
    %2333 = vmatpush1.xpose.msra.mxu0 0.0
    %2334 = vmatprep.mubr.f32.mxu0 0.0
    %v2335 = vand.u32 %v1890, 4294901760
    %2336 = vmatmul.mubr.f32.gmra.mrb[0].mxu0 %v2335
    %v2337 = vpop.f32.mrb[0].mxu0
    %v2338 = vadd.f32 %v2266, %v2337
    %v2339 = vpop.f32.mrb[0].mxu0
    %2340 = vdwg.mxu0
    %v2342 = vsel %vm80, %v61, 0
    %v2345 = vsel %vm80, %v69, 0
    %2347 = vmatprep.subr.mxu0 0.0
    %v2348 = vand.u32 %v2345, 4294901760
    %2349 = vmatpush1.xpose.msra.mxu0 %v2348
    %2350 = vmatprep.subr.mxu0 0.0
    %2351 = vmatpush1.xpose.msra.mxu0 0.0
    %2352 = vmatprep.subr.mxu0 0.0
    %2353 = vmatpush1.xpose.msra.mxu0 0.0
    %2354 = vmatprep.subr.mxu0 0.0
    %2355 = vmatpush1.xpose.msra.mxu0 0.0
    %2356 = vmatprep.subr.mxu0 0.0
    %2357 = vmatpush1.xpose.msra.mxu0 0.0
    %2358 = vmatprep.subr.mxu0 0.0
    %2359 = vmatpush1.xpose.msra.mxu0 0.0
    %2360 = vmatprep.subr.mxu0 0.0
    %2361 = vmatpush1.xpose.msra.mxu0 0.0
    %2362 = vmatprep.subr.mxu0 0.0
    %2363 = vmatpush1.xpose.msra.mxu0 0.0
    %2364 = vmatprep.subr.mxu0 0.0
    %2365 = vmatpush1.xpose.msra.mxu0 0.0
    %2366 = vmatprep.subr.mxu0 0.0
    %2367 = vmatpush1.xpose.msra.mxu0 0.0
    %2368 = vmatprep.subr.mxu0 0.0
    %2369 = vmatpush1.xpose.msra.mxu0 0.0
    %2370 = vmatprep.subr.mxu0 0.0
    %2371 = vmatpush1.xpose.msra.mxu0 0.0
    %2372 = vmatprep.subr.mxu0 0.0
    %2373 = vmatpush1.xpose.msra.mxu0 0.0
    %2374 = vmatprep.subr.mxu0 0.0
    %2375 = vmatpush1.xpose.msra.mxu0 0.0
    %2376 = vmatprep.subr.mxu0 0.0
    %2377 = vmatpush1.xpose.msra.mxu0 0.0
    %2378 = vmatprep.subr.mxu0 0.0
    %2379 = vmatpush1.xpose.msra.mxu0 0.0
    %2380 = vmatprep.subr.mxu0 0.0
    %2381 = vmatpush1.xpose.msra.mxu0 0.0
    %2382 = vmatprep.subr.mxu0 0.0
    %2383 = vmatpush1.xpose.msra.mxu0 0.0
    %2384 = vmatprep.subr.mxu0 0.0
    %2385 = vmatpush1.xpose.msra.mxu0 0.0
    %2386 = vmatprep.subr.mxu0 0.0
    %2387 = vmatpush1.xpose.msra.mxu0 0.0
    %2388 = vmatprep.subr.mxu0 0.0
    %2389 = vmatpush1.xpose.msra.mxu0 0.0
    %2390 = vmatprep.subr.mxu0 0.0
    %2391 = vmatpush1.xpose.msra.mxu0 0.0
    %2392 = vmatprep.subr.mxu0 0.0
    %2393 = vmatpush1.xpose.msra.mxu0 0.0
    %2394 = vmatprep.subr.mxu0 0.0
    %2395 = vmatpush1.xpose.msra.mxu0 0.0
    %2396 = vmatprep.subr.mxu0 0.0
    %2397 = vmatpush1.xpose.msra.mxu0 0.0
    %2398 = vmatprep.subr.mxu0 0.0
    %2399 = vmatpush1.xpose.msra.mxu0 0.0
    %2400 = vmatprep.subr.mxu0 0.0
    %2401 = vmatpush1.xpose.msra.mxu0 0.0
    %2402 = vmatprep.subr.mxu0 0.0
    %2403 = vmatpush1.xpose.msra.mxu0 0.0
    %2404 = vmatprep.subr.mxu0 0.0
    %2405 = vmatpush1.xpose.msra.mxu0 0.0
    %2406 = vmatprep.subr.mxu0 0.0
    %2407 = vmatpush1.xpose.msra.mxu0 0.0
    %2408 = vmatprep.subr.mxu0 0.0
    %2409 = vmatpush1.xpose.msra.mxu0 0.0
    %2410 = vmatprep.subr.mxu0 0.0
    %2411 = vmatpush1.xpose.msra.mxu0 0.0
    %2412 = vmatprep.mubr.f32.mxu0 0.0
    %v2413 = vand.u32 %v2342, 4294901760
    %v2414 = vsub.f32 %v2342, %v2413
    %v2415 = vand.u32 %v2414, 4294901760
    %v2416 = vsub.f32 %v2414, %v2415
    %v2417 = vand.u32 %v2416, 4294901760
    %2418 = vmatmul.mubr.f32.gmra.mrb[0].mxu0 %v2417
    %v2419 = vpop.f32.mrb[0].mxu0
    %v2420 = vadd.f32 0.0, %v2419
    %v2421 = vpop.f32.mrb[0].mxu0
    %2422 = vdwg.mxu0
    %2423 = vmatprep.subr.mxu0 0.0
    %v2424 = vand.u32 %v2345, 4294901760
    %v2425 = vsub.f32 %v2345, %v2424
    %v2426 = vand.u32 %v2425, 4294901760
    %v2427 = vsub.f32 %v2425, %v2426
    %v2428 = vand.u32 %v2427, 4294901760
    %2429 = vmatpush1.xpose.msra.mxu0 %v2428
    %2430 = vmatprep.subr.mxu0 0.0
    %2431 = vmatpush1.xpose.msra.mxu0 0.0
    %2432 = vmatprep.subr.mxu0 0.0
    %2433 = vmatpush1.xpose.msra.mxu0 0.0
    %2434 = vmatprep.subr.mxu0 0.0
    %2435 = vmatpush1.xpose.msra.mxu0 0.0
    %2436 = vmatprep.subr.mxu0 0.0
    %2437 = vmatpush1.xpose.msra.mxu0 0.0
    %2438 = vmatprep.subr.mxu0 0.0
    %2439 = vmatpush1.xpose.msra.mxu0 0.0
    %2440 = vmatprep.subr.mxu0 0.0
    %2441 = vmatpush1.xpose.msra.mxu0 0.0
    %2442 = vmatprep.subr.mxu0 0.0
    %2443 = vmatpush1.xpose.msra.mxu0 0.0
    %2444 = vmatprep.subr.mxu0 0.0
    %2445 = vmatpush1.xpose.msra.mxu0 0.0
    %2446 = vmatprep.subr.mxu0 0.0
    %2447 = vmatpush1.xpose.msra.mxu0 0.0
    %2448 = vmatprep.subr.mxu0 0.0
    %2449 = vmatpush1.xpose.msra.mxu0 0.0
    %2450 = vmatprep.subr.mxu0 0.0
    %2451 = vmatpush1.xpose.msra.mxu0 0.0
    %2452 = vmatprep.subr.mxu0 0.0
    %2453 = vmatpush1.xpose.msra.mxu0 0.0
    %2454 = vmatprep.subr.mxu0 0.0
    %2455 = vmatpush1.xpose.msra.mxu0 0.0
    %2456 = vmatprep.subr.mxu0 0.0
    %2457 = vmatpush1.xpose.msra.mxu0 0.0
    %2458 = vmatprep.subr.mxu0 0.0
    %2459 = vmatpush1.xpose.msra.mxu0 0.0
    %2460 = vmatprep.subr.mxu0 0.0
    %2461 = vmatpush1.xpose.msra.mxu0 0.0
    %2462 = vmatprep.subr.mxu0 0.0
    %2463 = vmatpush1.xpose.msra.mxu0 0.0
    %2464 = vmatprep.subr.mxu0 0.0
    %2465 = vmatpush1.xpose.msra.mxu0 0.0
    %2466 = vmatprep.subr.mxu0 0.0
    %2467 = vmatpush1.xpose.msra.mxu0 0.0
    %2468 = vmatprep.subr.mxu0 0.0
    %2469 = vmatpush1.xpose.msra.mxu0 0.0
    %2470 = vmatprep.subr.mxu0 0.0
    %2471 = vmatpush1.xpose.msra.mxu0 0.0
    %2472 = vmatprep.subr.mxu0 0.0
    %2473 = vmatpush1.xpose.msra.mxu0 0.0
    %2474 = vmatprep.subr.mxu0 0.0
    %2475 = vmatpush1.xpose.msra.mxu0 0.0
    %2476 = vmatprep.subr.mxu0 0.0
    %2477 = vmatpush1.xpose.msra.mxu0 0.0
    %2478 = vmatprep.subr.mxu0 0.0
    %2479 = vmatpush1.xpose.msra.mxu0 0.0
    %2480 = vmatprep.subr.mxu0 0.0
    %2481 = vmatpush1.xpose.msra.mxu0 0.0
    %2482 = vmatprep.subr.mxu0 0.0
    %2483 = vmatpush1.xpose.msra.mxu0 0.0
    %2484 = vmatprep.subr.mxu0 0.0
    %2485 = vmatpush1.xpose.msra.mxu0 0.0
    %2486 = vmatprep.subr.mxu0 0.0
    %2487 = vmatpush1.xpose.msra.mxu0 0.0
    %2488 = vmatprep.subr.mxu0 0.0
    %2489 = vmatpush1.xpose.msra.mxu0 0.0
    %2490 = vmatprep.subr.mxu0 0.0
    %2491 = vmatpush1.xpose.msra.mxu0 0.0
    %2492 = vmatprep.mubr.f32.mxu0 0.0
    %v2493 = vand.u32 %v2342, 4294901760
    %2494 = vmatmul.mubr.f32.gmra.mrb[0].mxu0 %v2493
    %v2495 = vpop.f32.mrb[0].mxu0
    %v2496 = vadd.f32 %v2420, %v2495
    %v2497 = vpop.f32.mrb[0].mxu0
    %2498 = vdwg.mxu0
    %2499 = vmatprep.subr.mxu0 0.0
    %v2500 = vand.u32 %v2345, 4294901760
    %v2501 = vsub.f32 %v2345, %v2500
    %2502 = vmatpush1.xpose.msra.mxu0 %v2501
    %2503 = vmatprep.subr.mxu0 0.0
    %2504 = vmatpush1.xpose.msra.mxu0 0.0
    %2505 = vmatprep.subr.mxu0 0.0
    %2506 = vmatpush1.xpose.msra.mxu0 0.0
    %2507 = vmatprep.subr.mxu0 0.0
    %2508 = vmatpush1.xpose.msra.mxu0 0.0
    %2509 = vmatprep.subr.mxu0 0.0
    %2510 = vmatpush1.xpose.msra.mxu0 0.0
    %2511 = vmatprep.subr.mxu0 0.0
    %2512 = vmatpush1.xpose.msra.mxu0 0.0
    %2513 = vmatprep.subr.mxu0 0.0
    %2514 = vmatpush1.xpose.msra.mxu0 0.0
    %2515 = vmatprep.subr.mxu0 0.0
    %2516 = vmatpush1.xpose.msra.mxu0 0.0
    %2517 = vmatprep.subr.mxu0 0.0
    %2518 = vmatpush1.xpose.msra.mxu0 0.0
    %2519 = vmatprep.subr.mxu0 0.0
    %2520 = vmatpush1.xpose.msra.mxu0 0.0
    %2521 = vmatprep.subr.mxu0 0.0
    %2522 = vmatpush1.xpose.msra.mxu0 0.0
    %2523 = vmatprep.subr.mxu0 0.0
    %2524 = vmatpush1.xpose.msra.mxu0 0.0
    %2525 = vmatprep.subr.mxu0 0.0
    %2526 = vmatpush1.xpose.msra.mxu0 0.0
    %2527 = vmatprep.subr.mxu0 0.0
    %2528 = vmatpush1.xpose.msra.mxu0 0.0
    %2529 = vmatprep.subr.mxu0 0.0
    %2530 = vmatpush1.xpose.msra.mxu0 0.0
    %2531 = vmatprep.subr.mxu0 0.0
    %2532 = vmatpush1.xpose.msra.mxu0 0.0
    %2533 = vmatprep.subr.mxu0 0.0
    %2534 = vmatpush1.xpose.msra.mxu0 0.0
    %2535 = vmatprep.subr.mxu0 0.0
    %2536 = vmatpush1.xpose.msra.mxu0 0.0
    %2537 = vmatprep.subr.mxu0 0.0
    %2538 = vmatpush1.xpose.msra.mxu0 0.0
    %2539 = vmatprep.subr.mxu0 0.0
    %2540 = vmatpush1.xpose.msra.mxu0 0.0
    %2541 = vmatprep.subr.mxu0 0.0
    %2542 = vmatpush1.xpose.msra.mxu0 0.0
    %2543 = vmatprep.subr.mxu0 0.0
    %2544 = vmatpush1.xpose.msra.mxu0 0.0
    %2545 = vmatprep.subr.mxu0 0.0
    %2546 = vmatpush1.xpose.msra.mxu0 0.0
    %2547 = vmatprep.subr.mxu0 0.0
    %2548 = vmatpush1.xpose.msra.mxu0 0.0
    %2549 = vmatprep.subr.mxu0 0.0
    %2550 = vmatpush1.xpose.msra.mxu0 0.0
    %2551 = vmatprep.subr.mxu0 0.0
    %2552 = vmatpush1.xpose.msra.mxu0 0.0
    %2553 = vmatprep.subr.mxu0 0.0
    %2554 = vmatpush1.xpose.msra.mxu0 0.0
    %2555 = vmatprep.subr.mxu0 0.0
    %2556 = vmatpush1.xpose.msra.mxu0 0.0
    %2557 = vmatprep.subr.mxu0 0.0
    %2558 = vmatpush1.xpose.msra.mxu0 0.0
    %2559 = vmatprep.subr.mxu0 0.0
    %2560 = vmatpush1.xpose.msra.mxu0 0.0
    %2561 = vmatprep.subr.mxu0 0.0
    %2562 = vmatpush1.xpose.msra.mxu0 0.0
    %2563 = vmatprep.subr.mxu0 0.0
    %2564 = vmatpush1.xpose.msra.mxu0 0.0
    %2565 = vmatprep.mubr.f32.mxu0 0.0
    %v2566 = vand.u32 %v2342, 4294901760
    %v2567 = vsub.f32 %v2342, %v2566
    %2568 = vmatmul.mubr.f32.gmra.mrb[0].mxu0 %v2567
    %v2569 = vpop.f32.mrb[0].mxu0
    %v2570 = vadd.f32 %v2496, %v2569
    %v2571 = vpop.f32.mrb[0].mxu0
    %2572 = vdwg.mxu0
    %2573 = vmatprep.subr.mxu0 0.0
    %v2574 = vand.u32 %v2345, 4294901760
    %2575 = vmatpush1.xpose.msra.mxu0 %v2574
    %2576 = vmatprep.subr.mxu0 0.0
    %2577 = vmatpush1.xpose.msra.mxu0 0.0
    %2578 = vmatprep.subr.mxu0 0.0
    %2579 = vmatpush1.xpose.msra.mxu0 0.0
    %2580 = vmatprep.subr.mxu0 0.0
    %2581 = vmatpush1.xpose.msra.mxu0 0.0
    %2582 = vmatprep.subr.mxu0 0.0
    %2583 = vmatpush1.xpose.msra.mxu0 0.0
    %2584 = vmatprep.subr.mxu0 0.0
    %2585 = vmatpush1.xpose.msra.mxu0 0.0
    %2586 = vmatprep.subr.mxu0 0.0
    %2587 = vmatpush1.xpose.msra.mxu0 0.0
    %2588 = vmatprep.subr.mxu0 0.0
    %2589 = vmatpush1.xpose.msra.mxu0 0.0
    %2590 = vmatprep.subr.mxu0 0.0
    %2591 = vmatpush1.xpose.msra.mxu0 0.0
    %2592 = vmatprep.subr.mxu0 0.0
    %2593 = vmatpush1.xpose.msra.mxu0 0.0
    %2594 = vmatprep.subr.mxu0 0.0
    %2595 = vmatpush1.xpose.msra.mxu0 0.0
    %2596 = vmatprep.subr.mxu0 0.0
    %2597 = vmatpush1.xpose.msra.mxu0 0.0
    %2598 = vmatprep.subr.mxu0 0.0
    %2599 = vmatpush1.xpose.msra.mxu0 0.0
    %2600 = vmatprep.subr.mxu0 0.0
    %2601 = vmatpush1.xpose.msra.mxu0 0.0
    %2602 = vmatprep.subr.mxu0 0.0
    %2603 = vmatpush1.xpose.msra.mxu0 0.0
    %2604 = vmatprep.subr.mxu0 0.0
    %2605 = vmatpush1.xpose.msra.mxu0 0.0
    %2606 = vmatprep.subr.mxu0 0.0
    %2607 = vmatpush1.xpose.msra.mxu0 0.0
    %2608 = vmatprep.subr.mxu0 0.0
    %2609 = vmatpush1.xpose.msra.mxu0 0.0
    %2610 = vmatprep.subr.mxu0 0.0
    %2611 = vmatpush1.xpose.msra.mxu0 0.0
    %2612 = vmatprep.subr.mxu0 0.0
    %2613 = vmatpush1.xpose.msra.mxu0 0.0
    %2614 = vmatprep.subr.mxu0 0.0
    %2615 = vmatpush1.xpose.msra.mxu0 0.0
    %2616 = vmatprep.subr.mxu0 0.0
    %2617 = vmatpush1.xpose.msra.mxu0 0.0
    %2618 = vmatprep.subr.mxu0 0.0
    %2619 = vmatpush1.xpose.msra.mxu0 0.0
    %2620 = vmatprep.subr.mxu0 0.0
    %2621 = vmatpush1.xpose.msra.mxu0 0.0
    %2622 = vmatprep.subr.mxu0 0.0
    %2623 = vmatpush1.xpose.msra.mxu0 0.0
    %2624 = vmatprep.subr.mxu0 0.0
    %2625 = vmatpush1.xpose.msra.mxu0 0.0
    %2626 = vmatprep.subr.mxu0 0.0
    %2627 = vmatpush1.xpose.msra.mxu0 0.0
    %2628 = vmatprep.subr.mxu0 0.0
    %2629 = vmatpush1.xpose.msra.mxu0 0.0
    %2630 = vmatprep.subr.mxu0 0.0
    %2631 = vmatpush1.xpose.msra.mxu0 0.0
    %2632 = vmatprep.subr.mxu0 0.0
    %2633 = vmatpush1.xpose.msra.mxu0 0.0
    %2634 = vmatprep.subr.mxu0 0.0
    %2635 = vmatpush1.xpose.msra.mxu0 0.0
    %2636 = vmatprep.subr.mxu0 0.0
    %2637 = vmatpush1.xpose.msra.mxu0 0.0
    %2638 = vmatprep.mubr.f32.mxu0 0.0
    %v2639 = vand.u32 %v2342, 4294901760
    %v2640 = vsub.f32 %v2342, %v2639
    %v2641 = vand.u32 %v2640, 4294901760
    %2642 = vmatmul.mubr.f32.gmra.mrb[0].mxu0 %v2641
    %v2643 = vpop.f32.mrb[0].mxu0
    %v2644 = vadd.f32 %v2570, %v2643
    %v2645 = vpop.f32.mrb[0].mxu0
    %2646 = vdwg.mxu0
    %2647 = vmatprep.subr.mxu0 0.0
    %v2648 = vand.u32 %v2345, 4294901760
    %v2649 = vsub.f32 %v2345, %v2648
    %v2650 = vand.u32 %v2649, 4294901760
    %2651 = vmatpush1.xpose.msra.mxu0 %v2650
    %2652 = vmatprep.subr.mxu0 0.0
    %2653 = vmatpush1.xpose.msra.mxu0 0.0
    %2654 = vmatprep.subr.mxu0 0.0
    %2655 = vmatpush1.xpose.msra.mxu0 0.0
    %2656 = vmatprep.subr.mxu0 0.0
    %2657 = vmatpush1.xpose.msra.mxu0 0.0
    %2658 = vmatprep.subr.mxu0 0.0
    %2659 = vmatpush1.xpose.msra.mxu0 0.0
    %2660 = vmatprep.subr.mxu0 0.0
    %2661 = vmatpush1.xpose.msra.mxu0 0.0
    %2662 = vmatprep.subr.mxu0 0.0
    %2663 = vmatpush1.xpose.msra.mxu0 0.0
    %2664 = vmatprep.subr.mxu0 0.0
    %2665 = vmatpush1.xpose.msra.mxu0 0.0
    %2666 = vmatprep.subr.mxu0 0.0
    %2667 = vmatpush1.xpose.msra.mxu0 0.0
    %2668 = vmatprep.subr.mxu0 0.0
    %2669 = vmatpush1.xpose.msra.mxu0 0.0
    %2670 = vmatprep.subr.mxu0 0.0
    %2671 = vmatpush1.xpose.msra.mxu0 0.0
    %2672 = vmatprep.subr.mxu0 0.0
    %2673 = vmatpush1.xpose.msra.mxu0 0.0
    %2674 = vmatprep.subr.mxu0 0.0
    %2675 = vmatpush1.xpose.msra.mxu0 0.0
    %2676 = vmatprep.subr.mxu0 0.0
    %2677 = vmatpush1.xpose.msra.mxu0 0.0
    %2678 = vmatprep.subr.mxu0 0.0
    %2679 = vmatpush1.xpose.msra.mxu0 0.0
    %2680 = vmatprep.subr.mxu0 0.0
    %2681 = vmatpush1.xpose.msra.mxu0 0.0
    %2682 = vmatprep.subr.mxu0 0.0
    %2683 = vmatpush1.xpose.msra.mxu0 0.0
    %2684 = vmatprep.subr.mxu0 0.0
    %2685 = vmatpush1.xpose.msra.mxu0 0.0
    %2686 = vmatprep.subr.mxu0 0.0
    %2687 = vmatpush1.xpose.msra.mxu0 0.0
    %2688 = vmatprep.subr.mxu0 0.0
    %2689 = vmatpush1.xpose.msra.mxu0 0.0
    %2690 = vmatprep.subr.mxu0 0.0
    %2691 = vmatpush1.xpose.msra.mxu0 0.0
    %2692 = vmatprep.subr.mxu0 0.0
    %2693 = vmatpush1.xpose.msra.mxu0 0.0
    %2694 = vmatprep.subr.mxu0 0.0
    %2695 = vmatpush1.xpose.msra.mxu0 0.0
    %2696 = vmatprep.subr.mxu0 0.0
    %2697 = vmatpush1.xpose.msra.mxu0 0.0
    %2698 = vmatprep.subr.mxu0 0.0
    %2699 = vmatpush1.xpose.msra.mxu0 0.0
    %2700 = vmatprep.subr.mxu0 0.0
    %2701 = vmatpush1.xpose.msra.mxu0 0.0
    %2702 = vmatprep.subr.mxu0 0.0
    %2703 = vmatpush1.xpose.msra.mxu0 0.0
    %2704 = vmatprep.subr.mxu0 0.0
    %2705 = vmatpush1.xpose.msra.mxu0 0.0
    %2706 = vmatprep.subr.mxu0 0.0
    %2707 = vmatpush1.xpose.msra.mxu0 0.0
    %2708 = vmatprep.subr.mxu0 0.0
    %2709 = vmatpush1.xpose.msra.mxu0 0.0
    %2710 = vmatprep.subr.mxu0 0.0
    %2711 = vmatpush1.xpose.msra.mxu0 0.0
    %2712 = vmatprep.subr.mxu0 0.0
    %2713 = vmatpush1.xpose.msra.mxu0 0.0
    %2714 = vmatprep.mubr.f32.mxu0 0.0
    %v2715 = vand.u32 %v2342, 4294901760
    %2716 = vmatmul.mubr.f32.gmra.mrb[0].mxu0 %v2715
    %v2717 = vpop.f32.mrb[0].mxu0
    %v2718 = vadd.f32 %v2644, %v2717
    %v2719 = vpop.f32.mrb[0].mxu0
    %2720 = vdwg.mxu0
    %2721 = vmatprep.subr.mxu0 0.0
    %v2722 = vand.u32 %v2345, 4294901760
    %2723 = vmatpush1.xpose.msra.mxu0 %v2722
    %2724 = vmatprep.subr.mxu0 0.0
    %2725 = vmatpush1.xpose.msra.mxu0 0.0
    %2726 = vmatprep.subr.mxu0 0.0
    %2727 = vmatpush1.xpose.msra.mxu0 0.0
    %2728 = vmatprep.subr.mxu0 0.0
    %2729 = vmatpush1.xpose.msra.mxu0 0.0
    %2730 = vmatprep.subr.mxu0 0.0
    %2731 = vmatpush1.xpose.msra.mxu0 0.0
    %2732 = vmatprep.subr.mxu0 0.0
    %2733 = vmatpush1.xpose.msra.mxu0 0.0
    %2734 = vmatprep.subr.mxu0 0.0
    %2735 = vmatpush1.xpose.msra.mxu0 0.0
    %2736 = vmatprep.subr.mxu0 0.0
    %2737 = vmatpush1.xpose.msra.mxu0 0.0
    %2738 = vmatprep.subr.mxu0 0.0
    %2739 = vmatpush1.xpose.msra.mxu0 0.0
    %2740 = vmatprep.subr.mxu0 0.0
    %2741 = vmatpush1.xpose.msra.mxu0 0.0
    %2742 = vmatprep.subr.mxu0 0.0
    %2743 = vmatpush1.xpose.msra.mxu0 0.0
    %2744 = vmatprep.subr.mxu0 0.0
    %2745 = vmatpush1.xpose.msra.mxu0 0.0
    %2746 = vmatprep.subr.mxu0 0.0
    %2747 = vmatpush1.xpose.msra.mxu0 0.0
    %2748 = vmatprep.subr.mxu0 0.0
    %2749 = vmatpush1.xpose.msra.mxu0 0.0
    %2750 = vmatprep.subr.mxu0 0.0
    %2751 = vmatpush1.xpose.msra.mxu0 0.0
    %2752 = vmatprep.subr.mxu0 0.0
    %2753 = vmatpush1.xpose.msra.mxu0 0.0
    %2754 = vmatprep.subr.mxu0 0.0
    %2755 = vmatpush1.xpose.msra.mxu0 0.0
    %2756 = vmatprep.subr.mxu0 0.0
    %2757 = vmatpush1.xpose.msra.mxu0 0.0
    %2758 = vmatprep.subr.mxu0 0.0
    %2759 = vmatpush1.xpose.msra.mxu0 0.0
    %2760 = vmatprep.subr.mxu0 0.0
    %2761 = vmatpush1.xpose.msra.mxu0 0.0
    %2762 = vmatprep.subr.mxu0 0.0
    %2763 = vmatpush1.xpose.msra.mxu0 0.0
    %2764 = vmatprep.subr.mxu0 0.0
    %2765 = vmatpush1.xpose.msra.mxu0 0.0
    %2766 = vmatprep.subr.mxu0 0.0
    %2767 = vmatpush1.xpose.msra.mxu0 0.0
    %2768 = vmatprep.subr.mxu0 0.0
    %2769 = vmatpush1.xpose.msra.mxu0 0.0
    %2770 = vmatprep.subr.mxu0 0.0
    %2771 = vmatpush1.xpose.msra.mxu0 0.0
    %2772 = vmatprep.subr.mxu0 0.0
    %2773 = vmatpush1.xpose.msra.mxu0 0.0
    %2774 = vmatprep.subr.mxu0 0.0
    %2775 = vmatpush1.xpose.msra.mxu0 0.0
    %2776 = vmatprep.subr.mxu0 0.0
    %2777 = vmatpush1.xpose.msra.mxu0 0.0
    %2778 = vmatprep.subr.mxu0 0.0
    %2779 = vmatpush1.xpose.msra.mxu0 0.0
    %2780 = vmatprep.subr.mxu0 0.0
    %2781 = vmatpush1.xpose.msra.mxu0 0.0
    %2782 = vmatprep.subr.mxu0 0.0
    %2783 = vmatpush1.xpose.msra.mxu0 0.0
    %2784 = vmatprep.subr.mxu0 0.0
    %2785 = vmatpush1.xpose.msra.mxu0 0.0
    %2786 = vmatprep.mubr.f32.mxu0 0.0
    %v2787 = vand.u32 %v2342, 4294901760
    %2788 = vmatmul.mubr.f32.gmra.mrb[0].mxu0 %v2787
    %v2789 = vpop.f32.mrb[0].mxu0
    %v2790 = vadd.f32 %v2718, %v2789
    %v2791 = vpop.f32.mrb[0].mxu0
    %2792 = vdwg.mxu0
    %v2794 = vsel %vm80, %v62, 0
    %v2797 = vsel %vm80, %v70, 0
    %2799 = vmatprep.subr.mxu0 0.0
    %v2800 = vand.u32 %v2797, 4294901760
    %2801 = vmatpush1.xpose.msra.mxu0 %v2800
    %2802 = vmatprep.subr.mxu0 0.0
    %2803 = vmatpush1.xpose.msra.mxu0 0.0
    %2804 = vmatprep.subr.mxu0 0.0
    %2805 = vmatpush1.xpose.msra.mxu0 0.0
    %2806 = vmatprep.subr.mxu0 0.0
    %2807 = vmatpush1.xpose.msra.mxu0 0.0
    %2808 = vmatprep.subr.mxu0 0.0
    %2809 = vmatpush1.xpose.msra.mxu0 0.0
    %2810 = vmatprep.subr.mxu0 0.0
    %2811 = vmatpush1.xpose.msra.mxu0 0.0
    %2812 = vmatprep.subr.mxu0 0.0
    %2813 = vmatpush1.xpose.msra.mxu0 0.0
    %2814 = vmatprep.subr.mxu0 0.0
    %2815 = vmatpush1.xpose.msra.mxu0 0.0
    %2816 = vmatprep.subr.mxu0 0.0
    %2817 = vmatpush1.xpose.msra.mxu0 0.0
    %2818 = vmatprep.subr.mxu0 0.0
    %2819 = vmatpush1.xpose.msra.mxu0 0.0
    %2820 = vmatprep.subr.mxu0 0.0
    %2821 = vmatpush1.xpose.msra.mxu0 0.0
    %2822 = vmatprep.subr.mxu0 0.0
    %2823 = vmatpush1.xpose.msra.mxu0 0.0
    %2824 = vmatprep.subr.mxu0 0.0
    %2825 = vmatpush1.xpose.msra.mxu0 0.0
    %2826 = vmatprep.subr.mxu0 0.0
    %2827 = vmatpush1.xpose.msra.mxu0 0.0
    %2828 = vmatprep.subr.mxu0 0.0
    %2829 = vmatpush1.xpose.msra.mxu0 0.0
    %2830 = vmatprep.subr.mxu0 0.0
    %2831 = vmatpush1.xpose.msra.mxu0 0.0
    %2832 = vmatprep.subr.mxu0 0.0
    %2833 = vmatpush1.xpose.msra.mxu0 0.0
    %2834 = vmatprep.subr.mxu0 0.0
    %2835 = vmatpush1.xpose.msra.mxu0 0.0
    %2836 = vmatprep.subr.mxu0 0.0
    %2837 = vmatpush1.xpose.msra.mxu0 0.0
    %2838 = vmatprep.subr.mxu0 0.0
    %2839 = vmatpush1.xpose.msra.mxu0 0.0
    %2840 = vmatprep.subr.mxu0 0.0
    %2841 = vmatpush1.xpose.msra.mxu0 0.0
    %2842 = vmatprep.subr.mxu0 0.0
    %2843 = vmatpush1.xpose.msra.mxu0 0.0
    %2844 = vmatprep.subr.mxu0 0.0
    %2845 = vmatpush1.xpose.msra.mxu0 0.0
    %2846 = vmatprep.subr.mxu0 0.0
    %2847 = vmatpush1.xpose.msra.mxu0 0.0
    %2848 = vmatprep.subr.mxu0 0.0
    %2849 = vmatpush1.xpose.msra.mxu0 0.0
    %2850 = vmatprep.subr.mxu0 0.0
    %2851 = vmatpush1.xpose.msra.mxu0 0.0
    %2852 = vmatprep.subr.mxu0 0.0
    %2853 = vmatpush1.xpose.msra.mxu0 0.0
    %2854 = vmatprep.subr.mxu0 0.0
    %2855 = vmatpush1.xpose.msra.mxu0 0.0
    %2856 = vmatprep.subr.mxu0 0.0
    %2857 = vmatpush1.xpose.msra.mxu0 0.0
    %2858 = vmatprep.subr.mxu0 0.0
    %2859 = vmatpush1.xpose.msra.mxu0 0.0
    %2860 = vmatprep.subr.mxu0 0.0
    %2861 = vmatpush1.xpose.msra.mxu0 0.0
    %2862 = vmatprep.subr.mxu0 0.0
    %2863 = vmatpush1.xpose.msra.mxu0 0.0
    %2864 = vmatprep.mubr.f32.mxu0 0.0
    %v2865 = vand.u32 %v2794, 4294901760
    %v2866 = vsub.f32 %v2794, %v2865
    %v2867 = vand.u32 %v2866, 4294901760
    %v2868 = vsub.f32 %v2866, %v2867
    %v2869 = vand.u32 %v2868, 4294901760
    %2870 = vmatmul.mubr.f32.gmra.mrb[0].mxu0 %v2869
    %v2871 = vpop.f32.mrb[0].mxu0
    %v2872 = vadd.f32 0.0, %v2871
    %v2873 = vpop.f32.mrb[0].mxu0
    %2874 = vdwg.mxu0
    %2875 = vmatprep.subr.mxu0 0.0
    %v2876 = vand.u32 %v2797, 4294901760
    %v2877 = vsub.f32 %v2797, %v2876
    %v2878 = vand.u32 %v2877, 4294901760
    %v2879 = vsub.f32 %v2877, %v2878
    %v2880 = vand.u32 %v2879, 4294901760
    %2881 = vmatpush1.xpose.msra.mxu0 %v2880
    %2882 = vmatprep.subr.mxu0 0.0
    %2883 = vmatpush1.xpose.msra.mxu0 0.0
    %2884 = vmatprep.subr.mxu0 0.0
    %2885 = vmatpush1.xpose.msra.mxu0 0.0
    %2886 = vmatprep.subr.mxu0 0.0
    %2887 = vmatpush1.xpose.msra.mxu0 0.0
    %2888 = vmatprep.subr.mxu0 0.0
    %2889 = vmatpush1.xpose.msra.mxu0 0.0
    %2890 = vmatprep.subr.mxu0 0.0
    %2891 = vmatpush1.xpose.msra.mxu0 0.0
    %2892 = vmatprep.subr.mxu0 0.0
    %2893 = vmatpush1.xpose.msra.mxu0 0.0
    %2894 = vmatprep.subr.mxu0 0.0
    %2895 = vmatpush1.xpose.msra.mxu0 0.0
    %2896 = vmatprep.subr.mxu0 0.0
    %2897 = vmatpush1.xpose.msra.mxu0 0.0
    %2898 = vmatprep.subr.mxu0 0.0
    %2899 = vmatpush1.xpose.msra.mxu0 0.0
    %2900 = vmatprep.subr.mxu0 0.0
    %2901 = vmatpush1.xpose.msra.mxu0 0.0
    %2902 = vmatprep.subr.mxu0 0.0
    %2903 = vmatpush1.xpose.msra.mxu0 0.0
    %2904 = vmatprep.subr.mxu0 0.0
    %2905 = vmatpush1.xpose.msra.mxu0 0.0
    %2906 = vmatprep.subr.mxu0 0.0
    %2907 = vmatpush1.xpose.msra.mxu0 0.0
    %2908 = vmatprep.subr.mxu0 0.0
    %2909 = vmatpush1.xpose.msra.mxu0 0.0
    %2910 = vmatprep.subr.mxu0 0.0
    %2911 = vmatpush1.xpose.msra.mxu0 0.0
    %2912 = vmatprep.subr.mxu0 0.0
    %2913 = vmatpush1.xpose.msra.mxu0 0.0
    %2914 = vmatprep.subr.mxu0 0.0
    %2915 = vmatpush1.xpose.msra.mxu0 0.0
    %2916 = vmatprep.subr.mxu0 0.0
    %2917 = vmatpush1.xpose.msra.mxu0 0.0
    %2918 = vmatprep.subr.mxu0 0.0
    %2919 = vmatpush1.xpose.msra.mxu0 0.0
    %2920 = vmatprep.subr.mxu0 0.0
    %2921 = vmatpush1.xpose.msra.mxu0 0.0
    %2922 = vmatprep.subr.mxu0 0.0
    %2923 = vmatpush1.xpose.msra.mxu0 0.0
    %2924 = vmatprep.subr.mxu0 0.0
    %2925 = vmatpush1.xpose.msra.mxu0 0.0
    %2926 = vmatprep.subr.mxu0 0.0
    %2927 = vmatpush1.xpose.msra.mxu0 0.0
    %2928 = vmatprep.subr.mxu0 0.0
    %2929 = vmatpush1.xpose.msra.mxu0 0.0
    %2930 = vmatprep.subr.mxu0 0.0
    %2931 = vmatpush1.xpose.msra.mxu0 0.0
    %2932 = vmatprep.subr.mxu0 0.0
    %2933 = vmatpush1.xpose.msra.mxu0 0.0
    %2934 = vmatprep.subr.mxu0 0.0
    %2935 = vmatpush1.xpose.msra.mxu0 0.0
    %2936 = vmatprep.subr.mxu0 0.0
    %2937 = vmatpush1.xpose.msra.mxu0 0.0
    %2938 = vmatprep.subr.mxu0 0.0
    %2939 = vmatpush1.xpose.msra.mxu0 0.0
    %2940 = vmatprep.subr.mxu0 0.0
    %2941 = vmatpush1.xpose.msra.mxu0 0.0
    %2942 = vmatprep.subr.mxu0 0.0
    %2943 = vmatpush1.xpose.msra.mxu0 0.0
    %2944 = vmatprep.mubr.f32.mxu0 0.0
    %v2945 = vand.u32 %v2794, 4294901760
    %2946 = vmatmul.mubr.f32.gmra.mrb[0].mxu0 %v2945
    %v2947 = vpop.f32.mrb[0].mxu0
    %v2948 = vadd.f32 %v2872, %v2947
    %v2949 = vpop.f32.mrb[0].mxu0
    %2950 = vdwg.mxu0
    %2951 = vmatprep.subr.mxu0 0.0
    %v2952 = vand.u32 %v2797, 4294901760
    %v2953 = vsub.f32 %v2797, %v2952
    %2954 = vmatpush1.xpose.msra.mxu0 %v2953
    %2955 = vmatprep.subr.mxu0 0.0
    %2956 = vmatpush1.xpose.msra.mxu0 0.0
    %2957 = vmatprep.subr.mxu0 0.0
    %2958 = vmatpush1.xpose.msra.mxu0 0.0
    %2959 = vmatprep.subr.mxu0 0.0
    %2960 = vmatpush1.xpose.msra.mxu0 0.0
    %2961 = vmatprep.subr.mxu0 0.0
    %2962 = vmatpush1.xpose.msra.mxu0 0.0
    %2963 = vmatprep.subr.mxu0 0.0
    %2964 = vmatpush1.xpose.msra.mxu0 0.0
    %2965 = vmatprep.subr.mxu0 0.0
    %2966 = vmatpush1.xpose.msra.mxu0 0.0
    %2967 = vmatprep.subr.mxu0 0.0
    %2968 = vmatpush1.xpose.msra.mxu0 0.0
    %2969 = vmatprep.subr.mxu0 0.0
    %2970 = vmatpush1.xpose.msra.mxu0 0.0
    %2971 = vmatprep.subr.mxu0 0.0
    %2972 = vmatpush1.xpose.msra.mxu0 0.0
    %2973 = vmatprep.subr.mxu0 0.0
    %2974 = vmatpush1.xpose.msra.mxu0 0.0
    %2975 = vmatprep.subr.mxu0 0.0
    %2976 = vmatpush1.xpose.msra.mxu0 0.0
    %2977 = vmatprep.subr.mxu0 0.0
    %2978 = vmatpush1.xpose.msra.mxu0 0.0
    %2979 = vmatprep.subr.mxu0 0.0
    %2980 = vmatpush1.xpose.msra.mxu0 0.0
    %2981 = vmatprep.subr.mxu0 0.0
    %2982 = vmatpush1.xpose.msra.mxu0 0.0
    %2983 = vmatprep.subr.mxu0 0.0
    %2984 = vmatpush1.xpose.msra.mxu0 0.0
    %2985 = vmatprep.subr.mxu0 0.0
    %2986 = vmatpush1.xpose.msra.mxu0 0.0
    %2987 = vmatprep.subr.mxu0 0.0
    %2988 = vmatpush1.xpose.msra.mxu0 0.0
    %2989 = vmatprep.subr.mxu0 0.0
    %2990 = vmatpush1.xpose.msra.mxu0 0.0
    %2991 = vmatprep.subr.mxu0 0.0
    %2992 = vmatpush1.xpose.msra.mxu0 0.0
    %2993 = vmatprep.subr.mxu0 0.0
    %2994 = vmatpush1.xpose.msra.mxu0 0.0
    %2995 = vmatprep.subr.mxu0 0.0
    %2996 = vmatpush1.xpose.msra.mxu0 0.0
    %2997 = vmatprep.subr.mxu0 0.0
    %2998 = vmatpush1.xpose.msra.mxu0 0.0
    %2999 = vmatprep.subr.mxu0 0.0
    %3000 = vmatpush1.xpose.msra.mxu0 0.0
    %3001 = vmatprep.subr.mxu0 0.0
    %3002 = vmatpush1.xpose.msra.mxu0 0.0
    %3003 = vmatprep.subr.mxu0 0.0
    %3004 = vmatpush1.xpose.msra.mxu0 0.0
    %3005 = vmatprep.subr.mxu0 0.0
    %3006 = vmatpush1.xpose.msra.mxu0 0.0
    %3007 = vmatprep.subr.mxu0 0.0
    %3008 = vmatpush1.xpose.msra.mxu0 0.0
    %3009 = vmatprep.subr.mxu0 0.0
    %3010 = vmatpush1.xpose.msra.mxu0 0.0
    %3011 = vmatprep.subr.mxu0 0.0
    %3012 = vmatpush1.xpose.msra.mxu0 0.0
    %3013 = vmatprep.subr.mxu0 0.0
    %3014 = vmatpush1.xpose.msra.mxu0 0.0
    %3015 = vmatprep.subr.mxu0 0.0
    %3016 = vmatpush1.xpose.msra.mxu0 0.0
    %3017 = vmatprep.mubr.f32.mxu0 0.0
    %v3018 = vand.u32 %v2794, 4294901760
    %v3019 = vsub.f32 %v2794, %v3018
    %3020 = vmatmul.mubr.f32.gmra.mrb[0].mxu0 %v3019
    %v3021 = vpop.f32.mrb[0].mxu0
    %v3022 = vadd.f32 %v2948, %v3021
    %v3023 = vpop.f32.mrb[0].mxu0
    %3024 = vdwg.mxu0
    %3025 = vmatprep.subr.mxu0 0.0
    %v3026 = vand.u32 %v2797, 4294901760
    %3027 = vmatpush1.xpose.msra.mxu0 %v3026
    %3028 = vmatprep.subr.mxu0 0.0
    %3029 = vmatpush1.xpose.msra.mxu0 0.0
    %3030 = vmatprep.subr.mxu0 0.0
    %3031 = vmatpush1.xpose.msra.mxu0 0.0
    %3032 = vmatprep.subr.mxu0 0.0
    %3033 = vmatpush1.xpose.msra.mxu0 0.0
    %3034 = vmatprep.subr.mxu0 0.0
    %3035 = vmatpush1.xpose.msra.mxu0 0.0
    %3036 = vmatprep.subr.mxu0 0.0
    %3037 = vmatpush1.xpose.msra.mxu0 0.0
    %3038 = vmatprep.subr.mxu0 0.0
    %3039 = vmatpush1.xpose.msra.mxu0 0.0
    %3040 = vmatprep.subr.mxu0 0.0
    %3041 = vmatpush1.xpose.msra.mxu0 0.0
    %3042 = vmatprep.subr.mxu0 0.0
    %3043 = vmatpush1.xpose.msra.mxu0 0.0
    %3044 = vmatprep.subr.mxu0 0.0
    %3045 = vmatpush1.xpose.msra.mxu0 0.0
    %3046 = vmatprep.subr.mxu0 0.0
    %3047 = vmatpush1.xpose.msra.mxu0 0.0
    %3048 = vmatprep.subr.mxu0 0.0
    %3049 = vmatpush1.xpose.msra.mxu0 0.0
    %3050 = vmatprep.subr.mxu0 0.0
    %3051 = vmatpush1.xpose.msra.mxu0 0.0
    %3052 = vmatprep.subr.mxu0 0.0
    %3053 = vmatpush1.xpose.msra.mxu0 0.0
    %3054 = vmatprep.subr.mxu0 0.0
    %3055 = vmatpush1.xpose.msra.mxu0 0.0
    %3056 = vmatprep.subr.mxu0 0.0
    %3057 = vmatpush1.xpose.msra.mxu0 0.0
    %3058 = vmatprep.subr.mxu0 0.0
    %3059 = vmatpush1.xpose.msra.mxu0 0.0
    %3060 = vmatprep.subr.mxu0 0.0
    %3061 = vmatpush1.xpose.msra.mxu0 0.0
    %3062 = vmatprep.subr.mxu0 0.0
    %3063 = vmatpush1.xpose.msra.mxu0 0.0
    %3064 = vmatprep.subr.mxu0 0.0
    %3065 = vmatpush1.xpose.msra.mxu0 0.0
    %3066 = vmatprep.subr.mxu0 0.0
    %3067 = vmatpush1.xpose.msra.mxu0 0.0
    %3068 = vmatprep.subr.mxu0 0.0
    %3069 = vmatpush1.xpose.msra.mxu0 0.0
    %3070 = vmatprep.subr.mxu0 0.0
    %3071 = vmatpush1.xpose.msra.mxu0 0.0
    %3072 = vmatprep.subr.mxu0 0.0
    %3073 = vmatpush1.xpose.msra.mxu0 0.0
    %3074 = vmatprep.subr.mxu0 0.0
    %3075 = vmatpush1.xpose.msra.mxu0 0.0
    %3076 = vmatprep.subr.mxu0 0.0
    %3077 = vmatpush1.xpose.msra.mxu0 0.0
    %3078 = vmatprep.subr.mxu0 0.0
    %3079 = vmatpush1.xpose.msra.mxu0 0.0
    %3080 = vmatprep.subr.mxu0 0.0
    %3081 = vmatpush1.xpose.msra.mxu0 0.0
    %3082 = vmatprep.subr.mxu0 0.0
    %3083 = vmatpush1.xpose.msra.mxu0 0.0
    %3084 = vmatprep.subr.mxu0 0.0
    %3085 = vmatpush1.xpose.msra.mxu0 0.0
    %3086 = vmatprep.subr.mxu0 0.0
    %3087 = vmatpush1.xpose.msra.mxu0 0.0
    %3088 = vmatprep.subr.mxu0 0.0
    %3089 = vmatpush1.xpose.msra.mxu0 0.0
    %3090 = vmatprep.mubr.f32.mxu0 0.0
    %v3091 = vand.u32 %v2794, 4294901760
    %v3092 = vsub.f32 %v2794, %v3091
    %v3093 = vand.u32 %v3092, 4294901760
    %3094 = vmatmul.mubr.f32.gmra.mrb[0].mxu0 %v3093
    %v3095 = vpop.f32.mrb[0].mxu0
    %v3096 = vadd.f32 %v3022, %v3095
    %v3097 = vpop.f32.mrb[0].mxu0
    %3098 = vdwg.mxu0
    %3099 = vmatprep.subr.mxu0 0.0
    %v3100 = vand.u32 %v2797, 4294901760
    %v3101 = vsub.f32 %v2797, %v3100
    %v3102 = vand.u32 %v3101, 4294901760
    %3103 = vmatpush1.xpose.msra.mxu0 %v3102
    %3104 = vmatprep.subr.mxu0 0.0
    %3105 = vmatpush1.xpose.msra.mxu0 0.0
    %3106 = vmatprep.subr.mxu0 0.0
    %3107 = vmatpush1.xpose.msra.mxu0 0.0
    %3108 = vmatprep.subr.mxu0 0.0
    %3109 = vmatpush1.xpose.msra.mxu0 0.0
    %3110 = vmatprep.subr.mxu0 0.0
    %3111 = vmatpush1.xpose.msra.mxu0 0.0
    %3112 = vmatprep.subr.mxu0 0.0
    %3113 = vmatpush1.xpose.msra.mxu0 0.0
    %3114 = vmatprep.subr.mxu0 0.0
    %3115 = vmatpush1.xpose.msra.mxu0 0.0
    %3116 = vmatprep.subr.mxu0 0.0
    %3117 = vmatpush1.xpose.msra.mxu0 0.0
    %3118 = vmatprep.subr.mxu0 0.0
    %3119 = vmatpush1.xpose.msra.mxu0 0.0
    %3120 = vmatprep.subr.mxu0 0.0
    %3121 = vmatpush1.xpose.msra.mxu0 0.0
    %3122 = vmatprep.subr.mxu0 0.0
    %3123 = vmatpush1.xpose.msra.mxu0 0.0
    %3124 = vmatprep.subr.mxu0 0.0
    %3125 = vmatpush1.xpose.msra.mxu0 0.0
    %3126 = vmatprep.subr.mxu0 0.0
    %3127 = vmatpush1.xpose.msra.mxu0 0.0
    %3128 = vmatprep.subr.mxu0 0.0
    %3129 = vmatpush1.xpose.msra.mxu0 0.0
    %3130 = vmatprep.subr.mxu0 0.0
    %3131 = vmatpush1.xpose.msra.mxu0 0.0
    %3132 = vmatprep.subr.mxu0 0.0
    %3133 = vmatpush1.xpose.msra.mxu0 0.0
    %3134 = vmatprep.subr.mxu0 0.0
    %3135 = vmatpush1.xpose.msra.mxu0 0.0
    %3136 = vmatprep.subr.mxu0 0.0
    %3137 = vmatpush1.xpose.msra.mxu0 0.0
    %3138 = vmatprep.subr.mxu0 0.0
    %3139 = vmatpush1.xpose.msra.mxu0 0.0
    %3140 = vmatprep.subr.mxu0 0.0
    %3141 = vmatpush1.xpose.msra.mxu0 0.0
    %3142 = vmatprep.subr.mxu0 0.0
    %3143 = vmatpush1.xpose.msra.mxu0 0.0
    %3144 = vmatprep.subr.mxu0 0.0
    %3145 = vmatpush1.xpose.msra.mxu0 0.0
    %3146 = vmatprep.subr.mxu0 0.0
    %3147 = vmatpush1.xpose.msra.mxu0 0.0
    %3148 = vmatprep.subr.mxu0 0.0
    %3149 = vmatpush1.xpose.msra.mxu0 0.0
    %3150 = vmatprep.subr.mxu0 0.0
    %3151 = vmatpush1.xpose.msra.mxu0 0.0
    %3152 = vmatprep.subr.mxu0 0.0
    %3153 = vmatpush1.xpose.msra.mxu0 0.0
    %3154 = vmatprep.subr.mxu0 0.0
    %3155 = vmatpush1.xpose.msra.mxu0 0.0
    %3156 = vmatprep.subr.mxu0 0.0
    %3157 = vmatpush1.xpose.msra.mxu0 0.0
    %3158 = vmatprep.subr.mxu0 0.0
    %3159 = vmatpush1.xpose.msra.mxu0 0.0
    %3160 = vmatprep.subr.mxu0 0.0
    %3161 = vmatpush1.xpose.msra.mxu0 0.0
    %3162 = vmatprep.subr.mxu0 0.0
    %3163 = vmatpush1.xpose.msra.mxu0 0.0
    %3164 = vmatprep.subr.mxu0 0.0
    %3165 = vmatpush1.xpose.msra.mxu0 0.0
    %3166 = vmatprep.mubr.f32.mxu0 0.0
    %v3167 = vand.u32 %v2794, 4294901760
    %3168 = vmatmul.mubr.f32.gmra.mrb[0].mxu0 %v3167
    %v3169 = vpop.f32.mrb[0].mxu0
    %v3170 = vadd.f32 %v3096, %v3169
    %v3171 = vpop.f32.mrb[0].mxu0
    %3172 = vdwg.mxu0
    %3173 = vmatprep.subr.mxu0 0.0
    %v3174 = vand.u32 %v2797, 4294901760
    %3175 = vmatpush1.xpose.msra.mxu0 %v3174
    %3176 = vmatprep.subr.mxu0 0.0
    %3177 = vmatpush1.xpose.msra.mxu0 0.0
    %3178 = vmatprep.subr.mxu0 0.0
    %3179 = vmatpush1.xpose.msra.mxu0 0.0
    %3180 = vmatprep.subr.mxu0 0.0
    %3181 = vmatpush1.xpose.msra.mxu0 0.0
    %3182 = vmatprep.subr.mxu0 0.0
    %3183 = vmatpush1.xpose.msra.mxu0 0.0
    %3184 = vmatprep.subr.mxu0 0.0
    %3185 = vmatpush1.xpose.msra.mxu0 0.0
    %3186 = vmatprep.subr.mxu0 0.0
    %3187 = vmatpush1.xpose.msra.mxu0 0.0
    %3188 = vmatprep.subr.mxu0 0.0
    %3189 = vmatpush1.xpose.msra.mxu0 0.0
    %3190 = vmatprep.subr.mxu0 0.0
    %3191 = vmatpush1.xpose.msra.mxu0 0.0
    %3192 = vmatprep.subr.mxu0 0.0
    %3193 = vmatpush1.xpose.msra.mxu0 0.0
    %3194 = vmatprep.subr.mxu0 0.0
    %3195 = vmatpush1.xpose.msra.mxu0 0.0
    %3196 = vmatprep.subr.mxu0 0.0
    %3197 = vmatpush1.xpose.msra.mxu0 0.0
    %3198 = vmatprep.subr.mxu0 0.0
    %3199 = vmatpush1.xpose.msra.mxu0 0.0
    %3200 = vmatprep.subr.mxu0 0.0
    %3201 = vmatpush1.xpose.msra.mxu0 0.0
    %3202 = vmatprep.subr.mxu0 0.0
    %3203 = vmatpush1.xpose.msra.mxu0 0.0
    %3204 = vmatprep.subr.mxu0 0.0
    %3205 = vmatpush1.xpose.msra.mxu0 0.0
    %3206 = vmatprep.subr.mxu0 0.0
    %3207 = vmatpush1.xpose.msra.mxu0 0.0
    %3208 = vmatprep.subr.mxu0 0.0
    %3209 = vmatpush1.xpose.msra.mxu0 0.0
    %3210 = vmatprep.subr.mxu0 0.0
    %3211 = vmatpush1.xpose.msra.mxu0 0.0
    %3212 = vmatprep.subr.mxu0 0.0
    %3213 = vmatpush1.xpose.msra.mxu0 0.0
    %3214 = vmatprep.subr.mxu0 0.0
    %3215 = vmatpush1.xpose.msra.mxu0 0.0
    %3216 = vmatprep.subr.mxu0 0.0
    %3217 = vmatpush1.xpose.msra.mxu0 0.0
    %3218 = vmatprep.subr.mxu0 0.0
    %3219 = vmatpush1.xpose.msra.mxu0 0.0
    %3220 = vmatprep.subr.mxu0 0.0
    %3221 = vmatpush1.xpose.msra.mxu0 0.0
    %3222 = vmatprep.subr.mxu0 0.0
    %3223 = vmatpush1.xpose.msra.mxu0 0.0
    %3224 = vmatprep.subr.mxu0 0.0
    %3225 = vmatpush1.xpose.msra.mxu0 0.0
    %3226 = vmatprep.subr.mxu0 0.0
    %3227 = vmatpush1.xpose.msra.mxu0 0.0
    %3228 = vmatprep.subr.mxu0 0.0
    %3229 = vmatpush1.xpose.msra.mxu0 0.0
    %3230 = vmatprep.subr.mxu0 0.0
    %3231 = vmatpush1.xpose.msra.mxu0 0.0
    %3232 = vmatprep.subr.mxu0 0.0
    %3233 = vmatpush1.xpose.msra.mxu0 0.0
    %3234 = vmatprep.subr.mxu0 0.0
    %3235 = vmatpush1.xpose.msra.mxu0 0.0
    %3236 = vmatprep.subr.mxu0 0.0
    %3237 = vmatpush1.xpose.msra.mxu0 0.0
    %3238 = vmatprep.mubr.f32.mxu0 0.0
    %v3239 = vand.u32 %v2794, 4294901760
    %3240 = vmatmul.mubr.f32.gmra.mrb[0].mxu0 %v3239
    %v3241 = vpop.f32.mrb[0].mxu0
    %v3242 = vadd.f32 %v3170, %v3241
    %v3243 = vpop.f32.mrb[0].mxu0
    %3244 = vdwg.mxu0
    %v3246 = vsel %vm80, %v63, 0
    %v3249 = vsel %vm80, %v71, 0
    %3251 = vmatprep.subr.mxu0 0.0
    %v3252 = vand.u32 %v3249, 4294901760
    %3253 = vmatpush1.xpose.msra.mxu0 %v3252
    %3254 = vmatprep.subr.mxu0 0.0
    %3255 = vmatpush1.xpose.msra.mxu0 0.0
    %3256 = vmatprep.subr.mxu0 0.0
    %3257 = vmatpush1.xpose.msra.mxu0 0.0
    %3258 = vmatprep.subr.mxu0 0.0
    %3259 = vmatpush1.xpose.msra.mxu0 0.0
    %3260 = vmatprep.subr.mxu0 0.0
    %3261 = vmatpush1.xpose.msra.mxu0 0.0
    %3262 = vmatprep.subr.mxu0 0.0
    %3263 = vmatpush1.xpose.msra.mxu0 0.0
    %3264 = vmatprep.subr.mxu0 0.0
    %3265 = vmatpush1.xpose.msra.mxu0 0.0
    %3266 = vmatprep.subr.mxu0 0.0
    %3267 = vmatpush1.xpose.msra.mxu0 0.0
    %3268 = vmatprep.subr.mxu0 0.0
    %3269 = vmatpush1.xpose.msra.mxu0 0.0
    %3270 = vmatprep.subr.mxu0 0.0
    %3271 = vmatpush1.xpose.msra.mxu0 0.0
    %3272 = vmatprep.subr.mxu0 0.0
    %3273 = vmatpush1.xpose.msra.mxu0 0.0
    %3274 = vmatprep.subr.mxu0 0.0
    %3275 = vmatpush1.xpose.msra.mxu0 0.0
    %3276 = vmatprep.subr.mxu0 0.0
    %3277 = vmatpush1.xpose.msra.mxu0 0.0
    %3278 = vmatprep.subr.mxu0 0.0
    %3279 = vmatpush1.xpose.msra.mxu0 0.0
    %3280 = vmatprep.subr.mxu0 0.0
    %3281 = vmatpush1.xpose.msra.mxu0 0.0
    %3282 = vmatprep.subr.mxu0 0.0
    %3283 = vmatpush1.xpose.msra.mxu0 0.0
    %3284 = vmatprep.subr.mxu0 0.0
    %3285 = vmatpush1.xpose.msra.mxu0 0.0
    %3286 = vmatprep.subr.mxu0 0.0
    %3287 = vmatpush1.xpose.msra.mxu0 0.0
    %3288 = vmatprep.subr.mxu0 0.0
    %3289 = vmatpush1.xpose.msra.mxu0 0.0
    %3290 = vmatprep.subr.mxu0 0.0
    %3291 = vmatpush1.xpose.msra.mxu0 0.0
    %3292 = vmatprep.subr.mxu0 0.0
    %3293 = vmatpush1.xpose.msra.mxu0 0.0
    %3294 = vmatprep.subr.mxu0 0.0
    %3295 = vmatpush1.xpose.msra.mxu0 0.0
    %3296 = vmatprep.subr.mxu0 0.0
    %3297 = vmatpush1.xpose.msra.mxu0 0.0
    %3298 = vmatprep.subr.mxu0 0.0
    %3299 = vmatpush1.xpose.msra.mxu0 0.0
    %3300 = vmatprep.subr.mxu0 0.0
    %3301 = vmatpush1.xpose.msra.mxu0 0.0
    %3302 = vmatprep.subr.mxu0 0.0
    %3303 = vmatpush1.xpose.msra.mxu0 0.0
    %3304 = vmatprep.subr.mxu0 0.0
    %3305 = vmatpush1.xpose.msra.mxu0 0.0
    %3306 = vmatprep.subr.mxu0 0.0
    %3307 = vmatpush1.xpose.msra.mxu0 0.0
    %3308 = vmatprep.subr.mxu0 0.0
    %3309 = vmatpush1.xpose.msra.mxu0 0.0
    %3310 = vmatprep.subr.mxu0 0.0
    %3311 = vmatpush1.xpose.msra.mxu0 0.0
    %3312 = vmatprep.subr.mxu0 0.0
    %3313 = vmatpush1.xpose.msra.mxu0 0.0
    %3314 = vmatprep.subr.mxu0 0.0
    %3315 = vmatpush1.xpose.msra.mxu0 0.0
    %3316 = vmatprep.mubr.f32.mxu0 0.0
    %v3317 = vand.u32 %v3246, 4294901760
    %v3318 = vsub.f32 %v3246, %v3317
    %v3319 = vand.u32 %v3318, 4294901760
    %v3320 = vsub.f32 %v3318, %v3319
    %v3321 = vand.u32 %v3320, 4294901760
    %3322 = vmatmul.mubr.f32.gmra.mrb[0].mxu0 %v3321
    %v3323 = vpop.f32.mrb[0].mxu0
    %v3324 = vadd.f32 0.0, %v3323
    %v3325 = vpop.f32.mrb[0].mxu0
    %3326 = vdwg.mxu0
    %3327 = vmatprep.subr.mxu0 0.0
    %v3328 = vand.u32 %v3249, 4294901760
    %v3329 = vsub.f32 %v3249, %v3328
    %v3330 = vand.u32 %v3329, 4294901760
    %v3331 = vsub.f32 %v3329, %v3330
    %v3332 = vand.u32 %v3331, 4294901760
    %3333 = vmatpush1.xpose.msra.mxu0 %v3332
    %3334 = vmatprep.subr.mxu0 0.0
    %3335 = vmatpush1.xpose.msra.mxu0 0.0
    %3336 = vmatprep.subr.mxu0 0.0
    %3337 = vmatpush1.xpose.msra.mxu0 0.0
    %3338 = vmatprep.subr.mxu0 0.0
    %3339 = vmatpush1.xpose.msra.mxu0 0.0
    %3340 = vmatprep.subr.mxu0 0.0
    %3341 = vmatpush1.xpose.msra.mxu0 0.0
    %3342 = vmatprep.subr.mxu0 0.0
    %3343 = vmatpush1.xpose.msra.mxu0 0.0
    %3344 = vmatprep.subr.mxu0 0.0
    %3345 = vmatpush1.xpose.msra.mxu0 0.0
    %3346 = vmatprep.subr.mxu0 0.0
    %3347 = vmatpush1.xpose.msra.mxu0 0.0
    %3348 = vmatprep.subr.mxu0 0.0
    %3349 = vmatpush1.xpose.msra.mxu0 0.0
    %3350 = vmatprep.subr.mxu0 0.0
    %3351 = vmatpush1.xpose.msra.mxu0 0.0
    %3352 = vmatprep.subr.mxu0 0.0
    %3353 = vmatpush1.xpose.msra.mxu0 0.0
    %3354 = vmatprep.subr.mxu0 0.0
    %3355 = vmatpush1.xpose.msra.mxu0 0.0
    %3356 = vmatprep.subr.mxu0 0.0
    %3357 = vmatpush1.xpose.msra.mxu0 0.0
    %3358 = vmatprep.subr.mxu0 0.0
    %3359 = vmatpush1.xpose.msra.mxu0 0.0
    %3360 = vmatprep.subr.mxu0 0.0
    %3361 = vmatpush1.xpose.msra.mxu0 0.0
    %3362 = vmatprep.subr.mxu0 0.0
    %3363 = vmatpush1.xpose.msra.mxu0 0.0
    %3364 = vmatprep.subr.mxu0 0.0
    %3365 = vmatpush1.xpose.msra.mxu0 0.0
    %3366 = vmatprep.subr.mxu0 0.0
    %3367 = vmatpush1.xpose.msra.mxu0 0.0
    %3368 = vmatprep.subr.mxu0 0.0
    %3369 = vmatpush1.xpose.msra.mxu0 0.0
    %3370 = vmatprep.subr.mxu0 0.0
    %3371 = vmatpush1.xpose.msra.mxu0 0.0
    %3372 = vmatprep.subr.mxu0 0.0
    %3373 = vmatpush1.xpose.msra.mxu0 0.0
    %3374 = vmatprep.subr.mxu0 0.0
    %3375 = vmatpush1.xpose.msra.mxu0 0.0
    %3376 = vmatprep.subr.mxu0 0.0
    %3377 = vmatpush1.xpose.msra.mxu0 0.0
    %3378 = vmatprep.subr.mxu0 0.0
    %3379 = vmatpush1.xpose.msra.mxu0 0.0
    %3380 = vmatprep.subr.mxu0 0.0
    %3381 = vmatpush1.xpose.msra.mxu0 0.0
    %3382 = vmatprep.subr.mxu0 0.0
    %3383 = vmatpush1.xpose.msra.mxu0 0.0
    %3384 = vmatprep.subr.mxu0 0.0
    %3385 = vmatpush1.xpose.msra.mxu0 0.0
    %3386 = vmatprep.subr.mxu0 0.0
    %3387 = vmatpush1.xpose.msra.mxu0 0.0
    %3388 = vmatprep.subr.mxu0 0.0
    %3389 = vmatpush1.xpose.msra.mxu0 0.0
    %3390 = vmatprep.subr.mxu0 0.0
    %3391 = vmatpush1.xpose.msra.mxu0 0.0
    %3392 = vmatprep.subr.mxu0 0.0
    %3393 = vmatpush1.xpose.msra.mxu0 0.0
    %3394 = vmatprep.subr.mxu0 0.0
    %3395 = vmatpush1.xpose.msra.mxu0 0.0
    %3396 = vmatprep.mubr.f32.mxu0 0.0
    %v3397 = vand.u32 %v3246, 4294901760
    %3398 = vmatmul.mubr.f32.gmra.mrb[0].mxu0 %v3397
    %v3399 = vpop.f32.mrb[0].mxu0
    %v3400 = vadd.f32 %v3324, %v3399
    %v3401 = vpop.f32.mrb[0].mxu0
    %3402 = vdwg.mxu0
    %3403 = vmatprep.subr.mxu0 0.0
    %v3404 = vand.u32 %v3249, 4294901760
    %v3405 = vsub.f32 %v3249, %v3404
    %3406 = vmatpush1.xpose.msra.mxu0 %v3405
    %3407 = vmatprep.subr.mxu0 0.0
    %3408 = vmatpush1.xpose.msra.mxu0 0.0
    %3409 = vmatprep.subr.mxu0 0.0
    %3410 = vmatpush1.xpose.msra.mxu0 0.0
    %3411 = vmatprep.subr.mxu0 0.0
    %3412 = vmatpush1.xpose.msra.mxu0 0.0
    %3413 = vmatprep.subr.mxu0 0.0
    %3414 = vmatpush1.xpose.msra.mxu0 0.0
    %3415 = vmatprep.subr.mxu0 0.0
    %3416 = vmatpush1.xpose.msra.mxu0 0.0
    %3417 = vmatprep.subr.mxu0 0.0
    %3418 = vmatpush1.xpose.msra.mxu0 0.0
    %3419 = vmatprep.subr.mxu0 0.0
    %3420 = vmatpush1.xpose.msra.mxu0 0.0
    %3421 = vmatprep.subr.mxu0 0.0
    %3422 = vmatpush1.xpose.msra.mxu0 0.0
    %3423 = vmatprep.subr.mxu0 0.0
    %3424 = vmatpush1.xpose.msra.mxu0 0.0
    %3425 = vmatprep.subr.mxu0 0.0
    %3426 = vmatpush1.xpose.msra.mxu0 0.0
    %3427 = vmatprep.subr.mxu0 0.0
    %3428 = vmatpush1.xpose.msra.mxu0 0.0
    %3429 = vmatprep.subr.mxu0 0.0
    %3430 = vmatpush1.xpose.msra.mxu0 0.0
    %3431 = vmatprep.subr.mxu0 0.0
    %3432 = vmatpush1.xpose.msra.mxu0 0.0
    %3433 = vmatprep.subr.mxu0 0.0
    %3434 = vmatpush1.xpose.msra.mxu0 0.0
    %3435 = vmatprep.subr.mxu0 0.0
    %3436 = vmatpush1.xpose.msra.mxu0 0.0
    %3437 = vmatprep.subr.mxu0 0.0
    %3438 = vmatpush1.xpose.msra.mxu0 0.0
    %3439 = vmatprep.subr.mxu0 0.0
    %3440 = vmatpush1.xpose.msra.mxu0 0.0
    %3441 = vmatprep.subr.mxu0 0.0
    %3442 = vmatpush1.xpose.msra.mxu0 0.0
    %3443 = vmatprep.subr.mxu0 0.0
    %3444 = vmatpush1.xpose.msra.mxu0 0.0
    %3445 = vmatprep.subr.mxu0 0.0
    %3446 = vmatpush1.xpose.msra.mxu0 0.0
    %3447 = vmatprep.subr.mxu0 0.0
    %3448 = vmatpush1.xpose.msra.mxu0 0.0
    %3449 = vmatprep.subr.mxu0 0.0
    %3450 = vmatpush1.xpose.msra.mxu0 0.0
    %3451 = vmatprep.subr.mxu0 0.0
    %3452 = vmatpush1.xpose.msra.mxu0 0.0
    %3453 = vmatprep.subr.mxu0 0.0
    %3454 = vmatpush1.xpose.msra.mxu0 0.0
    %3455 = vmatprep.subr.mxu0 0.0
    %3456 = vmatpush1.xpose.msra.mxu0 0.0
    %3457 = vmatprep.subr.mxu0 0.0
    %3458 = vmatpush1.xpose.msra.mxu0 0.0
    %3459 = vmatprep.subr.mxu0 0.0
    %3460 = vmatpush1.xpose.msra.mxu0 0.0
    %3461 = vmatprep.subr.mxu0 0.0
    %3462 = vmatpush1.xpose.msra.mxu0 0.0
    %3463 = vmatprep.subr.mxu0 0.0
    %3464 = vmatpush1.xpose.msra.mxu0 0.0
    %3465 = vmatprep.subr.mxu0 0.0
    %3466 = vmatpush1.xpose.msra.mxu0 0.0
    %3467 = vmatprep.subr.mxu0 0.0
    %3468 = vmatpush1.xpose.msra.mxu0 0.0
    %3469 = vmatprep.mubr.f32.mxu0 0.0
    %v3470 = vand.u32 %v3246, 4294901760
    %v3471 = vsub.f32 %v3246, %v3470
    %3472 = vmatmul.mubr.f32.gmra.mrb[0].mxu0 %v3471
    %v3473 = vpop.f32.mrb[0].mxu0
    %v3474 = vadd.f32 %v3400, %v3473
    %v3475 = vpop.f32.mrb[0].mxu0
    %3476 = vdwg.mxu0
    %3477 = vmatprep.subr.mxu0 0.0
    %v3478 = vand.u32 %v3249, 4294901760
    %3479 = vmatpush1.xpose.msra.mxu0 %v3478
    %3480 = vmatprep.subr.mxu0 0.0
    %3481 = vmatpush1.xpose.msra.mxu0 0.0
    %3482 = vmatprep.subr.mxu0 0.0
    %3483 = vmatpush1.xpose.msra.mxu0 0.0
    %3484 = vmatprep.subr.mxu0 0.0
    %3485 = vmatpush1.xpose.msra.mxu0 0.0
    %3486 = vmatprep.subr.mxu0 0.0
    %3487 = vmatpush1.xpose.msra.mxu0 0.0
    %3488 = vmatprep.subr.mxu0 0.0
    %3489 = vmatpush1.xpose.msra.mxu0 0.0
    %3490 = vmatprep.subr.mxu0 0.0
    %3491 = vmatpush1.xpose.msra.mxu0 0.0
    %3492 = vmatprep.subr.mxu0 0.0
    %3493 = vmatpush1.xpose.msra.mxu0 0.0
    %3494 = vmatprep.subr.mxu0 0.0
    %3495 = vmatpush1.xpose.msra.mxu0 0.0
    %3496 = vmatprep.subr.mxu0 0.0
    %3497 = vmatpush1.xpose.msra.mxu0 0.0
    %3498 = vmatprep.subr.mxu0 0.0
    %3499 = vmatpush1.xpose.msra.mxu0 0.0
    %3500 = vmatprep.subr.mxu0 0.0
    %3501 = vmatpush1.xpose.msra.mxu0 0.0
    %3502 = vmatprep.subr.mxu0 0.0
    %3503 = vmatpush1.xpose.msra.mxu0 0.0
    %3504 = vmatprep.subr.mxu0 0.0
    %3505 = vmatpush1.xpose.msra.mxu0 0.0
    %3506 = vmatprep.subr.mxu0 0.0
    %3507 = vmatpush1.xpose.msra.mxu0 0.0
    %3508 = vmatprep.subr.mxu0 0.0
    %3509 = vmatpush1.xpose.msra.mxu0 0.0
    %3510 = vmatprep.subr.mxu0 0.0
    %3511 = vmatpush1.xpose.msra.mxu0 0.0
    %3512 = vmatprep.subr.mxu0 0.0
    %3513 = vmatpush1.xpose.msra.mxu0 0.0
    %3514 = vmatprep.subr.mxu0 0.0
    %3515 = vmatpush1.xpose.msra.mxu0 0.0
    %3516 = vmatprep.subr.mxu0 0.0
    %3517 = vmatpush1.xpose.msra.mxu0 0.0
    %3518 = vmatprep.subr.mxu0 0.0
    %3519 = vmatpush1.xpose.msra.mxu0 0.0
    %3520 = vmatprep.subr.mxu0 0.0
    %3521 = vmatpush1.xpose.msra.mxu0 0.0
    %3522 = vmatprep.subr.mxu0 0.0
    %3523 = vmatpush1.xpose.msra.mxu0 0.0
    %3524 = vmatprep.subr.mxu0 0.0
    %3525 = vmatpush1.xpose.msra.mxu0 0.0
    %3526 = vmatprep.subr.mxu0 0.0
    %3527 = vmatpush1.xpose.msra.mxu0 0.0
    %3528 = vmatprep.subr.mxu0 0.0
    %3529 = vmatpush1.xpose.msra.mxu0 0.0
    %3530 = vmatprep.subr.mxu0 0.0
    %3531 = vmatpush1.xpose.msra.mxu0 0.0
    %3532 = vmatprep.subr.mxu0 0.0
    %3533 = vmatpush1.xpose.msra.mxu0 0.0
    %3534 = vmatprep.subr.mxu0 0.0
    %3535 = vmatpush1.xpose.msra.mxu0 0.0
    %3536 = vmatprep.subr.mxu0 0.0
    %3537 = vmatpush1.xpose.msra.mxu0 0.0
    %3538 = vmatprep.subr.mxu0 0.0
    %3539 = vmatpush1.xpose.msra.mxu0 0.0
    %3540 = vmatprep.subr.mxu0 0.0
    %3541 = vmatpush1.xpose.msra.mxu0 0.0
    %3542 = vmatprep.mubr.f32.mxu0 0.0
    %v3543 = vand.u32 %v3246, 4294901760
    %v3544 = vsub.f32 %v3246, %v3543
    %v3545 = vand.u32 %v3544, 4294901760
    %3546 = vmatmul.mubr.f32.gmra.mrb[0].mxu0 %v3545
    %v3547 = vpop.f32.mrb[0].mxu0
    %v3548 = vadd.f32 %v3474, %v3547
    %v3549 = vpop.f32.mrb[0].mxu0
    %3550 = vdwg.mxu0
    %3551 = vmatprep.subr.mxu0 0.0
    %v3552 = vand.u32 %v3249, 4294901760
    %v3553 = vsub.f32 %v3249, %v3552
    %v3554 = vand.u32 %v3553, 4294901760
    %3555 = vmatpush1.xpose.msra.mxu0 %v3554
    %3556 = vmatprep.subr.mxu0 0.0
    %3557 = vmatpush1.xpose.msra.mxu0 0.0
    %3558 = vmatprep.subr.mxu0 0.0
    %3559 = vmatpush1.xpose.msra.mxu0 0.0
    %3560 = vmatprep.subr.mxu0 0.0
    %3561 = vmatpush1.xpose.msra.mxu0 0.0
    %3562 = vmatprep.subr.mxu0 0.0
    %3563 = vmatpush1.xpose.msra.mxu0 0.0
    %3564 = vmatprep.subr.mxu0 0.0
    %3565 = vmatpush1.xpose.msra.mxu0 0.0
    %3566 = vmatprep.subr.mxu0 0.0
    %3567 = vmatpush1.xpose.msra.mxu0 0.0
    %3568 = vmatprep.subr.mxu0 0.0
    %3569 = vmatpush1.xpose.msra.mxu0 0.0
    %3570 = vmatprep.subr.mxu0 0.0
    %3571 = vmatpush1.xpose.msra.mxu0 0.0
    %3572 = vmatprep.subr.mxu0 0.0
    %3573 = vmatpush1.xpose.msra.mxu0 0.0
    %3574 = vmatprep.subr.mxu0 0.0
    %3575 = vmatpush1.xpose.msra.mxu0 0.0
    %3576 = vmatprep.subr.mxu0 0.0
    %3577 = vmatpush1.xpose.msra.mxu0 0.0
    %3578 = vmatprep.subr.mxu0 0.0
    %3579 = vmatpush1.xpose.msra.mxu0 0.0
    %3580 = vmatprep.subr.mxu0 0.0
    %3581 = vmatpush1.xpose.msra.mxu0 0.0
    %3582 = vmatprep.subr.mxu0 0.0
    %3583 = vmatpush1.xpose.msra.mxu0 0.0
    %3584 = vmatprep.subr.mxu0 0.0
    %3585 = vmatpush1.xpose.msra.mxu0 0.0
    %3586 = vmatprep.subr.mxu0 0.0
    %3587 = vmatpush1.xpose.msra.mxu0 0.0
    %3588 = vmatprep.subr.mxu0 0.0
    %3589 = vmatpush1.xpose.msra.mxu0 0.0
    %3590 = vmatprep.subr.mxu0 0.0
    %3591 = vmatpush1.xpose.msra.mxu0 0.0
    %3592 = vmatprep.subr.mxu0 0.0
    %3593 = vmatpush1.xpose.msra.mxu0 0.0
    %3594 = vmatprep.subr.mxu0 0.0
    %3595 = vmatpush1.xpose.msra.mxu0 0.0
    %3596 = vmatprep.subr.mxu0 0.0
    %3597 = vmatpush1.xpose.msra.mxu0 0.0
    %3598 = vmatprep.subr.mxu0 0.0
    %3599 = vmatpush1.xpose.msra.mxu0 0.0
    %3600 = vmatprep.subr.mxu0 0.0
    %3601 = vmatpush1.xpose.msra.mxu0 0.0
    %3602 = vmatprep.subr.mxu0 0.0
    %3603 = vmatpush1.xpose.msra.mxu0 0.0
    %3604 = vmatprep.subr.mxu0 0.0
    %3605 = vmatpush1.xpose.msra.mxu0 0.0
    %3606 = vmatprep.subr.mxu0 0.0
    %3607 = vmatpush1.xpose.msra.mxu0 0.0
    %3608 = vmatprep.subr.mxu0 0.0
    %3609 = vmatpush1.xpose.msra.mxu0 0.0
    %3610 = vmatprep.subr.mxu0 0.0
    %3611 = vmatpush1.xpose.msra.mxu0 0.0
    %3612 = vmatprep.subr.mxu0 0.0
    %3613 = vmatpush1.xpose.msra.mxu0 0.0
    %3614 = vmatprep.subr.mxu0 0.0
    %3615 = vmatpush1.xpose.msra.mxu0 0.0
    %3616 = vmatprep.subr.mxu0 0.0
    %3617 = vmatpush1.xpose.msra.mxu0 0.0
    %3618 = vmatprep.mubr.f32.mxu0 0.0
    %v3619 = vand.u32 %v3246, 4294901760
    %3620 = vmatmul.mubr.f32.gmra.mrb[0].mxu0 %v3619
    %v3621 = vpop.f32.mrb[0].mxu0
    %v3622 = vadd.f32 %v3548, %v3621
    %v3623 = vpop.f32.mrb[0].mxu0
    %3624 = vdwg.mxu0
    %3625 = vmatprep.subr.mxu0 0.0
    %v3626 = vand.u32 %v3249, 4294901760
    %3627 = vmatpush1.xpose.msra.mxu0 %v3626
    %3628 = vmatprep.subr.mxu0 0.0
    %3629 = vmatpush1.xpose.msra.mxu0 0.0
    %3630 = vmatprep.subr.mxu0 0.0
    %3631 = vmatpush1.xpose.msra.mxu0 0.0
    %3632 = vmatprep.subr.mxu0 0.0
    %3633 = vmatpush1.xpose.msra.mxu0 0.0
    %3634 = vmatprep.subr.mxu0 0.0
    %3635 = vmatpush1.xpose.msra.mxu0 0.0
    %3636 = vmatprep.subr.mxu0 0.0
    %3637 = vmatpush1.xpose.msra.mxu0 0.0
    %3638 = vmatprep.subr.mxu0 0.0
    %3639 = vmatpush1.xpose.msra.mxu0 0.0
    %3640 = vmatprep.subr.mxu0 0.0
    %3641 = vmatpush1.xpose.msra.mxu0 0.0
    %3642 = vmatprep.subr.mxu0 0.0
    %3643 = vmatpush1.xpose.msra.mxu0 0.0
    %3644 = vmatprep.subr.mxu0 0.0
    %3645 = vmatpush1.xpose.msra.mxu0 0.0
    %3646 = vmatprep.subr.mxu0 0.0
    %3647 = vmatpush1.xpose.msra.mxu0 0.0
    %3648 = vmatprep.subr.mxu0 0.0
    %3649 = vmatpush1.xpose.msra.mxu0 0.0
    %3650 = vmatprep.subr.mxu0 0.0
    %3651 = vmatpush1.xpose.msra.mxu0 0.0
    %3652 = vmatprep.subr.mxu0 0.0
    %3653 = vmatpush1.xpose.msra.mxu0 0.0
    %3654 = vmatprep.subr.mxu0 0.0
    %3655 = vmatpush1.xpose.msra.mxu0 0.0
    %3656 = vmatprep.subr.mxu0 0.0
    %3657 = vmatpush1.xpose.msra.mxu0 0.0
    %3658 = vmatprep.subr.mxu0 0.0
    %3659 = vmatpush1.xpose.msra.mxu0 0.0
    %3660 = vmatprep.subr.mxu0 0.0
    %3661 = vmatpush1.xpose.msra.mxu0 0.0
    %3662 = vmatprep.subr.mxu0 0.0
    %3663 = vmatpush1.xpose.msra.mxu0 0.0
    %3664 = vmatprep.subr.mxu0 0.0
    %3665 = vmatpush1.xpose.msra.mxu0 0.0
    %3666 = vmatprep.subr.mxu0 0.0
    %3667 = vmatpush1.xpose.msra.mxu0 0.0
    %3668 = vmatprep.subr.mxu0 0.0
    %3669 = vmatpush1.xpose.msra.mxu0 0.0
    %3670 = vmatprep.subr.mxu0 0.0
    %3671 = vmatpush1.xpose.msra.mxu0 0.0
    %3672 = vmatprep.subr.mxu0 0.0
    %3673 = vmatpush1.xpose.msra.mxu0 0.0
    %3674 = vmatprep.subr.mxu0 0.0
    %3675 = vmatpush1.xpose.msra.mxu0 0.0
    %3676 = vmatprep.subr.mxu0 0.0
    %3677 = vmatpush1.xpose.msra.mxu0 0.0
    %3678 = vmatprep.subr.mxu0 0.0
    %3679 = vmatpush1.xpose.msra.mxu0 0.0
    %3680 = vmatprep.subr.mxu0 0.0
    %3681 = vmatpush1.xpose.msra.mxu0 0.0
    %3682 = vmatprep.subr.mxu0 0.0
    %3683 = vmatpush1.xpose.msra.mxu0 0.0
    %3684 = vmatprep.subr.mxu0 0.0
    %3685 = vmatpush1.xpose.msra.mxu0 0.0
    %3686 = vmatprep.subr.mxu0 0.0
    %3687 = vmatpush1.xpose.msra.mxu0 0.0
    %3688 = vmatprep.subr.mxu0 0.0
    %3689 = vmatpush1.xpose.msra.mxu0 0.0
    %3690 = vmatprep.mubr.f32.mxu0 0.0
    %v3691 = vand.u32 %v3246, 4294901760
    %3692 = vmatmul.mubr.f32.gmra.mrb[0].mxu0 %v3691
    %v3693 = vpop.f32.mrb[0].mxu0
    %v3694 = vadd.f32 %v3622, %v3693
    %v3695 = vpop.f32.mrb[0].mxu0
    %3696 = vdwg.mxu0
    %vm3697 = vcmask 64512
    %v3698 = vsel %vm3697, %v530, -inf
    %3699 = vmax.xlane.f32.xlu0 %v3698
    %v3700 = vpop.xlane.xlu0 %3699
    %v3701 = vsel %vm3697, %v982, -inf
    %3702 = vmax.xlane.f32.xlu0 %v3701
    %v3703 = vpop.xlane.xlu0 %3702
    %v3704 = vsel %vm3697, %v1434, -inf
    %3705 = vmax.xlane.f32.xlu0 %v3704
    %v3706 = vpop.xlane.xlu0 %3705
    %v3707 = vsel %vm3697, %v1886, -inf
    %3708 = vmax.xlane.f32.xlu0 %v3707
    %v3709 = vpop.xlane.xlu0 %3708
    %v3710 = vsel %vm3697, %v2338, -inf
    %3711 = vmax.xlane.f32.xlu0 %v3710
    %v3712 = vpop.xlane.xlu0 %3711
    %v3713 = vsel %vm3697, %v2790, -inf
    %3714 = vmax.xlane.f32.xlu0 %v3713
    %v3715 = vpop.xlane.xlu0 %3714
    %v3716 = vsel %vm3697, %v3242, -inf
    %3717 = vmax.xlane.f32.xlu0 %v3716
    %v3718 = vpop.xlane.xlu0 %3717
    %v3719 = vsel %vm3697, %v3694, -inf
    %3720 = vmax.xlane.f32.xlu0 %v3719
    %v3721 = vpop.xlane.xlu0 %3720
    %v3722 = vsub.f32 %v530, %v3700
    %v3723 = vsub.f32 %v982, %v3703
    %v3724 = vsub.f32 %v1434, %v3706
    %v3725 = vsub.f32 %v1886, %v3709
    %v3726 = vsub.f32 %v2338, %v3712
    %v3727 = vsub.f32 %v2790, %v3715
    %v3728 = vsub.f32 %v3242, %v3718
    %v3729 = vsub.f32 %v3694, %v3721
    %v3730 = vmul.f32 %v3722, 1.442695
    %v3731 = vpow.pop %v3730
    %v3732 = vmul.f32 %v3723, 1.442695
    %v3733 = vpow.pop %v3732
    %v3734 = vmul.f32 %v3724, 1.442695
    %v3735 = vpow.pop %v3734
    %v3736 = vmul.f32 %v3725, 1.442695
    %v3737 = vpow.pop %v3736
    %v3738 = vmul.f32 %v3726, 1.442695
    %v3739 = vpow.pop %v3738
    %v3740 = vmul.f32 %v3727, 1.442695
    %v3741 = vpow.pop %v3740
    %v3742 = vmul.f32 %v3728, 1.442695
    %v3743 = vpow.pop %v3742
    %v3744 = vmul.f32 %v3729, 1.442695
    %v3745 = vpow.pop %v3744
    %v3746 = vsel %vm3697, %v3731, 0.0
    %3747 = vadd.xlane.f32.xlu0 %v3746
    %v3748 = vpop.xlane.xlu0 %3747
    %v3749 = vsel %vm3697, %v3733, 0.0
    %3750 = vadd.xlane.f32.xlu0 %v3749
    %v3751 = vpop.xlane.xlu0 %3750
    %v3752 = vsel %vm3697, %v3735, 0.0
    %3753 = vadd.xlane.f32.xlu0 %v3752
    %v3754 = vpop.xlane.xlu0 %3753
    %v3755 = vsel %vm3697, %v3737, 0.0
    %3756 = vadd.xlane.f32.xlu0 %v3755
    %v3757 = vpop.xlane.xlu0 %3756
    %v3758 = vsel %vm3697, %v3739, 0.0
    %3759 = vadd.xlane.f32.xlu0 %v3758
    %v3760 = vpop.xlane.xlu0 %3759
    %v3761 = vsel %vm3697, %v3741, 0.0
    %3762 = vadd.xlane.f32.xlu0 %v3761
    %v3763 = vpop.xlane.xlu0 %3762
    %v3764 = vsel %vm3697, %v3743, 0.0
    %3765 = vadd.xlane.f32.xlu0 %v3764
    %v3766 = vpop.xlane.xlu0 %3765
    %v3767 = vsel %vm3697, %v3745, 0.0
    %3768 = vadd.xlane.f32.xlu0 %v3767
    %v3769 = vpop.xlane.xlu0 %3768
    %v3771 = vsel %vm3697, %v3731, 0
    %3773 = vmatprep.subr.mxu0 0.0
    %v3774 = vand.u32 %v72, 4294901760
    %3775 = vmatpush1.msra.mxu0 %v3774
    %3776 = vmatprep.subr.mxu0 0.0
    %3777 = vmatpush1.msra.mxu0 0.0
    %3778 = vmatprep.subr.mxu0 0.0
    %3779 = vmatpush1.msra.mxu0 0.0
    %3780 = vmatprep.subr.mxu0 0.0
    %3781 = vmatpush1.msra.mxu0 0.0
    %3782 = vmatprep.subr.mxu0 0.0
    %3783 = vmatpush1.msra.mxu0 0.0
    %3784 = vmatprep.subr.mxu0 0.0
    %3785 = vmatpush1.msra.mxu0 0.0
    %3786 = vmatprep.subr.mxu0 0.0
    %3787 = vmatpush1.msra.mxu0 0.0
    %3788 = vmatprep.subr.mxu0 0.0
    %3789 = vmatpush1.msra.mxu0 0.0
    %3790 = vmatprep.subr.mxu0 0.0
    %3791 = vmatpush1.msra.mxu0 0.0
    %3792 = vmatprep.subr.mxu0 0.0
    %3793 = vmatpush1.msra.mxu0 0.0
    %3794 = vmatprep.subr.mxu0 0.0
    %3795 = vmatpush1.msra.mxu0 0.0
    %3796 = vmatprep.subr.mxu0 0.0
    %3797 = vmatpush1.msra.mxu0 0.0
    %3798 = vmatprep.subr.mxu0 0.0
    %3799 = vmatpush1.msra.mxu0 0.0
    %3800 = vmatprep.subr.mxu0 0.0
    %3801 = vmatpush1.msra.mxu0 0.0
    %3802 = vmatprep.subr.mxu0 0.0
    %3803 = vmatpush1.msra.mxu0 0.0
    %3804 = vmatprep.subr.mxu0 0.0
    %3805 = vmatpush1.msra.mxu0 0.0
    %3806 = vmatprep.subr.mxu0 0.0
    %3807 = vmatpush1.msra.mxu0 0.0
    %3808 = vmatprep.subr.mxu0 0.0
    %3809 = vmatpush1.msra.mxu0 0.0
    %3810 = vmatprep.subr.mxu0 0.0
    %3811 = vmatpush1.msra.mxu0 0.0
    %3812 = vmatprep.subr.mxu0 0.0
    %3813 = vmatpush1.msra.mxu0 0.0
    %3814 = vmatprep.subr.mxu0 0.0
    %3815 = vmatpush1.msra.mxu0 0.0
    %3816 = vmatprep.subr.mxu0 0.0
    %3817 = vmatpush1.msra.mxu0 0.0
    %3818 = vmatprep.subr.mxu0 0.0
    %3819 = vmatpush1.msra.mxu0 0.0
    %3820 = vmatprep.subr.mxu0 0.0
    %3821 = vmatpush1.msra.mxu0 0.0
    %3822 = vmatprep.subr.mxu0 0.0
    %3823 = vmatpush1.msra.mxu0 0.0
    %3824 = vmatprep.subr.mxu0 0.0
    %3825 = vmatpush1.msra.mxu0 0.0
    %3826 = vmatprep.subr.mxu0 0.0
    %3827 = vmatpush1.msra.mxu0 0.0
    %3828 = vmatprep.subr.mxu0 0.0
    %3829 = vmatpush1.msra.mxu0 0.0
    %3830 = vmatprep.subr.mxu0 0.0
    %3831 = vmatpush1.msra.mxu0 0.0
    %3832 = vmatprep.subr.mxu0 0.0
    %3833 = vmatpush1.msra.mxu0 0.0
    %3834 = vmatprep.subr.mxu0 0.0
    %3835 = vmatpush1.msra.mxu0 0.0
    %3836 = vmatprep.subr.mxu0 0.0
    %3837 = vmatpush1.msra.mxu0 0.0
    %3838 = vmatprep.mubr.f32.mxu0 0.0
    %v3839 = vand.u32 %v3771, 4294901760
    %v3840 = vsub.f32 %v3771, %v3839
    %v3841 = vand.u32 %v3840, 4294901760
    %v3842 = vsub.f32 %v3840, %v3841
    %v3843 = vand.u32 %v3842, 4294901760
    %3844 = vmatmul.mubr.f32.gmra.mrb[0].mxu0 %v3843
    %v3845 = vpop.f32.mrb[0].mxu0
    %v3846 = vadd.f32 0.0, %v3845
    %v3847 = vpop.f32.mrb[0].mxu0
    %3848 = vdwg.mxu0
    %3849 = vmatprep.subr.mxu0 0.0
    %v3850 = vand.u32 %v72, 4294901760
    %v3851 = vsub.f32 %v72, %v3850
    %v3852 = vand.u32 %v3851, 4294901760
    %v3853 = vsub.f32 %v3851, %v3852
    %v3854 = vand.u32 %v3853, 4294901760
    %3855 = vmatpush1.msra.mxu0 %v3854
    %3856 = vmatprep.subr.mxu0 0.0
    %3857 = vmatpush1.msra.mxu0 0.0
    %3858 = vmatprep.subr.mxu0 0.0
    %3859 = vmatpush1.msra.mxu0 0.0
    %3860 = vmatprep.subr.mxu0 0.0
    %3861 = vmatpush1.msra.mxu0 0.0
    %3862 = vmatprep.subr.mxu0 0.0
    %3863 = vmatpush1.msra.mxu0 0.0
    %3864 = vmatprep.subr.mxu0 0.0
    %3865 = vmatpush1.msra.mxu0 0.0
    %3866 = vmatprep.subr.mxu0 0.0
    %3867 = vmatpush1.msra.mxu0 0.0
    %3868 = vmatprep.subr.mxu0 0.0
    %3869 = vmatpush1.msra.mxu0 0.0
    %3870 = vmatprep.subr.mxu0 0.0
    %3871 = vmatpush1.msra.mxu0 0.0
    %3872 = vmatprep.subr.mxu0 0.0
    %3873 = vmatpush1.msra.mxu0 0.0
    %3874 = vmatprep.subr.mxu0 0.0
    %3875 = vmatpush1.msra.mxu0 0.0
    %3876 = vmatprep.subr.mxu0 0.0
    %3877 = vmatpush1.msra.mxu0 0.0
    %3878 = vmatprep.subr.mxu0 0.0
    %3879 = vmatpush1.msra.mxu0 0.0
    %3880 = vmatprep.subr.mxu0 0.0
    %3881 = vmatpush1.msra.mxu0 0.0
    %3882 = vmatprep.subr.mxu0 0.0
    %3883 = vmatpush1.msra.mxu0 0.0
    %3884 = vmatprep.subr.mxu0 0.0
    %3885 = vmatpush1.msra.mxu0 0.0
    %3886 = vmatprep.subr.mxu0 0.0
    %3887 = vmatpush1.msra.mxu0 0.0
    %3888 = vmatprep.subr.mxu0 0.0
    %3889 = vmatpush1.msra.mxu0 0.0
    %3890 = vmatprep.subr.mxu0 0.0
    %3891 = vmatpush1.msra.mxu0 0.0
    %3892 = vmatprep.subr.mxu0 0.0
    %3893 = vmatpush1.msra.mxu0 0.0
    %3894 = vmatprep.subr.mxu0 0.0
    %3895 = vmatpush1.msra.mxu0 0.0
    %3896 = vmatprep.subr.mxu0 0.0
    %3897 = vmatpush1.msra.mxu0 0.0
    %3898 = vmatprep.subr.mxu0 0.0
    %3899 = vmatpush1.msra.mxu0 0.0
    %3900 = vmatprep.subr.mxu0 0.0
    %3901 = vmatpush1.msra.mxu0 0.0
    %3902 = vmatprep.subr.mxu0 0.0
    %3903 = vmatpush1.msra.mxu0 0.0
    %3904 = vmatprep.subr.mxu0 0.0
    %3905 = vmatpush1.msra.mxu0 0.0
    %3906 = vmatprep.subr.mxu0 0.0
    %3907 = vmatpush1.msra.mxu0 0.0
    %3908 = vmatprep.subr.mxu0 0.0
    %3909 = vmatpush1.msra.mxu0 0.0
    %3910 = vmatprep.subr.mxu0 0.0
    %3911 = vmatpush1.msra.mxu0 0.0
    %3912 = vmatprep.subr.mxu0 0.0
    %3913 = vmatpush1.msra.mxu0 0.0
    %3914 = vmatprep.subr.mxu0 0.0
    %3915 = vmatpush1.msra.mxu0 0.0
    %3916 = vmatprep.subr.mxu0 0.0
    %3917 = vmatpush1.msra.mxu0 0.0
    %3918 = vmatprep.mubr.f32.mxu0 0.0
    %v3919 = vand.u32 %v3771, 4294901760
    %3920 = vmatmul.mubr.f32.gmra.mrb[0].mxu0 %v3919
    %v3921 = vpop.f32.mrb[0].mxu0
    %v3922 = vadd.f32 %v3846, %v3921
    %v3923 = vpop.f32.mrb[0].mxu0
    %3924 = vdwg.mxu0
    %3925 = vmatprep.subr.mxu0 0.0
    %v3926 = vand.u32 %v72, 4294901760
    %v3927 = vsub.f32 %v72, %v3926
    %3928 = vmatpush1.msra.mxu0 %v3927
    %3929 = vmatprep.subr.mxu0 0.0
    %3930 = vmatpush1.msra.mxu0 0.0
    %3931 = vmatprep.subr.mxu0 0.0
    %3932 = vmatpush1.msra.mxu0 0.0
    %3933 = vmatprep.subr.mxu0 0.0
    %3934 = vmatpush1.msra.mxu0 0.0
    %3935 = vmatprep.subr.mxu0 0.0
    %3936 = vmatpush1.msra.mxu0 0.0
    %3937 = vmatprep.subr.mxu0 0.0
    %3938 = vmatpush1.msra.mxu0 0.0
    %3939 = vmatprep.subr.mxu0 0.0
    %3940 = vmatpush1.msra.mxu0 0.0
    %3941 = vmatprep.subr.mxu0 0.0
    %3942 = vmatpush1.msra.mxu0 0.0
    %3943 = vmatprep.subr.mxu0 0.0
    %3944 = vmatpush1.msra.mxu0 0.0
    %3945 = vmatprep.subr.mxu0 0.0
    %3946 = vmatpush1.msra.mxu0 0.0
    %3947 = vmatprep.subr.mxu0 0.0
    %3948 = vmatpush1.msra.mxu0 0.0
    %3949 = vmatprep.subr.mxu0 0.0
    %3950 = vmatpush1.msra.mxu0 0.0
    %3951 = vmatprep.subr.mxu0 0.0
    %3952 = vmatpush1.msra.mxu0 0.0
    %3953 = vmatprep.subr.mxu0 0.0
    %3954 = vmatpush1.msra.mxu0 0.0
    %3955 = vmatprep.subr.mxu0 0.0
    %3956 = vmatpush1.msra.mxu0 0.0
    %3957 = vmatprep.subr.mxu0 0.0
    %3958 = vmatpush1.msra.mxu0 0.0
    %3959 = vmatprep.subr.mxu0 0.0
    %3960 = vmatpush1.msra.mxu0 0.0
    %3961 = vmatprep.subr.mxu0 0.0
    %3962 = vmatpush1.msra.mxu0 0.0
    %3963 = vmatprep.subr.mxu0 0.0
    %3964 = vmatpush1.msra.mxu0 0.0
    %3965 = vmatprep.subr.mxu0 0.0
    %3966 = vmatpush1.msra.mxu0 0.0
    %3967 = vmatprep.subr.mxu0 0.0
    %3968 = vmatpush1.msra.mxu0 0.0
    %3969 = vmatprep.subr.mxu0 0.0
    %3970 = vmatpush1.msra.mxu0 0.0
    %3971 = vmatprep.subr.mxu0 0.0
    %3972 = vmatpush1.msra.mxu0 0.0
    %3973 = vmatprep.subr.mxu0 0.0
    %3974 = vmatpush1.msra.mxu0 0.0
    %3975 = vmatprep.subr.mxu0 0.0
    %3976 = vmatpush1.msra.mxu0 0.0
    %3977 = vmatprep.subr.mxu0 0.0
    %3978 = vmatpush1.msra.mxu0 0.0
    %3979 = vmatprep.subr.mxu0 0.0
    %3980 = vmatpush1.msra.mxu0 0.0
    %3981 = vmatprep.subr.mxu0 0.0
    %3982 = vmatpush1.msra.mxu0 0.0
    %3983 = vmatprep.subr.mxu0 0.0
    %3984 = vmatpush1.msra.mxu0 0.0
    %3985 = vmatprep.subr.mxu0 0.0
    %3986 = vmatpush1.msra.mxu0 0.0
    %3987 = vmatprep.subr.mxu0 0.0
    %3988 = vmatpush1.msra.mxu0 0.0
    %3989 = vmatprep.subr.mxu0 0.0
    %3990 = vmatpush1.msra.mxu0 0.0
    %3991 = vmatprep.mubr.f32.mxu0 0.0
    %v3992 = vand.u32 %v3771, 4294901760
    %v3993 = vsub.f32 %v3771, %v3992
    %3994 = vmatmul.mubr.f32.gmra.mrb[0].mxu0 %v3993
    %v3995 = vpop.f32.mrb[0].mxu0
    %v3996 = vadd.f32 %v3922, %v3995
    %v3997 = vpop.f32.mrb[0].mxu0
    %3998 = vdwg.mxu0
    %3999 = vmatprep.subr.mxu0 0.0
    %v4000 = vand.u32 %v72, 4294901760
    %4001 = vmatpush1.msra.mxu0 %v4000
    %4002 = vmatprep.subr.mxu0 0.0
    %4003 = vmatpush1.msra.mxu0 0.0
    %4004 = vmatprep.subr.mxu0 0.0
    %4005 = vmatpush1.msra.mxu0 0.0
    %4006 = vmatprep.subr.mxu0 0.0
    %4007 = vmatpush1.msra.mxu0 0.0
    %4008 = vmatprep.subr.mxu0 0.0
    %4009 = vmatpush1.msra.mxu0 0.0
    %4010 = vmatprep.subr.mxu0 0.0
    %4011 = vmatpush1.msra.mxu0 0.0
    %4012 = vmatprep.subr.mxu0 0.0
    %4013 = vmatpush1.msra.mxu0 0.0
    %4014 = vmatprep.subr.mxu0 0.0
    %4015 = vmatpush1.msra.mxu0 0.0
    %4016 = vmatprep.subr.mxu0 0.0
    %4017 = vmatpush1.msra.mxu0 0.0
    %4018 = vmatprep.subr.mxu0 0.0
    %4019 = vmatpush1.msra.mxu0 0.0
    %4020 = vmatprep.subr.mxu0 0.0
    %4021 = vmatpush1.msra.mxu0 0.0
    %4022 = vmatprep.subr.mxu0 0.0
    %4023 = vmatpush1.msra.mxu0 0.0
    %4024 = vmatprep.subr.mxu0 0.0
    %4025 = vmatpush1.msra.mxu0 0.0
    %4026 = vmatprep.subr.mxu0 0.0
    %4027 = vmatpush1.msra.mxu0 0.0
    %4028 = vmatprep.subr.mxu0 0.0
    %4029 = vmatpush1.msra.mxu0 0.0
    %4030 = vmatprep.subr.mxu0 0.0
    %4031 = vmatpush1.msra.mxu0 0.0
    %4032 = vmatprep.subr.mxu0 0.0
    %4033 = vmatpush1.msra.mxu0 0.0
    %4034 = vmatprep.subr.mxu0 0.0
    %4035 = vmatpush1.msra.mxu0 0.0
    %4036 = vmatprep.subr.mxu0 0.0
    %4037 = vmatpush1.msra.mxu0 0.0
    %4038 = vmatprep.subr.mxu0 0.0
    %4039 = vmatpush1.msra.mxu0 0.0
    %4040 = vmatprep.subr.mxu0 0.0
    %4041 = vmatpush1.msra.mxu0 0.0
    %4042 = vmatprep.subr.mxu0 0.0
    %4043 = vmatpush1.msra.mxu0 0.0
    %4044 = vmatprep.subr.mxu0 0.0
    %4045 = vmatpush1.msra.mxu0 0.0
    %4046 = vmatprep.subr.mxu0 0.0
    %4047 = vmatpush1.msra.mxu0 0.0
    %4048 = vmatprep.subr.mxu0 0.0
    %4049 = vmatpush1.msra.mxu0 0.0
    %4050 = vmatprep.subr.mxu0 0.0
    %4051 = vmatpush1.msra.mxu0 0.0
    %4052 = vmatprep.subr.mxu0 0.0
    %4053 = vmatpush1.msra.mxu0 0.0
    %4054 = vmatprep.subr.mxu0 0.0
    %4055 = vmatpush1.msra.mxu0 0.0
    %4056 = vmatprep.subr.mxu0 0.0
    %4057 = vmatpush1.msra.mxu0 0.0
    %4058 = vmatprep.subr.mxu0 0.0
    %4059 = vmatpush1.msra.mxu0 0.0
    %4060 = vmatprep.subr.mxu0 0.0
    %4061 = vmatpush1.msra.mxu0 0.0
    %4062 = vmatprep.subr.mxu0 0.0
    %4063 = vmatpush1.msra.mxu0 0.0
    %4064 = vmatprep.mubr.f32.mxu0 0.0
    %v4065 = vand.u32 %v3771, 4294901760
    %v4066 = vsub.f32 %v3771, %v4065
    %v4067 = vand.u32 %v4066, 4294901760
    %4068 = vmatmul.mubr.f32.gmra.mrb[0].mxu0 %v4067
    %v4069 = vpop.f32.mrb[0].mxu0
    %v4070 = vadd.f32 %v3996, %v4069
    %v4071 = vpop.f32.mrb[0].mxu0
    %4072 = vdwg.mxu0
    %4073 = vmatprep.subr.mxu0 0.0
    %v4074 = vand.u32 %v72, 4294901760
    %v4075 = vsub.f32 %v72, %v4074
    %v4076 = vand.u32 %v4075, 4294901760
    %4077 = vmatpush1.msra.mxu0 %v4076
    %4078 = vmatprep.subr.mxu0 0.0
    %4079 = vmatpush1.msra.mxu0 0.0
    %4080 = vmatprep.subr.mxu0 0.0
    %4081 = vmatpush1.msra.mxu0 0.0
    %4082 = vmatprep.subr.mxu0 0.0
    %4083 = vmatpush1.msra.mxu0 0.0
    %4084 = vmatprep.subr.mxu0 0.0
    %4085 = vmatpush1.msra.mxu0 0.0
    %4086 = vmatprep.subr.mxu0 0.0
    %4087 = vmatpush1.msra.mxu0 0.0
    %4088 = vmatprep.subr.mxu0 0.0
    %4089 = vmatpush1.msra.mxu0 0.0
    %4090 = vmatprep.subr.mxu0 0.0
    %4091 = vmatpush1.msra.mxu0 0.0
    %4092 = vmatprep.subr.mxu0 0.0
    %4093 = vmatpush1.msra.mxu0 0.0
    %4094 = vmatprep.subr.mxu0 0.0
    %4095 = vmatpush1.msra.mxu0 0.0
    %4096 = vmatprep.subr.mxu0 0.0
    %4097 = vmatpush1.msra.mxu0 0.0
    %4098 = vmatprep.subr.mxu0 0.0
    %4099 = vmatpush1.msra.mxu0 0.0
    %4100 = vmatprep.subr.mxu0 0.0
    %4101 = vmatpush1.msra.mxu0 0.0
    %4102 = vmatprep.subr.mxu0 0.0
    %4103 = vmatpush1.msra.mxu0 0.0
    %4104 = vmatprep.subr.mxu0 0.0
    %4105 = vmatpush1.msra.mxu0 0.0
    %4106 = vmatprep.subr.mxu0 0.0
    %4107 = vmatpush1.msra.mxu0 0.0
    %4108 = vmatprep.subr.mxu0 0.0
    %4109 = vmatpush1.msra.mxu0 0.0
    %4110 = vmatprep.subr.mxu0 0.0
    %4111 = vmatpush1.msra.mxu0 0.0
    %4112 = vmatprep.subr.mxu0 0.0
    %4113 = vmatpush1.msra.mxu0 0.0
    %4114 = vmatprep.subr.mxu0 0.0
    %4115 = vmatpush1.msra.mxu0 0.0
    %4116 = vmatprep.subr.mxu0 0.0
    %4117 = vmatpush1.msra.mxu0 0.0
    %4118 = vmatprep.subr.mxu0 0.0
    %4119 = vmatpush1.msra.mxu0 0.0
    %4120 = vmatprep.subr.mxu0 0.0
    %4121 = vmatpush1.msra.mxu0 0.0
    %4122 = vmatprep.subr.mxu0 0.0
    %4123 = vmatpush1.msra.mxu0 0.0
    %4124 = vmatprep.subr.mxu0 0.0
    %4125 = vmatpush1.msra.mxu0 0.0
    %4126 = vmatprep.subr.mxu0 0.0
    %4127 = vmatpush1.msra.mxu0 0.0
    %4128 = vmatprep.subr.mxu0 0.0
    %4129 = vmatpush1.msra.mxu0 0.0
    %4130 = vmatprep.subr.mxu0 0.0
    %4131 = vmatpush1.msra.mxu0 0.0
    %4132 = vmatprep.subr.mxu0 0.0
    %4133 = vmatpush1.msra.mxu0 0.0
    %4134 = vmatprep.subr.mxu0 0.0
    %4135 = vmatpush1.msra.mxu0 0.0
    %4136 = vmatprep.subr.mxu0 0.0
    %4137 = vmatpush1.msra.mxu0 0.0
    %4138 = vmatprep.subr.mxu0 0.0
    %4139 = vmatpush1.msra.mxu0 0.0
    %4140 = vmatprep.mubr.f32.mxu0 0.0
    %v4141 = vand.u32 %v3771, 4294901760
    %4142 = vmatmul.mubr.f32.gmra.mrb[0].mxu0 %v4141
    %v4143 = vpop.f32.mrb[0].mxu0
    %v4144 = vadd.f32 %v4070, %v4143
    %v4145 = vpop.f32.mrb[0].mxu0
    %4146 = vdwg.mxu0
    %4147 = vmatprep.subr.mxu0 0.0
    %v4148 = vand.u32 %v72, 4294901760
    %4149 = vmatpush1.msra.mxu0 %v4148
    %4150 = vmatprep.subr.mxu0 0.0
    %4151 = vmatpush1.msra.mxu0 0.0
    %4152 = vmatprep.subr.mxu0 0.0
    %4153 = vmatpush1.msra.mxu0 0.0
    %4154 = vmatprep.subr.mxu0 0.0
    %4155 = vmatpush1.msra.mxu0 0.0
    %4156 = vmatprep.subr.mxu0 0.0
    %4157 = vmatpush1.msra.mxu0 0.0
    %4158 = vmatprep.subr.mxu0 0.0
    %4159 = vmatpush1.msra.mxu0 0.0
    %4160 = vmatprep.subr.mxu0 0.0
    %4161 = vmatpush1.msra.mxu0 0.0
    %4162 = vmatprep.subr.mxu0 0.0
    %4163 = vmatpush1.msra.mxu0 0.0
    %4164 = vmatprep.subr.mxu0 0.0
    %4165 = vmatpush1.msra.mxu0 0.0
    %4166 = vmatprep.subr.mxu0 0.0
    %4167 = vmatpush1.msra.mxu0 0.0
    %4168 = vmatprep.subr.mxu0 0.0
    %4169 = vmatpush1.msra.mxu0 0.0
    %4170 = vmatprep.subr.mxu0 0.0
    %4171 = vmatpush1.msra.mxu0 0.0
    %4172 = vmatprep.subr.mxu0 0.0
    %4173 = vmatpush1.msra.mxu0 0.0
    %4174 = vmatprep.subr.mxu0 0.0
    %4175 = vmatpush1.msra.mxu0 0.0
    %4176 = vmatprep.subr.mxu0 0.0
    %4177 = vmatpush1.msra.mxu0 0.0
    %4178 = vmatprep.subr.mxu0 0.0
    %4179 = vmatpush1.msra.mxu0 0.0
    %4180 = vmatprep.subr.mxu0 0.0
    %4181 = vmatpush1.msra.mxu0 0.0
    %4182 = vmatprep.subr.mxu0 0.0
    %4183 = vmatpush1.msra.mxu0 0.0
    %4184 = vmatprep.subr.mxu0 0.0
    %4185 = vmatpush1.msra.mxu0 0.0
    %4186 = vmatprep.subr.mxu0 0.0
    %4187 = vmatpush1.msra.mxu0 0.0
    %4188 = vmatprep.subr.mxu0 0.0
    %4189 = vmatpush1.msra.mxu0 0.0
    %4190 = vmatprep.subr.mxu0 0.0
    %4191 = vmatpush1.msra.mxu0 0.0
    %4192 = vmatprep.subr.mxu0 0.0
    %4193 = vmatpush1.msra.mxu0 0.0
    %4194 = vmatprep.subr.mxu0 0.0
    %4195 = vmatpush1.msra.mxu0 0.0
    %4196 = vmatprep.subr.mxu0 0.0
    %4197 = vmatpush1.msra.mxu0 0.0
    %4198 = vmatprep.subr.mxu0 0.0
    %4199 = vmatpush1.msra.mxu0 0.0
    %4200 = vmatprep.subr.mxu0 0.0
    %4201 = vmatpush1.msra.mxu0 0.0
    %4202 = vmatprep.subr.mxu0 0.0
    %4203 = vmatpush1.msra.mxu0 0.0
    %4204 = vmatprep.subr.mxu0 0.0
    %4205 = vmatpush1.msra.mxu0 0.0
    %4206 = vmatprep.subr.mxu0 0.0
    %4207 = vmatpush1.msra.mxu0 0.0
    %4208 = vmatprep.subr.mxu0 0.0
    %4209 = vmatpush1.msra.mxu0 0.0
    %4210 = vmatprep.subr.mxu0 0.0
    %4211 = vmatpush1.msra.mxu0 0.0
    %4212 = vmatprep.mubr.f32.mxu0 0.0
    %v4213 = vand.u32 %v3771, 4294901760
    %4214 = vmatmul.mubr.f32.gmra.mrb[0].mxu0 %v4213
    %v4215 = vpop.f32.mrb[0].mxu0
    %v4216 = vadd.f32 %v4144, %v4215
    %v4217 = vpop.f32.mrb[0].mxu0
    %4218 = vdwg.mxu0
    %v4220 = vsel %vm3697, %v3733, 0
    %4222 = vmatprep.subr.mxu0 0.0
    %v4223 = vand.u32 %v73, 4294901760
    %4224 = vmatpush1.msra.mxu0 %v4223
    %4225 = vmatprep.subr.mxu0 0.0
    %4226 = vmatpush1.msra.mxu0 0.0
    %4227 = vmatprep.subr.mxu0 0.0
    %4228 = vmatpush1.msra.mxu0 0.0
    %4229 = vmatprep.subr.mxu0 0.0
    %4230 = vmatpush1.msra.mxu0 0.0
    %4231 = vmatprep.subr.mxu0 0.0
    %4232 = vmatpush1.msra.mxu0 0.0
    %4233 = vmatprep.subr.mxu0 0.0
    %4234 = vmatpush1.msra.mxu0 0.0
    %4235 = vmatprep.subr.mxu0 0.0
    %4236 = vmatpush1.msra.mxu0 0.0
    %4237 = vmatprep.subr.mxu0 0.0
    %4238 = vmatpush1.msra.mxu0 0.0
    %4239 = vmatprep.subr.mxu0 0.0
    %4240 = vmatpush1.msra.mxu0 0.0
    %4241 = vmatprep.subr.mxu0 0.0
    %4242 = vmatpush1.msra.mxu0 0.0
    %4243 = vmatprep.subr.mxu0 0.0
    %4244 = vmatpush1.msra.mxu0 0.0
    %4245 = vmatprep.subr.mxu0 0.0
    %4246 = vmatpush1.msra.mxu0 0.0
    %4247 = vmatprep.subr.mxu0 0.0
    %4248 = vmatpush1.msra.mxu0 0.0
    %4249 = vmatprep.subr.mxu0 0.0
    %4250 = vmatpush1.msra.mxu0 0.0
    %4251 = vmatprep.subr.mxu0 0.0
    %4252 = vmatpush1.msra.mxu0 0.0
    %4253 = vmatprep.subr.mxu0 0.0
    %4254 = vmatpush1.msra.mxu0 0.0
    %4255 = vmatprep.subr.mxu0 0.0
    %4256 = vmatpush1.msra.mxu0 0.0
    %4257 = vmatprep.subr.mxu0 0.0
    %4258 = vmatpush1.msra.mxu0 0.0
    %4259 = vmatprep.subr.mxu0 0.0
    %4260 = vmatpush1.msra.mxu0 0.0
    %4261 = vmatprep.subr.mxu0 0.0
    %4262 = vmatpush1.msra.mxu0 0.0
    %4263 = vmatprep.subr.mxu0 0.0
    %4264 = vmatpush1.msra.mxu0 0.0
    %4265 = vmatprep.subr.mxu0 0.0
    %4266 = vmatpush1.msra.mxu0 0.0
    %4267 = vmatprep.subr.mxu0 0.0
    %4268 = vmatpush1.msra.mxu0 0.0
    %4269 = vmatprep.subr.mxu0 0.0
    %4270 = vmatpush1.msra.mxu0 0.0
    %4271 = vmatprep.subr.mxu0 0.0
    %4272 = vmatpush1.msra.mxu0 0.0
    %4273 = vmatprep.subr.mxu0 0.0
    %4274 = vmatpush1.msra.mxu0 0.0
    %4275 = vmatprep.subr.mxu0 0.0
    %4276 = vmatpush1.msra.mxu0 0.0
    %4277 = vmatprep.subr.mxu0 0.0
    %4278 = vmatpush1.msra.mxu0 0.0
    %4279 = vmatprep.subr.mxu0 0.0
    %4280 = vmatpush1.msra.mxu0 0.0
    %4281 = vmatprep.subr.mxu0 0.0
    %4282 = vmatpush1.msra.mxu0 0.0
    %4283 = vmatprep.subr.mxu0 0.0
    %4284 = vmatpush1.msra.mxu0 0.0
    %4285 = vmatprep.subr.mxu0 0.0
    %4286 = vmatpush1.msra.mxu0 0.0
    %4287 = vmatprep.mubr.f32.mxu0 0.0
    %v4288 = vand.u32 %v4220, 4294901760
    %v4289 = vsub.f32 %v4220, %v4288
    %v4290 = vand.u32 %v4289, 4294901760
    %v4291 = vsub.f32 %v4289, %v4290
    %v4292 = vand.u32 %v4291, 4294901760
    %4293 = vmatmul.mubr.f32.gmra.mrb[0].mxu0 %v4292
    %v4294 = vpop.f32.mrb[0].mxu0
    %v4295 = vadd.f32 0.0, %v4294
    %v4296 = vpop.f32.mrb[0].mxu0
    %4297 = vdwg.mxu0
    %4298 = vmatprep.subr.mxu0 0.0
    %v4299 = vand.u32 %v73, 4294901760
    %v4300 = vsub.f32 %v73, %v4299
    %v4301 = vand.u32 %v4300, 4294901760
    %v4302 = vsub.f32 %v4300, %v4301
    %v4303 = vand.u32 %v4302, 4294901760
    %4304 = vmatpush1.msra.mxu0 %v4303
    %4305 = vmatprep.subr.mxu0 0.0
    %4306 = vmatpush1.msra.mxu0 0.0
    %4307 = vmatprep.subr.mxu0 0.0
    %4308 = vmatpush1.msra.mxu0 0.0
    %4309 = vmatprep.subr.mxu0 0.0
    %4310 = vmatpush1.msra.mxu0 0.0
    %4311 = vmatprep.subr.mxu0 0.0
    %4312 = vmatpush1.msra.mxu0 0.0
    %4313 = vmatprep.subr.mxu0 0.0
    %4314 = vmatpush1.msra.mxu0 0.0
    %4315 = vmatprep.subr.mxu0 0.0
    %4316 = vmatpush1.msra.mxu0 0.0
    %4317 = vmatprep.subr.mxu0 0.0
    %4318 = vmatpush1.msra.mxu0 0.0
    %4319 = vmatprep.subr.mxu0 0.0
    %4320 = vmatpush1.msra.mxu0 0.0
    %4321 = vmatprep.subr.mxu0 0.0
    %4322 = vmatpush1.msra.mxu0 0.0
    %4323 = vmatprep.subr.mxu0 0.0
    %4324 = vmatpush1.msra.mxu0 0.0
    %4325 = vmatprep.subr.mxu0 0.0
    %4326 = vmatpush1.msra.mxu0 0.0
    %4327 = vmatprep.subr.mxu0 0.0
    %4328 = vmatpush1.msra.mxu0 0.0
    %4329 = vmatprep.subr.mxu0 0.0
    %4330 = vmatpush1.msra.mxu0 0.0
    %4331 = vmatprep.subr.mxu0 0.0
    %4332 = vmatpush1.msra.mxu0 0.0
    %4333 = vmatprep.subr.mxu0 0.0
    %4334 = vmatpush1.msra.mxu0 0.0
    %4335 = vmatprep.subr.mxu0 0.0
    %4336 = vmatpush1.msra.mxu0 0.0
    %4337 = vmatprep.subr.mxu0 0.0
    %4338 = vmatpush1.msra.mxu0 0.0
    %4339 = vmatprep.subr.mxu0 0.0
    %4340 = vmatpush1.msra.mxu0 0.0
    %4341 = vmatprep.subr.mxu0 0.0
    %4342 = vmatpush1.msra.mxu0 0.0
    %4343 = vmatprep.subr.mxu0 0.0
    %4344 = vmatpush1.msra.mxu0 0.0
    %4345 = vmatprep.subr.mxu0 0.0
    %4346 = vmatpush1.msra.mxu0 0.0
    %4347 = vmatprep.subr.mxu0 0.0
    %4348 = vmatpush1.msra.mxu0 0.0
    %4349 = vmatprep.subr.mxu0 0.0
    %4350 = vmatpush1.msra.mxu0 0.0
    %4351 = vmatprep.subr.mxu0 0.0
    %4352 = vmatpush1.msra.mxu0 0.0
    %4353 = vmatprep.subr.mxu0 0.0
    %4354 = vmatpush1.msra.mxu0 0.0
    %4355 = vmatprep.subr.mxu0 0.0
    %4356 = vmatpush1.msra.mxu0 0.0
    %4357 = vmatprep.subr.mxu0 0.0
    %4358 = vmatpush1.msra.mxu0 0.0
    %4359 = vmatprep.subr.mxu0 0.0
    %4360 = vmatpush1.msra.mxu0 0.0
    %4361 = vmatprep.subr.mxu0 0.0
    %4362 = vmatpush1.msra.mxu0 0.0
    %4363 = vmatprep.subr.mxu0 0.0
    %4364 = vmatpush1.msra.mxu0 0.0
    %4365 = vmatprep.subr.mxu0 0.0
    %4366 = vmatpush1.msra.mxu0 0.0
    %4367 = vmatprep.mubr.f32.mxu0 0.0
    %v4368 = vand.u32 %v4220, 4294901760
    %4369 = vmatmul.mubr.f32.gmra.mrb[0].mxu0 %v4368
    %v4370 = vpop.f32.mrb[0].mxu0
    %v4371 = vadd.f32 %v4295, %v4370
    %v4372 = vpop.f32.mrb[0].mxu0
    %4373 = vdwg.mxu0
    %4374 = vmatprep.subr.mxu0 0.0
    %v4375 = vand.u32 %v73, 4294901760
    %v4376 = vsub.f32 %v73, %v4375
    %4377 = vmatpush1.msra.mxu0 %v4376
    %4378 = vmatprep.subr.mxu0 0.0
    %4379 = vmatpush1.msra.mxu0 0.0
    %4380 = vmatprep.subr.mxu0 0.0
    %4381 = vmatpush1.msra.mxu0 0.0
    %4382 = vmatprep.subr.mxu0 0.0
    %4383 = vmatpush1.msra.mxu0 0.0
    %4384 = vmatprep.subr.mxu0 0.0
    %4385 = vmatpush1.msra.mxu0 0.0
    %4386 = vmatprep.subr.mxu0 0.0
    %4387 = vmatpush1.msra.mxu0 0.0
    %4388 = vmatprep.subr.mxu0 0.0
    %4389 = vmatpush1.msra.mxu0 0.0
    %4390 = vmatprep.subr.mxu0 0.0
    %4391 = vmatpush1.msra.mxu0 0.0
    %4392 = vmatprep.subr.mxu0 0.0
    %4393 = vmatpush1.msra.mxu0 0.0
    %4394 = vmatprep.subr.mxu0 0.0
    %4395 = vmatpush1.msra.mxu0 0.0
    %4396 = vmatprep.subr.mxu0 0.0
    %4397 = vmatpush1.msra.mxu0 0.0
    %4398 = vmatprep.subr.mxu0 0.0
    %4399 = vmatpush1.msra.mxu0 0.0
    %4400 = vmatprep.subr.mxu0 0.0
    %4401 = vmatpush1.msra.mxu0 0.0
    %4402 = vmatprep.subr.mxu0 0.0
    %4403 = vmatpush1.msra.mxu0 0.0
    %4404 = vmatprep.subr.mxu0 0.0
    %4405 = vmatpush1.msra.mxu0 0.0
    %4406 = vmatprep.subr.mxu0 0.0
    %4407 = vmatpush1.msra.mxu0 0.0
    %4408 = vmatprep.subr.mxu0 0.0
    %4409 = vmatpush1.msra.mxu0 0.0
    %4410 = vmatprep.subr.mxu0 0.0
    %4411 = vmatpush1.msra.mxu0 0.0
    %4412 = vmatprep.subr.mxu0 0.0
    %4413 = vmatpush1.msra.mxu0 0.0
    %4414 = vmatprep.subr.mxu0 0.0
    %4415 = vmatpush1.msra.mxu0 0.0
    %4416 = vmatprep.subr.mxu0 0.0
    %4417 = vmatpush1.msra.mxu0 0.0
    %4418 = vmatprep.subr.mxu0 0.0
    %4419 = vmatpush1.msra.mxu0 0.0
    %4420 = vmatprep.subr.mxu0 0.0
    %4421 = vmatpush1.msra.mxu0 0.0
    %4422 = vmatprep.subr.mxu0 0.0
    %4423 = vmatpush1.msra.mxu0 0.0
    %4424 = vmatprep.subr.mxu0 0.0
    %4425 = vmatpush1.msra.mxu0 0.0
    %4426 = vmatprep.subr.mxu0 0.0
    %4427 = vmatpush1.msra.mxu0 0.0
    %4428 = vmatprep.subr.mxu0 0.0
    %4429 = vmatpush1.msra.mxu0 0.0
    %4430 = vmatprep.subr.mxu0 0.0
    %4431 = vmatpush1.msra.mxu0 0.0
    %4432 = vmatprep.subr.mxu0 0.0
    %4433 = vmatpush1.msra.mxu0 0.0
    %4434 = vmatprep.subr.mxu0 0.0
    %4435 = vmatpush1.msra.mxu0 0.0
    %4436 = vmatprep.subr.mxu0 0.0
    %4437 = vmatpush1.msra.mxu0 0.0
    %4438 = vmatprep.subr.mxu0 0.0
    %4439 = vmatpush1.msra.mxu0 0.0
    %4440 = vmatprep.mubr.f32.mxu0 0.0
    %v4441 = vand.u32 %v4220, 4294901760
    %v4442 = vsub.f32 %v4220, %v4441
    %4443 = vmatmul.mubr.f32.gmra.mrb[0].mxu0 %v4442
    %v4444 = vpop.f32.mrb[0].mxu0
    %v4445 = vadd.f32 %v4371, %v4444
    %v4446 = vpop.f32.mrb[0].mxu0
    %4447 = vdwg.mxu0
    %4448 = vmatprep.subr.mxu0 0.0
    %v4449 = vand.u32 %v73, 4294901760
    %4450 = vmatpush1.msra.mxu0 %v4449
    %4451 = vmatprep.subr.mxu0 0.0
    %4452 = vmatpush1.msra.mxu0 0.0
    %4453 = vmatprep.subr.mxu0 0.0
    %4454 = vmatpush1.msra.mxu0 0.0
    %4455 = vmatprep.subr.mxu0 0.0
    %4456 = vmatpush1.msra.mxu0 0.0
    %4457 = vmatprep.subr.mxu0 0.0
    %4458 = vmatpush1.msra.mxu0 0.0
    %4459 = vmatprep.subr.mxu0 0.0
    %4460 = vmatpush1.msra.mxu0 0.0
    %4461 = vmatprep.subr.mxu0 0.0
    %4462 = vmatpush1.msra.mxu0 0.0
    %4463 = vmatprep.subr.mxu0 0.0
    %4464 = vmatpush1.msra.mxu0 0.0
    %4465 = vmatprep.subr.mxu0 0.0
    %4466 = vmatpush1.msra.mxu0 0.0
    %4467 = vmatprep.subr.mxu0 0.0
    %4468 = vmatpush1.msra.mxu0 0.0
    %4469 = vmatprep.subr.mxu0 0.0
    %4470 = vmatpush1.msra.mxu0 0.0
    %4471 = vmatprep.subr.mxu0 0.0
    %4472 = vmatpush1.msra.mxu0 0.0
    %4473 = vmatprep.subr.mxu0 0.0
    %4474 = vmatpush1.msra.mxu0 0.0
    %4475 = vmatprep.subr.mxu0 0.0
    %4476 = vmatpush1.msra.mxu0 0.0
    %4477 = vmatprep.subr.mxu0 0.0
    %4478 = vmatpush1.msra.mxu0 0.0
    %4479 = vmatprep.subr.mxu0 0.0
    %4480 = vmatpush1.msra.mxu0 0.0
    %4481 = vmatprep.subr.mxu0 0.0
    %4482 = vmatpush1.msra.mxu0 0.0
    %4483 = vmatprep.subr.mxu0 0.0
    %4484 = vmatpush1.msra.mxu0 0.0
    %4485 = vmatprep.subr.mxu0 0.0
    %4486 = vmatpush1.msra.mxu0 0.0
    %4487 = vmatprep.subr.mxu0 0.0
    %4488 = vmatpush1.msra.mxu0 0.0
    %4489 = vmatprep.subr.mxu0 0.0
    %4490 = vmatpush1.msra.mxu0 0.0
    %4491 = vmatprep.subr.mxu0 0.0
    %4492 = vmatpush1.msra.mxu0 0.0
    %4493 = vmatprep.subr.mxu0 0.0
    %4494 = vmatpush1.msra.mxu0 0.0
    %4495 = vmatprep.subr.mxu0 0.0
    %4496 = vmatpush1.msra.mxu0 0.0
    %4497 = vmatprep.subr.mxu0 0.0
    %4498 = vmatpush1.msra.mxu0 0.0
    %4499 = vmatprep.subr.mxu0 0.0
    %4500 = vmatpush1.msra.mxu0 0.0
    %4501 = vmatprep.subr.mxu0 0.0
    %4502 = vmatpush1.msra.mxu0 0.0
    %4503 = vmatprep.subr.mxu0 0.0
    %4504 = vmatpush1.msra.mxu0 0.0
    %4505 = vmatprep.subr.mxu0 0.0
    %4506 = vmatpush1.msra.mxu0 0.0
    %4507 = vmatprep.subr.mxu0 0.0
    %4508 = vmatpush1.msra.mxu0 0.0
    %4509 = vmatprep.subr.mxu0 0.0
    %4510 = vmatpush1.msra.mxu0 0.0
    %4511 = vmatprep.subr.mxu0 0.0
    %4512 = vmatpush1.msra.mxu0 0.0
    %4513 = vmatprep.mubr.f32.mxu0 0.0
    %v4514 = vand.u32 %v4220, 4294901760
    %v4515 = vsub.f32 %v4220, %v4514
    %v4516 = vand.u32 %v4515, 4294901760
    %4517 = vmatmul.mubr.f32.gmra.mrb[0].mxu0 %v4516
    %v4518 = vpop.f32.mrb[0].mxu0
    %v4519 = vadd.f32 %v4445, %v4518
    %v4520 = vpop.f32.mrb[0].mxu0
    %4521 = vdwg.mxu0
    %4522 = vmatprep.subr.mxu0 0.0
    %v4523 = vand.u32 %v73, 4294901760
    %v4524 = vsub.f32 %v73, %v4523
    %v4525 = vand.u32 %v4524, 4294901760
    %4526 = vmatpush1.msra.mxu0 %v4525
    %4527 = vmatprep.subr.mxu0 0.0
    %4528 = vmatpush1.msra.mxu0 0.0
    %4529 = vmatprep.subr.mxu0 0.0
    %4530 = vmatpush1.msra.mxu0 0.0
    %4531 = vmatprep.subr.mxu0 0.0
    %4532 = vmatpush1.msra.mxu0 0.0
    %4533 = vmatprep.subr.mxu0 0.0
    %4534 = vmatpush1.msra.mxu0 0.0
    %4535 = vmatprep.subr.mxu0 0.0
    %4536 = vmatpush1.msra.mxu0 0.0
    %4537 = vmatprep.subr.mxu0 0.0
    %4538 = vmatpush1.msra.mxu0 0.0
    %4539 = vmatprep.subr.mxu0 0.0
    %4540 = vmatpush1.msra.mxu0 0.0
    %4541 = vmatprep.subr.mxu0 0.0
    %4542 = vmatpush1.msra.mxu0 0.0
    %4543 = vmatprep.subr.mxu0 0.0
    %4544 = vmatpush1.msra.mxu0 0.0
    %4545 = vmatprep.subr.mxu0 0.0
    %4546 = vmatpush1.msra.mxu0 0.0
    %4547 = vmatprep.subr.mxu0 0.0
    %4548 = vmatpush1.msra.mxu0 0.0
    %4549 = vmatprep.subr.mxu0 0.0
    %4550 = vmatpush1.msra.mxu0 0.0
    %4551 = vmatprep.subr.mxu0 0.0
    %4552 = vmatpush1.msra.mxu0 0.0
    %4553 = vmatprep.subr.mxu0 0.0
    %4554 = vmatpush1.msra.mxu0 0.0
    %4555 = vmatprep.subr.mxu0 0.0
    %4556 = vmatpush1.msra.mxu0 0.0
    %4557 = vmatprep.subr.mxu0 0.0
    %4558 = vmatpush1.msra.mxu0 0.0
    %4559 = vmatprep.subr.mxu0 0.0
    %4560 = vmatpush1.msra.mxu0 0.0
    %4561 = vmatprep.subr.mxu0 0.0
    %4562 = vmatpush1.msra.mxu0 0.0
    %4563 = vmatprep.subr.mxu0 0.0
    %4564 = vmatpush1.msra.mxu0 0.0
    %4565 = vmatprep.subr.mxu0 0.0
    %4566 = vmatpush1.msra.mxu0 0.0
    %4567 = vmatprep.subr.mxu0 0.0
    %4568 = vmatpush1.msra.mxu0 0.0
    %4569 = vmatprep.subr.mxu0 0.0
    %4570 = vmatpush1.msra.mxu0 0.0
    %4571 = vmatprep.subr.mxu0 0.0
    %4572 = vmatpush1.msra.mxu0 0.0
    %4573 = vmatprep.subr.mxu0 0.0
    %4574 = vmatpush1.msra.mxu0 0.0
    %4575 = vmatprep.subr.mxu0 0.0
    %4576 = vmatpush1.msra.mxu0 0.0
    %4577 = vmatprep.subr.mxu0 0.0
    %4578 = vmatpush1.msra.mxu0 0.0
    %4579 = vmatprep.subr.mxu0 0.0
    %4580 = vmatpush1.msra.mxu0 0.0
    %4581 = vmatprep.subr.mxu0 0.0
    %4582 = vmatpush1.msra.mxu0 0.0
    %4583 = vmatprep.subr.mxu0 0.0
    %4584 = vmatpush1.msra.mxu0 0.0
    %4585 = vmatprep.subr.mxu0 0.0
    %4586 = vmatpush1.msra.mxu0 0.0
    %4587 = vmatprep.subr.mxu0 0.0
    %4588 = vmatpush1.msra.mxu0 0.0
    %4589 = vmatprep.mubr.f32.mxu0 0.0
    %v4590 = vand.u32 %v4220, 4294901760
    %4591 = vmatmul.mubr.f32.gmra.mrb[0].mxu0 %v4590
    %v4592 = vpop.f32.mrb[0].mxu0
    %v4593 = vadd.f32 %v4519, %v4592
    %v4594 = vpop.f32.mrb[0].mxu0
    %4595 = vdwg.mxu0
    %4596 = vmatprep.subr.mxu0 0.0
    %v4597 = vand.u32 %v73, 4294901760
    %4598 = vmatpush1.msra.mxu0 %v4597
    %4599 = vmatprep.subr.mxu0 0.0
    %4600 = vmatpush1.msra.mxu0 0.0
    %4601 = vmatprep.subr.mxu0 0.0
    %4602 = vmatpush1.msra.mxu0 0.0
    %4603 = vmatprep.subr.mxu0 0.0
    %4604 = vmatpush1.msra.mxu0 0.0
    %4605 = vmatprep.subr.mxu0 0.0
    %4606 = vmatpush1.msra.mxu0 0.0
    %4607 = vmatprep.subr.mxu0 0.0
    %4608 = vmatpush1.msra.mxu0 0.0
    %4609 = vmatprep.subr.mxu0 0.0
    %4610 = vmatpush1.msra.mxu0 0.0
    %4611 = vmatprep.subr.mxu0 0.0
    %4612 = vmatpush1.msra.mxu0 0.0
    %4613 = vmatprep.subr.mxu0 0.0
    %4614 = vmatpush1.msra.mxu0 0.0
    %4615 = vmatprep.subr.mxu0 0.0
    %4616 = vmatpush1.msra.mxu0 0.0
    %4617 = vmatprep.subr.mxu0 0.0
    %4618 = vmatpush1.msra.mxu0 0.0
    %4619 = vmatprep.subr.mxu0 0.0
    %4620 = vmatpush1.msra.mxu0 0.0
    %4621 = vmatprep.subr.mxu0 0.0
    %4622 = vmatpush1.msra.mxu0 0.0
    %4623 = vmatprep.subr.mxu0 0.0
    %4624 = vmatpush1.msra.mxu0 0.0
    %4625 = vmatprep.subr.mxu0 0.0
    %4626 = vmatpush1.msra.mxu0 0.0
    %4627 = vmatprep.subr.mxu0 0.0
    %4628 = vmatpush1.msra.mxu0 0.0
    %4629 = vmatprep.subr.mxu0 0.0
    %4630 = vmatpush1.msra.mxu0 0.0
    %4631 = vmatprep.subr.mxu0 0.0
    %4632 = vmatpush1.msra.mxu0 0.0
    %4633 = vmatprep.subr.mxu0 0.0
    %4634 = vmatpush1.msra.mxu0 0.0
    %4635 = vmatprep.subr.mxu0 0.0
    %4636 = vmatpush1.msra.mxu0 0.0
    %4637 = vmatprep.subr.mxu0 0.0
    %4638 = vmatpush1.msra.mxu0 0.0
    %4639 = vmatprep.subr.mxu0 0.0
    %4640 = vmatpush1.msra.mxu0 0.0
    %4641 = vmatprep.subr.mxu0 0.0
    %4642 = vmatpush1.msra.mxu0 0.0
    %4643 = vmatprep.subr.mxu0 0.0
    %4644 = vmatpush1.msra.mxu0 0.0
    %4645 = vmatprep.subr.mxu0 0.0
    %4646 = vmatpush1.msra.mxu0 0.0
    %4647 = vmatprep.subr.mxu0 0.0
    %4648 = vmatpush1.msra.mxu0 0.0
    %4649 = vmatprep.subr.mxu0 0.0
    %4650 = vmatpush1.msra.mxu0 0.0
    %4651 = vmatprep.subr.mxu0 0.0
    %4652 = vmatpush1.msra.mxu0 0.0
    %4653 = vmatprep.subr.mxu0 0.0
    %4654 = vmatpush1.msra.mxu0 0.0
    %4655 = vmatprep.subr.mxu0 0.0
    %4656 = vmatpush1.msra.mxu0 0.0
    %4657 = vmatprep.subr.mxu0 0.0
    %4658 = vmatpush1.msra.mxu0 0.0
    %4659 = vmatprep.subr.mxu0 0.0
    %4660 = vmatpush1.msra.mxu0 0.0
    %4661 = vmatprep.mubr.f32.mxu0 0.0
    %v4662 = vand.u32 %v4220, 4294901760
    %4663 = vmatmul.mubr.f32.gmra.mrb[0].mxu0 %v4662
    %v4664 = vpop.f32.mrb[0].mxu0
    %v4665 = vadd.f32 %v4593, %v4664
    %v4666 = vpop.f32.mrb[0].mxu0
    %4667 = vdwg.mxu0
    %v4669 = vsel %vm3697, %v3735, 0
    %4671 = vmatprep.subr.mxu0 0.0
    %v4672 = vand.u32 %v74, 4294901760
    %4673 = vmatpush1.msra.mxu0 %v4672
    %4674 = vmatprep.subr.mxu0 0.0
    %4675 = vmatpush1.msra.mxu0 0.0
    %4676 = vmatprep.subr.mxu0 0.0
    %4677 = vmatpush1.msra.mxu0 0.0
    %4678 = vmatprep.subr.mxu0 0.0
    %4679 = vmatpush1.msra.mxu0 0.0
    %4680 = vmatprep.subr.mxu0 0.0
    %4681 = vmatpush1.msra.mxu0 0.0
    %4682 = vmatprep.subr.mxu0 0.0
    %4683 = vmatpush1.msra.mxu0 0.0
    %4684 = vmatprep.subr.mxu0 0.0
    %4685 = vmatpush1.msra.mxu0 0.0
    %4686 = vmatprep.subr.mxu0 0.0
    %4687 = vmatpush1.msra.mxu0 0.0
    %4688 = vmatprep.subr.mxu0 0.0
    %4689 = vmatpush1.msra.mxu0 0.0
    %4690 = vmatprep.subr.mxu0 0.0
    %4691 = vmatpush1.msra.mxu0 0.0
    %4692 = vmatprep.subr.mxu0 0.0
    %4693 = vmatpush1.msra.mxu0 0.0
    %4694 = vmatprep.subr.mxu0 0.0
    %4695 = vmatpush1.msra.mxu0 0.0
    %4696 = vmatprep.subr.mxu0 0.0
    %4697 = vmatpush1.msra.mxu0 0.0
    %4698 = vmatprep.subr.mxu0 0.0
    %4699 = vmatpush1.msra.mxu0 0.0
    %4700 = vmatprep.subr.mxu0 0.0
    %4701 = vmatpush1.msra.mxu0 0.0
    %4702 = vmatprep.subr.mxu0 0.0
    %4703 = vmatpush1.msra.mxu0 0.0
    %4704 = vmatprep.subr.mxu0 0.0
    %4705 = vmatpush1.msra.mxu0 0.0
    %4706 = vmatprep.subr.mxu0 0.0
    %4707 = vmatpush1.msra.mxu0 0.0
    %4708 = vmatprep.subr.mxu0 0.0
    %4709 = vmatpush1.msra.mxu0 0.0
    %4710 = vmatprep.subr.mxu0 0.0
    %4711 = vmatpush1.msra.mxu0 0.0
    %4712 = vmatprep.subr.mxu0 0.0
    %4713 = vmatpush1.msra.mxu0 0.0
    %4714 = vmatprep.subr.mxu0 0.0
    %4715 = vmatpush1.msra.mxu0 0.0
    %4716 = vmatprep.subr.mxu0 0.0
    %4717 = vmatpush1.msra.mxu0 0.0
    %4718 = vmatprep.subr.mxu0 0.0
    %4719 = vmatpush1.msra.mxu0 0.0
    %4720 = vmatprep.subr.mxu0 0.0
    %4721 = vmatpush1.msra.mxu0 0.0
    %4722 = vmatprep.subr.mxu0 0.0
    %4723 = vmatpush1.msra.mxu0 0.0
    %4724 = vmatprep.subr.mxu0 0.0
    %4725 = vmatpush1.msra.mxu0 0.0
    %4726 = vmatprep.subr.mxu0 0.0
    %4727 = vmatpush1.msra.mxu0 0.0
    %4728 = vmatprep.subr.mxu0 0.0
    %4729 = vmatpush1.msra.mxu0 0.0
    %4730 = vmatprep.subr.mxu0 0.0
    %4731 = vmatpush1.msra.mxu0 0.0
    %4732 = vmatprep.subr.mxu0 0.0
    %4733 = vmatpush1.msra.mxu0 0.0
    %4734 = vmatprep.subr.mxu0 0.0
    %4735 = vmatpush1.msra.mxu0 0.0
    %4736 = vmatprep.mubr.f32.mxu0 0.0
    %v4737 = vand.u32 %v4669, 4294901760
    %v4738 = vsub.f32 %v4669, %v4737
    %v4739 = vand.u32 %v4738, 4294901760
    %v4740 = vsub.f32 %v4738, %v4739
    %v4741 = vand.u32 %v4740, 4294901760
    %4742 = vmatmul.mubr.f32.gmra.mrb[0].mxu0 %v4741
    %v4743 = vpop.f32.mrb[0].mxu0
    %v4744 = vadd.f32 0.0, %v4743
    %v4745 = vpop.f32.mrb[0].mxu0
    %4746 = vdwg.mxu0
    %4747 = vmatprep.subr.mxu0 0.0
    %v4748 = vand.u32 %v74, 4294901760
    %v4749 = vsub.f32 %v74, %v4748
    %v4750 = vand.u32 %v4749, 4294901760
    %v4751 = vsub.f32 %v4749, %v4750
    %v4752 = vand.u32 %v4751, 4294901760
    %4753 = vmatpush1.msra.mxu0 %v4752
    %4754 = vmatprep.subr.mxu0 0.0
    %4755 = vmatpush1.msra.mxu0 0.0
    %4756 = vmatprep.subr.mxu0 0.0
    %4757 = vmatpush1.msra.mxu0 0.0
    %4758 = vmatprep.subr.mxu0 0.0
    %4759 = vmatpush1.msra.mxu0 0.0
    %4760 = vmatprep.subr.mxu0 0.0
    %4761 = vmatpush1.msra.mxu0 0.0
    %4762 = vmatprep.subr.mxu0 0.0
    %4763 = vmatpush1.msra.mxu0 0.0
    %4764 = vmatprep.subr.mxu0 0.0
    %4765 = vmatpush1.msra.mxu0 0.0
    %4766 = vmatprep.subr.mxu0 0.0
    %4767 = vmatpush1.msra.mxu0 0.0
    %4768 = vmatprep.subr.mxu0 0.0
    %4769 = vmatpush1.msra.mxu0 0.0
    %4770 = vmatprep.subr.mxu0 0.0
    %4771 = vmatpush1.msra.mxu0 0.0
    %4772 = vmatprep.subr.mxu0 0.0
    %4773 = vmatpush1.msra.mxu0 0.0
    %4774 = vmatprep.subr.mxu0 0.0
    %4775 = vmatpush1.msra.mxu0 0.0
    %4776 = vmatprep.subr.mxu0 0.0
    %4777 = vmatpush1.msra.mxu0 0.0
    %4778 = vmatprep.subr.mxu0 0.0
    %4779 = vmatpush1.msra.mxu0 0.0
    %4780 = vmatprep.subr.mxu0 0.0
    %4781 = vmatpush1.msra.mxu0 0.0
    %4782 = vmatprep.subr.mxu0 0.0
    %4783 = vmatpush1.msra.mxu0 0.0
    %4784 = vmatprep.subr.mxu0 0.0
    %4785 = vmatpush1.msra.mxu0 0.0
    %4786 = vmatprep.subr.mxu0 0.0
    %4787 = vmatpush1.msra.mxu0 0.0
    %4788 = vmatprep.subr.mxu0 0.0
    %4789 = vmatpush1.msra.mxu0 0.0
    %4790 = vmatprep.subr.mxu0 0.0
    %4791 = vmatpush1.msra.mxu0 0.0
    %4792 = vmatprep.subr.mxu0 0.0
    %4793 = vmatpush1.msra.mxu0 0.0
    %4794 = vmatprep.subr.mxu0 0.0
    %4795 = vmatpush1.msra.mxu0 0.0
    %4796 = vmatprep.subr.mxu0 0.0
    %4797 = vmatpush1.msra.mxu0 0.0
    %4798 = vmatprep.subr.mxu0 0.0
    %4799 = vmatpush1.msra.mxu0 0.0
    %4800 = vmatprep.subr.mxu0 0.0
    %4801 = vmatpush1.msra.mxu0 0.0
    %4802 = vmatprep.subr.mxu0 0.0
    %4803 = vmatpush1.msra.mxu0 0.0
    %4804 = vmatprep.subr.mxu0 0.0
    %4805 = vmatpush1.msra.mxu0 0.0
    %4806 = vmatprep.subr.mxu0 0.0
    %4807 = vmatpush1.msra.mxu0 0.0
    %4808 = vmatprep.subr.mxu0 0.0
    %4809 = vmatpush1.msra.mxu0 0.0
    %4810 = vmatprep.subr.mxu0 0.0
    %4811 = vmatpush1.msra.mxu0 0.0
    %4812 = vmatprep.subr.mxu0 0.0
    %4813 = vmatpush1.msra.mxu0 0.0
    %4814 = vmatprep.subr.mxu0 0.0
    %4815 = vmatpush1.msra.mxu0 0.0
    %4816 = vmatprep.mubr.f32.mxu0 0.0
    %v4817 = vand.u32 %v4669, 4294901760
    %4818 = vmatmul.mubr.f32.gmra.mrb[0].mxu0 %v4817
    %v4819 = vpop.f32.mrb[0].mxu0
    %v4820 = vadd.f32 %v4744, %v4819
    %v4821 = vpop.f32.mrb[0].mxu0
    %4822 = vdwg.mxu0
    %4823 = vmatprep.subr.mxu0 0.0
    %v4824 = vand.u32 %v74, 4294901760
    %v4825 = vsub.f32 %v74, %v4824
    %4826 = vmatpush1.msra.mxu0 %v4825
    %4827 = vmatprep.subr.mxu0 0.0
    %4828 = vmatpush1.msra.mxu0 0.0
    %4829 = vmatprep.subr.mxu0 0.0
    %4830 = vmatpush1.msra.mxu0 0.0
    %4831 = vmatprep.subr.mxu0 0.0
    %4832 = vmatpush1.msra.mxu0 0.0
    %4833 = vmatprep.subr.mxu0 0.0
    %4834 = vmatpush1.msra.mxu0 0.0
    %4835 = vmatprep.subr.mxu0 0.0
    %4836 = vmatpush1.msra.mxu0 0.0
    %4837 = vmatprep.subr.mxu0 0.0
    %4838 = vmatpush1.msra.mxu0 0.0
    %4839 = vmatprep.subr.mxu0 0.0
    %4840 = vmatpush1.msra.mxu0 0.0
    %4841 = vmatprep.subr.mxu0 0.0
    %4842 = vmatpush1.msra.mxu0 0.0
    %4843 = vmatprep.subr.mxu0 0.0
    %4844 = vmatpush1.msra.mxu0 0.0
    %4845 = vmatprep.subr.mxu0 0.0
    %4846 = vmatpush1.msra.mxu0 0.0
    %4847 = vmatprep.subr.mxu0 0.0
    %4848 = vmatpush1.msra.mxu0 0.0
    %4849 = vmatprep.subr.mxu0 0.0
    %4850 = vmatpush1.msra.mxu0 0.0
    %4851 = vmatprep.subr.mxu0 0.0
    %4852 = vmatpush1.msra.mxu0 0.0
    %4853 = vmatprep.subr.mxu0 0.0
    %4854 = vmatpush1.msra.mxu0 0.0
    %4855 = vmatprep.subr.mxu0 0.0
    %4856 = vmatpush1.msra.mxu0 0.0
    %4857 = vmatprep.subr.mxu0 0.0
    %4858 = vmatpush1.msra.mxu0 0.0
    %4859 = vmatprep.subr.mxu0 0.0
    %4860 = vmatpush1.msra.mxu0 0.0
    %4861 = vmatprep.subr.mxu0 0.0
    %4862 = vmatpush1.msra.mxu0 0.0
    %4863 = vmatprep.subr.mxu0 0.0
    %4864 = vmatpush1.msra.mxu0 0.0
    %4865 = vmatprep.subr.mxu0 0.0
    %4866 = vmatpush1.msra.mxu0 0.0
    %4867 = vmatprep.subr.mxu0 0.0
    %4868 = vmatpush1.msra.mxu0 0.0
    %4869 = vmatprep.subr.mxu0 0.0
    %4870 = vmatpush1.msra.mxu0 0.0
    %4871 = vmatprep.subr.mxu0 0.0
    %4872 = vmatpush1.msra.mxu0 0.0
    %4873 = vmatprep.subr.mxu0 0.0
    %4874 = vmatpush1.msra.mxu0 0.0
    %4875 = vmatprep.subr.mxu0 0.0
    %4876 = vmatpush1.msra.mxu0 0.0
    %4877 = vmatprep.subr.mxu0 0.0
    %4878 = vmatpush1.msra.mxu0 0.0
    %4879 = vmatprep.subr.mxu0 0.0
    %4880 = vmatpush1.msra.mxu0 0.0
    %4881 = vmatprep.subr.mxu0 0.0
    %4882 = vmatpush1.msra.mxu0 0.0
    %4883 = vmatprep.subr.mxu0 0.0
    %4884 = vmatpush1.msra.mxu0 0.0
    %4885 = vmatprep.subr.mxu0 0.0
    %4886 = vmatpush1.msra.mxu0 0.0
    %4887 = vmatprep.subr.mxu0 0.0
    %4888 = vmatpush1.msra.mxu0 0.0
    %4889 = vmatprep.mubr.f32.mxu0 0.0
    %v4890 = vand.u32 %v4669, 4294901760
    %v4891 = vsub.f32 %v4669, %v4890
    %4892 = vmatmul.mubr.f32.gmra.mrb[0].mxu0 %v4891
    %v4893 = vpop.f32.mrb[0].mxu0
    %v4894 = vadd.f32 %v4820, %v4893
    %v4895 = vpop.f32.mrb[0].mxu0
    %4896 = vdwg.mxu0
    %4897 = vmatprep.subr.mxu0 0.0
    %v4898 = vand.u32 %v74, 4294901760
    %4899 = vmatpush1.msra.mxu0 %v4898
    %4900 = vmatprep.subr.mxu0 0.0
    %4901 = vmatpush1.msra.mxu0 0.0
    %4902 = vmatprep.subr.mxu0 0.0
    %4903 = vmatpush1.msra.mxu0 0.0
    %4904 = vmatprep.subr.mxu0 0.0
    %4905 = vmatpush1.msra.mxu0 0.0
    %4906 = vmatprep.subr.mxu0 0.0
    %4907 = vmatpush1.msra.mxu0 0.0
    %4908 = vmatprep.subr.mxu0 0.0
    %4909 = vmatpush1.msra.mxu0 0.0
    %4910 = vmatprep.subr.mxu0 0.0
    %4911 = vmatpush1.msra.mxu0 0.0
    %4912 = vmatprep.subr.mxu0 0.0
    %4913 = vmatpush1.msra.mxu0 0.0
    %4914 = vmatprep.subr.mxu0 0.0
    %4915 = vmatpush1.msra.mxu0 0.0
    %4916 = vmatprep.subr.mxu0 0.0
    %4917 = vmatpush1.msra.mxu0 0.0
    %4918 = vmatprep.subr.mxu0 0.0
    %4919 = vmatpush1.msra.mxu0 0.0
    %4920 = vmatprep.subr.mxu0 0.0
    %4921 = vmatpush1.msra.mxu0 0.0
    %4922 = vmatprep.subr.mxu0 0.0
    %4923 = vmatpush1.msra.mxu0 0.0
    %4924 = vmatprep.subr.mxu0 0.0
    %4925 = vmatpush1.msra.mxu0 0.0
    %4926 = vmatprep.subr.mxu0 0.0
    %4927 = vmatpush1.msra.mxu0 0.0
    %4928 = vmatprep.subr.mxu0 0.0
    %4929 = vmatpush1.msra.mxu0 0.0
    %4930 = vmatprep.subr.mxu0 0.0
    %4931 = vmatpush1.msra.mxu0 0.0
    %4932 = vmatprep.subr.mxu0 0.0
    %4933 = vmatpush1.msra.mxu0 0.0
    %4934 = vmatprep.subr.mxu0 0.0
    %4935 = vmatpush1.msra.mxu0 0.0
    %4936 = vmatprep.subr.mxu0 0.0
    %4937 = vmatpush1.msra.mxu0 0.0
    %4938 = vmatprep.subr.mxu0 0.0
    %4939 = vmatpush1.msra.mxu0 0.0
    %4940 = vmatprep.subr.mxu0 0.0
    %4941 = vmatpush1.msra.mxu0 0.0
    %4942 = vmatprep.subr.mxu0 0.0
    %4943 = vmatpush1.msra.mxu0 0.0
    %4944 = vmatprep.subr.mxu0 0.0
    %4945 = vmatpush1.msra.mxu0 0.0
    %4946 = vmatprep.subr.mxu0 0.0
    %4947 = vmatpush1.msra.mxu0 0.0
    %4948 = vmatprep.subr.mxu0 0.0
    %4949 = vmatpush1.msra.mxu0 0.0
    %4950 = vmatprep.subr.mxu0 0.0
    %4951 = vmatpush1.msra.mxu0 0.0
    %4952 = vmatprep.subr.mxu0 0.0
    %4953 = vmatpush1.msra.mxu0 0.0
    %4954 = vmatprep.subr.mxu0 0.0
    %4955 = vmatpush1.msra.mxu0 0.0
    %4956 = vmatprep.subr.mxu0 0.0
    %4957 = vmatpush1.msra.mxu0 0.0
    %4958 = vmatprep.subr.mxu0 0.0
    %4959 = vmatpush1.msra.mxu0 0.0
    %4960 = vmatprep.subr.mxu0 0.0
    %4961 = vmatpush1.msra.mxu0 0.0
    %4962 = vmatprep.mubr.f32.mxu0 0.0
    %v4963 = vand.u32 %v4669, 4294901760
    %v4964 = vsub.f32 %v4669, %v4963
    %v4965 = vand.u32 %v4964, 4294901760
    %4966 = vmatmul.mubr.f32.gmra.mrb[0].mxu0 %v4965
    %v4967 = vpop.f32.mrb[0].mxu0
    %v4968 = vadd.f32 %v4894, %v4967
    %v4969 = vpop.f32.mrb[0].mxu0
    %4970 = vdwg.mxu0
    %4971 = vmatprep.subr.mxu0 0.0
    %v4972 = vand.u32 %v74, 4294901760
    %v4973 = vsub.f32 %v74, %v4972
    %v4974 = vand.u32 %v4973, 4294901760
    %4975 = vmatpush1.msra.mxu0 %v4974
    %4976 = vmatprep.subr.mxu0 0.0
    %4977 = vmatpush1.msra.mxu0 0.0
    %4978 = vmatprep.subr.mxu0 0.0
    %4979 = vmatpush1.msra.mxu0 0.0
    %4980 = vmatprep.subr.mxu0 0.0
    %4981 = vmatpush1.msra.mxu0 0.0
    %4982 = vmatprep.subr.mxu0 0.0
    %4983 = vmatpush1.msra.mxu0 0.0
    %4984 = vmatprep.subr.mxu0 0.0
    %4985 = vmatpush1.msra.mxu0 0.0
    %4986 = vmatprep.subr.mxu0 0.0
    %4987 = vmatpush1.msra.mxu0 0.0
    %4988 = vmatprep.subr.mxu0 0.0
    %4989 = vmatpush1.msra.mxu0 0.0
    %4990 = vmatprep.subr.mxu0 0.0
    %4991 = vmatpush1.msra.mxu0 0.0
    %4992 = vmatprep.subr.mxu0 0.0
    %4993 = vmatpush1.msra.mxu0 0.0
    %4994 = vmatprep.subr.mxu0 0.0
    %4995 = vmatpush1.msra.mxu0 0.0
    %4996 = vmatprep.subr.mxu0 0.0
    %4997 = vmatpush1.msra.mxu0 0.0
    %4998 = vmatprep.subr.mxu0 0.0
    %4999 = vmatpush1.msra.mxu0 0.0
    %5000 = vmatprep.subr.mxu0 0.0
    %5001 = vmatpush1.msra.mxu0 0.0
    %5002 = vmatprep.subr.mxu0 0.0
    %5003 = vmatpush1.msra.mxu0 0.0
    %5004 = vmatprep.subr.mxu0 0.0
    %5005 = vmatpush1.msra.mxu0 0.0
    %5006 = vmatprep.subr.mxu0 0.0
    %5007 = vmatpush1.msra.mxu0 0.0
    %5008 = vmatprep.subr.mxu0 0.0
    %5009 = vmatpush1.msra.mxu0 0.0
    %5010 = vmatprep.subr.mxu0 0.0
    %5011 = vmatpush1.msra.mxu0 0.0
    %5012 = vmatprep.subr.mxu0 0.0
    %5013 = vmatpush1.msra.mxu0 0.0
    %5014 = vmatprep.subr.mxu0 0.0
    %5015 = vmatpush1.msra.mxu0 0.0
    %5016 = vmatprep.subr.mxu0 0.0
    %5017 = vmatpush1.msra.mxu0 0.0
    %5018 = vmatprep.subr.mxu0 0.0
    %5019 = vmatpush1.msra.mxu0 0.0
    %5020 = vmatprep.subr.mxu0 0.0
    %5021 = vmatpush1.msra.mxu0 0.0
    %5022 = vmatprep.subr.mxu0 0.0
    %5023 = vmatpush1.msra.mxu0 0.0
    %5024 = vmatprep.subr.mxu0 0.0
    %5025 = vmatpush1.msra.mxu0 0.0
    %5026 = vmatprep.subr.mxu0 0.0
    %5027 = vmatpush1.msra.mxu0 0.0
    %5028 = vmatprep.subr.mxu0 0.0
    %5029 = vmatpush1.msra.mxu0 0.0
    %5030 = vmatprep.subr.mxu0 0.0
    %5031 = vmatpush1.msra.mxu0 0.0
    %5032 = vmatprep.subr.mxu0 0.0
    %5033 = vmatpush1.msra.mxu0 0.0
    %5034 = vmatprep.subr.mxu0 0.0
    %5035 = vmatpush1.msra.mxu0 0.0
    %5036 = vmatprep.subr.mxu0 0.0
    %5037 = vmatpush1.msra.mxu0 0.0
    %5038 = vmatprep.mubr.f32.mxu0 0.0
    %v5039 = vand.u32 %v4669, 4294901760
    %5040 = vmatmul.mubr.f32.gmra.mrb[0].mxu0 %v5039
    %v5041 = vpop.f32.mrb[0].mxu0
    %v5042 = vadd.f32 %v4968, %v5041
    %v5043 = vpop.f32.mrb[0].mxu0
    %5044 = vdwg.mxu0
    %5045 = vmatprep.subr.mxu0 0.0
    %v5046 = vand.u32 %v74, 4294901760
    %5047 = vmatpush1.msra.mxu0 %v5046
    %5048 = vmatprep.subr.mxu0 0.0
    %5049 = vmatpush1.msra.mxu0 0.0
    %5050 = vmatprep.subr.mxu0 0.0
    %5051 = vmatpush1.msra.mxu0 0.0
    %5052 = vmatprep.subr.mxu0 0.0
    %5053 = vmatpush1.msra.mxu0 0.0
    %5054 = vmatprep.subr.mxu0 0.0
    %5055 = vmatpush1.msra.mxu0 0.0
    %5056 = vmatprep.subr.mxu0 0.0
    %5057 = vmatpush1.msra.mxu0 0.0
    %5058 = vmatprep.subr.mxu0 0.0
    %5059 = vmatpush1.msra.mxu0 0.0
    %5060 = vmatprep.subr.mxu0 0.0
    %5061 = vmatpush1.msra.mxu0 0.0
    %5062 = vmatprep.subr.mxu0 0.0
    %5063 = vmatpush1.msra.mxu0 0.0
    %5064 = vmatprep.subr.mxu0 0.0
    %5065 = vmatpush1.msra.mxu0 0.0
    %5066 = vmatprep.subr.mxu0 0.0
    %5067 = vmatpush1.msra.mxu0 0.0
    %5068 = vmatprep.subr.mxu0 0.0
    %5069 = vmatpush1.msra.mxu0 0.0
    %5070 = vmatprep.subr.mxu0 0.0
    %5071 = vmatpush1.msra.mxu0 0.0
    %5072 = vmatprep.subr.mxu0 0.0
    %5073 = vmatpush1.msra.mxu0 0.0
    %5074 = vmatprep.subr.mxu0 0.0
    %5075 = vmatpush1.msra.mxu0 0.0
    %5076 = vmatprep.subr.mxu0 0.0
    %5077 = vmatpush1.msra.mxu0 0.0
    %5078 = vmatprep.subr.mxu0 0.0
    %5079 = vmatpush1.msra.mxu0 0.0
    %5080 = vmatprep.subr.mxu0 0.0
    %5081 = vmatpush1.msra.mxu0 0.0
    %5082 = vmatprep.subr.mxu0 0.0
    %5083 = vmatpush1.msra.mxu0 0.0
    %5084 = vmatprep.subr.mxu0 0.0
    %5085 = vmatpush1.msra.mxu0 0.0
    %5086 = vmatprep.subr.mxu0 0.0
    %5087 = vmatpush1.msra.mxu0 0.0
    %5088 = vmatprep.subr.mxu0 0.0
    %5089 = vmatpush1.msra.mxu0 0.0
    %5090 = vmatprep.subr.mxu0 0.0
    %5091 = vmatpush1.msra.mxu0 0.0
    %5092 = vmatprep.subr.mxu0 0.0
    %5093 = vmatpush1.msra.mxu0 0.0
    %5094 = vmatprep.subr.mxu0 0.0
    %5095 = vmatpush1.msra.mxu0 0.0
    %5096 = vmatprep.subr.mxu0 0.0
    %5097 = vmatpush1.msra.mxu0 0.0
    %5098 = vmatprep.subr.mxu0 0.0
    %5099 = vmatpush1.msra.mxu0 0.0
    %5100 = vmatprep.subr.mxu0 0.0
    %5101 = vmatpush1.msra.mxu0 0.0
    %5102 = vmatprep.subr.mxu0 0.0
    %5103 = vmatpush1.msra.mxu0 0.0
    %5104 = vmatprep.subr.mxu0 0.0
    %5105 = vmatpush1.msra.mxu0 0.0
    %5106 = vmatprep.subr.mxu0 0.0
    %5107 = vmatpush1.msra.mxu0 0.0
    %5108 = vmatprep.subr.mxu0 0.0
    %5109 = vmatpush1.msra.mxu0 0.0
    %5110 = vmatprep.mubr.f32.mxu0 0.0
    %v5111 = vand.u32 %v4669, 4294901760
    %5112 = vmatmul.mubr.f32.gmra.mrb[0].mxu0 %v5111
    %v5113 = vpop.f32.mrb[0].mxu0
    %v5114 = vadd.f32 %v5042, %v5113
    %v5115 = vpop.f32.mrb[0].mxu0
    %5116 = vdwg.mxu0
    %v5118 = vsel %vm3697, %v3737, 0
    %5120 = vmatprep.subr.mxu0 0.0
    %v5121 = vand.u32 %v75, 4294901760
    %5122 = vmatpush1.msra.mxu0 %v5121
    %5123 = vmatprep.subr.mxu0 0.0
    %5124 = vmatpush1.msra.mxu0 0.0
    %5125 = vmatprep.subr.mxu0 0.0
    %5126 = vmatpush1.msra.mxu0 0.0
    %5127 = vmatprep.subr.mxu0 0.0
    %5128 = vmatpush1.msra.mxu0 0.0
    %5129 = vmatprep.subr.mxu0 0.0
    %5130 = vmatpush1.msra.mxu0 0.0
    %5131 = vmatprep.subr.mxu0 0.0
    %5132 = vmatpush1.msra.mxu0 0.0
    %5133 = vmatprep.subr.mxu0 0.0
    %5134 = vmatpush1.msra.mxu0 0.0
    %5135 = vmatprep.subr.mxu0 0.0
    %5136 = vmatpush1.msra.mxu0 0.0
    %5137 = vmatprep.subr.mxu0 0.0
    %5138 = vmatpush1.msra.mxu0 0.0
    %5139 = vmatprep.subr.mxu0 0.0
    %5140 = vmatpush1.msra.mxu0 0.0
    %5141 = vmatprep.subr.mxu0 0.0
    %5142 = vmatpush1.msra.mxu0 0.0
    %5143 = vmatprep.subr.mxu0 0.0
    %5144 = vmatpush1.msra.mxu0 0.0
    %5145 = vmatprep.subr.mxu0 0.0
    %5146 = vmatpush1.msra.mxu0 0.0
    %5147 = vmatprep.subr.mxu0 0.0
    %5148 = vmatpush1.msra.mxu0 0.0
    %5149 = vmatprep.subr.mxu0 0.0
    %5150 = vmatpush1.msra.mxu0 0.0
    %5151 = vmatprep.subr.mxu0 0.0
    %5152 = vmatpush1.msra.mxu0 0.0
    %5153 = vmatprep.subr.mxu0 0.0
    %5154 = vmatpush1.msra.mxu0 0.0
    %5155 = vmatprep.subr.mxu0 0.0
    %5156 = vmatpush1.msra.mxu0 0.0
    %5157 = vmatprep.subr.mxu0 0.0
    %5158 = vmatpush1.msra.mxu0 0.0
    %5159 = vmatprep.subr.mxu0 0.0
    %5160 = vmatpush1.msra.mxu0 0.0
    %5161 = vmatprep.subr.mxu0 0.0
    %5162 = vmatpush1.msra.mxu0 0.0
    %5163 = vmatprep.subr.mxu0 0.0
    %5164 = vmatpush1.msra.mxu0 0.0
    %5165 = vmatprep.subr.mxu0 0.0
    %5166 = vmatpush1.msra.mxu0 0.0
    %5167 = vmatprep.subr.mxu0 0.0
    %5168 = vmatpush1.msra.mxu0 0.0
    %5169 = vmatprep.subr.mxu0 0.0
    %5170 = vmatpush1.msra.mxu0 0.0
    %5171 = vmatprep.subr.mxu0 0.0
    %5172 = vmatpush1.msra.mxu0 0.0
    %5173 = vmatprep.subr.mxu0 0.0
    %5174 = vmatpush1.msra.mxu0 0.0
    %5175 = vmatprep.subr.mxu0 0.0
    %5176 = vmatpush1.msra.mxu0 0.0
    %5177 = vmatprep.subr.mxu0 0.0
    %5178 = vmatpush1.msra.mxu0 0.0
    %5179 = vmatprep.subr.mxu0 0.0
    %5180 = vmatpush1.msra.mxu0 0.0
    %5181 = vmatprep.subr.mxu0 0.0
    %5182 = vmatpush1.msra.mxu0 0.0
    %5183 = vmatprep.subr.mxu0 0.0
    %5184 = vmatpush1.msra.mxu0 0.0
    %5185 = vmatprep.mubr.f32.mxu0 0.0
    %v5186 = vand.u32 %v5118, 4294901760
    %v5187 = vsub.f32 %v5118, %v5186
    %v5188 = vand.u32 %v5187, 4294901760
    %v5189 = vsub.f32 %v5187, %v5188
    %v5190 = vand.u32 %v5189, 4294901760
    %5191 = vmatmul.mubr.f32.gmra.mrb[0].mxu0 %v5190
    %v5192 = vpop.f32.mrb[0].mxu0
    %v5193 = vadd.f32 0.0, %v5192
    %v5194 = vpop.f32.mrb[0].mxu0
    %5195 = vdwg.mxu0
    %5196 = vmatprep.subr.mxu0 0.0
    %v5197 = vand.u32 %v75, 4294901760
    %v5198 = vsub.f32 %v75, %v5197
    %v5199 = vand.u32 %v5198, 4294901760
    %v5200 = vsub.f32 %v5198, %v5199
    %v5201 = vand.u32 %v5200, 4294901760
    %5202 = vmatpush1.msra.mxu0 %v5201
    %5203 = vmatprep.subr.mxu0 0.0
    %5204 = vmatpush1.msra.mxu0 0.0
    %5205 = vmatprep.subr.mxu0 0.0
    %5206 = vmatpush1.msra.mxu0 0.0
    %5207 = vmatprep.subr.mxu0 0.0
    %5208 = vmatpush1.msra.mxu0 0.0
    %5209 = vmatprep.subr.mxu0 0.0
    %5210 = vmatpush1.msra.mxu0 0.0
    %5211 = vmatprep.subr.mxu0 0.0
    %5212 = vmatpush1.msra.mxu0 0.0
    %5213 = vmatprep.subr.mxu0 0.0
    %5214 = vmatpush1.msra.mxu0 0.0
    %5215 = vmatprep.subr.mxu0 0.0
    %5216 = vmatpush1.msra.mxu0 0.0
    %5217 = vmatprep.subr.mxu0 0.0
    %5218 = vmatpush1.msra.mxu0 0.0
    %5219 = vmatprep.subr.mxu0 0.0
    %5220 = vmatpush1.msra.mxu0 0.0
    %5221 = vmatprep.subr.mxu0 0.0
    %5222 = vmatpush1.msra.mxu0 0.0
    %5223 = vmatprep.subr.mxu0 0.0
    %5224 = vmatpush1.msra.mxu0 0.0
    %5225 = vmatprep.subr.mxu0 0.0
    %5226 = vmatpush1.msra.mxu0 0.0
    %5227 = vmatprep.subr.mxu0 0.0
    %5228 = vmatpush1.msra.mxu0 0.0
    %5229 = vmatprep.subr.mxu0 0.0
    %5230 = vmatpush1.msra.mxu0 0.0
    %5231 = vmatprep.subr.mxu0 0.0
    %5232 = vmatpush1.msra.mxu0 0.0
    %5233 = vmatprep.subr.mxu0 0.0
    %5234 = vmatpush1.msra.mxu0 0.0
    %5235 = vmatprep.subr.mxu0 0.0
    %5236 = vmatpush1.msra.mxu0 0.0
    %5237 = vmatprep.subr.mxu0 0.0
    %5238 = vmatpush1.msra.mxu0 0.0
    %5239 = vmatprep.subr.mxu0 0.0
    %5240 = vmatpush1.msra.mxu0 0.0
    %5241 = vmatprep.subr.mxu0 0.0
    %5242 = vmatpush1.msra.mxu0 0.0
    %5243 = vmatprep.subr.mxu0 0.0
    %5244 = vmatpush1.msra.mxu0 0.0
    %5245 = vmatprep.subr.mxu0 0.0
    %5246 = vmatpush1.msra.mxu0 0.0
    %5247 = vmatprep.subr.mxu0 0.0
    %5248 = vmatpush1.msra.mxu0 0.0
    %5249 = vmatprep.subr.mxu0 0.0
    %5250 = vmatpush1.msra.mxu0 0.0
    %5251 = vmatprep.subr.mxu0 0.0
    %5252 = vmatpush1.msra.mxu0 0.0
    %5253 = vmatprep.subr.mxu0 0.0
    %5254 = vmatpush1.msra.mxu0 0.0
    %5255 = vmatprep.subr.mxu0 0.0
    %5256 = vmatpush1.msra.mxu0 0.0
    %5257 = vmatprep.subr.mxu0 0.0
    %5258 = vmatpush1.msra.mxu0 0.0
    %5259 = vmatprep.subr.mxu0 0.0
    %5260 = vmatpush1.msra.mxu0 0.0
    %5261 = vmatprep.subr.mxu0 0.0
    %5262 = vmatpush1.msra.mxu0 0.0
    %5263 = vmatprep.subr.mxu0 0.0
    %5264 = vmatpush1.msra.mxu0 0.0
    %5265 = vmatprep.mubr.f32.mxu0 0.0
    %v5266 = vand.u32 %v5118, 4294901760
    %5267 = vmatmul.mubr.f32.gmra.mrb[0].mxu0 %v5266
    %v5268 = vpop.f32.mrb[0].mxu0
    %v5269 = vadd.f32 %v5193, %v5268
    %v5270 = vpop.f32.mrb[0].mxu0
    %5271 = vdwg.mxu0
    %5272 = vmatprep.subr.mxu0 0.0
    %v5273 = vand.u32 %v75, 4294901760
    %v5274 = vsub.f32 %v75, %v5273
    %5275 = vmatpush1.msra.mxu0 %v5274
    %5276 = vmatprep.subr.mxu0 0.0
    %5277 = vmatpush1.msra.mxu0 0.0
    %5278 = vmatprep.subr.mxu0 0.0
    %5279 = vmatpush1.msra.mxu0 0.0
    %5280 = vmatprep.subr.mxu0 0.0
    %5281 = vmatpush1.msra.mxu0 0.0
    %5282 = vmatprep.subr.mxu0 0.0
    %5283 = vmatpush1.msra.mxu0 0.0
    %5284 = vmatprep.subr.mxu0 0.0
    %5285 = vmatpush1.msra.mxu0 0.0
    %5286 = vmatprep.subr.mxu0 0.0
    %5287 = vmatpush1.msra.mxu0 0.0
    %5288 = vmatprep.subr.mxu0 0.0
    %5289 = vmatpush1.msra.mxu0 0.0
    %5290 = vmatprep.subr.mxu0 0.0
    %5291 = vmatpush1.msra.mxu0 0.0
    %5292 = vmatprep.subr.mxu0 0.0
    %5293 = vmatpush1.msra.mxu0 0.0
    %5294 = vmatprep.subr.mxu0 0.0
    %5295 = vmatpush1.msra.mxu0 0.0
    %5296 = vmatprep.subr.mxu0 0.0
    %5297 = vmatpush1.msra.mxu0 0.0
    %5298 = vmatprep.subr.mxu0 0.0
    %5299 = vmatpush1.msra.mxu0 0.0
    %5300 = vmatprep.subr.mxu0 0.0
    %5301 = vmatpush1.msra.mxu0 0.0
    %5302 = vmatprep.subr.mxu0 0.0
    %5303 = vmatpush1.msra.mxu0 0.0
    %5304 = vmatprep.subr.mxu0 0.0
    %5305 = vmatpush1.msra.mxu0 0.0
    %5306 = vmatprep.subr.mxu0 0.0
    %5307 = vmatpush1.msra.mxu0 0.0
    %5308 = vmatprep.subr.mxu0 0.0
    %5309 = vmatpush1.msra.mxu0 0.0
    %5310 = vmatprep.subr.mxu0 0.0
    %5311 = vmatpush1.msra.mxu0 0.0
    %5312 = vmatprep.subr.mxu0 0.0
    %5313 = vmatpush1.msra.mxu0 0.0
    %5314 = vmatprep.subr.mxu0 0.0
    %5315 = vmatpush1.msra.mxu0 0.0
    %5316 = vmatprep.subr.mxu0 0.0
    %5317 = vmatpush1.msra.mxu0 0.0
    %5318 = vmatprep.subr.mxu0 0.0
    %5319 = vmatpush1.msra.mxu0 0.0
    %5320 = vmatprep.subr.mxu0 0.0
    %5321 = vmatpush1.msra.mxu0 0.0
    %5322 = vmatprep.subr.mxu0 0.0
    %5323 = vmatpush1.msra.mxu0 0.0
    %5324 = vmatprep.subr.mxu0 0.0
    %5325 = vmatpush1.msra.mxu0 0.0
    %5326 = vmatprep.subr.mxu0 0.0
    %5327 = vmatpush1.msra.mxu0 0.0
    %5328 = vmatprep.subr.mxu0 0.0
    %5329 = vmatpush1.msra.mxu0 0.0
    %5330 = vmatprep.subr.mxu0 0.0
    %5331 = vmatpush1.msra.mxu0 0.0
    %5332 = vmatprep.subr.mxu0 0.0
    %5333 = vmatpush1.msra.mxu0 0.0
    %5334 = vmatprep.subr.mxu0 0.0
    %5335 = vmatpush1.msra.mxu0 0.0
    %5336 = vmatprep.subr.mxu0 0.0
    %5337 = vmatpush1.msra.mxu0 0.0
    %5338 = vmatprep.mubr.f32.mxu0 0.0
    %v5339 = vand.u32 %v5118, 4294901760
    %v5340 = vsub.f32 %v5118, %v5339
    %5341 = vmatmul.mubr.f32.gmra.mrb[0].mxu0 %v5340
    %v5342 = vpop.f32.mrb[0].mxu0
    %v5343 = vadd.f32 %v5269, %v5342
    %v5344 = vpop.f32.mrb[0].mxu0
    %5345 = vdwg.mxu0
    %5346 = vmatprep.subr.mxu0 0.0
    %v5347 = vand.u32 %v75, 4294901760
    %5348 = vmatpush1.msra.mxu0 %v5347
    %5349 = vmatprep.subr.mxu0 0.0
    %5350 = vmatpush1.msra.mxu0 0.0
    %5351 = vmatprep.subr.mxu0 0.0
    %5352 = vmatpush1.msra.mxu0 0.0
    %5353 = vmatprep.subr.mxu0 0.0
    %5354 = vmatpush1.msra.mxu0 0.0
    %5355 = vmatprep.subr.mxu0 0.0
    %5356 = vmatpush1.msra.mxu0 0.0
    %5357 = vmatprep.subr.mxu0 0.0
    %5358 = vmatpush1.msra.mxu0 0.0
    %5359 = vmatprep.subr.mxu0 0.0
    %5360 = vmatpush1.msra.mxu0 0.0
    %5361 = vmatprep.subr.mxu0 0.0
    %5362 = vmatpush1.msra.mxu0 0.0
    %5363 = vmatprep.subr.mxu0 0.0
    %5364 = vmatpush1.msra.mxu0 0.0
    %5365 = vmatprep.subr.mxu0 0.0
    %5366 = vmatpush1.msra.mxu0 0.0
    %5367 = vmatprep.subr.mxu0 0.0
    %5368 = vmatpush1.msra.mxu0 0.0
    %5369 = vmatprep.subr.mxu0 0.0
    %5370 = vmatpush1.msra.mxu0 0.0
    %5371 = vmatprep.subr.mxu0 0.0
    %5372 = vmatpush1.msra.mxu0 0.0
    %5373 = vmatprep.subr.mxu0 0.0
    %5374 = vmatpush1.msra.mxu0 0.0
    %5375 = vmatprep.subr.mxu0 0.0
    %5376 = vmatpush1.msra.mxu0 0.0
    %5377 = vmatprep.subr.mxu0 0.0
    %5378 = vmatpush1.msra.mxu0 0.0
    %5379 = vmatprep.subr.mxu0 0.0
    %5380 = vmatpush1.msra.mxu0 0.0
    %5381 = vmatprep.subr.mxu0 0.0
    %5382 = vmatpush1.msra.mxu0 0.0
    %5383 = vmatprep.subr.mxu0 0.0
    %5384 = vmatpush1.msra.mxu0 0.0
    %5385 = vmatprep.subr.mxu0 0.0
    %5386 = vmatpush1.msra.mxu0 0.0
    %5387 = vmatprep.subr.mxu0 0.0
    %5388 = vmatpush1.msra.mxu0 0.0
    %5389 = vmatprep.subr.mxu0 0.0
    %5390 = vmatpush1.msra.mxu0 0.0
    %5391 = vmatprep.subr.mxu0 0.0
    %5392 = vmatpush1.msra.mxu0 0.0
    %5393 = vmatprep.subr.mxu0 0.0
    %5394 = vmatpush1.msra.mxu0 0.0
    %5395 = vmatprep.subr.mxu0 0.0
    %5396 = vmatpush1.msra.mxu0 0.0
    %5397 = vmatprep.subr.mxu0 0.0
    %5398 = vmatpush1.msra.mxu0 0.0
    %5399 = vmatprep.subr.mxu0 0.0
    %5400 = vmatpush1.msra.mxu0 0.0
    %5401 = vmatprep.subr.mxu0 0.0
    %5402 = vmatpush1.msra.mxu0 0.0
    %5403 = vmatprep.subr.mxu0 0.0
    %5404 = vmatpush1.msra.mxu0 0.0
    %5405 = vmatprep.subr.mxu0 0.0
    %5406 = vmatpush1.msra.mxu0 0.0
    %5407 = vmatprep.subr.mxu0 0.0
    %5408 = vmatpush1.msra.mxu0 0.0
    %5409 = vmatprep.subr.mxu0 0.0
    %5410 = vmatpush1.msra.mxu0 0.0
    %5411 = vmatprep.mubr.f32.mxu0 0.0
    %v5412 = vand.u32 %v5118, 4294901760
    %v5413 = vsub.f32 %v5118, %v5412
    %v5414 = vand.u32 %v5413, 4294901760
    %5415 = vmatmul.mubr.f32.gmra.mrb[0].mxu0 %v5414
    %v5416 = vpop.f32.mrb[0].mxu0
    %v5417 = vadd.f32 %v5343, %v5416
    %v5418 = vpop.f32.mrb[0].mxu0
    %5419 = vdwg.mxu0
    %5420 = vmatprep.subr.mxu0 0.0
    %v5421 = vand.u32 %v75, 4294901760
    %v5422 = vsub.f32 %v75, %v5421
    %v5423 = vand.u32 %v5422, 4294901760
    %5424 = vmatpush1.msra.mxu0 %v5423
    %5425 = vmatprep.subr.mxu0 0.0
    %5426 = vmatpush1.msra.mxu0 0.0
    %5427 = vmatprep.subr.mxu0 0.0
    %5428 = vmatpush1.msra.mxu0 0.0
    %5429 = vmatprep.subr.mxu0 0.0
    %5430 = vmatpush1.msra.mxu0 0.0
    %5431 = vmatprep.subr.mxu0 0.0
    %5432 = vmatpush1.msra.mxu0 0.0
    %5433 = vmatprep.subr.mxu0 0.0
    %5434 = vmatpush1.msra.mxu0 0.0
    %5435 = vmatprep.subr.mxu0 0.0
    %5436 = vmatpush1.msra.mxu0 0.0
    %5437 = vmatprep.subr.mxu0 0.0
    %5438 = vmatpush1.msra.mxu0 0.0
    %5439 = vmatprep.subr.mxu0 0.0
    %5440 = vmatpush1.msra.mxu0 0.0
    %5441 = vmatprep.subr.mxu0 0.0
    %5442 = vmatpush1.msra.mxu0 0.0
    %5443 = vmatprep.subr.mxu0 0.0
    %5444 = vmatpush1.msra.mxu0 0.0
    %5445 = vmatprep.subr.mxu0 0.0
    %5446 = vmatpush1.msra.mxu0 0.0
    %5447 = vmatprep.subr.mxu0 0.0
    %5448 = vmatpush1.msra.mxu0 0.0
    %5449 = vmatprep.subr.mxu0 0.0
    %5450 = vmatpush1.msra.mxu0 0.0
    %5451 = vmatprep.subr.mxu0 0.0
    %5452 = vmatpush1.msra.mxu0 0.0
    %5453 = vmatprep.subr.mxu0 0.0
    %5454 = vmatpush1.msra.mxu0 0.0
    %5455 = vmatprep.subr.mxu0 0.0
    %5456 = vmatpush1.msra.mxu0 0.0
    %5457 = vmatprep.subr.mxu0 0.0
    %5458 = vmatpush1.msra.mxu0 0.0
    %5459 = vmatprep.subr.mxu0 0.0
    %5460 = vmatpush1.msra.mxu0 0.0
    %5461 = vmatprep.subr.mxu0 0.0
    %5462 = vmatpush1.msra.mxu0 0.0
    %5463 = vmatprep.subr.mxu0 0.0
    %5464 = vmatpush1.msra.mxu0 0.0
    %5465 = vmatprep.subr.mxu0 0.0
    %5466 = vmatpush1.msra.mxu0 0.0
    %5467 = vmatprep.subr.mxu0 0.0
    %5468 = vmatpush1.msra.mxu0 0.0
    %5469 = vmatprep.subr.mxu0 0.0
    %5470 = vmatpush1.msra.mxu0 0.0
    %5471 = vmatprep.subr.mxu0 0.0
    %5472 = vmatpush1.msra.mxu0 0.0
    %5473 = vmatprep.subr.mxu0 0.0
    %5474 = vmatpush1.msra.mxu0 0.0
    %5475 = vmatprep.subr.mxu0 0.0
    %5476 = vmatpush1.msra.mxu0 0.0
    %5477 = vmatprep.subr.mxu0 0.0
    %5478 = vmatpush1.msra.mxu0 0.0
    %5479 = vmatprep.subr.mxu0 0.0
    %5480 = vmatpush1.msra.mxu0 0.0
    %5481 = vmatprep.subr.mxu0 0.0
    %5482 = vmatpush1.msra.mxu0 0.0
    %5483 = vmatprep.subr.mxu0 0.0
    %5484 = vmatpush1.msra.mxu0 0.0
    %5485 = vmatprep.subr.mxu0 0.0
    %5486 = vmatpush1.msra.mxu0 0.0
    %5487 = vmatprep.mubr.f32.mxu0 0.0
    %v5488 = vand.u32 %v5118, 4294901760
    %5489 = vmatmul.mubr.f32.gmra.mrb[0].mxu0 %v5488
    %v5490 = vpop.f32.mrb[0].mxu0
    %v5491 = vadd.f32 %v5417, %v5490
    %v5492 = vpop.f32.mrb[0].mxu0
    %5493 = vdwg.mxu0
    %5494 = vmatprep.subr.mxu0 0.0
    %v5495 = vand.u32 %v75, 4294901760
    %5496 = vmatpush1.msra.mxu0 %v5495
    %5497 = vmatprep.subr.mxu0 0.0
    %5498 = vmatpush1.msra.mxu0 0.0
    %5499 = vmatprep.subr.mxu0 0.0
    %5500 = vmatpush1.msra.mxu0 0.0
    %5501 = vmatprep.subr.mxu0 0.0
    %5502 = vmatpush1.msra.mxu0 0.0
    %5503 = vmatprep.subr.mxu0 0.0
    %5504 = vmatpush1.msra.mxu0 0.0
    %5505 = vmatprep.subr.mxu0 0.0
    %5506 = vmatpush1.msra.mxu0 0.0
    %5507 = vmatprep.subr.mxu0 0.0
    %5508 = vmatpush1.msra.mxu0 0.0
    %5509 = vmatprep.subr.mxu0 0.0
    %5510 = vmatpush1.msra.mxu0 0.0
    %5511 = vmatprep.subr.mxu0 0.0
    %5512 = vmatpush1.msra.mxu0 0.0
    %5513 = vmatprep.subr.mxu0 0.0
    %5514 = vmatpush1.msra.mxu0 0.0
    %5515 = vmatprep.subr.mxu0 0.0
    %5516 = vmatpush1.msra.mxu0 0.0
    %5517 = vmatprep.subr.mxu0 0.0
    %5518 = vmatpush1.msra.mxu0 0.0
    %5519 = vmatprep.subr.mxu0 0.0
    %5520 = vmatpush1.msra.mxu0 0.0
    %5521 = vmatprep.subr.mxu0 0.0
    %5522 = vmatpush1.msra.mxu0 0.0
    %5523 = vmatprep.subr.mxu0 0.0
    %5524 = vmatpush1.msra.mxu0 0.0
    %5525 = vmatprep.subr.mxu0 0.0
    %5526 = vmatpush1.msra.mxu0 0.0
    %5527 = vmatprep.subr.mxu0 0.0
    %5528 = vmatpush1.msra.mxu0 0.0
    %5529 = vmatprep.subr.mxu0 0.0
    %5530 = vmatpush1.msra.mxu0 0.0
    %5531 = vmatprep.subr.mxu0 0.0
    %5532 = vmatpush1.msra.mxu0 0.0
    %5533 = vmatprep.subr.mxu0 0.0
    %5534 = vmatpush1.msra.mxu0 0.0
    %5535 = vmatprep.subr.mxu0 0.0
    %5536 = vmatpush1.msra.mxu0 0.0
    %5537 = vmatprep.subr.mxu0 0.0
    %5538 = vmatpush1.msra.mxu0 0.0
    %5539 = vmatprep.subr.mxu0 0.0
    %5540 = vmatpush1.msra.mxu0 0.0
    %5541 = vmatprep.subr.mxu0 0.0
    %5542 = vmatpush1.msra.mxu0 0.0
    %5543 = vmatprep.subr.mxu0 0.0
    %5544 = vmatpush1.msra.mxu0 0.0
    %5545 = vmatprep.subr.mxu0 0.0
    %5546 = vmatpush1.msra.mxu0 0.0
    %5547 = vmatprep.subr.mxu0 0.0
    %5548 = vmatpush1.msra.mxu0 0.0
    %5549 = vmatprep.subr.mxu0 0.0
    %5550 = vmatpush1.msra.mxu0 0.0
    %5551 = vmatprep.subr.mxu0 0.0
    %5552 = vmatpush1.msra.mxu0 0.0
    %5553 = vmatprep.subr.mxu0 0.0
    %5554 = vmatpush1.msra.mxu0 0.0
    %5555 = vmatprep.subr.mxu0 0.0
    %5556 = vmatpush1.msra.mxu0 0.0
    %5557 = vmatprep.subr.mxu0 0.0
    %5558 = vmatpush1.msra.mxu0 0.0
    %5559 = vmatprep.mubr.f32.mxu0 0.0
    %v5560 = vand.u32 %v5118, 4294901760
    %5561 = vmatmul.mubr.f32.gmra.mrb[0].mxu0 %v5560
    %v5562 = vpop.f32.mrb[0].mxu0
    %v5563 = vadd.f32 %v5491, %v5562
    %v5564 = vpop.f32.mrb[0].mxu0
    %5565 = vdwg.mxu0
    %v5567 = vsel %vm3697, %v3739, 0
    %5569 = vmatprep.subr.mxu0 0.0
    %v5570 = vand.u32 %v76, 4294901760
    %5571 = vmatpush1.msra.mxu0 %v5570
    %5572 = vmatprep.subr.mxu0 0.0
    %5573 = vmatpush1.msra.mxu0 0.0
    %5574 = vmatprep.subr.mxu0 0.0
    %5575 = vmatpush1.msra.mxu0 0.0
    %5576 = vmatprep.subr.mxu0 0.0
    %5577 = vmatpush1.msra.mxu0 0.0
    %5578 = vmatprep.subr.mxu0 0.0
    %5579 = vmatpush1.msra.mxu0 0.0
    %5580 = vmatprep.subr.mxu0 0.0
    %5581 = vmatpush1.msra.mxu0 0.0
    %5582 = vmatprep.subr.mxu0 0.0
    %5583 = vmatpush1.msra.mxu0 0.0
    %5584 = vmatprep.subr.mxu0 0.0
    %5585 = vmatpush1.msra.mxu0 0.0
    %5586 = vmatprep.subr.mxu0 0.0
    %5587 = vmatpush1.msra.mxu0 0.0
    %5588 = vmatprep.subr.mxu0 0.0
    %5589 = vmatpush1.msra.mxu0 0.0
    %5590 = vmatprep.subr.mxu0 0.0
    %5591 = vmatpush1.msra.mxu0 0.0
    %5592 = vmatprep.subr.mxu0 0.0
    %5593 = vmatpush1.msra.mxu0 0.0
    %5594 = vmatprep.subr.mxu0 0.0
    %5595 = vmatpush1.msra.mxu0 0.0
    %5596 = vmatprep.subr.mxu0 0.0
    %5597 = vmatpush1.msra.mxu0 0.0
    %5598 = vmatprep.subr.mxu0 0.0
    %5599 = vmatpush1.msra.mxu0 0.0
    %5600 = vmatprep.subr.mxu0 0.0
    %5601 = vmatpush1.msra.mxu0 0.0
    %5602 = vmatprep.subr.mxu0 0.0
    %5603 = vmatpush1.msra.mxu0 0.0
    %5604 = vmatprep.subr.mxu0 0.0
    %5605 = vmatpush1.msra.mxu0 0.0
    %5606 = vmatprep.subr.mxu0 0.0
    %5607 = vmatpush1.msra.mxu0 0.0
    %5608 = vmatprep.subr.mxu0 0.0
    %5609 = vmatpush1.msra.mxu0 0.0
    %5610 = vmatprep.subr.mxu0 0.0
    %5611 = vmatpush1.msra.mxu0 0.0
    %5612 = vmatprep.subr.mxu0 0.0
    %5613 = vmatpush1.msra.mxu0 0.0
    %5614 = vmatprep.subr.mxu0 0.0
    %5615 = vmatpush1.msra.mxu0 0.0
    %5616 = vmatprep.subr.mxu0 0.0
    %5617 = vmatpush1.msra.mxu0 0.0
    %5618 = vmatprep.subr.mxu0 0.0
    %5619 = vmatpush1.msra.mxu0 0.0
    %5620 = vmatprep.subr.mxu0 0.0
    %5621 = vmatpush1.msra.mxu0 0.0
    %5622 = vmatprep.subr.mxu0 0.0
    %5623 = vmatpush1.msra.mxu0 0.0
    %5624 = vmatprep.subr.mxu0 0.0
    %5625 = vmatpush1.msra.mxu0 0.0
    %5626 = vmatprep.subr.mxu0 0.0
    %5627 = vmatpush1.msra.mxu0 0.0
    %5628 = vmatprep.subr.mxu0 0.0
    %5629 = vmatpush1.msra.mxu0 0.0
    %5630 = vmatprep.subr.mxu0 0.0
    %5631 = vmatpush1.msra.mxu0 0.0
    %5632 = vmatprep.subr.mxu0 0.0
    %5633 = vmatpush1.msra.mxu0 0.0
    %5634 = vmatprep.mubr.f32.mxu0 0.0
    %v5635 = vand.u32 %v5567, 4294901760
    %v5636 = vsub.f32 %v5567, %v5635
    %v5637 = vand.u32 %v5636, 4294901760
    %v5638 = vsub.f32 %v5636, %v5637
    %v5639 = vand.u32 %v5638, 4294901760
    %5640 = vmatmul.mubr.f32.gmra.mrb[0].mxu0 %v5639
    %v5641 = vpop.f32.mrb[0].mxu0
    %v5642 = vadd.f32 0.0, %v5641
    %v5643 = vpop.f32.mrb[0].mxu0
    %5644 = vdwg.mxu0
    %5645 = vmatprep.subr.mxu0 0.0
    %v5646 = vand.u32 %v76, 4294901760
    %v5647 = vsub.f32 %v76, %v5646
    %v5648 = vand.u32 %v5647, 4294901760
    %v5649 = vsub.f32 %v5647, %v5648
    %v5650 = vand.u32 %v5649, 4294901760
    %5651 = vmatpush1.msra.mxu0 %v5650
    %5652 = vmatprep.subr.mxu0 0.0
    %5653 = vmatpush1.msra.mxu0 0.0
    %5654 = vmatprep.subr.mxu0 0.0
    %5655 = vmatpush1.msra.mxu0 0.0
    %5656 = vmatprep.subr.mxu0 0.0
    %5657 = vmatpush1.msra.mxu0 0.0
    %5658 = vmatprep.subr.mxu0 0.0
    %5659 = vmatpush1.msra.mxu0 0.0
    %5660 = vmatprep.subr.mxu0 0.0
    %5661 = vmatpush1.msra.mxu0 0.0
    %5662 = vmatprep.subr.mxu0 0.0
    %5663 = vmatpush1.msra.mxu0 0.0
    %5664 = vmatprep.subr.mxu0 0.0
    %5665 = vmatpush1.msra.mxu0 0.0
    %5666 = vmatprep.subr.mxu0 0.0
    %5667 = vmatpush1.msra.mxu0 0.0
    %5668 = vmatprep.subr.mxu0 0.0
    %5669 = vmatpush1.msra.mxu0 0.0
    %5670 = vmatprep.subr.mxu0 0.0
    %5671 = vmatpush1.msra.mxu0 0.0
    %5672 = vmatprep.subr.mxu0 0.0
    %5673 = vmatpush1.msra.mxu0 0.0
    %5674 = vmatprep.subr.mxu0 0.0
    %5675 = vmatpush1.msra.mxu0 0.0
    %5676 = vmatprep.subr.mxu0 0.0
    %5677 = vmatpush1.msra.mxu0 0.0
    %5678 = vmatprep.subr.mxu0 0.0
    %5679 = vmatpush1.msra.mxu0 0.0
    %5680 = vmatprep.subr.mxu0 0.0
    %5681 = vmatpush1.msra.mxu0 0.0
    %5682 = vmatprep.subr.mxu0 0.0
    %5683 = vmatpush1.msra.mxu0 0.0
    %5684 = vmatprep.subr.mxu0 0.0
    %5685 = vmatpush1.msra.mxu0 0.0
    %5686 = vmatprep.subr.mxu0 0.0
    %5687 = vmatpush1.msra.mxu0 0.0
    %5688 = vmatprep.subr.mxu0 0.0
    %5689 = vmatpush1.msra.mxu0 0.0
    %5690 = vmatprep.subr.mxu0 0.0
    %5691 = vmatpush1.msra.mxu0 0.0
    %5692 = vmatprep.subr.mxu0 0.0
    %5693 = vmatpush1.msra.mxu0 0.0
    %5694 = vmatprep.subr.mxu0 0.0
    %5695 = vmatpush1.msra.mxu0 0.0
    %5696 = vmatprep.subr.mxu0 0.0
    %5697 = vmatpush1.msra.mxu0 0.0
    %5698 = vmatprep.subr.mxu0 0.0
    %5699 = vmatpush1.msra.mxu0 0.0
    %5700 = vmatprep.subr.mxu0 0.0
    %5701 = vmatpush1.msra.mxu0 0.0
    %5702 = vmatprep.subr.mxu0 0.0
    %5703 = vmatpush1.msra.mxu0 0.0
    %5704 = vmatprep.subr.mxu0 0.0
    %5705 = vmatpush1.msra.mxu0 0.0
    %5706 = vmatprep.subr.mxu0 0.0
    %5707 = vmatpush1.msra.mxu0 0.0
    %5708 = vmatprep.subr.mxu0 0.0
    %5709 = vmatpush1.msra.mxu0 0.0
    %5710 = vmatprep.subr.mxu0 0.0
    %5711 = vmatpush1.msra.mxu0 0.0
    %5712 = vmatprep.subr.mxu0 0.0
    %5713 = vmatpush1.msra.mxu0 0.0
    %5714 = vmatprep.mubr.f32.mxu0 0.0
    %v5715 = vand.u32 %v5567, 4294901760
    %5716 = vmatmul.mubr.f32.gmra.mrb[0].mxu0 %v5715
    %v5717 = vpop.f32.mrb[0].mxu0
    %v5718 = vadd.f32 %v5642, %v5717
    %v5719 = vpop.f32.mrb[0].mxu0
    %5720 = vdwg.mxu0
    %5721 = vmatprep.subr.mxu0 0.0
    %v5722 = vand.u32 %v76, 4294901760
    %v5723 = vsub.f32 %v76, %v5722
    %5724 = vmatpush1.msra.mxu0 %v5723
    %5725 = vmatprep.subr.mxu0 0.0
    %5726 = vmatpush1.msra.mxu0 0.0
    %5727 = vmatprep.subr.mxu0 0.0
    %5728 = vmatpush1.msra.mxu0 0.0
    %5729 = vmatprep.subr.mxu0 0.0
    %5730 = vmatpush1.msra.mxu0 0.0
    %5731 = vmatprep.subr.mxu0 0.0
    %5732 = vmatpush1.msra.mxu0 0.0
    %5733 = vmatprep.subr.mxu0 0.0
    %5734 = vmatpush1.msra.mxu0 0.0
    %5735 = vmatprep.subr.mxu0 0.0
    %5736 = vmatpush1.msra.mxu0 0.0
    %5737 = vmatprep.subr.mxu0 0.0
    %5738 = vmatpush1.msra.mxu0 0.0
    %5739 = vmatprep.subr.mxu0 0.0
    %5740 = vmatpush1.msra.mxu0 0.0
    %5741 = vmatprep.subr.mxu0 0.0
    %5742 = vmatpush1.msra.mxu0 0.0
    %5743 = vmatprep.subr.mxu0 0.0
    %5744 = vmatpush1.msra.mxu0 0.0
    %5745 = vmatprep.subr.mxu0 0.0
    %5746 = vmatpush1.msra.mxu0 0.0
    %5747 = vmatprep.subr.mxu0 0.0
    %5748 = vmatpush1.msra.mxu0 0.0
    %5749 = vmatprep.subr.mxu0 0.0
    %5750 = vmatpush1.msra.mxu0 0.0
    %5751 = vmatprep.subr.mxu0 0.0
    %5752 = vmatpush1.msra.mxu0 0.0
    %5753 = vmatprep.subr.mxu0 0.0
    %5754 = vmatpush1.msra.mxu0 0.0
    %5755 = vmatprep.subr.mxu0 0.0
    %5756 = vmatpush1.msra.mxu0 0.0
    %5757 = vmatprep.subr.mxu0 0.0
    %5758 = vmatpush1.msra.mxu0 0.0
    %5759 = vmatprep.subr.mxu0 0.0
    %5760 = vmatpush1.msra.mxu0 0.0
    %5761 = vmatprep.subr.mxu0 0.0
    %5762 = vmatpush1.msra.mxu0 0.0
    %5763 = vmatprep.subr.mxu0 0.0
    %5764 = vmatpush1.msra.mxu0 0.0
    %5765 = vmatprep.subr.mxu0 0.0
    %5766 = vmatpush1.msra.mxu0 0.0
    %5767 = vmatprep.subr.mxu0 0.0
    %5768 = vmatpush1.msra.mxu0 0.0
    %5769 = vmatprep.subr.mxu0 0.0
    %5770 = vmatpush1.msra.mxu0 0.0
    %5771 = vmatprep.subr.mxu0 0.0
    %5772 = vmatpush1.msra.mxu0 0.0
    %5773 = vmatprep.subr.mxu0 0.0
    %5774 = vmatpush1.msra.mxu0 0.0
    %5775 = vmatprep.subr.mxu0 0.0
    %5776 = vmatpush1.msra.mxu0 0.0
    %5777 = vmatprep.subr.mxu0 0.0
    %5778 = vmatpush1.msra.mxu0 0.0
    %5779 = vmatprep.subr.mxu0 0.0
    %5780 = vmatpush1.msra.mxu0 0.0
    %5781 = vmatprep.subr.mxu0 0.0
    %5782 = vmatpush1.msra.mxu0 0.0
    %5783 = vmatprep.subr.mxu0 0.0
    %5784 = vmatpush1.msra.mxu0 0.0
    %5785 = vmatprep.subr.mxu0 0.0
    %5786 = vmatpush1.msra.mxu0 0.0
    %5787 = vmatprep.mubr.f32.mxu0 0.0
    %v5788 = vand.u32 %v5567, 4294901760
    %v5789 = vsub.f32 %v5567, %v5788
    %5790 = vmatmul.mubr.f32.gmra.mrb[0].mxu0 %v5789
    %v5791 = vpop.f32.mrb[0].mxu0
    %v5792 = vadd.f32 %v5718, %v5791
    %v5793 = vpop.f32.mrb[0].mxu0
    %5794 = vdwg.mxu0
    %5795 = vmatprep.subr.mxu0 0.0
    %v5796 = vand.u32 %v76, 4294901760
    %5797 = vmatpush1.msra.mxu0 %v5796
    %5798 = vmatprep.subr.mxu0 0.0
    %5799 = vmatpush1.msra.mxu0 0.0
    %5800 = vmatprep.subr.mxu0 0.0
    %5801 = vmatpush1.msra.mxu0 0.0
    %5802 = vmatprep.subr.mxu0 0.0
    %5803 = vmatpush1.msra.mxu0 0.0
    %5804 = vmatprep.subr.mxu0 0.0
    %5805 = vmatpush1.msra.mxu0 0.0
    %5806 = vmatprep.subr.mxu0 0.0
    %5807 = vmatpush1.msra.mxu0 0.0
    %5808 = vmatprep.subr.mxu0 0.0
    %5809 = vmatpush1.msra.mxu0 0.0
    %5810 = vmatprep.subr.mxu0 0.0
    %5811 = vmatpush1.msra.mxu0 0.0
    %5812 = vmatprep.subr.mxu0 0.0
    %5813 = vmatpush1.msra.mxu0 0.0
    %5814 = vmatprep.subr.mxu0 0.0
    %5815 = vmatpush1.msra.mxu0 0.0
    %5816 = vmatprep.subr.mxu0 0.0
    %5817 = vmatpush1.msra.mxu0 0.0
    %5818 = vmatprep.subr.mxu0 0.0
    %5819 = vmatpush1.msra.mxu0 0.0
    %5820 = vmatprep.subr.mxu0 0.0
    %5821 = vmatpush1.msra.mxu0 0.0
    %5822 = vmatprep.subr.mxu0 0.0
    %5823 = vmatpush1.msra.mxu0 0.0
    %5824 = vmatprep.subr.mxu0 0.0
    %5825 = vmatpush1.msra.mxu0 0.0
    %5826 = vmatprep.subr.mxu0 0.0
    %5827 = vmatpush1.msra.mxu0 0.0
    %5828 = vmatprep.subr.mxu0 0.0
    %5829 = vmatpush1.msra.mxu0 0.0
    %5830 = vmatprep.subr.mxu0 0.0
    %5831 = vmatpush1.msra.mxu0 0.0
    %5832 = vmatprep.subr.mxu0 0.0
    %5833 = vmatpush1.msra.mxu0 0.0
    %5834 = vmatprep.subr.mxu0 0.0
    %5835 = vmatpush1.msra.mxu0 0.0
    %5836 = vmatprep.subr.mxu0 0.0
    %5837 = vmatpush1.msra.mxu0 0.0
    %5838 = vmatprep.subr.mxu0 0.0
    %5839 = vmatpush1.msra.mxu0 0.0
    %5840 = vmatprep.subr.mxu0 0.0
    %5841 = vmatpush1.msra.mxu0 0.0
    %5842 = vmatprep.subr.mxu0 0.0
    %5843 = vmatpush1.msra.mxu0 0.0
    %5844 = vmatprep.subr.mxu0 0.0
    %5845 = vmatpush1.msra.mxu0 0.0
    %5846 = vmatprep.subr.mxu0 0.0
    %5847 = vmatpush1.msra.mxu0 0.0
    %5848 = vmatprep.subr.mxu0 0.0
    %5849 = vmatpush1.msra.mxu0 0.0
    %5850 = vmatprep.subr.mxu0 0.0
    %5851 = vmatpush1.msra.mxu0 0.0
    %5852 = vmatprep.subr.mxu0 0.0
    %5853 = vmatpush1.msra.mxu0 0.0
    %5854 = vmatprep.subr.mxu0 0.0
    %5855 = vmatpush1.msra.mxu0 0.0
    %5856 = vmatprep.subr.mxu0 0.0
    %5857 = vmatpush1.msra.mxu0 0.0
    %5858 = vmatprep.subr.mxu0 0.0
    %5859 = vmatpush1.msra.mxu0 0.0
    %5860 = vmatprep.mubr.f32.mxu0 0.0
    %v5861 = vand.u32 %v5567, 4294901760
    %v5862 = vsub.f32 %v5567, %v5861
    %v5863 = vand.u32 %v5862, 4294901760
    %5864 = vmatmul.mubr.f32.gmra.mrb[0].mxu0 %v5863
    %v5865 = vpop.f32.mrb[0].mxu0
    %v5866 = vadd.f32 %v5792, %v5865
    %v5867 = vpop.f32.mrb[0].mxu0
    %5868 = vdwg.mxu0
    %5869 = vmatprep.subr.mxu0 0.0
    %v5870 = vand.u32 %v76, 4294901760
    %v5871 = vsub.f32 %v76, %v5870
    %v5872 = vand.u32 %v5871, 4294901760
    %5873 = vmatpush1.msra.mxu0 %v5872
    %5874 = vmatprep.subr.mxu0 0.0
    %5875 = vmatpush1.msra.mxu0 0.0
    %5876 = vmatprep.subr.mxu0 0.0
    %5877 = vmatpush1.msra.mxu0 0.0
    %5878 = vmatprep.subr.mxu0 0.0
    %5879 = vmatpush1.msra.mxu0 0.0
    %5880 = vmatprep.subr.mxu0 0.0
    %5881 = vmatpush1.msra.mxu0 0.0
    %5882 = vmatprep.subr.mxu0 0.0
    %5883 = vmatpush1.msra.mxu0 0.0
    %5884 = vmatprep.subr.mxu0 0.0
    %5885 = vmatpush1.msra.mxu0 0.0
    %5886 = vmatprep.subr.mxu0 0.0
    %5887 = vmatpush1.msra.mxu0 0.0
    %5888 = vmatprep.subr.mxu0 0.0
    %5889 = vmatpush1.msra.mxu0 0.0
    %5890 = vmatprep.subr.mxu0 0.0
    %5891 = vmatpush1.msra.mxu0 0.0
    %5892 = vmatprep.subr.mxu0 0.0
    %5893 = vmatpush1.msra.mxu0 0.0
    %5894 = vmatprep.subr.mxu0 0.0
    %5895 = vmatpush1.msra.mxu0 0.0
    %5896 = vmatprep.subr.mxu0 0.0
    %5897 = vmatpush1.msra.mxu0 0.0
    %5898 = vmatprep.subr.mxu0 0.0
    %5899 = vmatpush1.msra.mxu0 0.0
    %5900 = vmatprep.subr.mxu0 0.0
    %5901 = vmatpush1.msra.mxu0 0.0
    %5902 = vmatprep.subr.mxu0 0.0
    %5903 = vmatpush1.msra.mxu0 0.0
    %5904 = vmatprep.subr.mxu0 0.0
    %5905 = vmatpush1.msra.mxu0 0.0
    %5906 = vmatprep.subr.mxu0 0.0
    %5907 = vmatpush1.msra.mxu0 0.0
    %5908 = vmatprep.subr.mxu0 0.0
    %5909 = vmatpush1.msra.mxu0 0.0
    %5910 = vmatprep.subr.mxu0 0.0
    %5911 = vmatpush1.msra.mxu0 0.0
    %5912 = vmatprep.subr.mxu0 0.0
    %5913 = vmatpush1.msra.mxu0 0.0
    %5914 = vmatprep.subr.mxu0 0.0
    %5915 = vmatpush1.msra.mxu0 0.0
    %5916 = vmatprep.subr.mxu0 0.0
    %5917 = vmatpush1.msra.mxu0 0.0
    %5918 = vmatprep.subr.mxu0 0.0
    %5919 = vmatpush1.msra.mxu0 0.0
    %5920 = vmatprep.subr.mxu0 0.0
    %5921 = vmatpush1.msra.mxu0 0.0
    %5922 = vmatprep.subr.mxu0 0.0
    %5923 = vmatpush1.msra.mxu0 0.0
    %5924 = vmatprep.subr.mxu0 0.0
    %5925 = vmatpush1.msra.mxu0 0.0
    %5926 = vmatprep.subr.mxu0 0.0
    %5927 = vmatpush1.msra.mxu0 0.0
    %5928 = vmatprep.subr.mxu0 0.0
    %5929 = vmatpush1.msra.mxu0 0.0
    %5930 = vmatprep.subr.mxu0 0.0
    %5931 = vmatpush1.msra.mxu0 0.0
    %5932 = vmatprep.subr.mxu0 0.0
    %5933 = vmatpush1.msra.mxu0 0.0
    %5934 = vmatprep.subr.mxu0 0.0
    %5935 = vmatpush1.msra.mxu0 0.0
    %5936 = vmatprep.mubr.f32.mxu0 0.0
    %v5937 = vand.u32 %v5567, 4294901760
    %5938 = vmatmul.mubr.f32.gmra.mrb[0].mxu0 %v5937
    %v5939 = vpop.f32.mrb[0].mxu0
    %v5940 = vadd.f32 %v5866, %v5939
    %v5941 = vpop.f32.mrb[0].mxu0
    %5942 = vdwg.mxu0
    %5943 = vmatprep.subr.mxu0 0.0
    %v5944 = vand.u32 %v76, 4294901760
    %5945 = vmatpush1.msra.mxu0 %v5944
    %5946 = vmatprep.subr.mxu0 0.0
    %5947 = vmatpush1.msra.mxu0 0.0
    %5948 = vmatprep.subr.mxu0 0.0
    %5949 = vmatpush1.msra.mxu0 0.0
    %5950 = vmatprep.subr.mxu0 0.0
    %5951 = vmatpush1.msra.mxu0 0.0
    %5952 = vmatprep.subr.mxu0 0.0
    %5953 = vmatpush1.msra.mxu0 0.0
    %5954 = vmatprep.subr.mxu0 0.0
    %5955 = vmatpush1.msra.mxu0 0.0
    %5956 = vmatprep.subr.mxu0 0.0
    %5957 = vmatpush1.msra.mxu0 0.0
    %5958 = vmatprep.subr.mxu0 0.0
    %5959 = vmatpush1.msra.mxu0 0.0
    %5960 = vmatprep.subr.mxu0 0.0
    %5961 = vmatpush1.msra.mxu0 0.0
    %5962 = vmatprep.subr.mxu0 0.0
    %5963 = vmatpush1.msra.mxu0 0.0
    %5964 = vmatprep.subr.mxu0 0.0
    %5965 = vmatpush1.msra.mxu0 0.0
    %5966 = vmatprep.subr.mxu0 0.0
    %5967 = vmatpush1.msra.mxu0 0.0
    %5968 = vmatprep.subr.mxu0 0.0
    %5969 = vmatpush1.msra.mxu0 0.0
    %5970 = vmatprep.subr.mxu0 0.0
    %5971 = vmatpush1.msra.mxu0 0.0
    %5972 = vmatprep.subr.mxu0 0.0
    %5973 = vmatpush1.msra.mxu0 0.0
    %5974 = vmatprep.subr.mxu0 0.0
    %5975 = vmatpush1.msra.mxu0 0.0
    %5976 = vmatprep.subr.mxu0 0.0
    %5977 = vmatpush1.msra.mxu0 0.0
    %5978 = vmatprep.subr.mxu0 0.0
    %5979 = vmatpush1.msra.mxu0 0.0
    %5980 = vmatprep.subr.mxu0 0.0
    %5981 = vmatpush1.msra.mxu0 0.0
    %5982 = vmatprep.subr.mxu0 0.0
    %5983 = vmatpush1.msra.mxu0 0.0
    %5984 = vmatprep.subr.mxu0 0.0
    %5985 = vmatpush1.msra.mxu0 0.0
    %5986 = vmatprep.subr.mxu0 0.0
    %5987 = vmatpush1.msra.mxu0 0.0
    %5988 = vmatprep.subr.mxu0 0.0
    %5989 = vmatpush1.msra.mxu0 0.0
    %5990 = vmatprep.subr.mxu0 0.0
    %5991 = vmatpush1.msra.mxu0 0.0
    %5992 = vmatprep.subr.mxu0 0.0
    %5993 = vmatpush1.msra.mxu0 0.0
    %5994 = vmatprep.subr.mxu0 0.0
    %5995 = vmatpush1.msra.mxu0 0.0
    %5996 = vmatprep.subr.mxu0 0.0
    %5997 = vmatpush1.msra.mxu0 0.0
    %5998 = vmatprep.subr.mxu0 0.0
    %5999 = vmatpush1.msra.mxu0 0.0
    %6000 = vmatprep.subr.mxu0 0.0
    %6001 = vmatpush1.msra.mxu0 0.0
    %6002 = vmatprep.subr.mxu0 0.0
    %6003 = vmatpush1.msra.mxu0 0.0
    %6004 = vmatprep.subr.mxu0 0.0
    %6005 = vmatpush1.msra.mxu0 0.0
    %6006 = vmatprep.subr.mxu0 0.0
    %6007 = vmatpush1.msra.mxu0 0.0
    %6008 = vmatprep.mubr.f32.mxu0 0.0
    %v6009 = vand.u32 %v5567, 4294901760
    %6010 = vmatmul.mubr.f32.gmra.mrb[0].mxu0 %v6009
    %v6011 = vpop.f32.mrb[0].mxu0
    %v6012 = vadd.f32 %v5940, %v6011
    %v6013 = vpop.f32.mrb[0].mxu0
    %6014 = vdwg.mxu0
    %v6016 = vsel %vm3697, %v3741, 0
    %6018 = vmatprep.subr.mxu0 0.0
    %v6019 = vand.u32 %v77, 4294901760
    %6020 = vmatpush1.msra.mxu0 %v6019
    %6021 = vmatprep.subr.mxu0 0.0
    %6022 = vmatpush1.msra.mxu0 0.0
    %6023 = vmatprep.subr.mxu0 0.0
    %6024 = vmatpush1.msra.mxu0 0.0
    %6025 = vmatprep.subr.mxu0 0.0
    %6026 = vmatpush1.msra.mxu0 0.0
    %6027 = vmatprep.subr.mxu0 0.0
    %6028 = vmatpush1.msra.mxu0 0.0
    %6029 = vmatprep.subr.mxu0 0.0
    %6030 = vmatpush1.msra.mxu0 0.0
    %6031 = vmatprep.subr.mxu0 0.0
    %6032 = vmatpush1.msra.mxu0 0.0
    %6033 = vmatprep.subr.mxu0 0.0
    %6034 = vmatpush1.msra.mxu0 0.0
    %6035 = vmatprep.subr.mxu0 0.0
    %6036 = vmatpush1.msra.mxu0 0.0
    %6037 = vmatprep.subr.mxu0 0.0
    %6038 = vmatpush1.msra.mxu0 0.0
    %6039 = vmatprep.subr.mxu0 0.0
    %6040 = vmatpush1.msra.mxu0 0.0
    %6041 = vmatprep.subr.mxu0 0.0
    %6042 = vmatpush1.msra.mxu0 0.0
    %6043 = vmatprep.subr.mxu0 0.0
    %6044 = vmatpush1.msra.mxu0 0.0
    %6045 = vmatprep.subr.mxu0 0.0
    %6046 = vmatpush1.msra.mxu0 0.0
    %6047 = vmatprep.subr.mxu0 0.0
    %6048 = vmatpush1.msra.mxu0 0.0
    %6049 = vmatprep.subr.mxu0 0.0
    %6050 = vmatpush1.msra.mxu0 0.0
    %6051 = vmatprep.subr.mxu0 0.0
    %6052 = vmatpush1.msra.mxu0 0.0
    %6053 = vmatprep.subr.mxu0 0.0
    %6054 = vmatpush1.msra.mxu0 0.0
    %6055 = vmatprep.subr.mxu0 0.0
    %6056 = vmatpush1.msra.mxu0 0.0
    %6057 = vmatprep.subr.mxu0 0.0
    %6058 = vmatpush1.msra.mxu0 0.0
    %6059 = vmatprep.subr.mxu0 0.0
    %6060 = vmatpush1.msra.mxu0 0.0
    %6061 = vmatprep.subr.mxu0 0.0
    %6062 = vmatpush1.msra.mxu0 0.0
    %6063 = vmatprep.subr.mxu0 0.0
    %6064 = vmatpush1.msra.mxu0 0.0
    %6065 = vmatprep.subr.mxu0 0.0
    %6066 = vmatpush1.msra.mxu0 0.0
    %6067 = vmatprep.subr.mxu0 0.0
    %6068 = vmatpush1.msra.mxu0 0.0
    %6069 = vmatprep.subr.mxu0 0.0
    %6070 = vmatpush1.msra.mxu0 0.0
    %6071 = vmatprep.subr.mxu0 0.0
    %6072 = vmatpush1.msra.mxu0 0.0
    %6073 = vmatprep.subr.mxu0 0.0
    %6074 = vmatpush1.msra.mxu0 0.0
    %6075 = vmatprep.subr.mxu0 0.0
    %6076 = vmatpush1.msra.mxu0 0.0
    %6077 = vmatprep.subr.mxu0 0.0
    %6078 = vmatpush1.msra.mxu0 0.0
    %6079 = vmatprep.subr.mxu0 0.0
    %6080 = vmatpush1.msra.mxu0 0.0
    %6081 = vmatprep.subr.mxu0 0.0
    %6082 = vmatpush1.msra.mxu0 0.0
    %6083 = vmatprep.mubr.f32.mxu0 0.0
    %v6084 = vand.u32 %v6016, 4294901760
    %v6085 = vsub.f32 %v6016, %v6084
    %v6086 = vand.u32 %v6085, 4294901760
    %v6087 = vsub.f32 %v6085, %v6086
    %v6088 = vand.u32 %v6087, 4294901760
    %6089 = vmatmul.mubr.f32.gmra.mrb[0].mxu0 %v6088
    %v6090 = vpop.f32.mrb[0].mxu0
    %v6091 = vadd.f32 0.0, %v6090
    %v6092 = vpop.f32.mrb[0].mxu0
    %6093 = vdwg.mxu0
    %6094 = vmatprep.subr.mxu0 0.0
    %v6095 = vand.u32 %v77, 4294901760
    %v6096 = vsub.f32 %v77, %v6095
    %v6097 = vand.u32 %v6096, 4294901760
    %v6098 = vsub.f32 %v6096, %v6097
    %v6099 = vand.u32 %v6098, 4294901760
    %6100 = vmatpush1.msra.mxu0 %v6099
    %6101 = vmatprep.subr.mxu0 0.0
    %6102 = vmatpush1.msra.mxu0 0.0
    %6103 = vmatprep.subr.mxu0 0.0
    %6104 = vmatpush1.msra.mxu0 0.0
    %6105 = vmatprep.subr.mxu0 0.0
    %6106 = vmatpush1.msra.mxu0 0.0
    %6107 = vmatprep.subr.mxu0 0.0
    %6108 = vmatpush1.msra.mxu0 0.0
    %6109 = vmatprep.subr.mxu0 0.0
    %6110 = vmatpush1.msra.mxu0 0.0
    %6111 = vmatprep.subr.mxu0 0.0
    %6112 = vmatpush1.msra.mxu0 0.0
    %6113 = vmatprep.subr.mxu0 0.0
    %6114 = vmatpush1.msra.mxu0 0.0
    %6115 = vmatprep.subr.mxu0 0.0
    %6116 = vmatpush1.msra.mxu0 0.0
    %6117 = vmatprep.subr.mxu0 0.0
    %6118 = vmatpush1.msra.mxu0 0.0
    %6119 = vmatprep.subr.mxu0 0.0
    %6120 = vmatpush1.msra.mxu0 0.0
    %6121 = vmatprep.subr.mxu0 0.0
    %6122 = vmatpush1.msra.mxu0 0.0
    %6123 = vmatprep.subr.mxu0 0.0
    %6124 = vmatpush1.msra.mxu0 0.0
    %6125 = vmatprep.subr.mxu0 0.0
    %6126 = vmatpush1.msra.mxu0 0.0
    %6127 = vmatprep.subr.mxu0 0.0
    %6128 = vmatpush1.msra.mxu0 0.0
    %6129 = vmatprep.subr.mxu0 0.0
    %6130 = vmatpush1.msra.mxu0 0.0
    %6131 = vmatprep.subr.mxu0 0.0
    %6132 = vmatpush1.msra.mxu0 0.0
    %6133 = vmatprep.subr.mxu0 0.0
    %6134 = vmatpush1.msra.mxu0 0.0
    %6135 = vmatprep.subr.mxu0 0.0
    %6136 = vmatpush1.msra.mxu0 0.0
    %6137 = vmatprep.subr.mxu0 0.0
    %6138 = vmatpush1.msra.mxu0 0.0
    %6139 = vmatprep.subr.mxu0 0.0
    %6140 = vmatpush1.msra.mxu0 0.0
    %6141 = vmatprep.subr.mxu0 0.0
    %6142 = vmatpush1.msra.mxu0 0.0
    %6143 = vmatprep.subr.mxu0 0.0
    %6144 = vmatpush1.msra.mxu0 0.0
    %6145 = vmatprep.subr.mxu0 0.0
    %6146 = vmatpush1.msra.mxu0 0.0
    %6147 = vmatprep.subr.mxu0 0.0
    %6148 = vmatpush1.msra.mxu0 0.0
    %6149 = vmatprep.subr.mxu0 0.0
    %6150 = vmatpush1.msra.mxu0 0.0
    %6151 = vmatprep.subr.mxu0 0.0
    %6152 = vmatpush1.msra.mxu0 0.0
    %6153 = vmatprep.subr.mxu0 0.0
    %6154 = vmatpush1.msra.mxu0 0.0
    %6155 = vmatprep.subr.mxu0 0.0
    %6156 = vmatpush1.msra.mxu0 0.0
    %6157 = vmatprep.subr.mxu0 0.0
    %6158 = vmatpush1.msra.mxu0 0.0
    %6159 = vmatprep.subr.mxu0 0.0
    %6160 = vmatpush1.msra.mxu0 0.0
    %6161 = vmatprep.subr.mxu0 0.0
    %6162 = vmatpush1.msra.mxu0 0.0
    %6163 = vmatprep.mubr.f32.mxu0 0.0
    %v6164 = vand.u32 %v6016, 4294901760
    %6165 = vmatmul.mubr.f32.gmra.mrb[0].mxu0 %v6164
    %v6166 = vpop.f32.mrb[0].mxu0
    %v6167 = vadd.f32 %v6091, %v6166
    %v6168 = vpop.f32.mrb[0].mxu0
    %6169 = vdwg.mxu0
    %6170 = vmatprep.subr.mxu0 0.0
    %v6171 = vand.u32 %v77, 4294901760
    %v6172 = vsub.f32 %v77, %v6171
    %6173 = vmatpush1.msra.mxu0 %v6172
    %6174 = vmatprep.subr.mxu0 0.0
    %6175 = vmatpush1.msra.mxu0 0.0
    %6176 = vmatprep.subr.mxu0 0.0
    %6177 = vmatpush1.msra.mxu0 0.0
    %6178 = vmatprep.subr.mxu0 0.0
    %6179 = vmatpush1.msra.mxu0 0.0
    %6180 = vmatprep.subr.mxu0 0.0
    %6181 = vmatpush1.msra.mxu0 0.0
    %6182 = vmatprep.subr.mxu0 0.0
    %6183 = vmatpush1.msra.mxu0 0.0
    %6184 = vmatprep.subr.mxu0 0.0
    %6185 = vmatpush1.msra.mxu0 0.0
    %6186 = vmatprep.subr.mxu0 0.0
    %6187 = vmatpush1.msra.mxu0 0.0
    %6188 = vmatprep.subr.mxu0 0.0
    %6189 = vmatpush1.msra.mxu0 0.0
    %6190 = vmatprep.subr.mxu0 0.0
    %6191 = vmatpush1.msra.mxu0 0.0
    %6192 = vmatprep.subr.mxu0 0.0
    %6193 = vmatpush1.msra.mxu0 0.0
    %6194 = vmatprep.subr.mxu0 0.0
    %6195 = vmatpush1.msra.mxu0 0.0
    %6196 = vmatprep.subr.mxu0 0.0
    %6197 = vmatpush1.msra.mxu0 0.0
    %6198 = vmatprep.subr.mxu0 0.0
    %6199 = vmatpush1.msra.mxu0 0.0
    %6200 = vmatprep.subr.mxu0 0.0
    %6201 = vmatpush1.msra.mxu0 0.0
    %6202 = vmatprep.subr.mxu0 0.0
    %6203 = vmatpush1.msra.mxu0 0.0
    %6204 = vmatprep.subr.mxu0 0.0
    %6205 = vmatpush1.msra.mxu0 0.0
    %6206 = vmatprep.subr.mxu0 0.0
    %6207 = vmatpush1.msra.mxu0 0.0
    %6208 = vmatprep.subr.mxu0 0.0
    %6209 = vmatpush1.msra.mxu0 0.0
    %6210 = vmatprep.subr.mxu0 0.0
    %6211 = vmatpush1.msra.mxu0 0.0
    %6212 = vmatprep.subr.mxu0 0.0
    %6213 = vmatpush1.msra.mxu0 0.0
    %6214 = vmatprep.subr.mxu0 0.0
    %6215 = vmatpush1.msra.mxu0 0.0
    %6216 = vmatprep.subr.mxu0 0.0
    %6217 = vmatpush1.msra.mxu0 0.0
    %6218 = vmatprep.subr.mxu0 0.0
    %6219 = vmatpush1.msra.mxu0 0.0
    %6220 = vmatprep.subr.mxu0 0.0
    %6221 = vmatpush1.msra.mxu0 0.0
    %6222 = vmatprep.subr.mxu0 0.0
    %6223 = vmatpush1.msra.mxu0 0.0
    %6224 = vmatprep.subr.mxu0 0.0
    %6225 = vmatpush1.msra.mxu0 0.0
    %6226 = vmatprep.subr.mxu0 0.0
    %6227 = vmatpush1.msra.mxu0 0.0
    %6228 = vmatprep.subr.mxu0 0.0
    %6229 = vmatpush1.msra.mxu0 0.0
    %6230 = vmatprep.subr.mxu0 0.0
    %6231 = vmatpush1.msra.mxu0 0.0
    %6232 = vmatprep.subr.mxu0 0.0
    %6233 = vmatpush1.msra.mxu0 0.0
    %6234 = vmatprep.subr.mxu0 0.0
    %6235 = vmatpush1.msra.mxu0 0.0
    %6236 = vmatprep.mubr.f32.mxu0 0.0
    %v6237 = vand.u32 %v6016, 4294901760
    %v6238 = vsub.f32 %v6016, %v6237
    %6239 = vmatmul.mubr.f32.gmra.mrb[0].mxu0 %v6238
    %v6240 = vpop.f32.mrb[0].mxu0
    %v6241 = vadd.f32 %v6167, %v6240
    %v6242 = vpop.f32.mrb[0].mxu0
    %6243 = vdwg.mxu0
    %6244 = vmatprep.subr.mxu0 0.0
    %v6245 = vand.u32 %v77, 4294901760
    %6246 = vmatpush1.msra.mxu0 %v6245
    %6247 = vmatprep.subr.mxu0 0.0
    %6248 = vmatpush1.msra.mxu0 0.0
    %6249 = vmatprep.subr.mxu0 0.0
    %6250 = vmatpush1.msra.mxu0 0.0
    %6251 = vmatprep.subr.mxu0 0.0
    %6252 = vmatpush1.msra.mxu0 0.0
    %6253 = vmatprep.subr.mxu0 0.0
    %6254 = vmatpush1.msra.mxu0 0.0
    %6255 = vmatprep.subr.mxu0 0.0
    %6256 = vmatpush1.msra.mxu0 0.0
    %6257 = vmatprep.subr.mxu0 0.0
    %6258 = vmatpush1.msra.mxu0 0.0
    %6259 = vmatprep.subr.mxu0 0.0
    %6260 = vmatpush1.msra.mxu0 0.0
    %6261 = vmatprep.subr.mxu0 0.0
    %6262 = vmatpush1.msra.mxu0 0.0
    %6263 = vmatprep.subr.mxu0 0.0
    %6264 = vmatpush1.msra.mxu0 0.0
    %6265 = vmatprep.subr.mxu0 0.0
    %6266 = vmatpush1.msra.mxu0 0.0
    %6267 = vmatprep.subr.mxu0 0.0
    %6268 = vmatpush1.msra.mxu0 0.0
    %6269 = vmatprep.subr.mxu0 0.0
    %6270 = vmatpush1.msra.mxu0 0.0
    %6271 = vmatprep.subr.mxu0 0.0
    %6272 = vmatpush1.msra.mxu0 0.0
    %6273 = vmatprep.subr.mxu0 0.0
    %6274 = vmatpush1.msra.mxu0 0.0
    %6275 = vmatprep.subr.mxu0 0.0
    %6276 = vmatpush1.msra.mxu0 0.0
    %6277 = vmatprep.subr.mxu0 0.0
    %6278 = vmatpush1.msra.mxu0 0.0
    %6279 = vmatprep.subr.mxu0 0.0
    %6280 = vmatpush1.msra.mxu0 0.0
    %6281 = vmatprep.subr.mxu0 0.0
    %6282 = vmatpush1.msra.mxu0 0.0
    %6283 = vmatprep.subr.mxu0 0.0
    %6284 = vmatpush1.msra.mxu0 0.0
    %6285 = vmatprep.subr.mxu0 0.0
    %6286 = vmatpush1.msra.mxu0 0.0
    %6287 = vmatprep.subr.mxu0 0.0
    %6288 = vmatpush1.msra.mxu0 0.0
    %6289 = vmatprep.subr.mxu0 0.0
    %6290 = vmatpush1.msra.mxu0 0.0
    %6291 = vmatprep.subr.mxu0 0.0
    %6292 = vmatpush1.msra.mxu0 0.0
    %6293 = vmatprep.subr.mxu0 0.0
    %6294 = vmatpush1.msra.mxu0 0.0
    %6295 = vmatprep.subr.mxu0 0.0
    %6296 = vmatpush1.msra.mxu0 0.0
    %6297 = vmatprep.subr.mxu0 0.0
    %6298 = vmatpush1.msra.mxu0 0.0
    %6299 = vmatprep.subr.mxu0 0.0
    %6300 = vmatpush1.msra.mxu0 0.0
    %6301 = vmatprep.subr.mxu0 0.0
    %6302 = vmatpush1.msra.mxu0 0.0
    %6303 = vmatprep.subr.mxu0 0.0
    %6304 = vmatpush1.msra.mxu0 0.0
    %6305 = vmatprep.subr.mxu0 0.0
    %6306 = vmatpush1.msra.mxu0 0.0
    %6307 = vmatprep.subr.mxu0 0.0
    %6308 = vmatpush1.msra.mxu0 0.0
    %6309 = vmatprep.mubr.f32.mxu0 0.0
    %v6310 = vand.u32 %v6016, 4294901760
    %v6311 = vsub.f32 %v6016, %v6310
    %v6312 = vand.u32 %v6311, 4294901760
    %6313 = vmatmul.mubr.f32.gmra.mrb[0].mxu0 %v6312
    %v6314 = vpop.f32.mrb[0].mxu0
    %v6315 = vadd.f32 %v6241, %v6314
    %v6316 = vpop.f32.mrb[0].mxu0
    %6317 = vdwg.mxu0
    %6318 = vmatprep.subr.mxu0 0.0
    %v6319 = vand.u32 %v77, 4294901760
    %v6320 = vsub.f32 %v77, %v6319
    %v6321 = vand.u32 %v6320, 4294901760
    %6322 = vmatpush1.msra.mxu0 %v6321
    %6323 = vmatprep.subr.mxu0 0.0
    %6324 = vmatpush1.msra.mxu0 0.0
    %6325 = vmatprep.subr.mxu0 0.0
    %6326 = vmatpush1.msra.mxu0 0.0
    %6327 = vmatprep.subr.mxu0 0.0
    %6328 = vmatpush1.msra.mxu0 0.0
    %6329 = vmatprep.subr.mxu0 0.0
    %6330 = vmatpush1.msra.mxu0 0.0
    %6331 = vmatprep.subr.mxu0 0.0
    %6332 = vmatpush1.msra.mxu0 0.0
    %6333 = vmatprep.subr.mxu0 0.0
    %6334 = vmatpush1.msra.mxu0 0.0
    %6335 = vmatprep.subr.mxu0 0.0
    %6336 = vmatpush1.msra.mxu0 0.0
    %6337 = vmatprep.subr.mxu0 0.0
    %6338 = vmatpush1.msra.mxu0 0.0
    %6339 = vmatprep.subr.mxu0 0.0
    %6340 = vmatpush1.msra.mxu0 0.0
    %6341 = vmatprep.subr.mxu0 0.0
    %6342 = vmatpush1.msra.mxu0 0.0
    %6343 = vmatprep.subr.mxu0 0.0
    %6344 = vmatpush1.msra.mxu0 0.0
    %6345 = vmatprep.subr.mxu0 0.0
    %6346 = vmatpush1.msra.mxu0 0.0
    %6347 = vmatprep.subr.mxu0 0.0
    %6348 = vmatpush1.msra.mxu0 0.0
    %6349 = vmatprep.subr.mxu0 0.0
    %6350 = vmatpush1.msra.mxu0 0.0
    %6351 = vmatprep.subr.mxu0 0.0
    %6352 = vmatpush1.msra.mxu0 0.0
    %6353 = vmatprep.subr.mxu0 0.0
    %6354 = vmatpush1.msra.mxu0 0.0
    %6355 = vmatprep.subr.mxu0 0.0
    %6356 = vmatpush1.msra.mxu0 0.0
    %6357 = vmatprep.subr.mxu0 0.0
    %6358 = vmatpush1.msra.mxu0 0.0
    %6359 = vmatprep.subr.mxu0 0.0
    %6360 = vmatpush1.msra.mxu0 0.0
    %6361 = vmatprep.subr.mxu0 0.0
    %6362 = vmatpush1.msra.mxu0 0.0
    %6363 = vmatprep.subr.mxu0 0.0
    %6364 = vmatpush1.msra.mxu0 0.0
    %6365 = vmatprep.subr.mxu0 0.0
    %6366 = vmatpush1.msra.mxu0 0.0
    %6367 = vmatprep.subr.mxu0 0.0
    %6368 = vmatpush1.msra.mxu0 0.0
    %6369 = vmatprep.subr.mxu0 0.0
    %6370 = vmatpush1.msra.mxu0 0.0
    %6371 = vmatprep.subr.mxu0 0.0
    %6372 = vmatpush1.msra.mxu0 0.0
    %6373 = vmatprep.subr.mxu0 0.0
    %6374 = vmatpush1.msra.mxu0 0.0
    %6375 = vmatprep.subr.mxu0 0.0
    %6376 = vmatpush1.msra.mxu0 0.0
    %6377 = vmatprep.subr.mxu0 0.0
    %6378 = vmatpush1.msra.mxu0 0.0
    %6379 = vmatprep.subr.mxu0 0.0
    %6380 = vmatpush1.msra.mxu0 0.0
    %6381 = vmatprep.subr.mxu0 0.0
    %6382 = vmatpush1.msra.mxu0 0.0
    %6383 = vmatprep.subr.mxu0 0.0
    %6384 = vmatpush1.msra.mxu0 0.0
    %6385 = vmatprep.mubr.f32.mxu0 0.0
    %v6386 = vand.u32 %v6016, 4294901760
    %6387 = vmatmul.mubr.f32.gmra.mrb[0].mxu0 %v6386
    %v6388 = vpop.f32.mrb[0].mxu0
    %v6389 = vadd.f32 %v6315, %v6388
    %v6390 = vpop.f32.mrb[0].mxu0
    %6391 = vdwg.mxu0
    %6392 = vmatprep.subr.mxu0 0.0
    %v6393 = vand.u32 %v77, 4294901760
    %6394 = vmatpush1.msra.mxu0 %v6393
    %6395 = vmatprep.subr.mxu0 0.0
    %6396 = vmatpush1.msra.mxu0 0.0
    %6397 = vmatprep.subr.mxu0 0.0
    %6398 = vmatpush1.msra.mxu0 0.0
    %6399 = vmatprep.subr.mxu0 0.0
    %6400 = vmatpush1.msra.mxu0 0.0
    %6401 = vmatprep.subr.mxu0 0.0
    %6402 = vmatpush1.msra.mxu0 0.0
    %6403 = vmatprep.subr.mxu0 0.0
    %6404 = vmatpush1.msra.mxu0 0.0
    %6405 = vmatprep.subr.mxu0 0.0
    %6406 = vmatpush1.msra.mxu0 0.0
    %6407 = vmatprep.subr.mxu0 0.0
    %6408 = vmatpush1.msra.mxu0 0.0
    %6409 = vmatprep.subr.mxu0 0.0
    %6410 = vmatpush1.msra.mxu0 0.0
    %6411 = vmatprep.subr.mxu0 0.0
    %6412 = vmatpush1.msra.mxu0 0.0
    %6413 = vmatprep.subr.mxu0 0.0
    %6414 = vmatpush1.msra.mxu0 0.0
    %6415 = vmatprep.subr.mxu0 0.0
    %6416 = vmatpush1.msra.mxu0 0.0
    %6417 = vmatprep.subr.mxu0 0.0
    %6418 = vmatpush1.msra.mxu0 0.0
    %6419 = vmatprep.subr.mxu0 0.0
    %6420 = vmatpush1.msra.mxu0 0.0
    %6421 = vmatprep.subr.mxu0 0.0
    %6422 = vmatpush1.msra.mxu0 0.0
    %6423 = vmatprep.subr.mxu0 0.0
    %6424 = vmatpush1.msra.mxu0 0.0
    %6425 = vmatprep.subr.mxu0 0.0
    %6426 = vmatpush1.msra.mxu0 0.0
    %6427 = vmatprep.subr.mxu0 0.0
    %6428 = vmatpush1.msra.mxu0 0.0
    %6429 = vmatprep.subr.mxu0 0.0
    %6430 = vmatpush1.msra.mxu0 0.0
    %6431 = vmatprep.subr.mxu0 0.0
    %6432 = vmatpush1.msra.mxu0 0.0
    %6433 = vmatprep.subr.mxu0 0.0
    %6434 = vmatpush1.msra.mxu0 0.0
    %6435 = vmatprep.subr.mxu0 0.0
    %6436 = vmatpush1.msra.mxu0 0.0
    %6437 = vmatprep.subr.mxu0 0.0
    %6438 = vmatpush1.msra.mxu0 0.0
    %6439 = vmatprep.subr.mxu0 0.0
    %6440 = vmatpush1.msra.mxu0 0.0
    %6441 = vmatprep.subr.mxu0 0.0
    %6442 = vmatpush1.msra.mxu0 0.0
    %6443 = vmatprep.subr.mxu0 0.0
    %6444 = vmatpush1.msra.mxu0 0.0
    %6445 = vmatprep.subr.mxu0 0.0
    %6446 = vmatpush1.msra.mxu0 0.0
    %6447 = vmatprep.subr.mxu0 0.0
    %6448 = vmatpush1.msra.mxu0 0.0
    %6449 = vmatprep.subr.mxu0 0.0
    %6450 = vmatpush1.msra.mxu0 0.0
    %6451 = vmatprep.subr.mxu0 0.0
    %6452 = vmatpush1.msra.mxu0 0.0
    %6453 = vmatprep.subr.mxu0 0.0
    %6454 = vmatpush1.msra.mxu0 0.0
    %6455 = vmatprep.subr.mxu0 0.0
    %6456 = vmatpush1.msra.mxu0 0.0
    %6457 = vmatprep.mubr.f32.mxu0 0.0
    %v6458 = vand.u32 %v6016, 4294901760
    %6459 = vmatmul.mubr.f32.gmra.mrb[0].mxu0 %v6458
    %v6460 = vpop.f32.mrb[0].mxu0
    %v6461 = vadd.f32 %v6389, %v6460
    %v6462 = vpop.f32.mrb[0].mxu0
    %6463 = vdwg.mxu0
    %v6465 = vsel %vm3697, %v3743, 0
    %6467 = vmatprep.subr.mxu0 0.0
    %v6468 = vand.u32 %v78, 4294901760
    %6469 = vmatpush1.msra.mxu0 %v6468
    %6470 = vmatprep.subr.mxu0 0.0
    %6471 = vmatpush1.msra.mxu0 0.0
    %6472 = vmatprep.subr.mxu0 0.0
    %6473 = vmatpush1.msra.mxu0 0.0
    %6474 = vmatprep.subr.mxu0 0.0
    %6475 = vmatpush1.msra.mxu0 0.0
    %6476 = vmatprep.subr.mxu0 0.0
    %6477 = vmatpush1.msra.mxu0 0.0
    %6478 = vmatprep.subr.mxu0 0.0
    %6479 = vmatpush1.msra.mxu0 0.0
    %6480 = vmatprep.subr.mxu0 0.0
    %6481 = vmatpush1.msra.mxu0 0.0
    %6482 = vmatprep.subr.mxu0 0.0
    %6483 = vmatpush1.msra.mxu0 0.0
    %6484 = vmatprep.subr.mxu0 0.0
    %6485 = vmatpush1.msra.mxu0 0.0
    %6486 = vmatprep.subr.mxu0 0.0
    %6487 = vmatpush1.msra.mxu0 0.0
    %6488 = vmatprep.subr.mxu0 0.0
    %6489 = vmatpush1.msra.mxu0 0.0
    %6490 = vmatprep.subr.mxu0 0.0
    %6491 = vmatpush1.msra.mxu0 0.0
    %6492 = vmatprep.subr.mxu0 0.0
    %6493 = vmatpush1.msra.mxu0 0.0
    %6494 = vmatprep.subr.mxu0 0.0
    %6495 = vmatpush1.msra.mxu0 0.0
    %6496 = vmatprep.subr.mxu0 0.0
    %6497 = vmatpush1.msra.mxu0 0.0
    %6498 = vmatprep.subr.mxu0 0.0
    %6499 = vmatpush1.msra.mxu0 0.0
    %6500 = vmatprep.subr.mxu0 0.0
    %6501 = vmatpush1.msra.mxu0 0.0
    %6502 = vmatprep.subr.mxu0 0.0
    %6503 = vmatpush1.msra.mxu0 0.0
    %6504 = vmatprep.subr.mxu0 0.0
    %6505 = vmatpush1.msra.mxu0 0.0
    %6506 = vmatprep.subr.mxu0 0.0
    %6507 = vmatpush1.msra.mxu0 0.0
    %6508 = vmatprep.subr.mxu0 0.0
    %6509 = vmatpush1.msra.mxu0 0.0
    %6510 = vmatprep.subr.mxu0 0.0
    %6511 = vmatpush1.msra.mxu0 0.0
    %6512 = vmatprep.subr.mxu0 0.0
    %6513 = vmatpush1.msra.mxu0 0.0
    %6514 = vmatprep.subr.mxu0 0.0
    %6515 = vmatpush1.msra.mxu0 0.0
    %6516 = vmatprep.subr.mxu0 0.0
    %6517 = vmatpush1.msra.mxu0 0.0
    %6518 = vmatprep.subr.mxu0 0.0
    %6519 = vmatpush1.msra.mxu0 0.0
    %6520 = vmatprep.subr.mxu0 0.0
    %6521 = vmatpush1.msra.mxu0 0.0
    %6522 = vmatprep.subr.mxu0 0.0
    %6523 = vmatpush1.msra.mxu0 0.0
    %6524 = vmatprep.subr.mxu0 0.0
    %6525 = vmatpush1.msra.mxu0 0.0
    %6526 = vmatprep.subr.mxu0 0.0
    %6527 = vmatpush1.msra.mxu0 0.0
    %6528 = vmatprep.subr.mxu0 0.0
    %6529 = vmatpush1.msra.mxu0 0.0
    %6530 = vmatprep.subr.mxu0 0.0
    %6531 = vmatpush1.msra.mxu0 0.0
    %6532 = vmatprep.mubr.f32.mxu0 0.0
    %v6533 = vand.u32 %v6465, 4294901760
    %v6534 = vsub.f32 %v6465, %v6533
    %v6535 = vand.u32 %v6534, 4294901760
    %v6536 = vsub.f32 %v6534, %v6535
    %v6537 = vand.u32 %v6536, 4294901760
    %6538 = vmatmul.mubr.f32.gmra.mrb[0].mxu0 %v6537
    %v6539 = vpop.f32.mrb[0].mxu0
    %v6540 = vadd.f32 0.0, %v6539
    %v6541 = vpop.f32.mrb[0].mxu0
    %6542 = vdwg.mxu0
    %6543 = vmatprep.subr.mxu0 0.0
    %v6544 = vand.u32 %v78, 4294901760
    %v6545 = vsub.f32 %v78, %v6544
    %v6546 = vand.u32 %v6545, 4294901760
    %v6547 = vsub.f32 %v6545, %v6546
    %v6548 = vand.u32 %v6547, 4294901760
    %6549 = vmatpush1.msra.mxu0 %v6548
    %6550 = vmatprep.subr.mxu0 0.0
    %6551 = vmatpush1.msra.mxu0 0.0
    %6552 = vmatprep.subr.mxu0 0.0
    %6553 = vmatpush1.msra.mxu0 0.0
    %6554 = vmatprep.subr.mxu0 0.0
    %6555 = vmatpush1.msra.mxu0 0.0
    %6556 = vmatprep.subr.mxu0 0.0
    %6557 = vmatpush1.msra.mxu0 0.0
    %6558 = vmatprep.subr.mxu0 0.0
    %6559 = vmatpush1.msra.mxu0 0.0
    %6560 = vmatprep.subr.mxu0 0.0
    %6561 = vmatpush1.msra.mxu0 0.0
    %6562 = vmatprep.subr.mxu0 0.0
    %6563 = vmatpush1.msra.mxu0 0.0
    %6564 = vmatprep.subr.mxu0 0.0
    %6565 = vmatpush1.msra.mxu0 0.0
    %6566 = vmatprep.subr.mxu0 0.0
    %6567 = vmatpush1.msra.mxu0 0.0
    %6568 = vmatprep.subr.mxu0 0.0
    %6569 = vmatpush1.msra.mxu0 0.0
    %6570 = vmatprep.subr.mxu0 0.0
    %6571 = vmatpush1.msra.mxu0 0.0
    %6572 = vmatprep.subr.mxu0 0.0
    %6573 = vmatpush1.msra.mxu0 0.0
    %6574 = vmatprep.subr.mxu0 0.0
    %6575 = vmatpush1.msra.mxu0 0.0
    %6576 = vmatprep.subr.mxu0 0.0
    %6577 = vmatpush1.msra.mxu0 0.0
    %6578 = vmatprep.subr.mxu0 0.0
    %6579 = vmatpush1.msra.mxu0 0.0
    %6580 = vmatprep.subr.mxu0 0.0
    %6581 = vmatpush1.msra.mxu0 0.0
    %6582 = vmatprep.subr.mxu0 0.0
    %6583 = vmatpush1.msra.mxu0 0.0
    %6584 = vmatprep.subr.mxu0 0.0
    %6585 = vmatpush1.msra.mxu0 0.0
    %6586 = vmatprep.subr.mxu0 0.0
    %6587 = vmatpush1.msra.mxu0 0.0
    %6588 = vmatprep.subr.mxu0 0.0
    %6589 = vmatpush1.msra.mxu0 0.0
    %6590 = vmatprep.subr.mxu0 0.0
    %6591 = vmatpush1.msra.mxu0 0.0
    %6592 = vmatprep.subr.mxu0 0.0
    %6593 = vmatpush1.msra.mxu0 0.0
    %6594 = vmatprep.subr.mxu0 0.0
    %6595 = vmatpush1.msra.mxu0 0.0
    %6596 = vmatprep.subr.mxu0 0.0
    %6597 = vmatpush1.msra.mxu0 0.0
    %6598 = vmatprep.subr.mxu0 0.0
    %6599 = vmatpush1.msra.mxu0 0.0
    %6600 = vmatprep.subr.mxu0 0.0
    %6601 = vmatpush1.msra.mxu0 0.0
    %6602 = vmatprep.subr.mxu0 0.0
    %6603 = vmatpush1.msra.mxu0 0.0
    %6604 = vmatprep.subr.mxu0 0.0
    %6605 = vmatpush1.msra.mxu0 0.0
    %6606 = vmatprep.subr.mxu0 0.0
    %6607 = vmatpush1.msra.mxu0 0.0
    %6608 = vmatprep.subr.mxu0 0.0
    %6609 = vmatpush1.msra.mxu0 0.0
    %6610 = vmatprep.subr.mxu0 0.0
    %6611 = vmatpush1.msra.mxu0 0.0
    %6612 = vmatprep.mubr.f32.mxu0 0.0
    %v6613 = vand.u32 %v6465, 4294901760
    %6614 = vmatmul.mubr.f32.gmra.mrb[0].mxu0 %v6613
    %v6615 = vpop.f32.mrb[0].mxu0
    %v6616 = vadd.f32 %v6540, %v6615
    %v6617 = vpop.f32.mrb[0].mxu0
    %6618 = vdwg.mxu0
    %6619 = vmatprep.subr.mxu0 0.0
    %v6620 = vand.u32 %v78, 4294901760
    %v6621 = vsub.f32 %v78, %v6620
    %6622 = vmatpush1.msra.mxu0 %v6621
    %6623 = vmatprep.subr.mxu0 0.0
    %6624 = vmatpush1.msra.mxu0 0.0
    %6625 = vmatprep.subr.mxu0 0.0
    %6626 = vmatpush1.msra.mxu0 0.0
    %6627 = vmatprep.subr.mxu0 0.0
    %6628 = vmatpush1.msra.mxu0 0.0
    %6629 = vmatprep.subr.mxu0 0.0
    %6630 = vmatpush1.msra.mxu0 0.0
    %6631 = vmatprep.subr.mxu0 0.0
    %6632 = vmatpush1.msra.mxu0 0.0
    %6633 = vmatprep.subr.mxu0 0.0
    %6634 = vmatpush1.msra.mxu0 0.0
    %6635 = vmatprep.subr.mxu0 0.0
    %6636 = vmatpush1.msra.mxu0 0.0
    %6637 = vmatprep.subr.mxu0 0.0
    %6638 = vmatpush1.msra.mxu0 0.0
    %6639 = vmatprep.subr.mxu0 0.0
    %6640 = vmatpush1.msra.mxu0 0.0
    %6641 = vmatprep.subr.mxu0 0.0
    %6642 = vmatpush1.msra.mxu0 0.0
    %6643 = vmatprep.subr.mxu0 0.0
    %6644 = vmatpush1.msra.mxu0 0.0
    %6645 = vmatprep.subr.mxu0 0.0
    %6646 = vmatpush1.msra.mxu0 0.0
    %6647 = vmatprep.subr.mxu0 0.0
    %6648 = vmatpush1.msra.mxu0 0.0
    %6649 = vmatprep.subr.mxu0 0.0
    %6650 = vmatpush1.msra.mxu0 0.0
    %6651 = vmatprep.subr.mxu0 0.0
    %6652 = vmatpush1.msra.mxu0 0.0
    %6653 = vmatprep.subr.mxu0 0.0
    %6654 = vmatpush1.msra.mxu0 0.0
    %6655 = vmatprep.subr.mxu0 0.0
    %6656 = vmatpush1.msra.mxu0 0.0
    %6657 = vmatprep.subr.mxu0 0.0
    %6658 = vmatpush1.msra.mxu0 0.0
    %6659 = vmatprep.subr.mxu0 0.0
    %6660 = vmatpush1.msra.mxu0 0.0
    %6661 = vmatprep.subr.mxu0 0.0
    %6662 = vmatpush1.msra.mxu0 0.0
    %6663 = vmatprep.subr.mxu0 0.0
    %6664 = vmatpush1.msra.mxu0 0.0
    %6665 = vmatprep.subr.mxu0 0.0
    %6666 = vmatpush1.msra.mxu0 0.0
    %6667 = vmatprep.subr.mxu0 0.0
    %6668 = vmatpush1.msra.mxu0 0.0
    %6669 = vmatprep.subr.mxu0 0.0
    %6670 = vmatpush1.msra.mxu0 0.0
    %6671 = vmatprep.subr.mxu0 0.0
    %6672 = vmatpush1.msra.mxu0 0.0
    %6673 = vmatprep.subr.mxu0 0.0
    %6674 = vmatpush1.msra.mxu0 0.0
    %6675 = vmatprep.subr.mxu0 0.0
    %6676 = vmatpush1.msra.mxu0 0.0
    %6677 = vmatprep.subr.mxu0 0.0
    %6678 = vmatpush1.msra.mxu0 0.0
    %6679 = vmatprep.subr.mxu0 0.0
    %6680 = vmatpush1.msra.mxu0 0.0
    %6681 = vmatprep.subr.mxu0 0.0
    %6682 = vmatpush1.msra.mxu0 0.0
    %6683 = vmatprep.subr.mxu0 0.0
    %6684 = vmatpush1.msra.mxu0 0.0
    %6685 = vmatprep.mubr.f32.mxu0 0.0
    %v6686 = vand.u32 %v6465, 4294901760
    %v6687 = vsub.f32 %v6465, %v6686
    %6688 = vmatmul.mubr.f32.gmra.mrb[0].mxu0 %v6687
    %v6689 = vpop.f32.mrb[0].mxu0
    %v6690 = vadd.f32 %v6616, %v6689
    %v6691 = vpop.f32.mrb[0].mxu0
    %6692 = vdwg.mxu0
    %6693 = vmatprep.subr.mxu0 0.0
    %v6694 = vand.u32 %v78, 4294901760
    %6695 = vmatpush1.msra.mxu0 %v6694
    %6696 = vmatprep.subr.mxu0 0.0
    %6697 = vmatpush1.msra.mxu0 0.0
    %6698 = vmatprep.subr.mxu0 0.0
    %6699 = vmatpush1.msra.mxu0 0.0
    %6700 = vmatprep.subr.mxu0 0.0
    %6701 = vmatpush1.msra.mxu0 0.0
    %6702 = vmatprep.subr.mxu0 0.0
    %6703 = vmatpush1.msra.mxu0 0.0
    %6704 = vmatprep.subr.mxu0 0.0
    %6705 = vmatpush1.msra.mxu0 0.0
    %6706 = vmatprep.subr.mxu0 0.0
    %6707 = vmatpush1.msra.mxu0 0.0
    %6708 = vmatprep.subr.mxu0 0.0
    %6709 = vmatpush1.msra.mxu0 0.0
    %6710 = vmatprep.subr.mxu0 0.0
    %6711 = vmatpush1.msra.mxu0 0.0
    %6712 = vmatprep.subr.mxu0 0.0
    %6713 = vmatpush1.msra.mxu0 0.0
    %6714 = vmatprep.subr.mxu0 0.0
    %6715 = vmatpush1.msra.mxu0 0.0
    %6716 = vmatprep.subr.mxu0 0.0
    %6717 = vmatpush1.msra.mxu0 0.0
    %6718 = vmatprep.subr.mxu0 0.0
    %6719 = vmatpush1.msra.mxu0 0.0
    %6720 = vmatprep.subr.mxu0 0.0
    %6721 = vmatpush1.msra.mxu0 0.0
    %6722 = vmatprep.subr.mxu0 0.0
    %6723 = vmatpush1.msra.mxu0 0.0
    %6724 = vmatprep.subr.mxu0 0.0
    %6725 = vmatpush1.msra.mxu0 0.0
    %6726 = vmatprep.subr.mxu0 0.0
    %6727 = vmatpush1.msra.mxu0 0.0
    %6728 = vmatprep.subr.mxu0 0.0
    %6729 = vmatpush1.msra.mxu0 0.0
    %6730 = vmatprep.subr.mxu0 0.0
    %6731 = vmatpush1.msra.mxu0 0.0
    %6732 = vmatprep.subr.mxu0 0.0
    %6733 = vmatpush1.msra.mxu0 0.0
    %6734 = vmatprep.subr.mxu0 0.0
    %6735 = vmatpush1.msra.mxu0 0.0
    %6736 = vmatprep.subr.mxu0 0.0
    %6737 = vmatpush1.msra.mxu0 0.0
    %6738 = vmatprep.subr.mxu0 0.0
    %6739 = vmatpush1.msra.mxu0 0.0
    %6740 = vmatprep.subr.mxu0 0.0
    %6741 = vmatpush1.msra.mxu0 0.0
    %6742 = vmatprep.subr.mxu0 0.0
    %6743 = vmatpush1.msra.mxu0 0.0
    %6744 = vmatprep.subr.mxu0 0.0
    %6745 = vmatpush1.msra.mxu0 0.0
    %6746 = vmatprep.subr.mxu0 0.0
    %6747 = vmatpush1.msra.mxu0 0.0
    %6748 = vmatprep.subr.mxu0 0.0
    %6749 = vmatpush1.msra.mxu0 0.0
    %6750 = vmatprep.subr.mxu0 0.0
    %6751 = vmatpush1.msra.mxu0 0.0
    %6752 = vmatprep.subr.mxu0 0.0
    %6753 = vmatpush1.msra.mxu0 0.0
    %6754 = vmatprep.subr.mxu0 0.0
    %6755 = vmatpush1.msra.mxu0 0.0
    %6756 = vmatprep.subr.mxu0 0.0
    %6757 = vmatpush1.msra.mxu0 0.0
    %6758 = vmatprep.mubr.f32.mxu0 0.0
    %v6759 = vand.u32 %v6465, 4294901760
    %v6760 = vsub.f32 %v6465, %v6759
    %v6761 = vand.u32 %v6760, 4294901760
    %6762 = vmatmul.mubr.f32.gmra.mrb[0].mxu0 %v6761
    %v6763 = vpop.f32.mrb[0].mxu0
    %v6764 = vadd.f32 %v6690, %v6763
    %v6765 = vpop.f32.mrb[0].mxu0
    %6766 = vdwg.mxu0
    %6767 = vmatprep.subr.mxu0 0.0
    %v6768 = vand.u32 %v78, 4294901760
    %v6769 = vsub.f32 %v78, %v6768
    %v6770 = vand.u32 %v6769, 4294901760
    %6771 = vmatpush1.msra.mxu0 %v6770
    %6772 = vmatprep.subr.mxu0 0.0
    %6773 = vmatpush1.msra.mxu0 0.0
    %6774 = vmatprep.subr.mxu0 0.0
    %6775 = vmatpush1.msra.mxu0 0.0
    %6776 = vmatprep.subr.mxu0 0.0
    %6777 = vmatpush1.msra.mxu0 0.0
    %6778 = vmatprep.subr.mxu0 0.0
    %6779 = vmatpush1.msra.mxu0 0.0
    %6780 = vmatprep.subr.mxu0 0.0
    %6781 = vmatpush1.msra.mxu0 0.0
    %6782 = vmatprep.subr.mxu0 0.0
    %6783 = vmatpush1.msra.mxu0 0.0
    %6784 = vmatprep.subr.mxu0 0.0
    %6785 = vmatpush1.msra.mxu0 0.0
    %6786 = vmatprep.subr.mxu0 0.0
    %6787 = vmatpush1.msra.mxu0 0.0
    %6788 = vmatprep.subr.mxu0 0.0
    %6789 = vmatpush1.msra.mxu0 0.0
    %6790 = vmatprep.subr.mxu0 0.0
    %6791 = vmatpush1.msra.mxu0 0.0
    %6792 = vmatprep.subr.mxu0 0.0
    %6793 = vmatpush1.msra.mxu0 0.0
    %6794 = vmatprep.subr.mxu0 0.0
    %6795 = vmatpush1.msra.mxu0 0.0
    %6796 = vmatprep.subr.mxu0 0.0
    %6797 = vmatpush1.msra.mxu0 0.0
    %6798 = vmatprep.subr.mxu0 0.0
    %6799 = vmatpush1.msra.mxu0 0.0
    %6800 = vmatprep.subr.mxu0 0.0
    %6801 = vmatpush1.msra.mxu0 0.0
    %6802 = vmatprep.subr.mxu0 0.0
    %6803 = vmatpush1.msra.mxu0 0.0
    %6804 = vmatprep.subr.mxu0 0.0
    %6805 = vmatpush1.msra.mxu0 0.0
    %6806 = vmatprep.subr.mxu0 0.0
    %6807 = vmatpush1.msra.mxu0 0.0
    %6808 = vmatprep.subr.mxu0 0.0
    %6809 = vmatpush1.msra.mxu0 0.0
    %6810 = vmatprep.subr.mxu0 0.0
    %6811 = vmatpush1.msra.mxu0 0.0
    %6812 = vmatprep.subr.mxu0 0.0
    %6813 = vmatpush1.msra.mxu0 0.0
    %6814 = vmatprep.subr.mxu0 0.0
    %6815 = vmatpush1.msra.mxu0 0.0
    %6816 = vmatprep.subr.mxu0 0.0
    %6817 = vmatpush1.msra.mxu0 0.0
    %6818 = vmatprep.subr.mxu0 0.0
    %6819 = vmatpush1.msra.mxu0 0.0
    %6820 = vmatprep.subr.mxu0 0.0
    %6821 = vmatpush1.msra.mxu0 0.0
    %6822 = vmatprep.subr.mxu0 0.0
    %6823 = vmatpush1.msra.mxu0 0.0
    %6824 = vmatprep.subr.mxu0 0.0
    %6825 = vmatpush1.msra.mxu0 0.0
    %6826 = vmatprep.subr.mxu0 0.0
    %6827 = vmatpush1.msra.mxu0 0.0
    %6828 = vmatprep.subr.mxu0 0.0
    %6829 = vmatpush1.msra.mxu0 0.0
    %6830 = vmatprep.subr.mxu0 0.0
    %6831 = vmatpush1.msra.mxu0 0.0
    %6832 = vmatprep.subr.mxu0 0.0
    %6833 = vmatpush1.msra.mxu0 0.0
    %6834 = vmatprep.mubr.f32.mxu0 0.0
    %v6835 = vand.u32 %v6465, 4294901760
    %6836 = vmatmul.mubr.f32.gmra.mrb[0].mxu0 %v6835
    %v6837 = vpop.f32.mrb[0].mxu0
    %v6838 = vadd.f32 %v6764, %v6837
    %v6839 = vpop.f32.mrb[0].mxu0
    %6840 = vdwg.mxu0
    %6841 = vmatprep.subr.mxu0 0.0
    %v6842 = vand.u32 %v78, 4294901760
    %6843 = vmatpush1.msra.mxu0 %v6842
    %6844 = vmatprep.subr.mxu0 0.0
    %6845 = vmatpush1.msra.mxu0 0.0
    %6846 = vmatprep.subr.mxu0 0.0
    %6847 = vmatpush1.msra.mxu0 0.0
    %6848 = vmatprep.subr.mxu0 0.0
    %6849 = vmatpush1.msra.mxu0 0.0
    %6850 = vmatprep.subr.mxu0 0.0
    %6851 = vmatpush1.msra.mxu0 0.0
    %6852 = vmatprep.subr.mxu0 0.0
    %6853 = vmatpush1.msra.mxu0 0.0
    %6854 = vmatprep.subr.mxu0 0.0
    %6855 = vmatpush1.msra.mxu0 0.0
    %6856 = vmatprep.subr.mxu0 0.0
    %6857 = vmatpush1.msra.mxu0 0.0
    %6858 = vmatprep.subr.mxu0 0.0
    %6859 = vmatpush1.msra.mxu0 0.0
    %6860 = vmatprep.subr.mxu0 0.0
    %6861 = vmatpush1.msra.mxu0 0.0
    %6862 = vmatprep.subr.mxu0 0.0
    %6863 = vmatpush1.msra.mxu0 0.0
    %6864 = vmatprep.subr.mxu0 0.0
    %6865 = vmatpush1.msra.mxu0 0.0
    %6866 = vmatprep.subr.mxu0 0.0
    %6867 = vmatpush1.msra.mxu0 0.0
    %6868 = vmatprep.subr.mxu0 0.0
    %6869 = vmatpush1.msra.mxu0 0.0
    %6870 = vmatprep.subr.mxu0 0.0
    %6871 = vmatpush1.msra.mxu0 0.0
    %6872 = vmatprep.subr.mxu0 0.0
    %6873 = vmatpush1.msra.mxu0 0.0
    %6874 = vmatprep.subr.mxu0 0.0
    %6875 = vmatpush1.msra.mxu0 0.0
    %6876 = vmatprep.subr.mxu0 0.0
    %6877 = vmatpush1.msra.mxu0 0.0
    %6878 = vmatprep.subr.mxu0 0.0
    %6879 = vmatpush1.msra.mxu0 0.0
    %6880 = vmatprep.subr.mxu0 0.0
    %6881 = vmatpush1.msra.mxu0 0.0
    %6882 = vmatprep.subr.mxu0 0.0
    %6883 = vmatpush1.msra.mxu0 0.0
    %6884 = vmatprep.subr.mxu0 0.0
    %6885 = vmatpush1.msra.mxu0 0.0
    %6886 = vmatprep.subr.mxu0 0.0
    %6887 = vmatpush1.msra.mxu0 0.0
    %6888 = vmatprep.subr.mxu0 0.0
    %6889 = vmatpush1.msra.mxu0 0.0
    %6890 = vmatprep.subr.mxu0 0.0
    %6891 = vmatpush1.msra.mxu0 0.0
    %6892 = vmatprep.subr.mxu0 0.0
    %6893 = vmatpush1.msra.mxu0 0.0
    %6894 = vmatprep.subr.mxu0 0.0
    %6895 = vmatpush1.msra.mxu0 0.0
    %6896 = vmatprep.subr.mxu0 0.0
    %6897 = vmatpush1.msra.mxu0 0.0
    %6898 = vmatprep.subr.mxu0 0.0
    %6899 = vmatpush1.msra.mxu0 0.0
    %6900 = vmatprep.subr.mxu0 0.0
    %6901 = vmatpush1.msra.mxu0 0.0
    %6902 = vmatprep.subr.mxu0 0.0
    %6903 = vmatpush1.msra.mxu0 0.0
    %6904 = vmatprep.subr.mxu0 0.0
    %6905 = vmatpush1.msra.mxu0 0.0
    %6906 = vmatprep.mubr.f32.mxu0 0.0
    %v6907 = vand.u32 %v6465, 4294901760
    %6908 = vmatmul.mubr.f32.gmra.mrb[0].mxu0 %v6907
    %v6909 = vpop.f32.mrb[0].mxu0
    %v6910 = vadd.f32 %v6838, %v6909
    %v6911 = vpop.f32.mrb[0].mxu0
    %6912 = vdwg.mxu0
    %v6914 = vsel %vm3697, %v3745, 0
    %6916 = vmatprep.subr.mxu0 0.0
    %v6917 = vand.u32 %v79, 4294901760
    %6918 = vmatpush1.msra.mxu0 %v6917
    %6919 = vmatprep.subr.mxu0 0.0
    %6920 = vmatpush1.msra.mxu0 0.0
    %6921 = vmatprep.subr.mxu0 0.0
    %6922 = vmatpush1.msra.mxu0 0.0
    %6923 = vmatprep.subr.mxu0 0.0
    %6924 = vmatpush1.msra.mxu0 0.0
    %6925 = vmatprep.subr.mxu0 0.0
    %6926 = vmatpush1.msra.mxu0 0.0
    %6927 = vmatprep.subr.mxu0 0.0
    %6928 = vmatpush1.msra.mxu0 0.0
    %6929 = vmatprep.subr.mxu0 0.0
    %6930 = vmatpush1.msra.mxu0 0.0
    %6931 = vmatprep.subr.mxu0 0.0
    %6932 = vmatpush1.msra.mxu0 0.0
    %6933 = vmatprep.subr.mxu0 0.0
    %6934 = vmatpush1.msra.mxu0 0.0
    %6935 = vmatprep.subr.mxu0 0.0
    %6936 = vmatpush1.msra.mxu0 0.0
    %6937 = vmatprep.subr.mxu0 0.0
    %6938 = vmatpush1.msra.mxu0 0.0
    %6939 = vmatprep.subr.mxu0 0.0
    %6940 = vmatpush1.msra.mxu0 0.0
    %6941 = vmatprep.subr.mxu0 0.0
    %6942 = vmatpush1.msra.mxu0 0.0
    %6943 = vmatprep.subr.mxu0 0.0
    %6944 = vmatpush1.msra.mxu0 0.0
    %6945 = vmatprep.subr.mxu0 0.0
    %6946 = vmatpush1.msra.mxu0 0.0
    %6947 = vmatprep.subr.mxu0 0.0
    %6948 = vmatpush1.msra.mxu0 0.0
    %6949 = vmatprep.subr.mxu0 0.0
    %6950 = vmatpush1.msra.mxu0 0.0
    %6951 = vmatprep.subr.mxu0 0.0
    %6952 = vmatpush1.msra.mxu0 0.0
    %6953 = vmatprep.subr.mxu0 0.0
    %6954 = vmatpush1.msra.mxu0 0.0
    %6955 = vmatprep.subr.mxu0 0.0
    %6956 = vmatpush1.msra.mxu0 0.0
    %6957 = vmatprep.subr.mxu0 0.0
    %6958 = vmatpush1.msra.mxu0 0.0
    %6959 = vmatprep.subr.mxu0 0.0
    %6960 = vmatpush1.msra.mxu0 0.0
    %6961 = vmatprep.subr.mxu0 0.0
    %6962 = vmatpush1.msra.mxu0 0.0
    %6963 = vmatprep.subr.mxu0 0.0
    %6964 = vmatpush1.msra.mxu0 0.0
    %6965 = vmatprep.subr.mxu0 0.0
    %6966 = vmatpush1.msra.mxu0 0.0
    %6967 = vmatprep.subr.mxu0 0.0
    %6968 = vmatpush1.msra.mxu0 0.0
    %6969 = vmatprep.subr.mxu0 0.0
    %6970 = vmatpush1.msra.mxu0 0.0
    %6971 = vmatprep.subr.mxu0 0.0
    %6972 = vmatpush1.msra.mxu0 0.0
    %6973 = vmatprep.subr.mxu0 0.0
    %6974 = vmatpush1.msra.mxu0 0.0
    %6975 = vmatprep.subr.mxu0 0.0
    %6976 = vmatpush1.msra.mxu0 0.0
    %6977 = vmatprep.subr.mxu0 0.0
    %6978 = vmatpush1.msra.mxu0 0.0
    %6979 = vmatprep.subr.mxu0 0.0
    %6980 = vmatpush1.msra.mxu0 0.0
    %6981 = vmatprep.mubr.f32.mxu0 0.0
    %v6982 = vand.u32 %v6914, 4294901760
    %v6983 = vsub.f32 %v6914, %v6982
    %v6984 = vand.u32 %v6983, 4294901760
    %v6985 = vsub.f32 %v6983, %v6984
    %v6986 = vand.u32 %v6985, 4294901760
    %6987 = vmatmul.mubr.f32.gmra.mrb[0].mxu0 %v6986
    %v6988 = vpop.f32.mrb[0].mxu0
    %v6989 = vadd.f32 0.0, %v6988
    %v6990 = vpop.f32.mrb[0].mxu0
    %6991 = vdwg.mxu0
    %6992 = vmatprep.subr.mxu0 0.0
    %v6993 = vand.u32 %v79, 4294901760
    %v6994 = vsub.f32 %v79, %v6993
    %v6995 = vand.u32 %v6994, 4294901760
    %v6996 = vsub.f32 %v6994, %v6995
    %v6997 = vand.u32 %v6996, 4294901760
    %6998 = vmatpush1.msra.mxu0 %v6997
    %6999 = vmatprep.subr.mxu0 0.0
    %7000 = vmatpush1.msra.mxu0 0.0
    %7001 = vmatprep.subr.mxu0 0.0
    %7002 = vmatpush1.msra.mxu0 0.0
    %7003 = vmatprep.subr.mxu0 0.0
    %7004 = vmatpush1.msra.mxu0 0.0
    %7005 = vmatprep.subr.mxu0 0.0
    %7006 = vmatpush1.msra.mxu0 0.0
    %7007 = vmatprep.subr.mxu0 0.0
    %7008 = vmatpush1.msra.mxu0 0.0
    %7009 = vmatprep.subr.mxu0 0.0
    %7010 = vmatpush1.msra.mxu0 0.0
    %7011 = vmatprep.subr.mxu0 0.0
    %7012 = vmatpush1.msra.mxu0 0.0
    %7013 = vmatprep.subr.mxu0 0.0
    %7014 = vmatpush1.msra.mxu0 0.0
    %7015 = vmatprep.subr.mxu0 0.0
    %7016 = vmatpush1.msra.mxu0 0.0
    %7017 = vmatprep.subr.mxu0 0.0
    %7018 = vmatpush1.msra.mxu0 0.0
    %7019 = vmatprep.subr.mxu0 0.0
    %7020 = vmatpush1.msra.mxu0 0.0
    %7021 = vmatprep.subr.mxu0 0.0
    %7022 = vmatpush1.msra.mxu0 0.0
    %7023 = vmatprep.subr.mxu0 0.0
    %7024 = vmatpush1.msra.mxu0 0.0
    %7025 = vmatprep.subr.mxu0 0.0
    %7026 = vmatpush1.msra.mxu0 0.0
    %7027 = vmatprep.subr.mxu0 0.0
    %7028 = vmatpush1.msra.mxu0 0.0
    %7029 = vmatprep.subr.mxu0 0.0
    %7030 = vmatpush1.msra.mxu0 0.0
    %7031 = vmatprep.subr.mxu0 0.0
    %7032 = vmatpush1.msra.mxu0 0.0
    %7033 = vmatprep.subr.mxu0 0.0
    %7034 = vmatpush1.msra.mxu0 0.0
    %7035 = vmatprep.subr.mxu0 0.0
    %7036 = vmatpush1.msra.mxu0 0.0
    %7037 = vmatprep.subr.mxu0 0.0
    %7038 = vmatpush1.msra.mxu0 0.0
    %7039 = vmatprep.subr.mxu0 0.0
    %7040 = vmatpush1.msra.mxu0 0.0
    %7041 = vmatprep.subr.mxu0 0.0
    %7042 = vmatpush1.msra.mxu0 0.0
    %7043 = vmatprep.subr.mxu0 0.0
    %7044 = vmatpush1.msra.mxu0 0.0
    %7045 = vmatprep.subr.mxu0 0.0
    %7046 = vmatpush1.msra.mxu0 0.0
    %7047 = vmatprep.subr.mxu0 0.0
    %7048 = vmatpush1.msra.mxu0 0.0
    %7049 = vmatprep.subr.mxu0 0.0
    %7050 = vmatpush1.msra.mxu0 0.0
    %7051 = vmatprep.subr.mxu0 0.0
    %7052 = vmatpush1.msra.mxu0 0.0
    %7053 = vmatprep.subr.mxu0 0.0
    %7054 = vmatpush1.msra.mxu0 0.0
    %7055 = vmatprep.subr.mxu0 0.0
    %7056 = vmatpush1.msra.mxu0 0.0
    %7057 = vmatprep.subr.mxu0 0.0
    %7058 = vmatpush1.msra.mxu0 0.0
    %7059 = vmatprep.subr.mxu0 0.0
    %7060 = vmatpush1.msra.mxu0 0.0
    %7061 = vmatprep.mubr.f32.mxu0 0.0
    %v7062 = vand.u32 %v6914, 4294901760
    %7063 = vmatmul.mubr.f32.gmra.mrb[0].mxu0 %v7062
    %v7064 = vpop.f32.mrb[0].mxu0
    %v7065 = vadd.f32 %v6989, %v7064
    %v7066 = vpop.f32.mrb[0].mxu0
    %7067 = vdwg.mxu0
    %7068 = vmatprep.subr.mxu0 0.0
    %v7069 = vand.u32 %v79, 4294901760
    %v7070 = vsub.f32 %v79, %v7069
    %7071 = vmatpush1.msra.mxu0 %v7070
    %7072 = vmatprep.subr.mxu0 0.0
    %7073 = vmatpush1.msra.mxu0 0.0
    %7074 = vmatprep.subr.mxu0 0.0
    %7075 = vmatpush1.msra.mxu0 0.0
    %7076 = vmatprep.subr.mxu0 0.0
    %7077 = vmatpush1.msra.mxu0 0.0
    %7078 = vmatprep.subr.mxu0 0.0
    %7079 = vmatpush1.msra.mxu0 0.0
    %7080 = vmatprep.subr.mxu0 0.0
    %7081 = vmatpush1.msra.mxu0 0.0
    %7082 = vmatprep.subr.mxu0 0.0
    %7083 = vmatpush1.msra.mxu0 0.0
    %7084 = vmatprep.subr.mxu0 0.0
    %7085 = vmatpush1.msra.mxu0 0.0
    %7086 = vmatprep.subr.mxu0 0.0
    %7087 = vmatpush1.msra.mxu0 0.0
    %7088 = vmatprep.subr.mxu0 0.0
    %7089 = vmatpush1.msra.mxu0 0.0
    %7090 = vmatprep.subr.mxu0 0.0
    %7091 = vmatpush1.msra.mxu0 0.0
    %7092 = vmatprep.subr.mxu0 0.0
    %7093 = vmatpush1.msra.mxu0 0.0
    %7094 = vmatprep.subr.mxu0 0.0
    %7095 = vmatpush1.msra.mxu0 0.0
    %7096 = vmatprep.subr.mxu0 0.0
    %7097 = vmatpush1.msra.mxu0 0.0
    %7098 = vmatprep.subr.mxu0 0.0
    %7099 = vmatpush1.msra.mxu0 0.0
    %7100 = vmatprep.subr.mxu0 0.0
    %7101 = vmatpush1.msra.mxu0 0.0
    %7102 = vmatprep.subr.mxu0 0.0
    %7103 = vmatpush1.msra.mxu0 0.0
    %7104 = vmatprep.subr.mxu0 0.0
    %7105 = vmatpush1.msra.mxu0 0.0
    %7106 = vmatprep.subr.mxu0 0.0
    %7107 = vmatpush1.msra.mxu0 0.0
    %7108 = vmatprep.subr.mxu0 0.0
    %7109 = vmatpush1.msra.mxu0 0.0
    %7110 = vmatprep.subr.mxu0 0.0
    %7111 = vmatpush1.msra.mxu0 0.0
    %7112 = vmatprep.subr.mxu0 0.0
    %7113 = vmatpush1.msra.mxu0 0.0
    %7114 = vmatprep.subr.mxu0 0.0
    %7115 = vmatpush1.msra.mxu0 0.0
    %7116 = vmatprep.subr.mxu0 0.0
    %7117 = vmatpush1.msra.mxu0 0.0
    %7118 = vmatprep.subr.mxu0 0.0
    %7119 = vmatpush1.msra.mxu0 0.0
    %7120 = vmatprep.subr.mxu0 0.0
    %7121 = vmatpush1.msra.mxu0 0.0
    %7122 = vmatprep.subr.mxu0 0.0
    %7123 = vmatpush1.msra.mxu0 0.0
    %7124 = vmatprep.subr.mxu0 0.0
    %7125 = vmatpush1.msra.mxu0 0.0
    %7126 = vmatprep.subr.mxu0 0.0
    %7127 = vmatpush1.msra.mxu0 0.0
    %7128 = vmatprep.subr.mxu0 0.0
    %7129 = vmatpush1.msra.mxu0 0.0
    %7130 = vmatprep.subr.mxu0 0.0
    %7131 = vmatpush1.msra.mxu0 0.0
    %7132 = vmatprep.subr.mxu0 0.0
    %7133 = vmatpush1.msra.mxu0 0.0
    %7134 = vmatprep.mubr.f32.mxu0 0.0
    %v7135 = vand.u32 %v6914, 4294901760
    %v7136 = vsub.f32 %v6914, %v7135
    %7137 = vmatmul.mubr.f32.gmra.mrb[0].mxu0 %v7136
    %v7138 = vpop.f32.mrb[0].mxu0
    %v7139 = vadd.f32 %v7065, %v7138
    %v7140 = vpop.f32.mrb[0].mxu0
    %7141 = vdwg.mxu0
    %7142 = vmatprep.subr.mxu0 0.0
    %v7143 = vand.u32 %v79, 4294901760
    %7144 = vmatpush1.msra.mxu0 %v7143
    %7145 = vmatprep.subr.mxu0 0.0
    %7146 = vmatpush1.msra.mxu0 0.0
    %7147 = vmatprep.subr.mxu0 0.0
    %7148 = vmatpush1.msra.mxu0 0.0
    %7149 = vmatprep.subr.mxu0 0.0
    %7150 = vmatpush1.msra.mxu0 0.0
    %7151 = vmatprep.subr.mxu0 0.0
    %7152 = vmatpush1.msra.mxu0 0.0
    %7153 = vmatprep.subr.mxu0 0.0
    %7154 = vmatpush1.msra.mxu0 0.0
    %7155 = vmatprep.subr.mxu0 0.0
    %7156 = vmatpush1.msra.mxu0 0.0
    %7157 = vmatprep.subr.mxu0 0.0
    %7158 = vmatpush1.msra.mxu0 0.0
    %7159 = vmatprep.subr.mxu0 0.0
    %7160 = vmatpush1.msra.mxu0 0.0
    %7161 = vmatprep.subr.mxu0 0.0
    %7162 = vmatpush1.msra.mxu0 0.0
    %7163 = vmatprep.subr.mxu0 0.0
    %7164 = vmatpush1.msra.mxu0 0.0
    %7165 = vmatprep.subr.mxu0 0.0
    %7166 = vmatpush1.msra.mxu0 0.0
    %7167 = vmatprep.subr.mxu0 0.0
    %7168 = vmatpush1.msra.mxu0 0.0
    %7169 = vmatprep.subr.mxu0 0.0
    %7170 = vmatpush1.msra.mxu0 0.0
    %7171 = vmatprep.subr.mxu0 0.0
    %7172 = vmatpush1.msra.mxu0 0.0
    %7173 = vmatprep.subr.mxu0 0.0
    %7174 = vmatpush1.msra.mxu0 0.0
    %7175 = vmatprep.subr.mxu0 0.0
    %7176 = vmatpush1.msra.mxu0 0.0
    %7177 = vmatprep.subr.mxu0 0.0
    %7178 = vmatpush1.msra.mxu0 0.0
    %7179 = vmatprep.subr.mxu0 0.0
    %7180 = vmatpush1.msra.mxu0 0.0
    %7181 = vmatprep.subr.mxu0 0.0
    %7182 = vmatpush1.msra.mxu0 0.0
    %7183 = vmatprep.subr.mxu0 0.0
    %7184 = vmatpush1.msra.mxu0 0.0
    %7185 = vmatprep.subr.mxu0 0.0
    %7186 = vmatpush1.msra.mxu0 0.0
    %7187 = vmatprep.subr.mxu0 0.0
    %7188 = vmatpush1.msra.mxu0 0.0
    %7189 = vmatprep.subr.mxu0 0.0
    %7190 = vmatpush1.msra.mxu0 0.0
    %7191 = vmatprep.subr.mxu0 0.0
    %7192 = vmatpush1.msra.mxu0 0.0
    %7193 = vmatprep.subr.mxu0 0.0
    %7194 = vmatpush1.msra.mxu0 0.0
    %7195 = vmatprep.subr.mxu0 0.0
    %7196 = vmatpush1.msra.mxu0 0.0
    %7197 = vmatprep.subr.mxu0 0.0
    %7198 = vmatpush1.msra.mxu0 0.0
    %7199 = vmatprep.subr.mxu0 0.0
    %7200 = vmatpush1.msra.mxu0 0.0
    %7201 = vmatprep.subr.mxu0 0.0
    %7202 = vmatpush1.msra.mxu0 0.0
    %7203 = vmatprep.subr.mxu0 0.0
    %7204 = vmatpush1.msra.mxu0 0.0
    %7205 = vmatprep.subr.mxu0 0.0
    %7206 = vmatpush1.msra.mxu0 0.0
    %7207 = vmatprep.mubr.f32.mxu0 0.0
    %v7208 = vand.u32 %v6914, 4294901760
    %v7209 = vsub.f32 %v6914, %v7208
    %v7210 = vand.u32 %v7209, 4294901760
    %7211 = vmatmul.mubr.f32.gmra.mrb[0].mxu0 %v7210
    %v7212 = vpop.f32.mrb[0].mxu0
    %v7213 = vadd.f32 %v7139, %v7212
    %v7214 = vpop.f32.mrb[0].mxu0
    %7215 = vdwg.mxu0
    %7216 = vmatprep.subr.mxu0 0.0
    %v7217 = vand.u32 %v79, 4294901760
    %v7218 = vsub.f32 %v79, %v7217
    %v7219 = vand.u32 %v7218, 4294901760
    %7220 = vmatpush1.msra.mxu0 %v7219
    %7221 = vmatprep.subr.mxu0 0.0
    %7222 = vmatpush1.msra.mxu0 0.0
    %7223 = vmatprep.subr.mxu0 0.0
    %7224 = vmatpush1.msra.mxu0 0.0
    %7225 = vmatprep.subr.mxu0 0.0
    %7226 = vmatpush1.msra.mxu0 0.0
    %7227 = vmatprep.subr.mxu0 0.0
    %7228 = vmatpush1.msra.mxu0 0.0
    %7229 = vmatprep.subr.mxu0 0.0
    %7230 = vmatpush1.msra.mxu0 0.0
    %7231 = vmatprep.subr.mxu0 0.0
    %7232 = vmatpush1.msra.mxu0 0.0
    %7233 = vmatprep.subr.mxu0 0.0
    %7234 = vmatpush1.msra.mxu0 0.0
    %7235 = vmatprep.subr.mxu0 0.0
    %7236 = vmatpush1.msra.mxu0 0.0
    %7237 = vmatprep.subr.mxu0 0.0
    %7238 = vmatpush1.msra.mxu0 0.0
    %7239 = vmatprep.subr.mxu0 0.0
    %7240 = vmatpush1.msra.mxu0 0.0
    %7241 = vmatprep.subr.mxu0 0.0
    %7242 = vmatpush1.msra.mxu0 0.0
    %7243 = vmatprep.subr.mxu0 0.0
    %7244 = vmatpush1.msra.mxu0 0.0
    %7245 = vmatprep.subr.mxu0 0.0
    %7246 = vmatpush1.msra.mxu0 0.0
    %7247 = vmatprep.subr.mxu0 0.0
    %7248 = vmatpush1.msra.mxu0 0.0
    %7249 = vmatprep.subr.mxu0 0.0
    %7250 = vmatpush1.msra.mxu0 0.0
    %7251 = vmatprep.subr.mxu0 0.0
    %7252 = vmatpush1.msra.mxu0 0.0
    %7253 = vmatprep.subr.mxu0 0.0
    %7254 = vmatpush1.msra.mxu0 0.0
    %7255 = vmatprep.subr.mxu0 0.0
    %7256 = vmatpush1.msra.mxu0 0.0
    %7257 = vmatprep.subr.mxu0 0.0
    %7258 = vmatpush1.msra.mxu0 0.0
    %7259 = vmatprep.subr.mxu0 0.0
    %7260 = vmatpush1.msra.mxu0 0.0
    %7261 = vmatprep.subr.mxu0 0.0
    %7262 = vmatpush1.msra.mxu0 0.0
    %7263 = vmatprep.subr.mxu0 0.0
    %7264 = vmatpush1.msra.mxu0 0.0
    %7265 = vmatprep.subr.mxu0 0.0
    %7266 = vmatpush1.msra.mxu0 0.0
    %7267 = vmatprep.subr.mxu0 0.0
    %7268 = vmatpush1.msra.mxu0 0.0
    %7269 = vmatprep.subr.mxu0 0.0
    %7270 = vmatpush1.msra.mxu0 0.0
    %7271 = vmatprep.subr.mxu0 0.0
    %7272 = vmatpush1.msra.mxu0 0.0
    %7273 = vmatprep.subr.mxu0 0.0
    %7274 = vmatpush1.msra.mxu0 0.0
    %7275 = vmatprep.subr.mxu0 0.0
    %7276 = vmatpush1.msra.mxu0 0.0
    %7277 = vmatprep.subr.mxu0 0.0
    %7278 = vmatpush1.msra.mxu0 0.0
    %7279 = vmatprep.subr.mxu0 0.0
    %7280 = vmatpush1.msra.mxu0 0.0
    %7281 = vmatprep.subr.mxu0 0.0
    %7282 = vmatpush1.msra.mxu0 0.0
    %7283 = vmatprep.mubr.f32.mxu0 0.0
    %v7284 = vand.u32 %v6914, 4294901760
    %7285 = vmatmul.mubr.f32.gmra.mrb[0].mxu0 %v7284
    %v7286 = vpop.f32.mrb[0].mxu0
    %v7287 = vadd.f32 %v7213, %v7286
    %v7288 = vpop.f32.mrb[0].mxu0
    %7289 = vdwg.mxu0
    %7290 = vmatprep.subr.mxu0 0.0
    %v7291 = vand.u32 %v79, 4294901760
    %7292 = vmatpush1.msra.mxu0 %v7291
    %7293 = vmatprep.subr.mxu0 0.0
    %7294 = vmatpush1.msra.mxu0 0.0
    %7295 = vmatprep.subr.mxu0 0.0
    %7296 = vmatpush1.msra.mxu0 0.0
    %7297 = vmatprep.subr.mxu0 0.0
    %7298 = vmatpush1.msra.mxu0 0.0
    %7299 = vmatprep.subr.mxu0 0.0
    %7300 = vmatpush1.msra.mxu0 0.0
    %7301 = vmatprep.subr.mxu0 0.0
    %7302 = vmatpush1.msra.mxu0 0.0
    %7303 = vmatprep.subr.mxu0 0.0
    %7304 = vmatpush1.msra.mxu0 0.0
    %7305 = vmatprep.subr.mxu0 0.0
    %7306 = vmatpush1.msra.mxu0 0.0
    %7307 = vmatprep.subr.mxu0 0.0
    %7308 = vmatpush1.msra.mxu0 0.0
    %7309 = vmatprep.subr.mxu0 0.0
    %7310 = vmatpush1.msra.mxu0 0.0
    %7311 = vmatprep.subr.mxu0 0.0
    %7312 = vmatpush1.msra.mxu0 0.0
    %7313 = vmatprep.subr.mxu0 0.0
    %7314 = vmatpush1.msra.mxu0 0.0
    %7315 = vmatprep.subr.mxu0 0.0
    %7316 = vmatpush1.msra.mxu0 0.0
    %7317 = vmatprep.subr.mxu0 0.0
    %7318 = vmatpush1.msra.mxu0 0.0
    %7319 = vmatprep.subr.mxu0 0.0
    %7320 = vmatpush1.msra.mxu0 0.0
    %7321 = vmatprep.subr.mxu0 0.0
    %7322 = vmatpush1.msra.mxu0 0.0
    %7323 = vmatprep.subr.mxu0 0.0
    %7324 = vmatpush1.msra.mxu0 0.0
    %7325 = vmatprep.subr.mxu0 0.0
    %7326 = vmatpush1.msra.mxu0 0.0
    %7327 = vmatprep.subr.mxu0 0.0
    %7328 = vmatpush1.msra.mxu0 0.0
    %7329 = vmatprep.subr.mxu0 0.0
    %7330 = vmatpush1.msra.mxu0 0.0
    %7331 = vmatprep.subr.mxu0 0.0
    %7332 = vmatpush1.msra.mxu0 0.0
    %7333 = vmatprep.subr.mxu0 0.0
    %7334 = vmatpush1.msra.mxu0 0.0
    %7335 = vmatprep.subr.mxu0 0.0
    %7336 = vmatpush1.msra.mxu0 0.0
    %7337 = vmatprep.subr.mxu0 0.0
    %7338 = vmatpush1.msra.mxu0 0.0
    %7339 = vmatprep.subr.mxu0 0.0
    %7340 = vmatpush1.msra.mxu0 0.0
    %7341 = vmatprep.subr.mxu0 0.0
    %7342 = vmatpush1.msra.mxu0 0.0
    %7343 = vmatprep.subr.mxu0 0.0
    %7344 = vmatpush1.msra.mxu0 0.0
    %7345 = vmatprep.subr.mxu0 0.0
    %7346 = vmatpush1.msra.mxu0 0.0
    %7347 = vmatprep.subr.mxu0 0.0
    %7348 = vmatpush1.msra.mxu0 0.0
    %7349 = vmatprep.subr.mxu0 0.0
    %7350 = vmatpush1.msra.mxu0 0.0
    %7351 = vmatprep.subr.mxu0 0.0
    %7352 = vmatpush1.msra.mxu0 0.0
    %7353 = vmatprep.subr.mxu0 0.0
    %7354 = vmatpush1.msra.mxu0 0.0
    %7355 = vmatprep.mubr.f32.mxu0 0.0
    %v7356 = vand.u32 %v6914, 4294901760
    %7357 = vmatmul.mubr.f32.gmra.mrb[0].mxu0 %v7356
    %v7358 = vpop.f32.mrb[0].mxu0
    %v7359 = vadd.f32 %v7287, %v7358
    %v7360 = vpop.f32.mrb[0].mxu0
    %7361 = vdwg.mxu0
    %v7362 = vrcp.pop %v3748
    %v7363 = vmul.f32 %v4216, %v7362
    %v7364 = vrcp.pop %v3751
    %v7365 = vmul.f32 %v4665, %v7364
    %v7366 = vrcp.pop %v3754
    %v7367 = vmul.f32 %v5114, %v7366
    %v7368 = vrcp.pop %v3757
    %v7369 = vmul.f32 %v5563, %v7368
    %v7370 = vrcp.pop %v3760
    %v7371 = vmul.f32 %v6012, %v7370
    %v7372 = vrcp.pop %v3763
    %v7373 = vmul.f32 %v6461, %v7372
    %v7374 = vrcp.pop %v3766
    %v7375 = vmul.f32 %v6910, %v7374
    %v7376 = vrcp.pop %v3769
    %v7377 = vmul.f32 %v7359, %v7376
    %7378 = vst.msk [vmem:[#allocation8] sm:$0xff] %vm80, %v7363
    %7379 = vst.msk [vmem:[#allocation8 + $0x8] sm:$0xff] %vm80, %v7365
    %7380 = vst.msk [vmem:[#allocation8 + $0x10] sm:$0xff] %vm80, %v7367
    %7381 = vst.msk [vmem:[#allocation8 + $0x18] sm:$0xff] %vm80, %v7369
    %7382 = vst.msk [vmem:[#allocation8 + $0x20] sm:$0xff] %vm80, %v7371
    %7383 = vst.msk [vmem:[#allocation8 + $0x28] sm:$0xff] %vm80, %v7373
    %7384 = vst.msk [vmem:[#allocation8 + $0x30] sm:$0xff] %vm80, %v7375
    %7385 = vst.msk [vmem:[#allocation8 + $0x38] sm:$0xff] %vm80, %v7377
    // Predicated region
    $region26: #{tpu_custom_call.1} parent=1 // pred_check
      _
    $region27: #{tpu_custom_call.1} parent=1 // pred_check_branch
      %7387 = sbr.rel (0) target = $region29
    $region28: #{tpu_custom_call.1} parent=1 // pred_region
      %s7389 = ssub.s32 1024, 1024
      %7390 = vsyncadd [#allocation4], %s7389
      %s7391 = sshll.u32 [#allocation8], 4
      %s7392 = int_to_ptr.vmem [resolvable:$true] %s7391
      %7397 = dma.vmem_to_hbm [thread:$0]  %s7392, 1024, %s3, [#allocation4], 128, 128, 8
    $region29: #{tpu_custom_call.1} parent=1 // pred_fallthru
      _
    // Predicated region
    $region30: #{tpu_custom_call.1} parent=1 // pred_check
      _
    $region31: #{tpu_custom_call.1} parent=1 // pred_check_branch
      %7399 = sbr.rel (0) target = $region33
    $region32: #{tpu_custom_call.1} parent=1 // pred_region
      %7400 = dma.done [#allocation4], 1024
    $region33: #{tpu_custom_call.1} parent=1 // pred_fallthru
      _
    %7401 = vsyncpa [#allocation3], 1
    %7402 = vsyncpa [#allocation6], 1
    %7403 = vsyncpa [#allocation4], 1

</llo_original>
